<compile_context>
chip_gen: v5e
topology: v5e:2x2
jax: 0.10.0
libtpu: 0.0.40
codegen_flags: <defaults>
</compile_context>

<pallas_src>
import functools

import jax
import jax.numpy as jnp
from jax.experimental import pallas as pl
from jax.experimental.pallas import tpu as pltpu


CP = 128  # channel padding: one full lane-register width


# ----------------------------------------------------------------------------
# Kernel A: tiled matmul + folded BN + activation (used for the stride-2 conv)
# ----------------------------------------------------------------------------
def _matmul_bn_act_kernel(a_ref, b_ref, scale_ref, bias_ref, o_ref, acc_ref, *, act):
    @pl.when(pl.program_id(2) == 0)
    def _():
        acc_ref[...] = jnp.zeros_like(acc_ref)

    acc_ref[...] += jnp.dot(a_ref[...], b_ref[...],
                            preferred_element_type=jnp.float32)

    @pl.when(pl.program_id(2) == pl.num_programs(2) - 1)
    def _():
        y = acc_ref[...] * scale_ref[...] + bias_ref[...]   # eval-mode BN folded
        if act == "swish":
            y = y * jax.nn.sigmoid(y)
        o_ref[...] = y.astype(o_ref.dtype)


def _pick_tile(d):
    for t in (512, 256, 128):
        if d % t == 0:
            return t
    return d  # falls back to the full dim (always allowed)


def _matmul_bn_act(a, b, scale, bias, *, act, out_dtype):
    M, K = a.shape
    Cout = b.shape[1]
    tm, tn, tk = _pick_tile(M), _pick_tile(Cout), _pick_tile(K)
    kernel = functools.partial(_matmul_bn_act_kernel, act=act)
    return pl.pallas_call(
        kernel,
        out_shape=jax.ShapeDtypeStruct((M, Cout), out_dtype),
        grid_spec=pltpu.PrefetchScalarGridSpec(
            num_scalar_prefetch=0,
            grid=(M // tm, Cout // tn, K // tk),
            in_specs=[
                pl.BlockSpec((tm, tk), lambda i, j, k: (i, k)),
                pl.BlockSpec((tk, tn), lambda i, j, k: (k, j)),
                pl.BlockSpec((1, tn), lambda i, j, k: (0, j)),
                pl.BlockSpec((1, tn), lambda i, j, k: (0, j)),
            ],
            out_specs=pl.BlockSpec((tm, tn), lambda i, j, k: (i, j)),
            scratch_shapes=[pltpu.VMEM((tm, tn), jnp.float32)],
        ),
        compiler_params=pltpu.CompilerParams(
            dimension_semantics=("parallel", "parallel", "arbitrary")),
        cost_estimate=pl.CostEstimate(
            flops=2 * M * K * Cout,
            transcendentals=M * Cout,
            bytes_accessed=(M * K * a.dtype.itemsize + K * Cout * b.dtype.itemsize
                            + M * Cout * jnp.dtype(out_dtype).itemsize),
        ),
    )(a, b, scale, bias)


# ----------------------------------------------------------------------------
# Kernel B: 3x3 stride-1 conv (in-kernel im2col) + folded BN + swish
# ----------------------------------------------------------------------------
def _conv3x3_bn_act_kernel(xp_ref, w_ref, scale_ref, bias_ref, o_ref):
    _, Hp, Wp, C = xp_ref.shape
    Ho, Wo = Hp - 2, Wp - 2
    acc = jnp.zeros((Ho * Wo, C), jnp.float32)
    for kh in range(3):
        for kw in range(3):
            xs = xp_ref[0, kh:kh + Ho, kw:kw + Wo, :].reshape(Ho * Wo, C)
            acc = acc + jnp.dot(xs, w_ref[kh * 3 + kw],
                                preferred_element_type=jnp.float32)
    y = acc * scale_ref[...] + bias_ref[...]
    y = y * jax.nn.sigmoid(y)                                # swish
    o_ref[...] = y.reshape(1, Ho, Wo, C).astype(o_ref.dtype)


def _conv3x3_bn_act(xp, w9, scale, bias, *, out_dtype):
    N, Hp, Wp, C = xp.shape
    Ho, Wo = Hp - 2, Wp - 2
    return pl.pallas_call(
        _conv3x3_bn_act_kernel,
        out_shape=jax.ShapeDtypeStruct((N, Ho, Wo, C), out_dtype),
        grid=(N,),
        in_specs=[
            pl.BlockSpec((1, Hp, Wp, C), lambda n: (n, 0, 0, 0)),
            pl.BlockSpec((9, C, C), lambda n: (0, 0, 0)),     # weights stay resident
            pl.BlockSpec((1, C), lambda n: (0, 0)),
            pl.BlockSpec((1, C), lambda n: (0, 0)),
        ],
        out_specs=pl.BlockSpec((1, Ho, Wo, C), lambda n: (n, 0, 0, 0)),
        compiler_params=pltpu.CompilerParams(dimension_semantics=("parallel",)),
        cost_estimate=pl.CostEstimate(
            flops=2 * N * Ho * Wo * 9 * C * C,
            transcendentals=N * Ho * Wo * C,
            bytes_accessed=(xp.size * xp.dtype.itemsize + w9.size * w9.dtype.itemsize
                            + N * Ho * Wo * C * jnp.dtype(out_dtype).itemsize),
        ),
    )(xp, w9, scale, bias)


# ----------------------------------------------------------------------------
# Kernel C: 3x3 stride-1 conv + BN + swish + SE + shortcut (+1x1 conv BN) + residual
# ----------------------------------------------------------------------------
def _conv3x3_se_res_kernel(*refs, sc_conv):
    if sc_conv:
        (hp_ref, w_ref, scale_ref, bias_ref, sc_ref,
         scw_ref, sc_scale_ref, sc_bias_ref,
         w1_ref, b1_ref, w2_ref, b2_ref, o_ref) = refs
    else:
        (hp_ref, w_ref, scale_ref, bias_ref, sc_ref,
         w1_ref, b1_ref, w2_ref, b2_ref, o_ref) = refs

    _, Hp, Wp, C = hp_ref.shape
    Ho, Wo = Hp - 2, Wp - 2

    # main branch: 3x3 conv (9 shifted-view MXU dots), folded BN, swish
    acc = jnp.zeros((Ho * Wo, C), jnp.float32)
    for kh in range(3):
        for kw in range(3):
            xs = hp_ref[0, kh:kh + Ho, kw:kw + Wo, :].reshape(Ho * Wo, C)
            acc = acc + jnp.dot(xs, w_ref[kh * 3 + kw],
                                preferred_element_type=jnp.float32)
    y = acc * scale_ref[...] + bias_ref[...]
    y = y * jax.nn.sigmoid(y)

    # Squeeze-Excite (padded channels carry exact zeros, so they don't perturb FCs)
    pooled = jnp.sum(y, axis=0, keepdims=True) * (1.0 / (Ho * Wo))       # (1, C)
    h1 = jnp.maximum(
        jnp.dot(pooled, w1_ref[...], preferred_element_type=jnp.float32)
        + b1_ref[...], 0.0)
    gate = jax.nn.sigmoid(
        jnp.dot(h1, w2_ref[...], preferred_element_type=jnp.float32)
        + b2_ref[...])

    # shortcut branch
    sc = sc_ref[0].reshape(Ho * Wo, C)
    if sc_conv:   # ConvBlock(k=1, actv='none'): 1x1 conv + folded BN, fused here
        sc = (jnp.dot(sc, scw_ref[...], preferred_element_type=jnp.float32)
              * sc_scale_ref[...] + sc_bias_ref[...])
    else:         # MaxPool2d(1, s) shortcut == (sub)sampled identity
        sc = sc.astype(jnp.float32)

    out = y * gate + sc
    o_ref[...] = out.reshape(1, Ho, Wo, C).astype(o_ref.dtype)


def _conv3x3_se_res(hp, w9, scale, bias, sc_src, sc_w, sc_scale, sc_bias,
                    se_w1, se_b1, se_w2, se_b2, *, sc_conv, out_dtype):
    N, Hp, Wp, C = hp.shape
    Ho, Wo = Hp - 2, Wp - 2
    vec = pl.BlockSpec((1, C), lambda n: (0, 0))
    mat = pl.BlockSpec((C, C), lambda n: (0, 0))
    img = pl.BlockSpec((1, Ho, Wo, C), lambda n: (n, 0, 0, 0))

    operands = [hp, w9, scale, bias, sc_src]
    in_specs = [pl.BlockSpec((1, Hp, Wp, C), lambda n: (n, 0, 0, 0)),
                pl.BlockSpec((9, C, C), lambda n: (0, 0, 0)),
                vec, vec, img]
    if sc_conv:
        operands += [sc_w, sc_scale, sc_bias]
        in_specs += [mat, vec, vec]
    operands += [se_w1, se_b1, se_w2, se_b2]
    in_specs += [mat, vec, mat, vec]

    kernel = functools.partial(_conv3x3_se_res_kernel, sc_conv=sc_conv)
    return pl.pallas_call(
        kernel,
        out_shape=jax.ShapeDtypeStruct((N, Ho, Wo, C), out_dtype),
        grid=(N,),
        in_specs=in_specs,
        out_specs=img,
        compiler_params=pltpu.CompilerParams(dimension_semantics=("parallel",)),
        cost_estimate=pl.CostEstimate(
            flops=2 * N * Ho * Wo * (9 + (1 if sc_conv else 0)) * C * C,
            transcendentals=N * (Ho * Wo * C + 2 * C),
            bytes_accessed=(hp.size * hp.dtype.itemsize + w9.size * w9.dtype.itemsize
                            + sc_src.size * sc_src.dtype.itemsize
                            + N * Ho * Wo * C * jnp.dtype(out_dtype).itemsize),
        ),
    )(*operands)


# ----------------------------------------------------------------------------
# Wrapper-side glue (cheap XLA ops: padding, subsampling, tiny im2col)
# ----------------------------------------------------------------------------
def _im2col(x, k, s, pad):
    """x: (N,H,W,C) -> patches (N*Ho*Wo, k*k*C) ordered (kh, kw, cin)."""
    N, H, W, C = x.shape
    if pad:
        x = jnp.pad(x, ((0, 0), (pad, pad), (pad, pad), (0, 0)))
    Ho = (H + 2 * pad - k) // s + 1
    Wo = (W + 2 * pad - k) // s + 1
    cols = []
    for kh in range(k):
        for kw in range(k):
            cols.append(x[:, kh:kh + (Ho - 1) * s + 1:s,
                          kw:kw + (Wo - 1) * s + 1:s, :])
    patches = jnp.concatenate(cols, axis=-1)
    return patches.reshape(N * Ho * Wo, k * k * C), Ho, Wo


def _spatial_pad1(x):
    return jnp.pad(x, ((0, 0), (1, 1), (1, 1), (0, 0)))


# ----------------------------------------------------------------------------
# Deterministic parameter construction (synthetic weights, PyTorch shapes),
# stored in the lane-padded (CP=128) kernel layouts.
# ----------------------------------------------------------------------------
def _round_up(x, m):
    return (x + m - 1) // m * m


def _pad2(w, rows, cols):
    return jnp.zeros((rows, cols), w.dtype).at[:w.shape[0], :w.shape[1]].set(w)


def _pad_vec(v):
    return _pad2(v.reshape(1, -1), 1, CP)


def _conv_w(key, cin, cout, k):
    # PyTorch layout (Cout, Cin, kh, kw) -> (kh, kw, Cin, Cout).
    w = jax.random.normal(key, (cout, cin, k, k), jnp.float32) / jnp.sqrt(cin * k * k)
    return jnp.transpose(w, (2, 3, 1, 0))


def _pad_w9(w, cin, cout):
    w9 = jnp.zeros((9, CP, CP), jnp.float32)
    return w9.at[:, :cin, :cout].set(w.reshape(9, cin, cout)).astype(jnp.bfloat16)


def _bn_params(key, c, eps=1e-5):
    k1, k2, k3, k4 = jax.random.split(key, 4)
    gamma = 1.0 + 0.1 * jax.random.normal(k1, (c,), jnp.float32)
    beta = 0.1 * jax.random.normal(k2, (c,), jnp.float32)
    mean = 0.1 * jax.random.normal(k3, (c,), jnp.float32)
    var = 1.0 + 0.1 * jax.random.uniform(k4, (c,), jnp.float32)
    scale = gamma / jnp.sqrt(var + eps)
    bias = beta - mean * scale
    return _pad_vec(scale), _pad_vec(bias)


def _se_params(key, c, reduction=16):
    cr = max(c // reduction, 1)
    k1, k2, k3, k4 = jax.random.split(key, 4)
    w1 = jax.random.normal(k1, (c, cr), jnp.float32) / jnp.sqrt(c)
    b1 = 0.1 * jax.random.normal(k2, (cr,), jnp.float32)
    w2 = jax.random.normal(k3, (cr, c), jnp.float32) / jnp.sqrt(cr)
    b2 = 0.1 * jax.random.normal(k4, (c,), jnp.float32)
    return _pad2(w1, CP, CP), _pad_vec(b1), _pad2(w2, CP, CP), _pad_vec(b2)


def init_fancy_res_block(key, nc_in, nc_out, stride):
    keys = jax.random.split(key, 7)
    p = {"stride": stride, "nc_in": nc_in, "nc_out": nc_out}
    w1 = _conv_w(keys[0], nc_in, nc_out, 3)
    if stride == 2:
        kpad = _round_up(9 * nc_in, 128)
        p["w1"] = _pad2(w1.reshape(9 * nc_in, nc_out), kpad, CP).astype(jnp.bfloat16)
    else:
        p["w1"] = _pad_w9(w1, nc_in, nc_out)
    p["bn1_scale"], p["bn1_bias"] = _bn_params(keys[1], nc_out)
    w2 = _conv_w(keys[2], nc_out, nc_out, 3)
    p["w2"] = _pad_w9(w2, nc_out, nc_out)
    p["bn2_scale"], p["bn2_bias"] = _bn_params(keys[3], nc_out)
    if nc_in != nc_out:
        scw = _conv_w(keys[4], nc_in, nc_out, 1).reshape(nc_in, nc_out)
        p["sc_w"] = _pad2(scw, CP, CP).astype(jnp.bfloat16)
        p["sc_scale"], p["sc_bias"] = _bn_params(keys[5], nc_out)
    p["se_w1"], p["se_b1"], p["se_w2"], p["se_b2"] = _se_params(keys[6], nc_out)
    return p


def init_fancy_multilayer_down(key, nc1, nc2, n_layers=2):
    keys = jax.random.split(key, n_layers)
    return [init_fancy_res_block(keys[i], nc1 if i == 0 else nc2, nc2,
                                 stride=2 if i == 0 else 1)
            for i in range(n_layers)]


# ----------------------------------------------------------------------------
# Forward pass
# ----------------------------------------------------------------------------
def fancy_res_block_fwd(x, p, out_dtype):
    """x: NHWC. First block gets raw channels; later blocks get CP-padded bf16."""
    s = p["stride"]
    sc_conv = "sc_w" in p

    if s == 2:
        # Stride-2 3x3 conv via a tiny raw-channel im2col (9*nc_in << CP bytes/px)
        # feeding the tiled, lane-dense MXU matmul kernel (fused BN + swish).
        N = x.shape[0]
        patches, Ho, Wo = _im2col(x, k=3, s=2, pad=1)
        kpad = p["w1"].shape[0]
        patches = jnp.pad(patches, ((0, 0), (0, kpad - patches.shape[1])))
        h = _matmul_bn_act(patches.astype(jnp.bfloat16), p["w1"],
                           p["bn1_scale"], p["bn1_bias"],
                           act="swish", out_dtype=jnp.bfloat16)
        h = h.reshape(N, Ho, Wo, CP)
        sc_src = x[:, ::2, ::2, :]
        sc_src = jnp.pad(
            sc_src, ((0, 0), (0, 0), (0, 0), (0, CP - sc_src.shape[-1]))
        ).astype(jnp.bfloat16)
    else:
        # Stride-1 3x3 conv with in-kernel im2col (no patch materialization).
        xp = _spatial_pad1(x)
        h = _conv3x3_bn_act(xp, p["w1"], p["bn1_scale"], p["bn1_bias"],
                            out_dtype=jnp.bfloat16)
        sc_src = x  # identity shortcut source

    # conv2 + BN + swish + SE + shortcut(+1x1 conv/BN) + residual, fully fused.
    hp = _spatial_pad1(h)
    return _conv3x3_se_res(
        hp, p["w2"], p["bn2_scale"], p["bn2_bias"], sc_src,
        p.get("sc_w"), p.get("sc_scale"), p.get("sc_bias"),
        p["se_w1"], p["se_b1"], p["se_w2"], p["se_b2"],
        sc_conv=sc_conv, out_dtype=out_dtype)


def fancy_multilayer_down(x_nchw, params):
    x = jnp.transpose(x_nchw, (0, 2, 3, 1))          # NCHW -> NHWC (single tiny pass)
    n_blocks = len(params)
    for i, p in enumerate(params):
        out_dtype = jnp.float32 if i == n_blocks - 1 else jnp.bfloat16
        x = fancy_res_block_fwd(x, p, out_dtype)
    x = x[..., :params[-1]["nc_out"]].astype(jnp.float32)   # drop lane padding
    return jnp.transpose(x, (0, 3, 1, 2))            # NHWC -> NCHW


# ----------------------------------------------------------------------------
if __name__ == "__main__":
    key = jax.random.PRNGKey(0)
    kx, kp = jax.random.split(key)

    nc1, nc2 = 4, 8
    x = jax.random.normal(kx, (2, nc1, 16, 16), jnp.float32)   # NCHW like PyTorch
    params = init_fancy_multilayer_down(kp, nc1, nc2, n_layers=2)

    fwd = jax.jit(lambda inp: fancy_multilayer_down(inp, params))
    out = fwd(x)
    jax.block_until_ready(out)

    assert out.shape == (2, nc2, 8, 8), out.shape            # stride-2 downsample once
    assert bool(jnp.all(jnp.isfinite(out)))
    print("KERNEL_OK")
</pallas_src>

<mosaic_0001>
module attributes {stable_mosaic.version = 11 : i64} {
  func.func @_matmul_bn_act_kernel(%arg0: i32, %arg1: i32, %arg2: i32, %arg3: memref<128x128xbf16, #tpu.memory_space<vmem>>, %arg4: memref<128x128xbf16, #tpu.memory_space<vmem>>, %arg5: memref<1x128xf32, #tpu.memory_space<vmem>>, %arg6: memref<1x128xf32, #tpu.memory_space<vmem>>, %arg7: memref<128x128xbf16, #tpu.memory_space<vmem>>, %arg8: memref<128x128xf32, #tpu.memory_space<vmem>>) attributes {dimension_semantics = [#tpu.dimension_semantics<parallel>, #tpu.dimension_semantics<parallel>, #tpu.dimension_semantics<arbitrary>], iteration_bounds = array<i64: 1, 1, 1>, scalar_prefetch = 0 : i64, scratch_operands = 1 : i64, tpu.core_type = #tpu.core_type<tc>, window_params = [{transform_indices = @transform_0, window_bounds = array<i64: 128, 128>}, {transform_indices = @transform_1, window_bounds = array<i64: 128, 128>}, {transform_indices = @transform_2, window_bounds = array<i64: 1, 128>}, {transform_indices = @transform_3, window_bounds = array<i64: 1, 128>}, {transform_indices = @transform_4, window_bounds = array<i64: 128, 128>}]} {
    %c0_i32 = arith.constant 0 : i32
    %0 = arith.cmpi eq, %arg2, %c0_i32 : i32
    %1 = arith.extui %0 : i1 to i32
    %c0_i32_0 = arith.constant 0 : i32
    %2 = arith.cmpi ne, %1, %c0_i32_0 : i32
    scf.if %2 {
      %cst_10 = arith.constant 0.000000e+00 : f32
      %12 = vector.broadcast %cst_10 : f32 to vector<128x128xf32>
      %c0_11 = arith.constant 0 : index
      %c0_12 = arith.constant 0 : index
      %13 = vector.load %arg8[%c0_11, %c0_12] : memref<128x128xf32, #tpu.memory_space<vmem>>, vector<128x128xf32>
      tpu.vector_store %arg8[%c0_11, %c0_12], %12 {strides = array<i32>} : memref<128x128xf32, #tpu.memory_space<vmem>>, vector<128x128xf32>,
    } else {
    }
    %c0 = arith.constant 0 : index
    %c0_1 = arith.constant 0 : index
    %3 = vector.load %arg8[%c0, %c0_1] : memref<128x128xf32, #tpu.memory_space<vmem>>, vector<128x128xf32>
    %c0_2 = arith.constant 0 : index
    %c0_3 = arith.constant 0 : index
    %4 = vector.load %arg3[%c0_2, %c0_3] : memref<128x128xbf16, #tpu.memory_space<vmem>>, vector<128x128xbf16>
    %c0_4 = arith.constant 0 : index
    %c0_5 = arith.constant 0 : index
    %5 = vector.load %arg4[%c0_4, %c0_5] : memref<128x128xbf16, #tpu.memory_space<vmem>>, vector<128x128xbf16>
    %cst = arith.constant dense<0.000000e+00> : vector<128x128xf32>
    %6 = tpu.matmul %4, %5, %cst {dimension_numbers = #tpu.dot_dimension_numbers<[1], [0], [0], [1], [0, 0, 1, 1], [], []>} : vector<128x128xbf16>, vector<128x128xbf16>, vector<128x128xf32> -> vector<128x128xf32>
    %7 = arith.addf %3, %6 : vector<128x128xf32>
    %c0_6 = arith.constant 0 : index
    %c0_7 = arith.constant 0 : index
    %8 = vector.load %arg8[%c0_6, %c0_7] : memref<128x128xf32, #tpu.memory_space<vmem>>, vector<128x128xf32>
    tpu.vector_store %arg8[%c0_6, %c0_7], %7 {strides = array<i32>} : memref<128x128xf32, #tpu.memory_space<vmem>>, vector<128x128xf32>,
    %c0_i32_8 = arith.constant 0 : i32
    %9 = arith.cmpi eq, %arg2, %c0_i32_8 : i32
    %10 = arith.extui %9 : i1 to i32
    %c0_i32_9 = arith.constant 0 : i32
    %11 = arith.cmpi ne, %10, %c0_i32_9 : i32
    scf.if %11 {
      %c0_10 = arith.constant 0 : index
      %c0_11 = arith.constant 0 : index
      %12 = vector.load %arg8[%c0_10, %c0_11] : memref<128x128xf32, #tpu.memory_space<vmem>>, vector<128x128xf32>
      %c0_12 = arith.constant 0 : index
      %c0_13 = arith.constant 0 : index
      %13 = vector.load %arg5[%c0_12, %c0_13] : memref<1x128xf32, #tpu.memory_space<vmem>>, vector<1x128xf32>
      %14 = vector.broadcast %13 : vector<1x128xf32> to vector<128x128xf32>
      %15 = arith.mulf %12, %14 : vector<128x128xf32>
      %c0_14 = arith.constant 0 : index
      %c0_15 = arith.constant 0 : index
      %16 = vector.load %arg6[%c0_14, %c0_15] : memref<1x128xf32, #tpu.memory_space<vmem>>, vector<1x128xf32>
      %17 = vector.broadcast %16 : vector<1x128xf32> to vector<128x128xf32>
      %18 = arith.addf %15, %17 : vector<128x128xf32>
      %19 = arith.negf %18 : vector<128x128xf32>
      %20 = math.exp %19 : vector<128x128xf32>
      %cst_16 = arith.constant 1.000000e+00 : f32
      %21 = vector.broadcast %cst_16 : f32 to vector<128x128xf32>
      %22 = arith.addf %21, %20 : vector<128x128xf32>
      %23 = arith.divf %21, %22 : vector<128x128xf32>
      %24 = arith.mulf %18, %23 : vector<128x128xf32>
      %25 = arith.truncf %24 : vector<128x128xf32> to vector<128x128xbf16>
      %c0_17 = arith.constant 0 : index
      %c0_18 = arith.constant 0 : index
      %26 = vector.load %arg7[%c0_17, %c0_18] : memref<128x128xbf16, #tpu.memory_space<vmem>>, vector<128x128xbf16>
      tpu.vector_store %arg7[%c0_17, %c0_18], %25 {strides = array<i32>} : memref<128x128xbf16, #tpu.memory_space<vmem>>, vector<128x128xbf16>,
    } else {
    }
    return
  }
  func.func @transform_0(%arg0: i32, %arg1: i32, %arg2: i32) -> (i32, i32) {
    %c0_i32 = arith.constant 0 : i32
    return %arg0, %arg2 : i32, i32
  }
  func.func @transform_1(%arg0: i32, %arg1: i32, %arg2: i32) -> (i32, i32) {
    %c0_i32 = arith.constant 0 : i32
    return %arg2, %arg1 : i32, i32
  }
  func.func @transform_2(%arg0: i32, %arg1: i32, %arg2: i32) -> (i32, i32) {
    %c0_i32 = arith.constant 0 : i32
    %c0_i32_0 = arith.constant 0 : i32
    return %c0_i32, %arg1 : i32, i32
  }
  func.func @transform_3(%arg0: i32, %arg1: i32, %arg2: i32) -> (i32, i32) {
    %c0_i32 = arith.constant 0 : i32
    %c0_i32_0 = arith.constant 0 : i32
    return %c0_i32, %arg1 : i32, i32
  }
  func.func @transform_4(%arg0: i32, %arg1: i32, %arg2: i32) -> (i32, i32) {
    %c0_i32 = arith.constant 0 : i32
    return %arg0, %arg1 : i32, i32
  }
}

module attributes {stable_mosaic.version = 11 : i64} {
  func.func @_conv3x3_se_res_kernel(%arg0: i32, %arg1: memref<1x10x10x128xbf16, #tpu.memory_space<vmem>>, %arg2: memref<9x128x128xbf16, #tpu.memory_space<vmem>>, %arg3: memref<1x128xf32, #tpu.memory_space<vmem>>, %arg4: memref<1x128xf32, #tpu.memory_space<vmem>>, %arg5: memref<1x8x8x128xbf16, #tpu.memory_space<vmem>>, %arg6: memref<128x128xbf16, #tpu.memory_space<vmem>>, %arg7: memref<1x128xf32, #tpu.memory_space<vmem>>, %arg8: memref<1x128xf32, #tpu.memory_space<vmem>>, %arg9: memref<128x128xf32, #tpu.memory_space<vmem>>, %arg10: memref<1x128xf32, #tpu.memory_space<vmem>>, %arg11: memref<128x128xf32, #tpu.memory_space<vmem>>, %arg12: memref<1x128xf32, #tpu.memory_space<vmem>>, %arg13: memref<1x8x8x128xbf16, #tpu.memory_space<vmem>>) attributes {dimension_semantics = [#tpu.dimension_semantics<parallel>], iteration_bounds = array<i64: 2>, scalar_prefetch = 0 : i64, scratch_operands = 0 : i64, tpu.core_type = #tpu.core_type<tc>, window_params = [{transform_indices = @transform_0, window_bounds = array<i64: 1, 10, 10, 128>}, {pipeline_mode = #tpu.pipeline_mode<synchronous>, transform_indices = @transform_1, window_bounds = array<i64: 9, 128, 128>}, {pipeline_mode = #tpu.pipeline_mode<synchronous>, transform_indices = @transform_2, window_bounds = array<i64: 1, 128>}, {pipeline_mode = #tpu.pipeline_mode<synchronous>, transform_indices = @transform_3, window_bounds = array<i64: 1, 128>}, {transform_indices = @transform_4, window_bounds = array<i64: 1, 8, 8, 128>}, {pipeline_mode = #tpu.pipeline_mode<synchronous>, transform_indices = @transform_5, window_bounds = array<i64: 128, 128>}, {pipeline_mode = #tpu.pipeline_mode<synchronous>, transform_indices = @transform_6, window_bounds = array<i64: 1, 128>}, {pipeline_mode = #tpu.pipeline_mode<synchronous>, transform_indices = @transform_7, window_bounds = array<i64: 1, 128>}, {pipeline_mode = #tpu.pipeline_mode<synchronous>, transform_indices = @transform_8, window_bounds = array<i64: 128, 128>}, {pipeline_mode = #tpu.pipeline_mode<synchronous>, transform_indices = @transform_9, window_bounds = array<i64: 1, 128>}, {pipeline_mode = #tpu.pipeline_mode<synchronous>, transform_indices = @transform_10, window_bounds = array<i64: 128, 128>}, {pipeline_mode = #tpu.pipeline_mode<synchronous>, transform_indices = @transform_11, window_bounds = array<i64: 1, 128>}, {transform_indices = @transform_12, window_bounds = array<i64: 1, 8, 8, 128>}]} {
    %cst = arith.constant 0.000000e+00 : f32
    %0 = vector.broadcast %cst : f32 to vector<64x128xf32>
    %c0 = arith.constant 0 : index
    %c0_0 = arith.constant 0 : index
    %c0_1 = arith.constant 0 : index
    %c0_2 = arith.constant 0 : index
    %1 = vector.load %arg1[%c0, %c0_0, %c0_1, %c0_2] : memref<1x10x10x128xbf16, #tpu.memory_space<vmem>>, vector<1x8x8x128xbf16>
    %2 = vector.shape_cast %1 : vector<1x8x8x128xbf16> to vector<8x8x128xbf16>
    %3 = vector.shape_cast %2 : vector<8x8x128xbf16> to vector<64x128xbf16>
    %c0_3 = arith.constant 0 : index
    %c0_4 = arith.constant 0 : index
    %c0_5 = arith.constant 0 : index
    %4 = vector.load %arg2[%c0_3, %c0_4, %c0_5] : memref<9x128x128xbf16, #tpu.memory_space<vmem>>, vector<1x128x128xbf16>
    %5 = vector.shape_cast %4 : vector<1x128x128xbf16> to vector<128x128xbf16>
    %cst_6 = arith.constant dense<0.000000e+00> : vector<64x128xf32>
    %6 = tpu.matmul %3, %5, %cst_6 {dimension_numbers = #tpu.dot_dimension_numbers<[1], [0], [0], [1], [0, 0, 1, 1], [], []>} : vector<64x128xbf16>, vector<128x128xbf16>, vector<64x128xf32> -> vector<64x128xf32>
    %7 = arith.addf %0, %6 : vector<64x128xf32>
    %c0_7 = arith.constant 0 : index
    %c0_8 = arith.constant 0 : index
    %c1 = arith.constant 1 : index
    %c0_9 = arith.constant 0 : index
    %8 = vector.load %arg1[%c0_7, %c0_8, %c1, %c0_9] : memref<1x10x10x128xbf16, #tpu.memory_space<vmem>>, vector<1x8x8x128xbf16>
    %9 = vector.shape_cast %8 : vector<1x8x8x128xbf16> to vector<8x8x128xbf16>
    %10 = vector.shape_cast %9 : vector<8x8x128xbf16> to vector<64x128xbf16>
    %c1_10 = arith.constant 1 : index
    %c0_11 = arith.constant 0 : index
    %c0_12 = arith.constant 0 : index
    %11 = vector.load %arg2[%c1_10, %c0_11, %c0_12] : memref<9x128x128xbf16, #tpu.memory_space<vmem>>, vector<1x128x128xbf16>
    %12 = vector.shape_cast %11 : vector<1x128x128xbf16> to vector<128x128xbf16>
    %cst_13 = arith.constant dense<0.000000e+00> : vector<64x128xf32>
    %13 = tpu.matmul %10, %12, %cst_13 {dimension_numbers = #tpu.dot_dimension_numbers<[1], [0], [0], [1], [0, 0, 1, 1], [], []>} : vector<64x128xbf16>, vector<128x128xbf16>, vector<64x128xf32> -> vector<64x128xf32>
    %14 = arith.addf %7, %13 : vector<64x128xf32>
    %c0_14 = arith.constant 0 : index
    %c0_15 = arith.constant 0 : index
    %c2 = arith.constant 2 : index
    %c0_16 = arith.constant 0 : index
    %15 = vector.load %arg1[%c0_14, %c0_15, %c2, %c0_16] : memref<1x10x10x128xbf16, #tpu.memory_space<vmem>>, vector<1x8x8x128xbf16>
    %16 = vector.shape_cast %15 : vector<1x8x8x128xbf16> to vector<8x8x128xbf16>
    %17 = vector.shape_cast %16 : vector<8x8x128xbf16> to vector<64x128xbf16>
    %c2_17 = arith.constant 2 : index
    %c0_18 = arith.constant 0 : index
    %c0_19 = arith.constant 0 : index
    %18 = vector.load %arg2[%c2_17, %c0_18, %c0_19] : memref<9x128x128xbf16, #tpu.memory_space<vmem>>, vector<1x128x128xbf16>
    %19 = vector.shape_cast %18 : vector<1x128x128xbf16> to vector<128x128xbf16>
    %cst_20 = arith.constant dense<0.000000e+00> : vector<64x128xf32>
    %20 = tpu.matmul %17, %19, %cst_20 {dimension_numbers = #tpu.dot_dimension_numbers<[1], [0], [0], [1], [0, 0, 1, 1], [], []>} : vector<64x128xbf16>, vector<128x128xbf16>, vector<64x128xf32> -> vector<64x128xf32>
    %21 = arith.addf %14, %20 : vector<64x128xf32>
    %c0_21 = arith.constant 0 : index
    %c1_22 = arith.constant 1 : index
    %c0_23 = arith.constant 0 : index
    %c0_24 = arith.constant 0 : index
    %22 = vector.load %arg1[%c0_21, %c1_22, %c0_23, %c0_24] : memref<1x10x10x128xbf16, #tpu.memory_space<vmem>>, vector<1x8x8x128xbf16>
    %23 = vector.shape_cast %22 : vector<1x8x8x128xbf16> to vector<8x8x128xbf16>
    %24 = vector.shape_cast %23 : vector<8x8x128xbf16> to vector<64x128xbf16>
    %c3 = arith.constant 3 : index
    %c0_25 = arith.constant 0 : index
    %c0_26 = arith.constant 0 : index
    %25 = vector.load %arg2[%c3, %c0_25, %c0_26] : memref<9x128x128xbf16, #tpu.memory_space<vmem>>, vector<1x128x128xbf16>
    %26 = vector.shape_cast %25 : vector<1x128x128xbf16> to vector<128x128xbf16>
    %cst_27 = arith.constant dense<0.000000e+00> : vector<64x128xf32>
    %27 = tpu.matmul %24, %26, %cst_27 {dimension_numbers = #tpu.dot_dimension_numbers<[1], [0], [0], [1], [0, 0, 1, 1], [], []>} : vector<64x128xbf16>, vector<128x128xbf16>, vector<64x128xf32> -> vector<64x128xf32>
    %28 = arith.addf %21, %27 : vector<64x128xf32>
    %c0_28 = arith.constant 0 : index
    %c1_29 = arith.constant 1 : index
    %c1_30 = arith.constant 1 : index
    %c0_31 = arith.constant 0 : index
    %29 = vector.load %arg1[%c0_28, %c1_29, %c1_30, %c0_31] : memref<1x10x10x128xbf16, #tpu.memory_space<vmem>>, vector<1x8x8x128xbf16>
    %30 = vector.shape_cast %29 : vector<1x8x8x128xbf16> to vector<8x8x128xbf16>
    %31 = vector.shape_cast %30 : vector<8x8x128xbf16> to vector<64x128xbf16>
    %c4 = arith.constant 4 : index
    %c0_32 = arith.constant 0 : index
    %c0_33 = arith.constant 0 : index
    %32 = vector.load %arg2[%c4, %c0_32, %c0_33] : memref<9x128x128xbf16, #tpu.memory_space<vmem>>, vector<1x128x128xbf16>
    %33 = vector.shape_cast %32 : vector<1x128x128xbf16> to vector<128x128xbf16>
    %cst_34 = arith.constant dense<0.000000e+00> : vector<64x128xf32>
    %34 = tpu.matmul %31, %33, %cst_34 {dimension_numbers = #tpu.dot_dimension_numbers<[1], [0], [0], [1], [0, 0, 1, 1], [], []>} : vector<64x128xbf16>, vector<128x128xbf16>, vector<64x128xf32> -> vector<64x128xf32>
    %35 = arith.addf %28, %34 : vector<64x128xf32>
    %c0_35 = arith.constant 0 : index
    %c1_36 = arith.constant 1 : index
    %c2_37 = arith.constant 2 : index
    %c0_38 = arith.constant 0 : index
    %36 = vector.load %arg1[%c0_35, %c1_36, %c2_37, %c0_38] : memref<1x10x10x128xbf16, #tpu.memory_space<vmem>>, vector<1x8x8x128xbf16>
    %37 = vector.shape_cast %36 : vector<1x8x8x128xbf16> to vector<8x8x128xbf16>
    %38 = vector.shape_cast %37 : vector<8x8x128xbf16> to vector<64x128xbf16>
    %c5 = arith.constant 5 : index
    %c0_39 = arith.constant 0 : index
    %c0_40 = arith.constant 0 : index
    %39 = vector.load %arg2[%c5, %c0_39, %c0_40] : memref<9x128x128xbf16, #tpu.memory_space<vmem>>, vector<1x128x128xbf16>
    %40 = vector.shape_cast %39 : vector<1x128x128xbf16> to vector<128x128xbf16>
    %cst_41 = arith.constant dense<0.000000e+00> : vector<64x128xf32>
    %41 = tpu.matmul %38, %40, %cst_41 {dimension_numbers = #tpu.dot_dimension_numbers<[1], [0], [0], [1], [0, 0, 1, 1], [], []>} : vector<64x128xbf16>, vector<128x128xbf16>, vector<64x128xf32> -> vector<64x128xf32>
    %42 = arith.addf %35, %41 : vector<64x128xf32>
    %c0_42 = arith.constant 0 : index
    %c2_43 = arith.constant 2 : index
    %c0_44 = arith.constant 0 : index
    %c0_45 = arith.constant 0 : index
    %43 = vector.load %arg1[%c0_42, %c2_43, %c0_44, %c0_45] : memref<1x10x10x128xbf16, #tpu.memory_space<vmem>>, vector<1x8x8x128xbf16>
    %44 = vector.shape_cast %43 : vector<1x8x8x128xbf16> to vector<8x8x128xbf16>
    %45 = vector.shape_cast %44 : vector<8x8x128xbf16> to vector<64x128xbf16>
    %c6 = arith.constant 6 : index
    %c0_46 = arith.constant 0 : index
    %c0_47 = arith.constant 0 : index
    %46 = vector.load %arg2[%c6, %c0_46, %c0_47] : memref<9x128x128xbf16, #tpu.memory_space<vmem>>, vector<1x128x128xbf16>
    %47 = vector.shape_cast %46 : vector<1x128x128xbf16> to vector<128x128xbf16>
    %cst_48 = arith.constant dense<0.000000e+00> : vector<64x128xf32>
    %48 = tpu.matmul %45, %47, %cst_48 {dimension_numbers = #tpu.dot_dimension_numbers<[1], [0], [0], [1], [0, 0, 1, 1], [], []>} : vector<64x128xbf16>, vector<128x128xbf16>, vector<64x128xf32> -> vector<64x128xf32>
    %49 = arith.addf %42, %48 : vector<64x128xf32>
    %c0_49 = arith.constant 0 : index
    %c2_50 = arith.constant 2 : index
    %c1_51 = arith.constant 1 : index
    %c0_52 = arith.constant 0 : index
    %50 = vector.load %arg1[%c0_49, %c2_50, %c1_51, %c0_52] : memref<1x10x10x128xbf16, #tpu.memory_space<vmem>>, vector<1x8x8x128xbf16>
    %51 = vector.shape_cast %50 : vector<1x8x8x128xbf16> to vector<8x8x128xbf16>
    %52 = vector.shape_cast %51 : vector<8x8x128xbf16> to vector<64x128xbf16>
    %c7 = arith.constant 7 : index
    %c0_53 = arith.constant 0 : index
    %c0_54 = arith.constant 0 : index
    %53 = vector.load %arg2[%c7, %c0_53, %c0_54] : memref<9x128x128xbf16, #tpu.memory_space<vmem>>, vector<1x128x128xbf16>
    %54 = vector.shape_cast %53 : vector<1x128x128xbf16> to vector<128x128xbf16>
    %cst_55 = arith.constant dense<0.000000e+00> : vector<64x128xf32>
    %55 = tpu.matmul %52, %54, %cst_55 {dimension_numbers = #tpu.dot_dimension_numbers<[1], [0], [0], [1], [0, 0, 1, 1], [], []>} : vector<64x128xbf16>, vector<128x128xbf16>, vector<64x128xf32> -> vector<64x128xf32>
    %56 = arith.addf %49, %55 : vector<64x128xf32>
    %c0_56 = arith.constant 0 : index
    %c2_57 = arith.constant 2 : index
    %c2_58 = arith.constant 2 : index
    %c0_59 = arith.constant 0 : index
    %57 = vector.load %arg1[%c0_56, %c2_57, %c2_58, %c0_59] : memref<1x10x10x128xbf16, #tpu.memory_space<vmem>>, vector<1x8x8x128xbf16>
    %58 = vector.shape_cast %57 : vector<1x8x8x128xbf16> to vector<8x8x128xbf16>
    %59 = vector.shape_cast %58 : vector<8x8x128xbf16> to vector<64x128xbf16>
    %c8 = arith.constant 8 : index
    %c0_60 = arith.constant 0 : index
    %c0_61 = arith.constant 0 : index
    %60 = vector.load %arg2[%c8, %c0_60, %c0_61] : memref<9x128x128xbf16, #tpu.memory_space<vmem>>, vector<1x128x128xbf16>
    %61 = vector.shape_cast %60 : vector<1x128x128xbf16> to vector<128x128xbf16>
    %cst_62 = arith.constant dense<0.000000e+00> : vector<64x128xf32>
    %62 = tpu.matmul %59, %61, %cst_62 {dimension_numbers = #tpu.dot_dimension_numbers<[1], [0], [0], [1], [0, 0, 1, 1], [], []>} : vector<64x128xbf16>, vector<128x128xbf16>, vector<64x128xf32> -> vector<64x128xf32>
    %63 = arith.addf %56, %62 : vector<64x128xf32>
    %c0_63 = arith.constant 0 : index
    %c0_64 = arith.constant 0 : index
    %64 = vector.load %arg3[%c0_63, %c0_64] : memref<1x128xf32, #tpu.memory_space<vmem>>, vector<1x128xf32>
    %65 = vector.broadcast %64 : vector<1x128xf32> to vector<64x128xf32>
    %66 = arith.mulf %63, %65 : vector<64x128xf32>
    %c0_65 = arith.constant 0 : index
    %c0_66 = arith.constant 0 : index
    %67 = vector.load %arg4[%c0_65, %c0_66] : memref<1x128xf32, #tpu.memory_space<vmem>>, vector<1x128xf32>
    %68 = vector.broadcast %67 : vector<1x128xf32> to vector<64x128xf32>
    %69 = arith.addf %66, %68 : vector<64x128xf32>
    %70 = arith.negf %69 : vector<64x128xf32>
    %71 = math.exp %70 : vector<64x128xf32>
    %cst_67 = arith.constant 1.000000e+00 : f32
    %72 = vector.broadcast %cst_67 : f32 to vector<64x128xf32>
    %73 = arith.addf %72, %71 : vector<64x128xf32>
    %74 = arith.divf %72, %73 : vector<64x128xf32>
    %75 = arith.mulf %69, %74 : vector<64x128xf32>
    %cst_68 = arith.constant dense<0.000000e+00> : vector<128xf32>
    %76 = vector.multi_reduction <add>, %75, %cst_68 [0] : vector<64x128xf32> to vector<128xf32>
    %77 = vector.shape_cast %76 : vector<128xf32> to vector<1x128xf32>
    %cst_69 = arith.constant 1.562500e-02 : f32
    %78 = vector.broadcast %cst_69 : f32 to vector<1x128xf32>
    %79 = arith.mulf %77, %78 : vector<1x128xf32>
    %c0_70 = arith.constant 0 : index
    %c0_71 = arith.constant 0 : index
    %80 = vector.load %arg9[%c0_70, %c0_71] : memref<128x128xf32, #tpu.memory_space<vmem>>, vector<128x128xf32>
    %cst_72 = arith.constant dense<0.000000e+00> : vector<1x128xf32>
    %81 = tpu.matmul %79, %80, %cst_72 {dimension_numbers = #tpu.dot_dimension_numbers<[1], [0], [0], [1], [0, 0, 1, 1], [], []>} : vector<1x128xf32>, vector<128x128xf32>, vector<1x128xf32> -> vector<1x128xf32>
    %c0_73 = arith.constant 0 : index
    %c0_74 = arith.constant 0 : index
    %82 = vector.load %arg10[%c0_73, %c0_74] : memref<1x128xf32, #tpu.memory_space<vmem>>, vector<1x128xf32>
    %83 = arith.addf %81, %82 : vector<1x128xf32>
    %cst_75 = arith.constant 0.000000e+00 : f32
    %84 = vector.broadcast %cst_75 : f32 to vector<1x128xf32>
    %85 = arith.maximumf %83, %84 : vector<1x128xf32>
    %c0_76 = arith.constant 0 : index
    %c0_77 = arith.constant 0 : index
    %86 = vector.load %arg11[%c0_76, %c0_77] : memref<128x128xf32, #tpu.memory_space<vmem>>, vector<128x128xf32>
    %cst_78 = arith.constant dense<0.000000e+00> : vector<1x128xf32>
    %87 = tpu.matmul %85, %86, %cst_78 {dimension_numbers = #tpu.dot_dimension_numbers<[1], [0], [0], [1], [0, 0, 1, 1], [], []>} : vector<1x128xf32>, vector<128x128xf32>, vector<1x128xf32> -> vector<1x128xf32>
    %c0_79 = arith.constant 0 : index
    %c0_80 = arith.constant 0 : index
    %88 = vector.load %arg12[%c0_79, %c0_80] : memref<1x128xf32, #tpu.memory_space<vmem>>, vector<1x128xf32>
    %89 = arith.addf %87, %88 : vector<1x128xf32>
    %90 = arith.negf %89 : vector<1x128xf32>
    %91 = math.exp %90 : vector<1x128xf32>
    %cst_81 = arith.constant 1.000000e+00 : f32
    %92 = vector.broadcast %cst_81 : f32 to vector<1x128xf32>
    %93 = arith.addf %92, %91 : vector<1x128xf32>
    %94 = arith.divf %92, %93 : vector<1x128xf32>
    %c0_82 = arith.constant 0 : index
    %c0_83 = arith.constant 0 : index
    %c0_84 = arith.constant 0 : index
    %c0_85 = arith.constant 0 : index
    %95 = vector.load %arg5[%c0_82, %c0_83, %c0_84, %c0_85] : memref<1x8x8x128xbf16, #tpu.memory_space<vmem>>, vector<1x8x8x128xbf16>
    %96 = vector.shape_cast %95 : vector<1x8x8x128xbf16> to vector<8x8x128xbf16>
    %97 = vector.shape_cast %96 : vector<8x8x128xbf16> to vector<64x128xbf16>
    %c0_86 = arith.constant 0 : index
    %c0_87 = arith.constant 0 : index
    %98 = vector.load %arg6[%c0_86, %c0_87] : memref<128x128xbf16, #tpu.memory_space<vmem>>, vector<128x128xbf16>
    %cst_88 = arith.constant dense<0.000000e+00> : vector<64x128xf32>
    %99 = tpu.matmul %97, %98, %cst_88 {dimension_numbers = #tpu.dot_dimension_numbers<[1], [0], [0], [1], [0, 0, 1, 1], [], []>} : vector<64x128xbf16>, vector<128x128xbf16>, vector<64x128xf32> -> vector<64x128xf32>
    %c0_89 = arith.constant 0 : index
    %c0_90 = arith.constant 0 : index
    %100 = vector.load %arg7[%c0_89, %c0_90] : memref<1x128xf32, #tpu.memory_space<vmem>>, vector<1x128xf32>
    %101 = vector.broadcast %100 : vector<1x128xf32> to vector<64x128xf32>
    %102 = arith.mulf %99, %101 : vector<64x128xf32>
    %c0_91 = arith.constant 0 : index
    %c0_92 = arith.constant 0 : index
    %103 = vector.load %arg8[%c0_91, %c0_92] : memref<1x128xf32, #tpu.memory_space<vmem>>, vector<1x128xf32>
    %104 = vector.broadcast %103 : vector<1x128xf32> to vector<64x128xf32>
    %105 = arith.addf %102, %104 : vector<64x128xf32>
    %106 = vector.broadcast %94 : vector<1x128xf32> to vector<64x128xf32>
    %107 = arith.mulf %75, %106 : vector<64x128xf32>
    %108 = arith.addf %107, %105 : vector<64x128xf32>
    %109 = vector.shape_cast %108 : vector<64x128xf32> to vector<1x8x8x128xf32>
    %110 = arith.truncf %109 : vector<1x8x8x128xf32> to vector<1x8x8x128xbf16>
    %c0_93 = arith.constant 0 : index
    %c0_94 = arith.constant 0 : index
    %c0_95 = arith.constant 0 : index
    %c0_96 = arith.constant 0 : index
    %111 = vector.load %arg13[%c0_93, %c0_94, %c0_95, %c0_96] : memref<1x8x8x128xbf16, #tpu.memory_space<vmem>>, vector<1x8x8x128xbf16>
    tpu.vector_store %arg13[%c0_93, %c0_94, %c0_95, %c0_96], %110 {strides = array<i32>} : memref<1x8x8x128xbf16, #tpu.memory_space<vmem>>, vector<1x8x8x128xbf16>,
    return
  }
  func.func @transform_0(%arg0: i32) -> (i32, i32, i32, i32) {
    %c0_i32 = arith.constant 0 : i32
    %c0_i32_0 = arith.constant 0 : i32
    %c0_i32_1 = arith.constant 0 : i32
    %c0_i32_2 = arith.constant 0 : i32
    return %arg0, %c0_i32, %c0_i32_0, %c0_i32_1 : i32, i32, i32, i32
  }
  func.func @transform_1(%arg0: i32) -> (i32, i32, i32) {
    %c0_i32 = arith.constant 0 : i32
    %c0_i32_0 = arith.constant 0 : i32
    %c0_i32_1 = arith.constant 0 : i32
    %c0_i32_2 = arith.constant 0 : i32
    return %c0_i32, %c0_i32_0, %c0_i32_1 : i32, i32, i32
  }
  func.func @transform_2(%arg0: i32) -> (i32, i32) {
    %c0_i32 = arith.constant 0 : i32
    %c0_i32_0 = arith.constant 0 : i32
    %c0_i32_1 = arith.constant 0 : i32
    return %c0_i32, %c0_i32_0 : i32, i32
  }
  func.func @transform_3(%arg0: i32) -> (i32, i32) {
    %c0_i32 = arith.constant 0 : i32
    %c0_i32_0 = arith.constant 0 : i32
    %c0_i32_1 = arith.constant 0 : i32
    return %c0_i32, %c0_i32_0 : i32, i32
  }
  func.func @transform_4(%arg0: i32) -> (i32, i32, i32, i32) {
    %c0_i32 = arith.constant 0 : i32
    %c0_i32_0 = arith.constant 0 : i32
    %c0_i32_1 = arith.constant 0 : i32
    %c0_i32_2 = arith.constant 0 : i32
    return %arg0, %c0_i32, %c0_i32_0, %c0_i32_1 : i32, i32, i32, i32
  }
  func.func @transform_5(%arg0: i32) -> (i32, i32) {
    %c0_i32 = arith.constant 0 : i32
    %c0_i32_0 = arith.constant 0 : i32
    %c0_i32_1 = arith.constant 0 : i32
    return %c0_i32, %c0_i32_0 : i32, i32
  }
  func.func @transform_6(%arg0: i32) -> (i32, i32) {
    %c0_i32 = arith.constant 0 : i32
    %c0_i32_0 = arith.constant 0 : i32
    %c0_i32_1 = arith.constant 0 : i32
    return %c0_i32, %c0_i32_0 : i32, i32
  }
  func.func @transform_7(%arg0: i32) -> (i32, i32) {
    %c0_i32 = arith.constant 0 : i32
    %c0_i32_0 = arith.constant 0 : i32
    %c0_i32_1 = arith.constant 0 : i32
    return %c0_i32, %c0_i32_0 : i32, i32
  }
  func.func @transform_8(%arg0: i32) -> (i32, i32) {
    %c0_i32 = arith.constant 0 : i32
    %c0_i32_0 = arith.constant 0 : i32
    %c0_i32_1 = arith.constant 0 : i32
    return %c0_i32, %c0_i32_0 : i32, i32
  }
  func.func @transform_9(%arg0: i32) -> (i32, i32) {
    %c0_i32 = arith.constant 0 : i32
    %c0_i32_0 = arith.constant 0 : i32
    %c0_i32_1 = arith.constant 0 : i32
    return %c0_i32, %c0_i32_0 : i32, i32
  }
  func.func @transform_10(%arg0: i32) -> (i32, i32) {
    %c0_i32 = arith.constant 0 : i32
    %c0_i32_0 = arith.constant 0 : i32
    %c0_i32_1 = arith.constant 0 : i32
    return %c0_i32, %c0_i32_0 : i32, i32
  }
  func.func @transform_11(%arg0: i32) -> (i32, i32) {
    %c0_i32 = arith.constant 0 : i32
    %c0_i32_0 = arith.constant 0 : i32
    %c0_i32_1 = arith.constant 0 : i32
    return %c0_i32, %c0_i32_0 : i32, i32
  }
  func.func @transform_12(%arg0: i32) -> (i32, i32, i32, i32) {
    %c0_i32 = arith.constant 0 : i32
    %c0_i32_0 = arith.constant 0 : i32
    %c0_i32_1 = arith.constant 0 : i32
    %c0_i32_2 = arith.constant 0 : i32
    return %arg0, %c0_i32, %c0_i32_0, %c0_i32_1 : i32, i32, i32, i32
  }
}

module attributes {stable_mosaic.version = 11 : i64} {
  func.func @_conv3x3_bn_act_kernel(%arg0: i32, %arg1: memref<1x10x10x128xbf16, #tpu.memory_space<vmem>>, %arg2: memref<9x128x128xbf16, #tpu.memory_space<vmem>>, %arg3: memref<1x128xf32, #tpu.memory_space<vmem>>, %arg4: memref<1x128xf32, #tpu.memory_space<vmem>>, %arg5: memref<1x8x8x128xbf16, #tpu.memory_space<vmem>>) attributes {dimension_semantics = [#tpu.dimension_semantics<parallel>], iteration_bounds = array<i64: 2>, scalar_prefetch = 0 : i64, scratch_operands = 0 : i64, tpu.core_type = #tpu.core_type<tc>, window_params = [{transform_indices = @transform_0, window_bounds = array<i64: 1, 10, 10, 128>}, {pipeline_mode = #tpu.pipeline_mode<synchronous>, transform_indices = @transform_1, window_bounds = array<i64: 9, 128, 128>}, {pipeline_mode = #tpu.pipeline_mode<synchronous>, transform_indices = @transform_2, window_bounds = array<i64: 1, 128>}, {pipeline_mode = #tpu.pipeline_mode<synchronous>, transform_indices = @transform_3, window_bounds = array<i64: 1, 128>}, {transform_indices = @transform_4, window_bounds = array<i64: 1, 8, 8, 128>}]} {
    %cst = arith.constant 0.000000e+00 : f32
    %0 = vector.broadcast %cst : f32 to vector<64x128xf32>
    %c0 = arith.constant 0 : index
    %c0_0 = arith.constant 0 : index
    %c0_1 = arith.constant 0 : index
    %c0_2 = arith.constant 0 : index
    %1 = vector.load %arg1[%c0, %c0_0, %c0_1, %c0_2] : memref<1x10x10x128xbf16, #tpu.memory_space<vmem>>, vector<1x8x8x128xbf16>
    %2 = vector.shape_cast %1 : vector<1x8x8x128xbf16> to vector<8x8x128xbf16>
    %3 = vector.shape_cast %2 : vector<8x8x128xbf16> to vector<64x128xbf16>
    %c0_3 = arith.constant 0 : index
    %c0_4 = arith.constant 0 : index
    %c0_5 = arith.constant 0 : index
    %4 = vector.load %arg2[%c0_3, %c0_4, %c0_5] : memref<9x128x128xbf16, #tpu.memory_space<vmem>>, vector<1x128x128xbf16>
    %5 = vector.shape_cast %4 : vector<1x128x128xbf16> to vector<128x128xbf16>
    %cst_6 = arith.constant dense<0.000000e+00> : vector<64x128xf32>
    %6 = tpu.matmul %3, %5, %cst_6 {dimension_numbers = #tpu.dot_dimension_numbers<[1], [0], [0], [1], [0, 0, 1, 1], [], []>} : vector<64x128xbf16>, vector<128x128xbf16>, vector<64x128xf32> -> vector<64x128xf32>
    %7 = arith.addf %0, %6 : vector<64x128xf32>
    %c0_7 = arith.constant 0 : index
    %c0_8 = arith.constant 0 : index
    %c1 = arith.constant 1 : index
    %c0_9 = arith.constant 0 : index
    %8 = vector.load %arg1[%c0_7, %c0_8, %c1, %c0_9] : memref<1x10x10x128xbf16, #tpu.memory_space<vmem>>, vector<1x8x8x128xbf16>
    %9 = vector.shape_cast %8 : vector<1x8x8x128xbf16> to vector<8x8x128xbf16>
    %10 = vector.shape_cast %9 : vector<8x8x128xbf16> to vector<64x128xbf16>
    %c1_10 = arith.constant 1 : index
    %c0_11 = arith.constant 0 : index
    %c0_12 = arith.constant 0 : index
    %11 = vector.load %arg2[%c1_10, %c0_11, %c0_12] : memref<9x128x128xbf16, #tpu.memory_space<vmem>>, vector<1x128x128xbf16>
    %12 = vector.shape_cast %11 : vector<1x128x128xbf16> to vector<128x128xbf16>
    %cst_13 = arith.constant dense<0.000000e+00> : vector<64x128xf32>
    %13 = tpu.matmul %10, %12, %cst_13 {dimension_numbers = #tpu.dot_dimension_numbers<[1], [0], [0], [1], [0, 0, 1, 1], [], []>} : vector<64x128xbf16>, vector<128x128xbf16>, vector<64x128xf32> -> vector<64x128xf32>
    %14 = arith.addf %7, %13 : vector<64x128xf32>
    %c0_14 = arith.constant 0 : index
    %c0_15 = arith.constant 0 : index
    %c2 = arith.constant 2 : index
    %c0_16 = arith.constant 0 : index
    %15 = vector.load %arg1[%c0_14, %c0_15, %c2, %c0_16] : memref<1x10x10x128xbf16, #tpu.memory_space<vmem>>, vector<1x8x8x128xbf16>
    %16 = vector.shape_cast %15 : vector<1x8x8x128xbf16> to vector<8x8x128xbf16>
    %17 = vector.shape_cast %16 : vector<8x8x128xbf16> to vector<64x128xbf16>
    %c2_17 = arith.constant 2 : index
    %c0_18 = arith.constant 0 : index
    %c0_19 = arith.constant 0 : index
    %18 = vector.load %arg2[%c2_17, %c0_18, %c0_19] : memref<9x128x128xbf16, #tpu.memory_space<vmem>>, vector<1x128x128xbf16>
    %19 = vector.shape_cast %18 : vector<1x128x128xbf16> to vector<128x128xbf16>
    %cst_20 = arith.constant dense<0.000000e+00> : vector<64x128xf32>
    %20 = tpu.matmul %17, %19, %cst_20 {dimension_numbers = #tpu.dot_dimension_numbers<[1], [0], [0], [1], [0, 0, 1, 1], [], []>} : vector<64x128xbf16>, vector<128x128xbf16>, vector<64x128xf32> -> vector<64x128xf32>
    %21 = arith.addf %14, %20 : vector<64x128xf32>
    %c0_21 = arith.constant 0 : index
    %c1_22 = arith.constant 1 : index
    %c0_23 = arith.constant 0 : index
    %c0_24 = arith.constant 0 : index
    %22 = vector.load %arg1[%c0_21, %c1_22, %c0_23, %c0_24] : memref<1x10x10x128xbf16, #tpu.memory_space<vmem>>, vector<1x8x8x128xbf16>
    %23 = vector.shape_cast %22 : vector<1x8x8x128xbf16> to vector<8x8x128xbf16>
    %24 = vector.shape_cast %23 : vector<8x8x128xbf16> to vector<64x128xbf16>
    %c3 = arith.constant 3 : index
    %c0_25 = arith.constant 0 : index
    %c0_26 = arith.constant 0 : index
    %25 = vector.load %arg2[%c3, %c0_25, %c0_26] : memref<9x128x128xbf16, #tpu.memory_space<vmem>>, vector<1x128x128xbf16>
    %26 = vector.shape_cast %25 : vector<1x128x128xbf16> to vector<128x128xbf16>
    %cst_27 = arith.constant dense<0.000000e+00> : vector<64x128xf32>
    %27 = tpu.matmul %24, %26, %cst_27 {dimension_numbers = #tpu.dot_dimension_numbers<[1], [0], [0], [1], [0, 0, 1, 1], [], []>} : vector<64x128xbf16>, vector<128x128xbf16>, vector<64x128xf32> -> vector<64x128xf32>
    %28 = arith.addf %21, %27 : vector<64x128xf32>
    %c0_28 = arith.constant 0 : index
    %c1_29 = arith.constant 1 : index
    %c1_30 = arith.constant 1 : index
    %c0_31 = arith.constant 0 : index
    %29 = vector.load %arg1[%c0_28, %c1_29, %c1_30, %c0_31] : memref<1x10x10x128xbf16, #tpu.memory_space<vmem>>, vector<1x8x8x128xbf16>
    %30 = vector.shape_cast %29 : vector<1x8x8x128xbf16> to vector<8x8x128xbf16>
    %31 = vector.shape_cast %30 : vector<8x8x128xbf16> to vector<64x128xbf16>
    %c4 = arith.constant 4 : index
    %c0_32 = arith.constant 0 : index
    %c0_33 = arith.constant 0 : index
    %32 = vector.load %arg2[%c4, %c0_32, %c0_33] : memref<9x128x128xbf16, #tpu.memory_space<vmem>>, vector<1x128x128xbf16>
    %33 = vector.shape_cast %32 : vector<1x128x128xbf16> to vector<128x128xbf16>
    %cst_34 = arith.constant dense<0.000000e+00> : vector<64x128xf32>
    %34 = tpu.matmul %31, %33, %cst_34 {dimension_numbers = #tpu.dot_dimension_numbers<[1], [0], [0], [1], [0, 0, 1, 1], [], []>} : vector<64x128xbf16>, vector<128x128xbf16>, vector<64x128xf32> -> vector<64x128xf32>
    %35 = arith.addf %28, %34 : vector<64x128xf32>
    %c0_35 = arith.constant 0 : index
    %c1_36 = arith.constant 1 : index
    %c2_37 = arith.constant 2 : index
    %c0_38 = arith.constant 0 : index
    %36 = vector.load %arg1[%c0_35, %c1_36, %c2_37, %c0_38] : memref<1x10x10x128xbf16, #tpu.memory_space<vmem>>, vector<1x8x8x128xbf16>
    %37 = vector.shape_cast %36 : vector<1x8x8x128xbf16> to vector<8x8x128xbf16>
    %38 = vector.shape_cast %37 : vector<8x8x128xbf16> to vector<64x128xbf16>
    %c5 = arith.constant 5 : index
    %c0_39 = arith.constant 0 : index
    %c0_40 = arith.constant 0 : index
    %39 = vector.load %arg2[%c5, %c0_39, %c0_40] : memref<9x128x128xbf16, #tpu.memory_space<vmem>>, vector<1x128x128xbf16>
    %40 = vector.shape_cast %39 : vector<1x128x128xbf16> to vector<128x128xbf16>
    %cst_41 = arith.constant dense<0.000000e+00> : vector<64x128xf32>
    %41 = tpu.matmul %38, %40, %cst_41 {dimension_numbers = #tpu.dot_dimension_numbers<[1], [0], [0], [1], [0, 0, 1, 1], [], []>} : vector<64x128xbf16>, vector<128x128xbf16>, vector<64x128xf32> -> vector<64x128xf32>
    %42 = arith.addf %35, %41 : vector<64x128xf32>
    %c0_42 = arith.constant 0 : index
    %c2_43 = arith.constant 2 : index
    %c0_44 = arith.constant 0 : index
    %c0_45 = arith.constant 0 : index
    %43 = vector.load %arg1[%c0_42, %c2_43, %c0_44, %c0_45] : memref<1x10x10x128xbf16, #tpu.memory_space<vmem>>, vector<1x8x8x128xbf16>
    %44 = vector.shape_cast %43 : vector<1x8x8x128xbf16> to vector<8x8x128xbf16>
    %45 = vector.shape_cast %44 : vector<8x8x128xbf16> to vector<64x128xbf16>
    %c6 = arith.constant 6 : index
    %c0_46 = arith.constant 0 : index
    %c0_47 = arith.constant 0 : index
    %46 = vector.load %arg2[%c6, %c0_46, %c0_47] : memref<9x128x128xbf16, #tpu.memory_space<vmem>>, vector<1x128x128xbf16>
    %47 = vector.shape_cast %46 : vector<1x128x128xbf16> to vector<128x128xbf16>
    %cst_48 = arith.constant dense<0.000000e+00> : vector<64x128xf32>
    %48 = tpu.matmul %45, %47, %cst_48 {dimension_numbers = #tpu.dot_dimension_numbers<[1], [0], [0], [1], [0, 0, 1, 1], [], []>} : vector<64x128xbf16>, vector<128x128xbf16>, vector<64x128xf32> -> vector<64x128xf32>
    %49 = arith.addf %42, %48 : vector<64x128xf32>
    %c0_49 = arith.constant 0 : index
    %c2_50 = arith.constant 2 : index
    %c1_51 = arith.constant 1 : index
    %c0_52 = arith.constant 0 : index
    %50 = vector.load %arg1[%c0_49, %c2_50, %c1_51, %c0_52] : memref<1x10x10x128xbf16, #tpu.memory_space<vmem>>, vector<1x8x8x128xbf16>
    %51 = vector.shape_cast %50 : vector<1x8x8x128xbf16> to vector<8x8x128xbf16>
    %52 = vector.shape_cast %51 : vector<8x8x128xbf16> to vector<64x128xbf16>
    %c7 = arith.constant 7 : index
    %c0_53 = arith.constant 0 : index
    %c0_54 = arith.constant 0 : index
    %53 = vector.load %arg2[%c7, %c0_53, %c0_54] : memref<9x128x128xbf16, #tpu.memory_space<vmem>>, vector<1x128x128xbf16>
    %54 = vector.shape_cast %53 : vector<1x128x128xbf16> to vector<128x128xbf16>
    %cst_55 = arith.constant dense<0.000000e+00> : vector<64x128xf32>
    %55 = tpu.matmul %52, %54, %cst_55 {dimension_numbers = #tpu.dot_dimension_numbers<[1], [0], [0], [1], [0, 0, 1, 1], [], []>} : vector<64x128xbf16>, vector<128x128xbf16>, vector<64x128xf32> -> vector<64x128xf32>
    %56 = arith.addf %49, %55 : vector<64x128xf32>
    %c0_56 = arith.constant 0 : index
    %c2_57 = arith.constant 2 : index
    %c2_58 = arith.constant 2 : index
    %c0_59 = arith.constant 0 : index
    %57 = vector.load %arg1[%c0_56, %c2_57, %c2_58, %c0_59] : memref<1x10x10x128xbf16, #tpu.memory_space<vmem>>, vector<1x8x8x128xbf16>
    %58 = vector.shape_cast %57 : vector<1x8x8x128xbf16> to vector<8x8x128xbf16>
    %59 = vector.shape_cast %58 : vector<8x8x128xbf16> to vector<64x128xbf16>
    %c8 = arith.constant 8 : index
    %c0_60 = arith.constant 0 : index
    %c0_61 = arith.constant 0 : index
    %60 = vector.load %arg2[%c8, %c0_60, %c0_61] : memref<9x128x128xbf16, #tpu.memory_space<vmem>>, vector<1x128x128xbf16>
    %61 = vector.shape_cast %60 : vector<1x128x128xbf16> to vector<128x128xbf16>
    %cst_62 = arith.constant dense<0.000000e+00> : vector<64x128xf32>
    %62 = tpu.matmul %59, %61, %cst_62 {dimension_numbers = #tpu.dot_dimension_numbers<[1], [0], [0], [1], [0, 0, 1, 1], [], []>} : vector<64x128xbf16>, vector<128x128xbf16>, vector<64x128xf32> -> vector<64x128xf32>
    %63 = arith.addf %56, %62 : vector<64x128xf32>
    %c0_63 = arith.constant 0 : index
    %c0_64 = arith.constant 0 : index
    %64 = vector.load %arg3[%c0_63, %c0_64] : memref<1x128xf32, #tpu.memory_space<vmem>>, vector<1x128xf32>
    %65 = vector.broadcast %64 : vector<1x128xf32> to vector<64x128xf32>
    %66 = arith.mulf %63, %65 : vector<64x128xf32>
    %c0_65 = arith.constant 0 : index
    %c0_66 = arith.constant 0 : index
    %67 = vector.load %arg4[%c0_65, %c0_66] : memref<1x128xf32, #tpu.memory_space<vmem>>, vector<1x128xf32>
    %68 = vector.broadcast %67 : vector<1x128xf32> to vector<64x128xf32>
    %69 = arith.addf %66, %68 : vector<64x128xf32>
    %70 = arith.negf %69 : vector<64x128xf32>
    %71 = math.exp %70 : vector<64x128xf32>
    %cst_67 = arith.constant 1.000000e+00 : f32
    %72 = vector.broadcast %cst_67 : f32 to vector<64x128xf32>
    %73 = arith.addf %72, %71 : vector<64x128xf32>
    %74 = arith.divf %72, %73 : vector<64x128xf32>
    %75 = arith.mulf %69, %74 : vector<64x128xf32>
    %76 = vector.shape_cast %75 : vector<64x128xf32> to vector<1x8x8x128xf32>
    %77 = arith.truncf %76 : vector<1x8x8x128xf32> to vector<1x8x8x128xbf16>
    %c0_68 = arith.constant 0 : index
    %c0_69 = arith.constant 0 : index
    %c0_70 = arith.constant 0 : index
    %c0_71 = arith.constant 0 : index
    %78 = vector.load %arg5[%c0_68, %c0_69, %c0_70, %c0_71] : memref<1x8x8x128xbf16, #tpu.memory_space<vmem>>, vector<1x8x8x128xbf16>
    tpu.vector_store %arg5[%c0_68, %c0_69, %c0_70, %c0_71], %77 {strides = array<i32>} : memref<1x8x8x128xbf16, #tpu.memory_space<vmem>>, vector<1x8x8x128xbf16>,
    return
  }
  func.func @transform_0(%arg0: i32) -> (i32, i32, i32, i32) {
    %c0_i32 = arith.constant 0 : i32
    %c0_i32_0 = arith.constant 0 : i32
    %c0_i32_1 = arith.constant 0 : i32
    %c0_i32_2 = arith.constant 0 : i32
    return %arg0, %c0_i32, %c0_i32_0, %c0_i32_1 : i32, i32, i32, i32
  }
  func.func @transform_1(%arg0: i32) -> (i32, i32, i32) {
    %c0_i32 = arith.constant 0 : i32
    %c0_i32_0 = arith.constant 0 : i32
    %c0_i32_1 = arith.constant 0 : i32
    %c0_i32_2 = arith.constant 0 : i32
    return %c0_i32, %c0_i32_0, %c0_i32_1 : i32, i32, i32
  }
  func.func @transform_2(%arg0: i32) -> (i32, i32) {
    %c0_i32 = arith.constant 0 : i32
    %c0_i32_0 = arith.constant 0 : i32
    %c0_i32_1 = arith.constant 0 : i32
    return %c0_i32, %c0_i32_0 : i32, i32
  }
  func.func @transform_3(%arg0: i32) -> (i32, i32) {
    %c0_i32 = arith.constant 0 : i32
    %c0_i32_0 = arith.constant 0 : i32
    %c0_i32_1 = arith.constant 0 : i32
    return %c0_i32, %c0_i32_0 : i32, i32
  }
  func.func @transform_4(%arg0: i32) -> (i32, i32, i32, i32) {
    %c0_i32 = arith.constant 0 : i32
    %c0_i32_0 = arith.constant 0 : i32
    %c0_i32_1 = arith.constant 0 : i32
    %c0_i32_2 = arith.constant 0 : i32
    return %arg0, %c0_i32, %c0_i32_0, %c0_i32_1 : i32, i32, i32, i32
  }
}

module attributes {stable_mosaic.version = 11 : i64} {
  func.func @_conv3x3_se_res_kernel(%arg0: i32, %arg1: memref<1x10x10x128xbf16, #tpu.memory_space<vmem>>, %arg2: memref<9x128x128xbf16, #tpu.memory_space<vmem>>, %arg3: memref<1x128xf32, #tpu.memory_space<vmem>>, %arg4: memref<1x128xf32, #tpu.memory_space<vmem>>, %arg5: memref<1x8x8x128xbf16, #tpu.memory_space<vmem>>, %arg6: memref<128x128xf32, #tpu.memory_space<vmem>>, %arg7: memref<1x128xf32, #tpu.memory_space<vmem>>, %arg8: memref<128x128xf32, #tpu.memory_space<vmem>>, %arg9: memref<1x128xf32, #tpu.memory_space<vmem>>, %arg10: memref<1x8x8x128xf32, #tpu.memory_space<vmem>>) attributes {dimension_semantics = [#tpu.dimension_semantics<parallel>], iteration_bounds = array<i64: 2>, scalar_prefetch = 0 : i64, scratch_operands = 0 : i64, tpu.core_type = #tpu.core_type<tc>, window_params = [{transform_indices = @transform_0, window_bounds = array<i64: 1, 10, 10, 128>}, {pipeline_mode = #tpu.pipeline_mode<synchronous>, transform_indices = @transform_1, window_bounds = array<i64: 9, 128, 128>}, {pipeline_mode = #tpu.pipeline_mode<synchronous>, transform_indices = @transform_2, window_bounds = array<i64: 1, 128>}, {pipeline_mode = #tpu.pipeline_mode<synchronous>, transform_indices = @transform_3, window_bounds = array<i64: 1, 128>}, {transform_indices = @transform_4, window_bounds = array<i64: 1, 8, 8, 128>}, {pipeline_mode = #tpu.pipeline_mode<synchronous>, transform_indices = @transform_5, window_bounds = array<i64: 128, 128>}, {pipeline_mode = #tpu.pipeline_mode<synchronous>, transform_indices = @transform_6, window_bounds = array<i64: 1, 128>}, {pipeline_mode = #tpu.pipeline_mode<synchronous>, transform_indices = @transform_7, window_bounds = array<i64: 128, 128>}, {pipeline_mode = #tpu.pipeline_mode<synchronous>, transform_indices = @transform_8, window_bounds = array<i64: 1, 128>}, {transform_indices = @transform_9, window_bounds = array<i64: 1, 8, 8, 128>}]} {
    %cst = arith.constant 0.000000e+00 : f32
    %0 = vector.broadcast %cst : f32 to vector<64x128xf32>
    %c0 = arith.constant 0 : index
    %c0_0 = arith.constant 0 : index
    %c0_1 = arith.constant 0 : index
    %c0_2 = arith.constant 0 : index
    %1 = vector.load %arg1[%c0, %c0_0, %c0_1, %c0_2] : memref<1x10x10x128xbf16, #tpu.memory_space<vmem>>, vector<1x8x8x128xbf16>
    %2 = vector.shape_cast %1 : vector<1x8x8x128xbf16> to vector<8x8x128xbf16>
    %3 = vector.shape_cast %2 : vector<8x8x128xbf16> to vector<64x128xbf16>
    %c0_3 = arith.constant 0 : index
    %c0_4 = arith.constant 0 : index
    %c0_5 = arith.constant 0 : index
    %4 = vector.load %arg2[%c0_3, %c0_4, %c0_5] : memref<9x128x128xbf16, #tpu.memory_space<vmem>>, vector<1x128x128xbf16>
    %5 = vector.shape_cast %4 : vector<1x128x128xbf16> to vector<128x128xbf16>
    %cst_6 = arith.constant dense<0.000000e+00> : vector<64x128xf32>
    %6 = tpu.matmul %3, %5, %cst_6 {dimension_numbers = #tpu.dot_dimension_numbers<[1], [0], [0], [1], [0, 0, 1, 1], [], []>} : vector<64x128xbf16>, vector<128x128xbf16>, vector<64x128xf32> -> vector<64x128xf32>
    %7 = arith.addf %0, %6 : vector<64x128xf32>
    %c0_7 = arith.constant 0 : index
    %c0_8 = arith.constant 0 : index
    %c1 = arith.constant 1 : index
    %c0_9 = arith.constant 0 : index
    %8 = vector.load %arg1[%c0_7, %c0_8, %c1, %c0_9] : memref<1x10x10x128xbf16, #tpu.memory_space<vmem>>, vector<1x8x8x128xbf16>
    %9 = vector.shape_cast %8 : vector<1x8x8x128xbf16> to vector<8x8x128xbf16>
    %10 = vector.shape_cast %9 : vector<8x8x128xbf16> to vector<64x128xbf16>
    %c1_10 = arith.constant 1 : index
    %c0_11 = arith.constant 0 : index
    %c0_12 = arith.constant 0 : index
    %11 = vector.load %arg2[%c1_10, %c0_11, %c0_12] : memref<9x128x128xbf16, #tpu.memory_space<vmem>>, vector<1x128x128xbf16>
    %12 = vector.shape_cast %11 : vector<1x128x128xbf16> to vector<128x128xbf16>
    %cst_13 = arith.constant dense<0.000000e+00> : vector<64x128xf32>
    %13 = tpu.matmul %10, %12, %cst_13 {dimension_numbers = #tpu.dot_dimension_numbers<[1], [0], [0], [1], [0, 0, 1, 1], [], []>} : vector<64x128xbf16>, vector<128x128xbf16>, vector<64x128xf32> -> vector<64x128xf32>
    %14 = arith.addf %7, %13 : vector<64x128xf32>
    %c0_14 = arith.constant 0 : index
    %c0_15 = arith.constant 0 : index
    %c2 = arith.constant 2 : index
    %c0_16 = arith.constant 0 : index
    %15 = vector.load %arg1[%c0_14, %c0_15, %c2, %c0_16] : memref<1x10x10x128xbf16, #tpu.memory_space<vmem>>, vector<1x8x8x128xbf16>
    %16 = vector.shape_cast %15 : vector<1x8x8x128xbf16> to vector<8x8x128xbf16>
    %17 = vector.shape_cast %16 : vector<8x8x128xbf16> to vector<64x128xbf16>
    %c2_17 = arith.constant 2 : index
    %c0_18 = arith.constant 0 : index
    %c0_19 = arith.constant 0 : index
    %18 = vector.load %arg2[%c2_17, %c0_18, %c0_19] : memref<9x128x128xbf16, #tpu.memory_space<vmem>>, vector<1x128x128xbf16>
    %19 = vector.shape_cast %18 : vector<1x128x128xbf16> to vector<128x128xbf16>
    %cst_20 = arith.constant dense<0.000000e+00> : vector<64x128xf32>
    %20 = tpu.matmul %17, %19, %cst_20 {dimension_numbers = #tpu.dot_dimension_numbers<[1], [0], [0], [1], [0, 0, 1, 1], [], []>} : vector<64x128xbf16>, vector<128x128xbf16>, vector<64x128xf32> -> vector<64x128xf32>
    %21 = arith.addf %14, %20 : vector<64x128xf32>
    %c0_21 = arith.constant 0 : index
    %c1_22 = arith.constant 1 : index
    %c0_23 = arith.constant 0 : index
    %c0_24 = arith.constant 0 : index
    %22 = vector.load %arg1[%c0_21, %c1_22, %c0_23, %c0_24] : memref<1x10x10x128xbf16, #tpu.memory_space<vmem>>, vector<1x8x8x128xbf16>
    %23 = vector.shape_cast %22 : vector<1x8x8x128xbf16> to vector<8x8x128xbf16>
    %24 = vector.shape_cast %23 : vector<8x8x128xbf16> to vector<64x128xbf16>
    %c3 = arith.constant 3 : index
    %c0_25 = arith.constant 0 : index
    %c0_26 = arith.constant 0 : index
    %25 = vector.load %arg2[%c3, %c0_25, %c0_26] : memref<9x128x128xbf16, #tpu.memory_space<vmem>>, vector<1x128x128xbf16>
    %26 = vector.shape_cast %25 : vector<1x128x128xbf16> to vector<128x128xbf16>
    %cst_27 = arith.constant dense<0.000000e+00> : vector<64x128xf32>
    %27 = tpu.matmul %24, %26, %cst_27 {dimension_numbers = #tpu.dot_dimension_numbers<[1], [0], [0], [1], [0, 0, 1, 1], [], []>} : vector<64x128xbf16>, vector<128x128xbf16>, vector<64x128xf32> -> vector<64x128xf32>
    %28 = arith.addf %21, %27 : vector<64x128xf32>
    %c0_28 = arith.constant 0 : index
    %c1_29 = arith.constant 1 : index
    %c1_30 = arith.constant 1 : index
    %c0_31 = arith.constant 0 : index
    %29 = vector.load %arg1[%c0_28, %c1_29, %c1_30, %c0_31] : memref<1x10x10x128xbf16, #tpu.memory_space<vmem>>, vector<1x8x8x128xbf16>
    %30 = vector.shape_cast %29 : vector<1x8x8x128xbf16> to vector<8x8x128xbf16>
    %31 = vector.shape_cast %30 : vector<8x8x128xbf16> to vector<64x128xbf16>
    %c4 = arith.constant 4 : index
    %c0_32 = arith.constant 0 : index
    %c0_33 = arith.constant 0 : index
    %32 = vector.load %arg2[%c4, %c0_32, %c0_33] : memref<9x128x128xbf16, #tpu.memory_space<vmem>>, vector<1x128x128xbf16>
    %33 = vector.shape_cast %32 : vector<1x128x128xbf16> to vector<128x128xbf16>
    %cst_34 = arith.constant dense<0.000000e+00> : vector<64x128xf32>
    %34 = tpu.matmul %31, %33, %cst_34 {dimension_numbers = #tpu.dot_dimension_numbers<[1], [0], [0], [1], [0, 0, 1, 1], [], []>} : vector<64x128xbf16>, vector<128x128xbf16>, vector<64x128xf32> -> vector<64x128xf32>
    %35 = arith.addf %28, %34 : vector<64x128xf32>
    %c0_35 = arith.constant 0 : index
    %c1_36 = arith.constant 1 : index
    %c2_37 = arith.constant 2 : index
    %c0_38 = arith.constant 0 : index
    %36 = vector.load %arg1[%c0_35, %c1_36, %c2_37, %c0_38] : memref<1x10x10x128xbf16, #tpu.memory_space<vmem>>, vector<1x8x8x128xbf16>
    %37 = vector.shape_cast %36 : vector<1x8x8x128xbf16> to vector<8x8x128xbf16>
    %38 = vector.shape_cast %37 : vector<8x8x128xbf16> to vector<64x128xbf16>
    %c5 = arith.constant 5 : index
    %c0_39 = arith.constant 0 : index
    %c0_40 = arith.constant 0 : index
    %39 = vector.load %arg2[%c5, %c0_39, %c0_40] : memref<9x128x128xbf16, #tpu.memory_space<vmem>>, vector<1x128x128xbf16>
    %40 = vector.shape_cast %39 : vector<1x128x128xbf16> to vector<128x128xbf16>
    %cst_41 = arith.constant dense<0.000000e+00> : vector<64x128xf32>
    %41 = tpu.matmul %38, %40, %cst_41 {dimension_numbers = #tpu.dot_dimension_numbers<[1], [0], [0], [1], [0, 0, 1, 1], [], []>} : vector<64x128xbf16>, vector<128x128xbf16>, vector<64x128xf32> -> vector<64x128xf32>
    %42 = arith.addf %35, %41 : vector<64x128xf32>
    %c0_42 = arith.constant 0 : index
    %c2_43 = arith.constant 2 : index
    %c0_44 = arith.constant 0 : index
    %c0_45 = arith.constant 0 : index
    %43 = vector.load %arg1[%c0_42, %c2_43, %c0_44, %c0_45] : memref<1x10x10x128xbf16, #tpu.memory_space<vmem>>, vector<1x8x8x128xbf16>
    %44 = vector.shape_cast %43 : vector<1x8x8x128xbf16> to vector<8x8x128xbf16>
    %45 = vector.shape_cast %44 : vector<8x8x128xbf16> to vector<64x128xbf16>
    %c6 = arith.constant 6 : index
    %c0_46 = arith.constant 0 : index
    %c0_47 = arith.constant 0 : index
    %46 = vector.load %arg2[%c6, %c0_46, %c0_47] : memref<9x128x128xbf16, #tpu.memory_space<vmem>>, vector<1x128x128xbf16>
    %47 = vector.shape_cast %46 : vector<1x128x128xbf16> to vector<128x128xbf16>
    %cst_48 = arith.constant dense<0.000000e+00> : vector<64x128xf32>
    %48 = tpu.matmul %45, %47, %cst_48 {dimension_numbers = #tpu.dot_dimension_numbers<[1], [0], [0], [1], [0, 0, 1, 1], [], []>} : vector<64x128xbf16>, vector<128x128xbf16>, vector<64x128xf32> -> vector<64x128xf32>
    %49 = arith.addf %42, %48 : vector<64x128xf32>
    %c0_49 = arith.constant 0 : index
    %c2_50 = arith.constant 2 : index
    %c1_51 = arith.constant 1 : index
    %c0_52 = arith.constant 0 : index
    %50 = vector.load %arg1[%c0_49, %c2_50, %c1_51, %c0_52] : memref<1x10x10x128xbf16, #tpu.memory_space<vmem>>, vector<1x8x8x128xbf16>
    %51 = vector.shape_cast %50 : vector<1x8x8x128xbf16> to vector<8x8x128xbf16>
    %52 = vector.shape_cast %51 : vector<8x8x128xbf16> to vector<64x128xbf16>
    %c7 = arith.constant 7 : index
    %c0_53 = arith.constant 0 : index
    %c0_54 = arith.constant 0 : index
    %53 = vector.load %arg2[%c7, %c0_53, %c0_54] : memref<9x128x128xbf16, #tpu.memory_space<vmem>>, vector<1x128x128xbf16>
    %54 = vector.shape_cast %53 : vector<1x128x128xbf16> to vector<128x128xbf16>
    %cst_55 = arith.constant dense<0.000000e+00> : vector<64x128xf32>
    %55 = tpu.matmul %52, %54, %cst_55 {dimension_numbers = #tpu.dot_dimension_numbers<[1], [0], [0], [1], [0, 0, 1, 1], [], []>} : vector<64x128xbf16>, vector<128x128xbf16>, vector<64x128xf32> -> vector<64x128xf32>
    %56 = arith.addf %49, %55 : vector<64x128xf32>
    %c0_56 = arith.constant 0 : index
    %c2_57 = arith.constant 2 : index
    %c2_58 = arith.constant 2 : index
    %c0_59 = arith.constant 0 : index
    %57 = vector.load %arg1[%c0_56, %c2_57, %c2_58, %c0_59] : memref<1x10x10x128xbf16, #tpu.memory_space<vmem>>, vector<1x8x8x128xbf16>
    %58 = vector.shape_cast %57 : vector<1x8x8x128xbf16> to vector<8x8x128xbf16>
    %59 = vector.shape_cast %58 : vector<8x8x128xbf16> to vector<64x128xbf16>
    %c8 = arith.constant 8 : index
    %c0_60 = arith.constant 0 : index
    %c0_61 = arith.constant 0 : index
    %60 = vector.load %arg2[%c8, %c0_60, %c0_61] : memref<9x128x128xbf16, #tpu.memory_space<vmem>>, vector<1x128x128xbf16>
    %61 = vector.shape_cast %60 : vector<1x128x128xbf16> to vector<128x128xbf16>
    %cst_62 = arith.constant dense<0.000000e+00> : vector<64x128xf32>
    %62 = tpu.matmul %59, %61, %cst_62 {dimension_numbers = #tpu.dot_dimension_numbers<[1], [0], [0], [1], [0, 0, 1, 1], [], []>} : vector<64x128xbf16>, vector<128x128xbf16>, vector<64x128xf32> -> vector<64x128xf32>
    %63 = arith.addf %56, %62 : vector<64x128xf32>
    %c0_63 = arith.constant 0 : index
    %c0_64 = arith.constant 0 : index
    %64 = vector.load %arg3[%c0_63, %c0_64] : memref<1x128xf32, #tpu.memory_space<vmem>>, vector<1x128xf32>
    %65 = vector.broadcast %64 : vector<1x128xf32> to vector<64x128xf32>
    %66 = arith.mulf %63, %65 : vector<64x128xf32>
    %c0_65 = arith.constant 0 : index
    %c0_66 = arith.constant 0 : index
    %67 = vector.load %arg4[%c0_65, %c0_66] : memref<1x128xf32, #tpu.memory_space<vmem>>, vector<1x128xf32>
    %68 = vector.broadcast %67 : vector<1x128xf32> to vector<64x128xf32>
    %69 = arith.addf %66, %68 : vector<64x128xf32>
    %70 = arith.negf %69 : vector<64x128xf32>
    %71 = math.exp %70 : vector<64x128xf32>
    %cst_67 = arith.constant 1.000000e+00 : f32
    %72 = vector.broadcast %cst_67 : f32 to vector<64x128xf32>
    %73 = arith.addf %72, %71 : vector<64x128xf32>
    %74 = arith.divf %72, %73 : vector<64x128xf32>
    %75 = arith.mulf %69, %74 : vector<64x128xf32>
    %cst_68 = arith.constant dense<0.000000e+00> : vector<128xf32>
    %76 = vector.multi_reduction <add>, %75, %cst_68 [0] : vector<64x128xf32> to vector<128xf32>
    %77 = vector.shape_cast %76 : vector<128xf32> to vector<1x128xf32>
    %cst_69 = arith.constant 1.562500e-02 : f32
    %78 = vector.broadcast %cst_69 : f32 to vector<1x128xf32>
    %79 = arith.mulf %77, %78 : vector<1x128xf32>
    %c0_70 = arith.constant 0 : index
    %c0_71 = arith.constant 0 : index
    %80 = vector.load %arg6[%c0_70, %c0_71] : memref<128x128xf32, #tpu.memory_space<vmem>>, vector<128x128xf32>
    %cst_72 = arith.constant dense<0.000000e+00> : vector<1x128xf32>
    %81 = tpu.matmul %79, %80, %cst_72 {dimension_numbers = #tpu.dot_dimension_numbers<[1], [0], [0], [1], [0, 0, 1, 1], [], []>} : vector<1x128xf32>, vector<128x128xf32>, vector<1x128xf32> -> vector<1x128xf32>
    %c0_73 = arith.constant 0 : index
    %c0_74 = arith.constant 0 : index
    %82 = vector.load %arg7[%c0_73, %c0_74] : memref<1x128xf32, #tpu.memory_space<vmem>>, vector<1x128xf32>
    %83 = arith.addf %81, %82 : vector<1x128xf32>
    %cst_75 = arith.constant 0.000000e+00 : f32
    %84 = vector.broadcast %cst_75 : f32 to vector<1x128xf32>
    %85 = arith.maximumf %83, %84 : vector<1x128xf32>
    %c0_76 = arith.constant 0 : index
    %c0_77 = arith.constant 0 : index
    %86 = vector.load %arg8[%c0_76, %c0_77] : memref<128x128xf32, #tpu.memory_space<vmem>>, vector<128x128xf32>
    %cst_78 = arith.constant dense<0.000000e+00> : vector<1x128xf32>
    %87 = tpu.matmul %85, %86, %cst_78 {dimension_numbers = #tpu.dot_dimension_numbers<[1], [0], [0], [1], [0, 0, 1, 1], [], []>} : vector<1x128xf32>, vector<128x128xf32>, vector<1x128xf32> -> vector<1x128xf32>
    %c0_79 = arith.constant 0 : index
    %c0_80 = arith.constant 0 : index
    %88 = vector.load %arg9[%c0_79, %c0_80] : memref<1x128xf32, #tpu.memory_space<vmem>>, vector<1x128xf32>
    %89 = arith.addf %87, %88 : vector<1x128xf32>
    %90 = arith.negf %89 : vector<1x128xf32>
    %91 = math.exp %90 : vector<1x128xf32>
    %cst_81 = arith.constant 1.000000e+00 : f32
    %92 = vector.broadcast %cst_81 : f32 to vector<1x128xf32>
    %93 = arith.addf %92, %91 : vector<1x128xf32>
    %94 = arith.divf %92, %93 : vector<1x128xf32>
    %c0_82 = arith.constant 0 : index
    %c0_83 = arith.constant 0 : index
    %c0_84 = arith.constant 0 : index
    %c0_85 = arith.constant 0 : index
    %95 = vector.load %arg5[%c0_82, %c0_83, %c0_84, %c0_85] : memref<1x8x8x128xbf16, #tpu.memory_space<vmem>>, vector<1x8x8x128xbf16>
    %96 = vector.shape_cast %95 : vector<1x8x8x128xbf16> to vector<8x8x128xbf16>
    %97 = vector.shape_cast %96 : vector<8x8x128xbf16> to vector<64x128xbf16>
    %98 = arith.extf %97 : vector<64x128xbf16> to vector<64x128xf32>
    %99 = vector.broadcast %94 : vector<1x128xf32> to vector<64x128xf32>
    %100 = arith.mulf %75, %99 : vector<64x128xf32>
    %101 = arith.addf %100, %98 : vector<64x128xf32>
    %102 = vector.shape_cast %101 : vector<64x128xf32> to vector<1x8x8x128xf32>
    %c0_86 = arith.constant 0 : index
    %c0_87 = arith.constant 0 : index
    %c0_88 = arith.constant 0 : index
    %c0_89 = arith.constant 0 : index
    %103 = vector.load %arg10[%c0_86, %c0_87, %c0_88, %c0_89] : memref<1x8x8x128xf32, #tpu.memory_space<vmem>>, vector<1x8x8x128xf32>
    tpu.vector_store %arg10[%c0_86, %c0_87, %c0_88, %c0_89], %102 {strides = array<i32>} : memref<1x8x8x128xf32, #tpu.memory_space<vmem>>, vector<1x8x8x128xf32>,
    return
  }
  func.func @transform_0(%arg0: i32) -> (i32, i32, i32, i32) {
    %c0_i32 = arith.constant 0 : i32
    %c0_i32_0 = arith.constant 0 : i32
    %c0_i32_1 = arith.constant 0 : i32
    %c0_i32_2 = arith.constant 0 : i32
    return %arg0, %c0_i32, %c0_i32_0, %c0_i32_1 : i32, i32, i32, i32
  }
  func.func @transform_1(%arg0: i32) -> (i32, i32, i32) {
    %c0_i32 = arith.constant 0 : i32
    %c0_i32_0 = arith.constant 0 : i32
    %c0_i32_1 = arith.constant 0 : i32
    %c0_i32_2 = arith.constant 0 : i32
    return %c0_i32, %c0_i32_0, %c0_i32_1 : i32, i32, i32
  }
  func.func @transform_2(%arg0: i32) -> (i32, i32) {
    %c0_i32 = arith.constant 0 : i32
    %c0_i32_0 = arith.constant 0 : i32
    %c0_i32_1 = arith.constant 0 : i32
    return %c0_i32, %c0_i32_0 : i32, i32
  }
  func.func @transform_3(%arg0: i32) -> (i32, i32) {
    %c0_i32 = arith.constant 0 : i32
    %c0_i32_0 = arith.constant 0 : i32
    %c0_i32_1 = arith.constant 0 : i32
    return %c0_i32, %c0_i32_0 : i32, i32
  }
  func.func @transform_4(%arg0: i32) -> (i32, i32, i32, i32) {
    %c0_i32 = arith.constant 0 : i32
    %c0_i32_0 = arith.constant 0 : i32
    %c0_i32_1 = arith.constant 0 : i32
    %c0_i32_2 = arith.constant 0 : i32
    return %arg0, %c0_i32, %c0_i32_0, %c0_i32_1 : i32, i32, i32, i32
  }
  func.func @transform_5(%arg0: i32) -> (i32, i32) {
    %c0_i32 = arith.constant 0 : i32
    %c0_i32_0 = arith.constant 0 : i32
    %c0_i32_1 = arith.constant 0 : i32
    return %c0_i32, %c0_i32_0 : i32, i32
  }
  func.func @transform_6(%arg0: i32) -> (i32, i32) {
    %c0_i32 = arith.constant 0 : i32
    %c0_i32_0 = arith.constant 0 : i32
    %c0_i32_1 = arith.constant 0 : i32
    return %c0_i32, %c0_i32_0 : i32, i32
  }
  func.func @transform_7(%arg0: i32) -> (i32, i32) {
    %c0_i32 = arith.constant 0 : i32
    %c0_i32_0 = arith.constant 0 : i32
    %c0_i32_1 = arith.constant 0 : i32
    return %c0_i32, %c0_i32_0 : i32, i32
  }
  func.func @transform_8(%arg0: i32) -> (i32, i32) {
    %c0_i32 = arith.constant 0 : i32
    %c0_i32_0 = arith.constant 0 : i32
    %c0_i32_1 = arith.constant 0 : i32
    return %c0_i32, %c0_i32_0 : i32, i32
  }
  func.func @transform_9(%arg0: i32) -> (i32, i32, i32, i32) {
    %c0_i32 = arith.constant 0 : i32
    %c0_i32_0 = arith.constant 0 : i32
    %c0_i32_1 = arith.constant 0 : i32
    %c0_i32_2 = arith.constant 0 : i32
    return %arg0, %c0_i32, %c0_i32_0, %c0_i32_1 : i32, i32, i32, i32
  }
}

</mosaic_0001>

<llo_original>
// kernel: _lambda_.4
$region0: #{_lambda_.4}
  #allocation0 [shape = 'u32[]', space=smem, size = 0x4, offset = 0x4, fixed_abs, tag = 'smem constant byte address 0x4 - core index']
  #allocation1 [shape = 'u32[72,128]{1,0:T(1,128)}', space=vmem, size = 0x9000, scoped, tag = 'internal scratch']
  #allocation2 [shape = 'f32[128,128]{1,0:T(8,128)}', space=vmem, size = 0x10000, scoped, tag = 'scratch operand']
  %s0 = inlined_call_operand.vmem [shape: bf16[128,128], index: 0, kind: input, shape index: {}]
  %s1 = inlined_call_operand.vmem [shape: bf16[128,128], index: 1, kind: input, shape index: {}]
  %s2 = inlined_call_operand.vmem [shape: f32[1,128], index: 2, kind: input, shape index: {}]
  %s3 = inlined_call_operand.vmem [shape: f32[1,128], index: 3, kind: input, shape index: {}]
  %s4 = inlined_call_operand.vmem [shape: bf16[128,128], index: 4, kind: output, shape index: {}]
  %s5 = sld [smem:[#allocation0]]
  $region34: #{_lambda_.4} parent=0
    _
  %s7 = ssub.s32 1, %s5
  %s8 = scalar_select 0, %s7, %s5
  // Predicated region
  $region2: #{_lambda_.4} parent=0 // pred_check
    _
  $region3: #{_lambda_.4} parent=0 // pred_check_branch
    %10 = sbr.rel (0) target = $region5
  $region4: #{_lambda_.4} parent=0 // pred_region
    _
  $region5: #{_lambda_.4} parent=0 // pred_fallthru
    _
  // Predicated region
  $region6: #{_lambda_.4} parent=0 // pred_check
    _
  $region7: #{_lambda_.4} parent=0 // pred_check_branch
    %12 = sbr.rel (0) target = $region9
  $region8: #{_lambda_.4} parent=0 // pred_region
    _
  $region9: #{_lambda_.4} parent=0 // pred_fallthru
    _
  // Predicated region
  $region10: #{_lambda_.4} parent=0 // pred_check
    _
  $region11: #{_lambda_.4} parent=0 // pred_check_branch
    %14 = sbr.rel (0) target = $region13
  $region12: #{_lambda_.4} parent=0 // pred_region
    _
  $region13: #{_lambda_.4} parent=0 // pred_fallthru
    _
  // Predicated region
  $region14: #{_lambda_.4} parent=0 // pred_check
    _
  $region15: #{_lambda_.4} parent=0 // pred_check_branch
    %16 = sbr.rel (0) target = $region17
  $region16: #{_lambda_.4} parent=0 // pred_region
    _
  $region17: #{_lambda_.4} parent=0 // pred_fallthru
    _
  %p17 = scmp.eq.s32.totalorder 0, 0
  // Predicated region
  $region18: #{_lambda_.4} parent=0 // pred_check
    %p18 = pneg %p17
  $region19: #{_lambda_.4} parent=0 // pred_check_branch
    %20 = sbr.rel (%p18) target = $region21
  $region20: #{_lambda_.4} parent=0 // pred_region
    %21 = vst [vmem:[#allocation2] sm:$0xff] 0.0
    %22 = vst [vmem:[#allocation2 + $0x8] sm:$0xff] 0.0
    %23 = vst [vmem:[#allocation2 + $0x10] sm:$0xff] 0.0
    %24 = vst [vmem:[#allocation2 + $0x18] sm:$0xff] 0.0
    %25 = vst [vmem:[#allocation2 + $0x20] sm:$0xff] 0.0
    %26 = vst [vmem:[#allocation2 + $0x28] sm:$0xff] 0.0
    %27 = vst [vmem:[#allocation2 + $0x30] sm:$0xff] 0.0
    %28 = vst [vmem:[#allocation2 + $0x38] sm:$0xff] 0.0
    %29 = vst [vmem:[#allocation2 + $0x40] sm:$0xff] 0.0
    %30 = vst [vmem:[#allocation2 + $0x48] sm:$0xff] 0.0
    %31 = vst [vmem:[#allocation2 + $0x50] sm:$0xff] 0.0
    %32 = vst [vmem:[#allocation2 + $0x58] sm:$0xff] 0.0
    %33 = vst [vmem:[#allocation2 + $0x60] sm:$0xff] 0.0
    %34 = vst [vmem:[#allocation2 + $0x68] sm:$0xff] 0.0
    %35 = vst [vmem:[#allocation2 + $0x70] sm:$0xff] 0.0
    %36 = vst [vmem:[#allocation2 + $0x78] sm:$0xff] 0.0
  $region21: #{_lambda_.4} parent=0 // pred_fallthru
    _
  %v37 = vld [vmem:[#allocation2] sm:$0xff]
  %v38 = vld [vmem:[#allocation2 + $0x8] sm:$0xff]
  %v39 = vld [vmem:[#allocation2 + $0x10] sm:$0xff]
  %v40 = vld [vmem:[#allocation2 + $0x18] sm:$0xff]
  %v41 = vld [vmem:[#allocation2 + $0x20] sm:$0xff]
  %v42 = vld [vmem:[#allocation2 + $0x28] sm:$0xff]
  %v43 = vld [vmem:[#allocation2 + $0x30] sm:$0xff]
  %v44 = vld [vmem:[#allocation2 + $0x38] sm:$0xff]
  %v45 = vld [vmem:[#allocation2 + $0x40] sm:$0xff]
  %v46 = vld [vmem:[#allocation2 + $0x48] sm:$0xff]
  %v47 = vld [vmem:[#allocation2 + $0x50] sm:$0xff]
  %v48 = vld [vmem:[#allocation2 + $0x58] sm:$0xff]
  %v49 = vld [vmem:[#allocation2 + $0x60] sm:$0xff]
  %v50 = vld [vmem:[#allocation2 + $0x68] sm:$0xff]
  %v51 = vld [vmem:[#allocation2 + $0x70] sm:$0xff]
  %v52 = vld [vmem:[#allocation2 + $0x78] sm:$0xff]
  %v53 = vld [vmem:[%s0] sm:$0xf]
  %v54 = vld [vmem:[%s0 + $0x4] sm:$0xf]
  %v55 = vld [vmem:[%s0 + $0x8] sm:$0xf]
  %v56 = vld [vmem:[%s0 + $0xc] sm:$0xf]
  %v57 = vld [vmem:[%s0 + $0x10] sm:$0xf]
  %v58 = vld [vmem:[%s0 + $0x14] sm:$0xf]
  %v59 = vld [vmem:[%s0 + $0x18] sm:$0xf]
  %v60 = vld [vmem:[%s0 + $0x1c] sm:$0xf]
  %v61 = vld [vmem:[%s0 + $0x20] sm:$0xf]
  %v62 = vld [vmem:[%s0 + $0x24] sm:$0xf]
  %v63 = vld [vmem:[%s0 + $0x28] sm:$0xf]
  %v64 = vld [vmem:[%s0 + $0x2c] sm:$0xf]
  %v65 = vld [vmem:[%s0 + $0x30] sm:$0xf]
  %v66 = vld [vmem:[%s0 + $0x34] sm:$0xf]
  %v67 = vld [vmem:[%s0 + $0x38] sm:$0xf]
  %v68 = vld [vmem:[%s0 + $0x3c] sm:$0xf]
  %v69 = vld [vmem:[%s1] sm:$0xf]
  %v70 = vld [vmem:[%s1 + $0x4] sm:$0xf]
  %v71 = vld [vmem:[%s1 + $0x8] sm:$0xf]
  %v72 = vld [vmem:[%s1 + $0xc] sm:$0xf]
  %v73 = vld [vmem:[%s1 + $0x10] sm:$0xf]
  %v74 = vld [vmem:[%s1 + $0x14] sm:$0xf]
  %v75 = vld [vmem:[%s1 + $0x18] sm:$0xf]
  %v76 = vld [vmem:[%s1 + $0x1c] sm:$0xf]
  %v77 = vld [vmem:[%s1 + $0x20] sm:$0xf]
  %v78 = vld [vmem:[%s1 + $0x24] sm:$0xf]
  %v79 = vld [vmem:[%s1 + $0x28] sm:$0xf]
  %v80 = vld [vmem:[%s1 + $0x2c] sm:$0xf]
  %v81 = vld [vmem:[%s1 + $0x30] sm:$0xf]
  %v82 = vld [vmem:[%s1 + $0x34] sm:$0xf]
  %v83 = vld [vmem:[%s1 + $0x38] sm:$0xf]
  %v84 = vld [vmem:[%s1 + $0x3c] sm:$0xf]
  %v101 = vunpack.c.l.b16 %v53
  %v102 = vunpack.c.l.b16 %v54
  %v103 = vunpack.c.l.b16 %v55
  %v104 = vunpack.c.l.b16 %v56
  %v105 = vunpack.c.l.b16 %v57
  %v106 = vunpack.c.l.b16 %v58
  %v107 = vunpack.c.l.b16 %v59
  %v108 = vunpack.c.l.b16 %v60
  %v109 = vunpack.c.l.b16 %v61
  %v110 = vunpack.c.l.b16 %v62
  %v111 = vunpack.c.l.b16 %v63
  %v112 = vunpack.c.l.b16 %v64
  %v113 = vunpack.c.l.b16 %v65
  %v114 = vunpack.c.l.b16 %v66
  %v115 = vunpack.c.l.b16 %v67
  %v116 = vunpack.c.l.b16 %v68
  %v117 = vpack.c.b16 %v102, %v101
  %v118 = vpack.c.b16 %v104, %v103
  %v119 = vpack.c.b16 %v106, %v105
  %v120 = vpack.c.b16 %v108, %v107
  %v121 = vpack.c.b16 %v110, %v109
  %v122 = vpack.c.b16 %v112, %v111
  %v123 = vpack.c.b16 %v114, %v113
  %v124 = vpack.c.b16 %v116, %v115
  %v149 = vunpack.c.l.b16 %v69
  %v150 = vunpack.c.l.b16 %v70
  %v151 = vunpack.c.l.b16 %v71
  %v152 = vunpack.c.l.b16 %v72
  %v153 = vunpack.c.l.b16 %v73
  %v154 = vunpack.c.l.b16 %v74
  %v155 = vunpack.c.l.b16 %v75
  %v156 = vunpack.c.l.b16 %v76
  %v157 = vunpack.c.l.b16 %v77
  %v158 = vunpack.c.l.b16 %v78
  %v159 = vunpack.c.l.b16 %v79
  %v160 = vunpack.c.l.b16 %v80
  %v161 = vunpack.c.l.b16 %v81
  %v162 = vunpack.c.l.b16 %v82
  %v163 = vunpack.c.l.b16 %v83
  %v164 = vunpack.c.l.b16 %v84
  %v165 = vpack.c.b16 %v150, %v149
  %v166 = vpack.c.b16 %v152, %v151
  %v167 = vpack.c.b16 %v154, %v153
  %v168 = vpack.c.b16 %v156, %v155
  %v169 = vpack.c.b16 %v158, %v157
  %v170 = vpack.c.b16 %v160, %v159
  %v171 = vpack.c.b16 %v162, %v161
  %v172 = vpack.c.b16 %v164, %v163
  %181 = vmatpush.bf16.msra.mxu0 %v172
  %182 = vmatpush.bf16.msra.mxu0 %v171
  %183 = vmatpush.bf16.msra.mxu0 %v170
  %184 = vmatpush.bf16.msra.mxu0 %v169
  %185 = vmatpush.bf16.msra.mxu0 %v168
  %186 = vmatpush.bf16.msra.mxu0 %v167
  %187 = vmatpush.bf16.msra.mxu0 %v166
  %188 = vmatpush.bf16.msra.mxu0 %v165
  %189 = vmatmul.bf16.gmra.mxu0 %v117
  %v190 = vpop.f32.mrf.mxu0
  %v191 = vadd.f32 0.0, %v190
  %v192 = vpop.f32.mrf.mxu0
  %v193 = vadd.f32 0.0, %v192
  %194 = vmatmul.bf16.gmra.mxu0 %v118
  %v195 = vpop.f32.mrf.mxu0
  %v196 = vadd.f32 0.0, %v195
  %v197 = vpop.f32.mrf.mxu0
  %v198 = vadd.f32 0.0, %v197
  %199 = vmatmul.bf16.gmra.mxu0 %v119
  %v200 = vpop.f32.mrf.mxu0
  %v201 = vadd.f32 0.0, %v200
  %v202 = vpop.f32.mrf.mxu0
  %v203 = vadd.f32 0.0, %v202
  %204 = vmatmul.bf16.gmra.mxu0 %v120
  %v205 = vpop.f32.mrf.mxu0
  %v206 = vadd.f32 0.0, %v205
  %v207 = vpop.f32.mrf.mxu0
  %v208 = vadd.f32 0.0, %v207
  %209 = vmatmul.bf16.gmra.mxu0 %v121
  %v210 = vpop.f32.mrf.mxu0
  %v211 = vadd.f32 0.0, %v210
  %v212 = vpop.f32.mrf.mxu0
  %v213 = vadd.f32 0.0, %v212
  %214 = vmatmul.bf16.gmra.mxu0 %v122
  %v215 = vpop.f32.mrf.mxu0
  %v216 = vadd.f32 0.0, %v215
  %v217 = vpop.f32.mrf.mxu0
  %v218 = vadd.f32 0.0, %v217
  %219 = vmatmul.bf16.gmra.mxu0 %v123
  %v220 = vpop.f32.mrf.mxu0
  %v221 = vadd.f32 0.0, %v220
  %v222 = vpop.f32.mrf.mxu0
  %v223 = vadd.f32 0.0, %v222
  %224 = vmatmul.bf16.gmra.mxu0 %v124
  %v225 = vpop.f32.mrf.mxu0
  %v226 = vadd.f32 0.0, %v225
  %v227 = vpop.f32.mrf.mxu0
  %v228 = vadd.f32 0.0, %v227
  %229 = vdwg.mxu0
  %v230 = vadd.f32 %v37, %v191
  %v231 = vadd.f32 %v38, %v193
  %v232 = vadd.f32 %v39, %v196
  %v233 = vadd.f32 %v40, %v198
  %v234 = vadd.f32 %v41, %v201
  %v235 = vadd.f32 %v42, %v203
  %v236 = vadd.f32 %v43, %v206
  %v237 = vadd.f32 %v44, %v208
  %v238 = vadd.f32 %v45, %v211
  %v239 = vadd.f32 %v46, %v213
  %v240 = vadd.f32 %v47, %v216
  %v241 = vadd.f32 %v48, %v218
  %v242 = vadd.f32 %v49, %v221
  %v243 = vadd.f32 %v50, %v223
  %v244 = vadd.f32 %v51, %v226
  %v245 = vadd.f32 %v52, %v228
  %246 = vst [vmem:[#allocation2] sm:$0xff] %v230
  %247 = vst [vmem:[#allocation2 + $0x8] sm:$0xff] %v231
  %248 = vst [vmem:[#allocation2 + $0x10] sm:$0xff] %v232
  %249 = vst [vmem:[#allocation2 + $0x18] sm:$0xff] %v233
  %250 = vst [vmem:[#allocation2 + $0x20] sm:$0xff] %v234
  %251 = vst [vmem:[#allocation2 + $0x28] sm:$0xff] %v235
  %252 = vst [vmem:[#allocation2 + $0x30] sm:$0xff] %v236
  %253 = vst [vmem:[#allocation2 + $0x38] sm:$0xff] %v237
  %254 = vst [vmem:[#allocation2 + $0x40] sm:$0xff] %v238
  %255 = vst [vmem:[#allocation2 + $0x48] sm:$0xff] %v239
  %256 = vst [vmem:[#allocation2 + $0x50] sm:$0xff] %v240
  %257 = vst [vmem:[#allocation2 + $0x58] sm:$0xff] %v241
  %258 = vst [vmem:[#allocation2 + $0x60] sm:$0xff] %v242
  %259 = vst [vmem:[#allocation2 + $0x68] sm:$0xff] %v243
  %260 = vst [vmem:[#allocation2 + $0x70] sm:$0xff] %v244
  %261 = vst [vmem:[#allocation2 + $0x78] sm:$0xff] %v245
  // Predicated region
  $region22: #{_lambda_.4} parent=0 // pred_check
    %p262 = pneg %p17
  $region23: #{_lambda_.4} parent=0 // pred_check_branch
    %264 = sbr.rel (%p262) target = $region25
  $region24: #{_lambda_.4} parent=0 // pred_region
    %v265 = vld [vmem:[#allocation2] sm:$0xff]
    %v266 = vld [vmem:[#allocation2 + $0x8] sm:$0xff]
    %v267 = vld [vmem:[#allocation2 + $0x10] sm:$0xff]
    %v268 = vld [vmem:[#allocation2 + $0x18] sm:$0xff]
    %v269 = vld [vmem:[#allocation2 + $0x20] sm:$0xff]
    %v270 = vld [vmem:[#allocation2 + $0x28] sm:$0xff]
    %v271 = vld [vmem:[#allocation2 + $0x30] sm:$0xff]
    %v272 = vld [vmem:[#allocation2 + $0x38] sm:$0xff]
    %v273 = vld [vmem:[#allocation2 + $0x40] sm:$0xff]
    %v274 = vld [vmem:[#allocation2 + $0x48] sm:$0xff]
    %v275 = vld [vmem:[#allocation2 + $0x50] sm:$0xff]
    %v276 = vld [vmem:[#allocation2 + $0x58] sm:$0xff]
    %v277 = vld [vmem:[#allocation2 + $0x60] sm:$0xff]
    %v278 = vld [vmem:[#allocation2 + $0x68] sm:$0xff]
    %v279 = vld [vmem:[#allocation2 + $0x70] sm:$0xff]
    %v280 = vld [vmem:[#allocation2 + $0x78] sm:$0xff]
    %v281 = vld [vmem:[%s2] sm:$0x1]
    %v283 = vperm.slane %v281, 0
    %v285 = vmul.f32 %v265, %v283
    %v286 = vmul.f32 %v266, %v283
    %v287 = vmul.f32 %v267, %v283
    %v288 = vmul.f32 %v268, %v283
    %v289 = vmul.f32 %v269, %v283
    %v290 = vmul.f32 %v270, %v283
    %v291 = vmul.f32 %v271, %v283
    %v292 = vmul.f32 %v272, %v283
    %v293 = vmul.f32 %v273, %v283
    %v294 = vmul.f32 %v274, %v283
    %v295 = vmul.f32 %v275, %v283
    %v296 = vmul.f32 %v276, %v283
    %v297 = vmul.f32 %v277, %v283
    %v298 = vmul.f32 %v278, %v283
    %v299 = vmul.f32 %v279, %v283
    %v300 = vmul.f32 %v280, %v283
    %v301 = vld [vmem:[%s3] sm:$0x1]
    %v303 = vperm.slane %v301, 0
    %v305 = vadd.f32 %v285, %v303
    %v306 = vadd.f32 %v286, %v303
    %v307 = vadd.f32 %v287, %v303
    %v308 = vadd.f32 %v288, %v303
    %v309 = vadd.f32 %v289, %v303
    %v310 = vadd.f32 %v290, %v303
    %v311 = vadd.f32 %v291, %v303
    %v312 = vadd.f32 %v292, %v303
    %v313 = vadd.f32 %v293, %v303
    %v314 = vadd.f32 %v294, %v303
    %v315 = vadd.f32 %v295, %v303
    %v316 = vadd.f32 %v296, %v303
    %v317 = vadd.f32 %v297, %v303
    %v318 = vadd.f32 %v298, %v303
    %v319 = vadd.f32 %v299, %v303
    %v320 = vadd.f32 %v300, %v303
    %v321 = vxor.u32 %v305, 2147483648
    %v322 = vxor.u32 %v306, 2147483648
    %v323 = vxor.u32 %v307, 2147483648
    %v324 = vxor.u32 %v308, 2147483648
    %v325 = vxor.u32 %v309, 2147483648
    %v326 = vxor.u32 %v310, 2147483648
    %v327 = vxor.u32 %v311, 2147483648
    %v328 = vxor.u32 %v312, 2147483648
    %v329 = vxor.u32 %v313, 2147483648
    %v330 = vxor.u32 %v314, 2147483648
    %v331 = vxor.u32 %v315, 2147483648
    %v332 = vxor.u32 %v316, 2147483648
    %v333 = vxor.u32 %v317, 2147483648
    %v334 = vxor.u32 %v318, 2147483648
    %v335 = vxor.u32 %v319, 2147483648
    %v336 = vxor.u32 %v320, 2147483648
    %v337 = vmul.f32 %v321, 1.442695
    %v338 = vpow.pop %v337
    %v339 = vmul.f32 %v322, 1.442695
    %v340 = vpow.pop %v339
    %v341 = vmul.f32 %v323, 1.442695
    %v342 = vpow.pop %v341
    %v343 = vmul.f32 %v324, 1.442695
    %v344 = vpow.pop %v343
    %v345 = vmul.f32 %v325, 1.442695
    %v346 = vpow.pop %v345
    %v347 = vmul.f32 %v326, 1.442695
    %v348 = vpow.pop %v347
    %v349 = vmul.f32 %v327, 1.442695
    %v350 = vpow.pop %v349
    %v351 = vmul.f32 %v328, 1.442695
    %v352 = vpow.pop %v351
    %v353 = vmul.f32 %v329, 1.442695
    %v354 = vpow.pop %v353
    %v355 = vmul.f32 %v330, 1.442695
    %v356 = vpow.pop %v355
    %v357 = vmul.f32 %v331, 1.442695
    %v358 = vpow.pop %v357
    %v359 = vmul.f32 %v332, 1.442695
    %v360 = vpow.pop %v359
    %v361 = vmul.f32 %v333, 1.442695
    %v362 = vpow.pop %v361
    %v363 = vmul.f32 %v334, 1.442695
    %v364 = vpow.pop %v363
    %v365 = vmul.f32 %v335, 1.442695
    %v366 = vpow.pop %v365
    %v367 = vmul.f32 %v336, 1.442695
    %v368 = vpow.pop %v367
    %v369 = vadd.f32 %v338, 1.0
    %v370 = vadd.f32 %v340, 1.0
    %v371 = vadd.f32 %v342, 1.0
    %v372 = vadd.f32 %v344, 1.0
    %v373 = vadd.f32 %v346, 1.0
    %v374 = vadd.f32 %v348, 1.0
    %v375 = vadd.f32 %v350, 1.0
    %v376 = vadd.f32 %v352, 1.0
    %v377 = vadd.f32 %v354, 1.0
    %v378 = vadd.f32 %v356, 1.0
    %v379 = vadd.f32 %v358, 1.0
    %v380 = vadd.f32 %v360, 1.0
    %v381 = vadd.f32 %v362, 1.0
    %v382 = vadd.f32 %v364, 1.0
    %v383 = vadd.f32 %v366, 1.0
    %v384 = vadd.f32 %v368, 1.0
    %v385 = vrcp.pop %v369
    %v386 = vmul.f32 %v369, %v385
    %v387 = vsub.f32 1.0, %v386
    %v388 = vmul.f32 %v385, %v387
    %v389 = vadd.f32 %v385, %v388
    %vm390 = vweird.f32 %v369
    %vm391 = vweird.f32 %v385
    %vm392 = vmor %vm390, %vm391
    %v393 = vsel %vm392, %v385, %v389
    %v394 = vand.u32 2147483647, %v369
    %vm395 = vcmp.eq.f32.partialorder %v394, 8.507059e+37
    %v396 = vand.u32 %v369, 2147483648
    %v397 = vor.u32 1.1754944e-38, %v396
    %v398 = vsel %vm395, %v397, %v393
    %v399 = vmul.f32 1.0, %v398
    %v400 = vrcp.pop %v370
    %v401 = vmul.f32 %v370, %v400
    %v402 = vsub.f32 1.0, %v401
    %v403 = vmul.f32 %v400, %v402
    %v404 = vadd.f32 %v400, %v403
    %vm405 = vweird.f32 %v370
    %vm406 = vweird.f32 %v400
    %vm407 = vmor %vm405, %vm406
    %v408 = vsel %vm407, %v400, %v404
    %v409 = vand.u32 2147483647, %v370
    %vm410 = vcmp.eq.f32.partialorder %v409, 8.507059e+37
    %v411 = vand.u32 %v370, 2147483648
    %v412 = vor.u32 1.1754944e-38, %v411
    %v413 = vsel %vm410, %v412, %v408
    %v414 = vmul.f32 1.0, %v413
    %v415 = vrcp.pop %v371
    %v416 = vmul.f32 %v371, %v415
    %v417 = vsub.f32 1.0, %v416
    %v418 = vmul.f32 %v415, %v417
    %v419 = vadd.f32 %v415, %v418
    %vm420 = vweird.f32 %v371
    %vm421 = vweird.f32 %v415
    %vm422 = vmor %vm420, %vm421
    %v423 = vsel %vm422, %v415, %v419
    %v424 = vand.u32 2147483647, %v371
    %vm425 = vcmp.eq.f32.partialorder %v424, 8.507059e+37
    %v426 = vand.u32 %v371, 2147483648
    %v427 = vor.u32 1.1754944e-38, %v426
    %v428 = vsel %vm425, %v427, %v423
    %v429 = vmul.f32 1.0, %v428
    %v430 = vrcp.pop %v372
    %v431 = vmul.f32 %v372, %v430
    %v432 = vsub.f32 1.0, %v431
    %v433 = vmul.f32 %v430, %v432
    %v434 = vadd.f32 %v430, %v433
    %vm435 = vweird.f32 %v372
    %vm436 = vweird.f32 %v430
    %vm437 = vmor %vm435, %vm436
    %v438 = vsel %vm437, %v430, %v434
    %v439 = vand.u32 2147483647, %v372
    %vm440 = vcmp.eq.f32.partialorder %v439, 8.507059e+37
    %v441 = vand.u32 %v372, 2147483648
    %v442 = vor.u32 1.1754944e-38, %v441
    %v443 = vsel %vm440, %v442, %v438
    %v444 = vmul.f32 1.0, %v443
    %v445 = vrcp.pop %v373
    %v446 = vmul.f32 %v373, %v445
    %v447 = vsub.f32 1.0, %v446
    %v448 = vmul.f32 %v445, %v447
    %v449 = vadd.f32 %v445, %v448
    %vm450 = vweird.f32 %v373
    %vm451 = vweird.f32 %v445
    %vm452 = vmor %vm450, %vm451
    %v453 = vsel %vm452, %v445, %v449
    %v454 = vand.u32 2147483647, %v373
    %vm455 = vcmp.eq.f32.partialorder %v454, 8.507059e+37
    %v456 = vand.u32 %v373, 2147483648
    %v457 = vor.u32 1.1754944e-38, %v456
    %v458 = vsel %vm455, %v457, %v453
    %v459 = vmul.f32 1.0, %v458
    %v460 = vrcp.pop %v374
    %v461 = vmul.f32 %v374, %v460
    %v462 = vsub.f32 1.0, %v461
    %v463 = vmul.f32 %v460, %v462
    %v464 = vadd.f32 %v460, %v463
    %vm465 = vweird.f32 %v374
    %vm466 = vweird.f32 %v460
    %vm467 = vmor %vm465, %vm466
    %v468 = vsel %vm467, %v460, %v464
    %v469 = vand.u32 2147483647, %v374
    %vm470 = vcmp.eq.f32.partialorder %v469, 8.507059e+37
    %v471 = vand.u32 %v374, 2147483648
    %v472 = vor.u32 1.1754944e-38, %v471
    %v473 = vsel %vm470, %v472, %v468
    %v474 = vmul.f32 1.0, %v473
    %v475 = vrcp.pop %v375
    %v476 = vmul.f32 %v375, %v475
    %v477 = vsub.f32 1.0, %v476
    %v478 = vmul.f32 %v475, %v477
    %v479 = vadd.f32 %v475, %v478
    %vm480 = vweird.f32 %v375
    %vm481 = vweird.f32 %v475
    %vm482 = vmor %vm480, %vm481
    %v483 = vsel %vm482, %v475, %v479
    %v484 = vand.u32 2147483647, %v375
    %vm485 = vcmp.eq.f32.partialorder %v484, 8.507059e+37
    %v486 = vand.u32 %v375, 2147483648
    %v487 = vor.u32 1.1754944e-38, %v486
    %v488 = vsel %vm485, %v487, %v483
    %v489 = vmul.f32 1.0, %v488
    %v490 = vrcp.pop %v376
    %v491 = vmul.f32 %v376, %v490
    %v492 = vsub.f32 1.0, %v491
    %v493 = vmul.f32 %v490, %v492
    %v494 = vadd.f32 %v490, %v493
    %vm495 = vweird.f32 %v376
    %vm496 = vweird.f32 %v490
    %vm497 = vmor %vm495, %vm496
    %v498 = vsel %vm497, %v490, %v494
    %v499 = vand.u32 2147483647, %v376
    %vm500 = vcmp.eq.f32.partialorder %v499, 8.507059e+37
    %v501 = vand.u32 %v376, 2147483648
    %v502 = vor.u32 1.1754944e-38, %v501
    %v503 = vsel %vm500, %v502, %v498
    %v504 = vmul.f32 1.0, %v503
    %v505 = vrcp.pop %v377
    %v506 = vmul.f32 %v377, %v505
    %v507 = vsub.f32 1.0, %v506
    %v508 = vmul.f32 %v505, %v507
    %v509 = vadd.f32 %v505, %v508
    %vm510 = vweird.f32 %v377
    %vm511 = vweird.f32 %v505
    %vm512 = vmor %vm510, %vm511
    %v513 = vsel %vm512, %v505, %v509
    %v514 = vand.u32 2147483647, %v377
    %vm515 = vcmp.eq.f32.partialorder %v514, 8.507059e+37
    %v516 = vand.u32 %v377, 2147483648
    %v517 = vor.u32 1.1754944e-38, %v516
    %v518 = vsel %vm515, %v517, %v513
    %v519 = vmul.f32 1.0, %v518
    %v520 = vrcp.pop %v378
    %v521 = vmul.f32 %v378, %v520
    %v522 = vsub.f32 1.0, %v521
    %v523 = vmul.f32 %v520, %v522
    %v524 = vadd.f32 %v520, %v523
    %vm525 = vweird.f32 %v378
    %vm526 = vweird.f32 %v520
    %vm527 = vmor %vm525, %vm526
    %v528 = vsel %vm527, %v520, %v524
    %v529 = vand.u32 2147483647, %v378
    %vm530 = vcmp.eq.f32.partialorder %v529, 8.507059e+37
    %v531 = vand.u32 %v378, 2147483648
    %v532 = vor.u32 1.1754944e-38, %v531
    %v533 = vsel %vm530, %v532, %v528
    %v534 = vmul.f32 1.0, %v533
    %v535 = vrcp.pop %v379
    %v536 = vmul.f32 %v379, %v535
    %v537 = vsub.f32 1.0, %v536
    %v538 = vmul.f32 %v535, %v537
    %v539 = vadd.f32 %v535, %v538
    %vm540 = vweird.f32 %v379
    %vm541 = vweird.f32 %v535
    %vm542 = vmor %vm540, %vm541
    %v543 = vsel %vm542, %v535, %v539
    %v544 = vand.u32 2147483647, %v379
    %vm545 = vcmp.eq.f32.partialorder %v544, 8.507059e+37
    %v546 = vand.u32 %v379, 2147483648
    %v547 = vor.u32 1.1754944e-38, %v546
    %v548 = vsel %vm545, %v547, %v543
    %v549 = vmul.f32 1.0, %v548
    %v550 = vrcp.pop %v380
    %v551 = vmul.f32 %v380, %v550
    %v552 = vsub.f32 1.0, %v551
    %v553 = vmul.f32 %v550, %v552
    %v554 = vadd.f32 %v550, %v553
    %vm555 = vweird.f32 %v380
    %vm556 = vweird.f32 %v550
    %vm557 = vmor %vm555, %vm556
    %v558 = vsel %vm557, %v550, %v554
    %v559 = vand.u32 2147483647, %v380
    %vm560 = vcmp.eq.f32.partialorder %v559, 8.507059e+37
    %v561 = vand.u32 %v380, 2147483648
    %v562 = vor.u32 1.1754944e-38, %v561
    %v563 = vsel %vm560, %v562, %v558
    %v564 = vmul.f32 1.0, %v563
    %v565 = vrcp.pop %v381
    %v566 = vmul.f32 %v381, %v565
    %v567 = vsub.f32 1.0, %v566
    %v568 = vmul.f32 %v565, %v567
    %v569 = vadd.f32 %v565, %v568
    %vm570 = vweird.f32 %v381
    %vm571 = vweird.f32 %v565
    %vm572 = vmor %vm570, %vm571
    %v573 = vsel %vm572, %v565, %v569
    %v574 = vand.u32 2147483647, %v381
    %vm575 = vcmp.eq.f32.partialorder %v574, 8.507059e+37
    %v576 = vand.u32 %v381, 2147483648
    %v577 = vor.u32 1.1754944e-38, %v576
    %v578 = vsel %vm575, %v577, %v573
    %v579 = vmul.f32 1.0, %v578
    %v580 = vrcp.pop %v382
    %v581 = vmul.f32 %v382, %v580
    %v582 = vsub.f32 1.0, %v581
    %v583 = vmul.f32 %v580, %v582
    %v584 = vadd.f32 %v580, %v583
    %vm585 = vweird.f32 %v382
    %vm586 = vweird.f32 %v580
    %vm587 = vmor %vm585, %vm586
    %v588 = vsel %vm587, %v580, %v584
    %v589 = vand.u32 2147483647, %v382
    %vm590 = vcmp.eq.f32.partialorder %v589, 8.507059e+37
    %v591 = vand.u32 %v382, 2147483648
    %v592 = vor.u32 1.1754944e-38, %v591
    %v593 = vsel %vm590, %v592, %v588
    %v594 = vmul.f32 1.0, %v593
    %v595 = vrcp.pop %v383
    %v596 = vmul.f32 %v383, %v595
    %v597 = vsub.f32 1.0, %v596
    %v598 = vmul.f32 %v595, %v597
    %v599 = vadd.f32 %v595, %v598
    %vm600 = vweird.f32 %v383
    %vm601 = vweird.f32 %v595
    %vm602 = vmor %vm600, %vm601
    %v603 = vsel %vm602, %v595, %v599
    %v604 = vand.u32 2147483647, %v383
    %vm605 = vcmp.eq.f32.partialorder %v604, 8.507059e+37
    %v606 = vand.u32 %v383, 2147483648
    %v607 = vor.u32 1.1754944e-38, %v606
    %v608 = vsel %vm605, %v607, %v603
    %v609 = vmul.f32 1.0, %v608
    %v610 = vrcp.pop %v384
    %v611 = vmul.f32 %v384, %v610
    %v612 = vsub.f32 1.0, %v611
    %v613 = vmul.f32 %v610, %v612
    %v614 = vadd.f32 %v610, %v613
    %vm615 = vweird.f32 %v384
    %vm616 = vweird.f32 %v610
    %vm617 = vmor %vm615, %vm616
    %v618 = vsel %vm617, %v610, %v614
    %v619 = vand.u32 2147483647, %v384
    %vm620 = vcmp.eq.f32.partialorder %v619, 8.507059e+37
    %v621 = vand.u32 %v384, 2147483648
    %v622 = vor.u32 1.1754944e-38, %v621
    %v623 = vsel %vm620, %v622, %v618
    %v624 = vmul.f32 1.0, %v623
    %v625 = vmul.f32 %v305, %v399
    %v626 = vmul.f32 %v306, %v414
    %v627 = vmul.f32 %v307, %v429
    %v628 = vmul.f32 %v308, %v444
    %v629 = vmul.f32 %v309, %v459
    %v630 = vmul.f32 %v310, %v474
    %v631 = vmul.f32 %v311, %v489
    %v632 = vmul.f32 %v312, %v504
    %v633 = vmul.f32 %v313, %v519
    %v634 = vmul.f32 %v314, %v534
    %v635 = vmul.f32 %v315, %v549
    %v636 = vmul.f32 %v316, %v564
    %v637 = vmul.f32 %v317, %v579
    %v638 = vmul.f32 %v318, %v594
    %v639 = vmul.f32 %v319, %v609
    %v640 = vmul.f32 %v320, %v624
    %v641 = vpack.c.bf16 %v625, %v625
    %v642 = vpack.c.bf16 %v626, %v626
    %v643 = vpack.c.bf16 %v627, %v627
    %v644 = vpack.c.bf16 %v628, %v628
    %v645 = vpack.c.bf16 %v629, %v629
    %v646 = vpack.c.bf16 %v630, %v630
    %v647 = vpack.c.bf16 %v631, %v631
    %v648 = vpack.c.bf16 %v632, %v632
    %v649 = vpack.c.bf16 %v633, %v633
    %v650 = vpack.c.bf16 %v634, %v634
    %v651 = vpack.c.bf16 %v635, %v635
    %v652 = vpack.c.bf16 %v636, %v636
    %v653 = vpack.c.bf16 %v637, %v637
    %v654 = vpack.c.bf16 %v638, %v638
    %v655 = vpack.c.bf16 %v639, %v639
    %v656 = vpack.c.bf16 %v640, %v640
    %657 = vst [vmem:[%s4] sm:$0xf] %v641
    %658 = vst [vmem:[%s4 + $0x4] sm:$0xf] %v642
    %659 = vst [vmem:[%s4 + $0x8] sm:$0xf] %v643
    %660 = vst [vmem:[%s4 + $0xc] sm:$0xf] %v644
    %661 = vst [vmem:[%s4 + $0x10] sm:$0xf] %v645
    %662 = vst [vmem:[%s4 + $0x14] sm:$0xf] %v646
    %663 = vst [vmem:[%s4 + $0x18] sm:$0xf] %v647
    %664 = vst [vmem:[%s4 + $0x1c] sm:$0xf] %v648
    %665 = vst [vmem:[%s4 + $0x20] sm:$0xf] %v649
    %666 = vst [vmem:[%s4 + $0x24] sm:$0xf] %v650
    %667 = vst [vmem:[%s4 + $0x28] sm:$0xf] %v651
    %668 = vst [vmem:[%s4 + $0x2c] sm:$0xf] %v652
    %669 = vst [vmem:[%s4 + $0x30] sm:$0xf] %v653
    %670 = vst [vmem:[%s4 + $0x34] sm:$0xf] %v654
    %671 = vst [vmem:[%s4 + $0x38] sm:$0xf] %v655
    %672 = vst [vmem:[%s4 + $0x3c] sm:$0xf] %v656
  $region25: #{_lambda_.4} parent=0 // pred_fallthru
    _
  // Predicated region
  $region26: #{_lambda_.4} parent=0 // pred_check
    _
  $region27: #{_lambda_.4} parent=0 // pred_check_branch
    %674 = sbr.rel (0) target = $region29
  $region28: #{_lambda_.4} parent=0 // pred_region
    _
  $region29: #{_lambda_.4} parent=0 // pred_fallthru
    _
  // Predicated region
  $region30: #{_lambda_.4} parent=0 // pred_check
    _
  $region31: #{_lambda_.4} parent=0 // pred_check_branch
    %676 = sbr.rel (0) target = $region33
  $region32: #{_lambda_.4} parent=0 // pred_region
    _
  $region33: #{_lambda_.4} parent=0 // pred_fallthru
    _

// kernel: _lambda_.6
$region0: #{_lambda_.6}
  #allocation0 [shape = 'u32[]', space=smem, size = 0x4, offset = 0x4, fixed_abs, tag = 'smem constant byte address 0x4 - core index']
  #allocation1 [shape = 'u32[72,128]{1,0:T(1,128)}', space=vmem, size = 0x9000, scoped, tag = 'internal scratch']
  %s0 = inlined_call_operand.vmem [shape: bf16[2,10,10,128], index: 0, kind: input, shape index: {}]
  %s1 = inlined_call_operand.vmem [shape: bf16[9,128,128], index: 1, kind: input, shape index: {}]
  %s2 = inlined_call_operand.vmem [shape: f32[1,128], index: 2, kind: input, shape index: {}]
  %s3 = inlined_call_operand.vmem [shape: f32[1,128], index: 3, kind: input, shape index: {}]
  %s4 = inlined_call_operand.vmem [shape: bf16[2,8,8,128], index: 4, kind: output, shape index: {}]
  %s5 = sld [smem:[#allocation0]]
  $region49: #{_lambda_.6} parent=0
    _
  %s7 = ssub.s32 1, %s5
  %s8 = scalar_select 0, %s7, %s5
  loop: start=0, step=1, limit=4
  $region2: #{_lambda_.6} parent=0 // loop_pre_header
    _
  $region3: #{_lambda_.6} parent=0 // loop_header
    %s10 = sphi 0, %s14
    %p11 = scmp.ge.s32.totalorder %s10, 4
    %s20 = sphi 0, %s22
    %s23 = sphi 0, %s20
    %s24 = sphi 0, %s23
    %s40 = sphi 0, %s24
    %s44 = sphi 0, %s44
    %s46 = sphi 0, %s44
    %s47 = sphi 0, %s46
    %s61 = sphi 0, %s47
    %s65 = sphi 0, %s65
    %s67 = sphi 0, %s65
    %s68 = sphi 0, %s67
    %s82 = sphi 0, %s68
    %s86 = sphi 0, %s86
    %s88 = sphi 0, %s86
    %s89 = sphi 0, %s88
    %s103 = sphi 0, %s89
    %s109 = sphi 0, %s111
    %s112 = sphi 0, %s109
    %s113 = sphi 0, %s112
    %s129 = sphi 0, %s113
  $region4: #{_lambda_.6} parent=0 // loop_header_branch
    %13 = sbr.rel (%p11) target = $region8
  $region5: #{_lambda_.6} parent=0 // loop_body
    %s15 = ssub.s32 %s10, 1
    %s16 = ssub.s32 %s10, 2
    %s17 = sadd.s32 %s10, 1
    %s18 = ssub.s32 %s10, %s17
    %p19 = scmp.eq.s32.totalorder %s18, 0
    %s21 = sadd.s32 %s20, 1
    %s22 = scalar_select %p19, %s20, %s21
    %p25 = pneg %p19
    %p26 = scmp.eq.s32.totalorder %s10, 1
    %p27 = por %p25, %p26
    %p28 = scmp.ne.s32.totalorder %s20, %s23
    %p29 = scmp.eq.s32.totalorder %s10, 0
    %p30 = por %p28, %p29
    %p31 = scmp.ne.s32.totalorder %s20, %s23
    %p32 = scmp.eq.s32.totalorder %s15, 1
    %p33 = por %p31, %p32
    %p34 = scmp.ne.s32.totalorder %s23, %s24
    %p35 = scmp.eq.s32.totalorder %s15, 0
    %p36 = por %p34, %p35
    %p37 = scmp.ne.s32.totalorder %s23, %s24
    %p38 = scmp.eq.s32.totalorder %s16, 1
    %p39 = por %p37, %p38
    %p41 = scmp.ne.s32.totalorder %s24, %s40
    %p42 = scmp.eq.s32.totalorder %s16, 0
    %p43 = por %p41, %p42
    %s45 = sadd.s32 %s44, 1
    %p48 = scmp.eq.s32.totalorder %s10, 1
    %p49 = scmp.ne.s32.totalorder %s44, %s46
    %p50 = scmp.eq.s32.totalorder %s10, 0
    %p51 = por %p49, %p50
    %p52 = scmp.ne.s32.totalorder %s44, %s46
    %p53 = scmp.eq.s32.totalorder %s15, 1
    %p54 = por %p52, %p53
    %p55 = scmp.ne.s32.totalorder %s46, %s47
    %p56 = scmp.eq.s32.totalorder %s15, 0
    %p57 = por %p55, %p56
    %p58 = scmp.ne.s32.totalorder %s46, %s47
    %p59 = scmp.eq.s32.totalorder %s16, 1
    %p60 = por %p58, %p59
    %p62 = scmp.ne.s32.totalorder %s47, %s61
    %p63 = scmp.eq.s32.totalorder %s16, 0
    %p64 = por %p62, %p63
    %s66 = sadd.s32 %s65, 1
    %p69 = scmp.eq.s32.totalorder %s10, 1
    %p70 = scmp.ne.s32.totalorder %s65, %s67
    %p71 = scmp.eq.s32.totalorder %s10, 0
    %p72 = por %p70, %p71
    %p73 = scmp.ne.s32.totalorder %s65, %s67
    %p74 = scmp.eq.s32.totalorder %s15, 1
    %p75 = por %p73, %p74
    %p76 = scmp.ne.s32.totalorder %s67, %s68
    %p77 = scmp.eq.s32.totalorder %s15, 0
    %p78 = por %p76, %p77
    %p79 = scmp.ne.s32.totalorder %s67, %s68
    %p80 = scmp.eq.s32.totalorder %s16, 1
    %p81 = por %p79, %p80
    %p83 = scmp.ne.s32.totalorder %s68, %s82
    %p84 = scmp.eq.s32.totalorder %s16, 0
    %p85 = por %p83, %p84
    %s87 = sadd.s32 %s86, 1
    %p90 = scmp.eq.s32.totalorder %s10, 1
    %p91 = scmp.ne.s32.totalorder %s86, %s88
    %p92 = scmp.eq.s32.totalorder %s10, 0
    %p93 = por %p91, %p92
    %p94 = scmp.ne.s32.totalorder %s86, %s88
    %p95 = scmp.eq.s32.totalorder %s15, 1
    %p96 = por %p94, %p95
    %p97 = scmp.ne.s32.totalorder %s88, %s89
    %p98 = scmp.eq.s32.totalorder %s15, 0
    %p99 = por %p97, %p98
    %p100 = scmp.ne.s32.totalorder %s88, %s89
    %p101 = scmp.eq.s32.totalorder %s16, 1
    %p102 = por %p100, %p101
    %p104 = scmp.ne.s32.totalorder %s89, %s103
    %p105 = scmp.eq.s32.totalorder %s16, 0
    %p106 = por %p104, %p105
    %s107 = ssub.s32 %s10, %s17
    %p108 = scmp.eq.s32.totalorder %s107, 0
    %s110 = sadd.s32 %s109, 1
    %s111 = scalar_select %p108, %s109, %s110
    %p114 = pneg %p108
    %p115 = scmp.eq.s32.totalorder %s10, 1
    %p116 = por %p114, %p115
    %p117 = scmp.ne.s32.totalorder %s109, %s112
    %p118 = scmp.eq.s32.totalorder %s10, 0
    %p119 = por %p117, %p118
    %p120 = scmp.ne.s32.totalorder %s109, %s112
    %p121 = scmp.eq.s32.totalorder %s15, 1
    %p122 = por %p120, %p121
    %p123 = scmp.ne.s32.totalorder %s112, %s113
    %p124 = scmp.eq.s32.totalorder %s15, 0
    %p125 = por %p123, %p124
    %p126 = scmp.ne.s32.totalorder %s112, %s113
    %p127 = scmp.eq.s32.totalorder %s16, 1
    %p128 = por %p126, %p127
    %p130 = scmp.ne.s32.totalorder %s113, %s129
    %p131 = scmp.eq.s32.totalorder %s16, 0
    %p132 = por %p130, %p131
    %p133 = scmp.le.s32.totalorder 1, %s10
    %p134 = scmp.lt.s32.totalorder %s10, 3
    %p135 = pnand %p133, %p134
    %p136 = pneg %p135
    // Predicated region
    $region9: #{_lambda_.6} parent=5 // pred_check
      _
    $region10: #{_lambda_.6} parent=5 // pred_check_branch
      %138 = sbr.rel (%p135) target = $region12
    $region11: #{_lambda_.6} parent=5 // pred_region
      %s139 = ssub.s32 %s10, 1
      // Predicated region
      $region13: #{_lambda_.6} parent=11 // pred_check
        %p140 = pneg %p57
      $region14: #{_lambda_.6} parent=11 // pred_check_branch
        %142 = sbr.rel (%p140) target = $region16
      $region15: #{_lambda_.6} parent=11 // pred_region
        _
      $region16: #{_lambda_.6} parent=11 // pred_fallthru
        _
      // Predicated region
      $region17: #{_lambda_.6} parent=11 // pred_check
        %p143 = pneg %p78
      $region18: #{_lambda_.6} parent=11 // pred_check_branch
        %145 = sbr.rel (%p143) target = $region20
      $region19: #{_lambda_.6} parent=11 // pred_region
        _
      $region20: #{_lambda_.6} parent=11 // pred_fallthru
        _
      // Predicated region
      $region21: #{_lambda_.6} parent=11 // pred_check
        %p146 = pneg %p99
      $region22: #{_lambda_.6} parent=11 // pred_check_branch
        %148 = sbr.rel (%p146) target = $region24
      $region23: #{_lambda_.6} parent=11 // pred_region
        _
      $region24: #{_lambda_.6} parent=11 // pred_fallthru
        _
    $region12: #{_lambda_.6} parent=5 // pred_fallthru
      _
    %p149 = scmp.lt.s32.totalorder %s10, 2
    // Predicated region
    $region25: #{_lambda_.6} parent=5 // pred_check
      %p150 = pneg %p149
    $region26: #{_lambda_.6} parent=5 // pred_check_branch
      %152 = sbr.rel (%p150) target = $region28
    $region27: #{_lambda_.6} parent=5 // pred_region
      // Predicated region
      $region29: #{_lambda_.6} parent=27 // pred_check
        %p153 = pneg %p30
      $region30: #{_lambda_.6} parent=27 // pred_check_branch
        %155 = sbr.rel (%p153) target = $region32
      $region31: #{_lambda_.6} parent=27 // pred_region
        %p156 = scmp.lt.s32.totalorder %s10, 1
        %s157 = scalar_select %p156, %s10, 1
        %s158 = smul.addr %s157, 20
        %s159 = smul.addr %s158, 4
        %s160 = scalar_lea.vmem %s0, %s159
      $region32: #{_lambda_.6} parent=27 // pred_fallthru
        _
    $region28: #{_lambda_.6} parent=5 // pred_fallthru
      _
    %p161 = scmp.le.s32.totalorder 1, %s10
    %p162 = scmp.lt.s32.totalorder %s10, 3
    %p163 = pnand %p161, %p162
    %p164 = pneg %p163
    // Predicated region
    $region33: #{_lambda_.6} parent=5 // pred_check
      _
    $region34: #{_lambda_.6} parent=5 // pred_check_branch
      %166 = sbr.rel (%p163) target = $region36
    $region35: #{_lambda_.6} parent=5 // pred_region
      %s167 = ssub.s32 %s10, 1
      %p168 = scmp.lt.s32.totalorder %s15, 1
      %s169 = scalar_select %p168, %s15, 1
      %s170 = smul.addr %s169, 20
      %s171 = smul.addr %s170, 4
      %s172 = scalar_lea.vmem %s0, %s171
      %p173 = pneg %p36
      %p174 = pneg %p33
      %p175 = pneg %p57
      %p176 = pneg %p54
      %p177 = pneg %p78
      %p178 = pneg %p75
      %p179 = pneg %p99
      %p180 = pneg %p96
      %p181 = pneg %p125
      %p182 = pneg %p122
      %p183 = scmp.lt.s32.totalorder %s15, 1
      %s184 = scalar_select %p183, %s15, 1
      %s185 = smul.addr %s184, 8
      %s186 = smul.addr %s185, 4
      %s187 = scalar_lea.vmem %s4, %s186
      %p188 = scmp.lt.s32.totalorder %s15, 1
      %s189 = scalar_select %p188, %s15, 1
      %s190 = smul.addr %s189, 20
      %s191 = smul.addr %s190, 4
      %s192 = scalar_lea.vmem %s0, %s191
      %p193 = scmp.lt.s32.totalorder %s15, 1
      %s194 = scalar_select %p193, %s15, 1
      %s195 = smul.addr %s194, 8
      %s196 = smul.addr %s195, 4
      %s197 = scalar_lea.vmem %s4, %s196
      %v198 = vld [vmem:[%s192] sm:$0xf]
      %v199 = vld [vmem:[%s192 + $0x8] sm:$0xf]
      %v200 = vld [vmem:[%s192 + $0x10] sm:$0xf]
      %v201 = vld [vmem:[%s192 + $0x18] sm:$0xf]
      %v202 = vld [vmem:[%s192 + $0x20] sm:$0xf]
      %v203 = vld [vmem:[%s192 + $0x28] sm:$0xf]
      %v204 = vld [vmem:[%s192 + $0x30] sm:$0xf]
      %v205 = vld [vmem:[%s192 + $0x38] sm:$0xf]
      %v206 = vld [vmem:[%s1] sm:$0xf]
      %v207 = vld [vmem:[%s1 + $0x4] sm:$0xf]
      %v208 = vld [vmem:[%s1 + $0x8] sm:$0xf]
      %v209 = vld [vmem:[%s1 + $0xc] sm:$0xf]
      %v210 = vld [vmem:[%s1 + $0x10] sm:$0xf]
      %v211 = vld [vmem:[%s1 + $0x14] sm:$0xf]
      %v212 = vld [vmem:[%s1 + $0x18] sm:$0xf]
      %v213 = vld [vmem:[%s1 + $0x1c] sm:$0xf]
      %v214 = vld [vmem:[%s1 + $0x20] sm:$0xf]
      %v215 = vld [vmem:[%s1 + $0x24] sm:$0xf]
      %v216 = vld [vmem:[%s1 + $0x28] sm:$0xf]
      %v217 = vld [vmem:[%s1 + $0x2c] sm:$0xf]
      %v218 = vld [vmem:[%s1 + $0x30] sm:$0xf]
      %v219 = vld [vmem:[%s1 + $0x34] sm:$0xf]
      %v220 = vld [vmem:[%s1 + $0x38] sm:$0xf]
      %v221 = vld [vmem:[%s1 + $0x3c] sm:$0xf]
      %v222 = vld [vmem:[%s192 + $0x4] sm:$0x1]
      %v223 = vld [vmem:[%s192 + $0xc] sm:$0x1]
      %v224 = vld [vmem:[%s192 + $0x14] sm:$0x1]
      %v225 = vld [vmem:[%s192 + $0x1c] sm:$0x1]
      %v226 = vld [vmem:[%s192 + $0x24] sm:$0x1]
      %v227 = vld [vmem:[%s192 + $0x2c] sm:$0x1]
      %v228 = vld [vmem:[%s192 + $0x34] sm:$0x1]
      %v229 = vld [vmem:[%s192 + $0x3c] sm:$0x1]
      %vm230 = vsmask.f32 3328
      %vm231 = vsmask.f32 7440
      %vm232 = vmor %vm230, %vm231
      %v234 = vshrl.u32 %v198, 16
      %v236 = vrot.slane %v234, 4
      %v237 = vshll.u32 %v198, 16
      %v239 = vrot.slane %v237, 5
      %v240 = vor.u32 %v236, %v239
      %v241 = vrot.slane %v240, 4
      %v243 = vshll.u32 %v222, 16
      %v245 = vrot.slane %v243, 5
      %v246 = vsel %vm232, %v241, %v245
      %v248 = vshrl.u32 %v199, 16
      %v250 = vrot.slane %v248, 4
      %v251 = vshll.u32 %v199, 16
      %v253 = vrot.slane %v251, 5
      %v254 = vor.u32 %v250, %v253
      %v255 = vrot.slane %v254, 4
      %v257 = vshll.u32 %v223, 16
      %v259 = vrot.slane %v257, 5
      %v260 = vsel %vm232, %v255, %v259
      %v262 = vshrl.u32 %v200, 16
      %v264 = vrot.slane %v262, 4
      %v265 = vshll.u32 %v200, 16
      %v267 = vrot.slane %v265, 5
      %v268 = vor.u32 %v264, %v267
      %v269 = vrot.slane %v268, 4
      %v271 = vshll.u32 %v224, 16
      %v273 = vrot.slane %v271, 5
      %v274 = vsel %vm232, %v269, %v273
      %v276 = vshrl.u32 %v201, 16
      %v278 = vrot.slane %v276, 4
      %v279 = vshll.u32 %v201, 16
      %v281 = vrot.slane %v279, 5
      %v282 = vor.u32 %v278, %v281
      %v283 = vrot.slane %v282, 4
      %v285 = vshll.u32 %v225, 16
      %v287 = vrot.slane %v285, 5
      %v288 = vsel %vm232, %v283, %v287
      %v290 = vshrl.u32 %v202, 16
      %v292 = vrot.slane %v290, 4
      %v293 = vshll.u32 %v202, 16
      %v295 = vrot.slane %v293, 5
      %v296 = vor.u32 %v292, %v295
      %v297 = vrot.slane %v296, 4
      %v299 = vshll.u32 %v226, 16
      %v301 = vrot.slane %v299, 5
      %v302 = vsel %vm232, %v297, %v301
      %v304 = vshrl.u32 %v203, 16
      %v306 = vrot.slane %v304, 4
      %v307 = vshll.u32 %v203, 16
      %v309 = vrot.slane %v307, 5
      %v310 = vor.u32 %v306, %v309
      %v311 = vrot.slane %v310, 4
      %v313 = vshll.u32 %v227, 16
      %v315 = vrot.slane %v313, 5
      %v316 = vsel %vm232, %v311, %v315
      %v318 = vshrl.u32 %v204, 16
      %v320 = vrot.slane %v318, 4
      %v321 = vshll.u32 %v204, 16
      %v323 = vrot.slane %v321, 5
      %v324 = vor.u32 %v320, %v323
      %v325 = vrot.slane %v324, 4
      %v327 = vshll.u32 %v228, 16
      %v329 = vrot.slane %v327, 5
      %v330 = vsel %vm232, %v325, %v329
      %v332 = vshrl.u32 %v205, 16
      %v334 = vrot.slane %v332, 4
      %v335 = vshll.u32 %v205, 16
      %v337 = vrot.slane %v335, 5
      %v338 = vor.u32 %v334, %v337
      %v339 = vrot.slane %v338, 4
      %v341 = vshll.u32 %v229, 16
      %v343 = vrot.slane %v341, 5
      %v344 = vsel %vm232, %v339, %v343
      %s345 = scalar_lea.vmem %s1, 64
      %v346 = vld [vmem:[%s345] sm:$0xf]
      %v347 = vld [vmem:[%s345 + $0x4] sm:$0xf]
      %v348 = vld [vmem:[%s345 + $0x8] sm:$0xf]
      %v349 = vld [vmem:[%s345 + $0xc] sm:$0xf]
      %v350 = vld [vmem:[%s345 + $0x10] sm:$0xf]
      %v351 = vld [vmem:[%s345 + $0x14] sm:$0xf]
      %v352 = vld [vmem:[%s345 + $0x18] sm:$0xf]
      %v353 = vld [vmem:[%s345 + $0x1c] sm:$0xf]
      %v354 = vld [vmem:[%s345 + $0x20] sm:$0xf]
      %v355 = vld [vmem:[%s345 + $0x24] sm:$0xf]
      %v356 = vld [vmem:[%s345 + $0x28] sm:$0xf]
      %v357 = vld [vmem:[%s345 + $0x2c] sm:$0xf]
      %v358 = vld [vmem:[%s345 + $0x30] sm:$0xf]
      %v359 = vld [vmem:[%s345 + $0x34] sm:$0xf]
      %v360 = vld [vmem:[%s345 + $0x38] sm:$0xf]
      %v361 = vld [vmem:[%s345 + $0x3c] sm:$0xf]
      %v362 = vunpack.c.l.b16 %v246
      %v363 = vunpack.c.l.b16 %v260
      %v364 = vunpack.c.l.b16 %v274
      %v365 = vunpack.c.l.b16 %v288
      %v366 = vunpack.c.l.b16 %v302
      %v367 = vunpack.c.l.b16 %v316
      %v368 = vunpack.c.l.b16 %v330
      %v369 = vunpack.c.l.b16 %v344
      %v370 = vpack.c.b16 %v363, %v362
      %v371 = vpack.c.b16 %v365, %v364
      %v372 = vpack.c.b16 %v367, %v366
      %v373 = vpack.c.b16 %v369, %v368
      %v394 = vunpack.c.l.b16 %v346
      %v395 = vunpack.c.l.b16 %v347
      %v396 = vunpack.c.l.b16 %v348
      %v397 = vunpack.c.l.b16 %v349
      %v398 = vunpack.c.l.b16 %v350
      %v399 = vunpack.c.l.b16 %v351
      %v400 = vunpack.c.l.b16 %v352
      %v401 = vunpack.c.l.b16 %v353
      %v402 = vunpack.c.l.b16 %v354
      %v403 = vunpack.c.l.b16 %v355
      %v404 = vunpack.c.l.b16 %v356
      %v405 = vunpack.c.l.b16 %v357
      %v406 = vunpack.c.l.b16 %v358
      %v407 = vunpack.c.l.b16 %v359
      %v408 = vunpack.c.l.b16 %v360
      %v409 = vunpack.c.l.b16 %v361
      %v410 = vpack.c.b16 %v395, %v394
      %v411 = vpack.c.b16 %v397, %v396
      %v412 = vpack.c.b16 %v399, %v398
      %v413 = vpack.c.b16 %v401, %v400
      %v414 = vpack.c.b16 %v403, %v402
      %v415 = vpack.c.b16 %v405, %v404
      %v416 = vpack.c.b16 %v407, %v406
      %v417 = vpack.c.b16 %v409, %v408
      %426 = vmatpush.bf16.msra.mxu0 %v417
      %427 = vmatpush.bf16.msra.mxu0 %v416
      %428 = vmatpush.bf16.msra.mxu0 %v415
      %429 = vmatpush.bf16.msra.mxu0 %v414
      %430 = vmatpush.bf16.msra.mxu0 %v413
      %431 = vmatpush.bf16.msra.mxu0 %v412
      %432 = vmatpush.bf16.msra.mxu0 %v411
      %433 = vmatpush.bf16.msra.mxu0 %v410
      %434 = vmatmul.bf16.gmra.mxu0 %v370
      %v435 = vpop.f32.mrf.mxu0
      %v436 = vadd.f32 0.0, %v435
      %v437 = vpop.f32.mrf.mxu0
      %v438 = vadd.f32 0.0, %v437
      %439 = vmatmul.bf16.gmra.mxu0 %v371
      %v440 = vpop.f32.mrf.mxu0
      %v441 = vadd.f32 0.0, %v440
      %v442 = vpop.f32.mrf.mxu0
      %v443 = vadd.f32 0.0, %v442
      %444 = vmatmul.bf16.gmra.mxu0 %v372
      %v445 = vpop.f32.mrf.mxu0
      %v446 = vadd.f32 0.0, %v445
      %v447 = vpop.f32.mrf.mxu0
      %v448 = vadd.f32 0.0, %v447
      %449 = vmatmul.bf16.gmra.mxu0 %v373
      %v450 = vpop.f32.mrf.mxu0
      %v451 = vadd.f32 0.0, %v450
      %v452 = vpop.f32.mrf.mxu0
      %v453 = vadd.f32 0.0, %v452
      %454 = vdwg.mxu0
      %v463 = vunpack.c.l.b16 %v198
      %v464 = vunpack.c.l.b16 %v199
      %v465 = vunpack.c.l.b16 %v200
      %v466 = vunpack.c.l.b16 %v201
      %v467 = vunpack.c.l.b16 %v202
      %v468 = vunpack.c.l.b16 %v203
      %v469 = vunpack.c.l.b16 %v204
      %v470 = vunpack.c.l.b16 %v205
      %v471 = vpack.c.b16 %v464, %v463
      %v472 = vpack.c.b16 %v466, %v465
      %v473 = vpack.c.b16 %v468, %v467
      %v474 = vpack.c.b16 %v470, %v469
      %v495 = vunpack.c.l.b16 %v206
      %v496 = vunpack.c.l.b16 %v207
      %v497 = vunpack.c.l.b16 %v208
      %v498 = vunpack.c.l.b16 %v209
      %v499 = vunpack.c.l.b16 %v210
      %v500 = vunpack.c.l.b16 %v211
      %v501 = vunpack.c.l.b16 %v212
      %v502 = vunpack.c.l.b16 %v213
      %v503 = vunpack.c.l.b16 %v214
      %v504 = vunpack.c.l.b16 %v215
      %v505 = vunpack.c.l.b16 %v216
      %v506 = vunpack.c.l.b16 %v217
      %v507 = vunpack.c.l.b16 %v218
      %v508 = vunpack.c.l.b16 %v219
      %v509 = vunpack.c.l.b16 %v220
      %v510 = vunpack.c.l.b16 %v221
      %v511 = vpack.c.b16 %v496, %v495
      %v512 = vpack.c.b16 %v498, %v497
      %v513 = vpack.c.b16 %v500, %v499
      %v514 = vpack.c.b16 %v502, %v501
      %v515 = vpack.c.b16 %v504, %v503
      %v516 = vpack.c.b16 %v506, %v505
      %v517 = vpack.c.b16 %v508, %v507
      %v518 = vpack.c.b16 %v510, %v509
      %527 = vmatpush.bf16.msra.mxu0 %v518
      %528 = vmatpush.bf16.msra.mxu0 %v517
      %529 = vmatpush.bf16.msra.mxu0 %v516
      %530 = vmatpush.bf16.msra.mxu0 %v515
      %531 = vmatpush.bf16.msra.mxu0 %v514
      %532 = vmatpush.bf16.msra.mxu0 %v513
      %533 = vmatpush.bf16.msra.mxu0 %v512
      %534 = vmatpush.bf16.msra.mxu0 %v511
      %535 = vmatmul.bf16.gmra.mxu0 %v471
      %v536 = vpop.f32.mrf.mxu0
      %v537 = vadd.f32 %v436, %v536
      %v538 = vpop.f32.mrf.mxu0
      %v539 = vadd.f32 %v438, %v538
      %540 = vmatmul.bf16.gmra.mxu0 %v472
      %v541 = vpop.f32.mrf.mxu0
      %v542 = vadd.f32 %v441, %v541
      %v543 = vpop.f32.mrf.mxu0
      %v544 = vadd.f32 %v443, %v543
      %545 = vmatmul.bf16.gmra.mxu0 %v473
      %v546 = vpop.f32.mrf.mxu0
      %v547 = vadd.f32 %v446, %v546
      %v548 = vpop.f32.mrf.mxu0
      %v549 = vadd.f32 %v448, %v548
      %550 = vmatmul.bf16.gmra.mxu0 %v474
      %v551 = vpop.f32.mrf.mxu0
      %v552 = vadd.f32 %v451, %v551
      %v553 = vpop.f32.mrf.mxu0
      %v554 = vadd.f32 %v453, %v553
      %555 = vdwg.mxu0
      %v556 = vld [vmem:[%s192] sm:$0xe]
      %v557 = vld [vmem:[%s192 + $0x8] sm:$0xe]
      %v558 = vld [vmem:[%s192 + $0x10] sm:$0xe]
      %v559 = vld [vmem:[%s192 + $0x18] sm:$0xe]
      %v560 = vld [vmem:[%s192 + $0x20] sm:$0xe]
      %v561 = vld [vmem:[%s192 + $0x28] sm:$0xe]
      %v562 = vld [vmem:[%s192 + $0x30] sm:$0xe]
      %v563 = vld [vmem:[%s192 + $0x38] sm:$0xe]
      %vm580 = vcmask 1042432
      %vm581 = vcmask 1046532
      %vm582 = vmor %vm580, %vm581
      %v583 = vrot.slane %v556, 5
      %v584 = vrot.slane %v583, 4
      %v585 = vrot.slane %v222, 5
      %v586 = vsel %vm582, %v584, %v585
      %v587 = vrot.slane %v557, 5
      %v588 = vrot.slane %v587, 4
      %v589 = vrot.slane %v223, 5
      %v590 = vsel %vm582, %v588, %v589
      %v591 = vrot.slane %v558, 5
      %v592 = vrot.slane %v591, 4
      %v593 = vrot.slane %v224, 5
      %v594 = vsel %vm582, %v592, %v593
      %v595 = vrot.slane %v559, 5
      %v596 = vrot.slane %v595, 4
      %v597 = vrot.slane %v225, 5
      %v598 = vsel %vm582, %v596, %v597
      %v599 = vrot.slane %v560, 5
      %v600 = vrot.slane %v599, 4
      %v601 = vrot.slane %v226, 5
      %v602 = vsel %vm582, %v600, %v601
      %v603 = vrot.slane %v561, 5
      %v604 = vrot.slane %v603, 4
      %v605 = vrot.slane %v227, 5
      %v606 = vsel %vm582, %v604, %v605
      %v607 = vrot.slane %v562, 5
      %v608 = vrot.slane %v607, 4
      %v609 = vrot.slane %v228, 5
      %v610 = vsel %vm582, %v608, %v609
      %v611 = vrot.slane %v563, 5
      %v612 = vrot.slane %v611, 4
      %v613 = vrot.slane %v229, 5
      %v614 = vsel %vm582, %v612, %v613
      %s615 = scalar_lea.vmem %s1, 128
      %v616 = vld [vmem:[%s615] sm:$0xf]
      %v617 = vld [vmem:[%s615 + $0x4] sm:$0xf]
      %v618 = vld [vmem:[%s615 + $0x8] sm:$0xf]
      %v619 = vld [vmem:[%s615 + $0xc] sm:$0xf]
      %v620 = vld [vmem:[%s615 + $0x10] sm:$0xf]
      %v621 = vld [vmem:[%s615 + $0x14] sm:$0xf]
      %v622 = vld [vmem:[%s615 + $0x18] sm:$0xf]
      %v623 = vld [vmem:[%s615 + $0x1c] sm:$0xf]
      %v624 = vld [vmem:[%s615 + $0x20] sm:$0xf]
      %v625 = vld [vmem:[%s615 + $0x24] sm:$0xf]
      %v626 = vld [vmem:[%s615 + $0x28] sm:$0xf]
      %v627 = vld [vmem:[%s615 + $0x2c] sm:$0xf]
      %v628 = vld [vmem:[%s615 + $0x30] sm:$0xf]
      %v629 = vld [vmem:[%s615 + $0x34] sm:$0xf]
      %v630 = vld [vmem:[%s615 + $0x38] sm:$0xf]
      %v631 = vld [vmem:[%s615 + $0x3c] sm:$0xf]
      %v632 = vunpack.c.l.b16 %v586
      %v633 = vunpack.c.l.b16 %v590
      %v634 = vunpack.c.l.b16 %v594
      %v635 = vunpack.c.l.b16 %v598
      %v636 = vunpack.c.l.b16 %v602
      %v637 = vunpack.c.l.b16 %v606
      %v638 = vunpack.c.l.b16 %v610
      %v639 = vunpack.c.l.b16 %v614
      %v640 = vpack.c.b16 %v633, %v632
      %v641 = vpack.c.b16 %v635, %v634
      %v642 = vpack.c.b16 %v637, %v636
      %v643 = vpack.c.b16 %v639, %v638
      %v664 = vunpack.c.l.b16 %v616
      %v665 = vunpack.c.l.b16 %v617
      %v666 = vunpack.c.l.b16 %v618
      %v667 = vunpack.c.l.b16 %v619
      %v668 = vunpack.c.l.b16 %v620
      %v669 = vunpack.c.l.b16 %v621
      %v670 = vunpack.c.l.b16 %v622
      %v671 = vunpack.c.l.b16 %v623
      %v672 = vunpack.c.l.b16 %v624
      %v673 = vunpack.c.l.b16 %v625
      %v674 = vunpack.c.l.b16 %v626
      %v675 = vunpack.c.l.b16 %v627
      %v676 = vunpack.c.l.b16 %v628
      %v677 = vunpack.c.l.b16 %v629
      %v678 = vunpack.c.l.b16 %v630
      %v679 = vunpack.c.l.b16 %v631
      %v680 = vpack.c.b16 %v665, %v664
      %v681 = vpack.c.b16 %v667, %v666
      %v682 = vpack.c.b16 %v669, %v668
      %v683 = vpack.c.b16 %v671, %v670
      %v684 = vpack.c.b16 %v673, %v672
      %v685 = vpack.c.b16 %v675, %v674
      %v686 = vpack.c.b16 %v677, %v676
      %v687 = vpack.c.b16 %v679, %v678
      %696 = vmatpush.bf16.msra.mxu0 %v687
      %697 = vmatpush.bf16.msra.mxu0 %v686
      %698 = vmatpush.bf16.msra.mxu0 %v685
      %699 = vmatpush.bf16.msra.mxu0 %v684
      %700 = vmatpush.bf16.msra.mxu0 %v683
      %701 = vmatpush.bf16.msra.mxu0 %v682
      %702 = vmatpush.bf16.msra.mxu0 %v681
      %703 = vmatpush.bf16.msra.mxu0 %v680
      %704 = vmatmul.bf16.gmra.mxu0 %v640
      %v705 = vpop.f32.mrf.mxu0
      %v706 = vadd.f32 0.0, %v705
      %v707 = vpop.f32.mrf.mxu0
      %v708 = vadd.f32 0.0, %v707
      %709 = vmatmul.bf16.gmra.mxu0 %v641
      %v710 = vpop.f32.mrf.mxu0
      %v711 = vadd.f32 0.0, %v710
      %v712 = vpop.f32.mrf.mxu0
      %v713 = vadd.f32 0.0, %v712
      %714 = vmatmul.bf16.gmra.mxu0 %v642
      %v715 = vpop.f32.mrf.mxu0
      %v716 = vadd.f32 0.0, %v715
      %v717 = vpop.f32.mrf.mxu0
      %v718 = vadd.f32 0.0, %v717
      %719 = vmatmul.bf16.gmra.mxu0 %v643
      %v720 = vpop.f32.mrf.mxu0
      %v721 = vadd.f32 0.0, %v720
      %v722 = vpop.f32.mrf.mxu0
      %v723 = vadd.f32 0.0, %v722
      %724 = vdwg.mxu0
      %v725 = vadd.f32 %v537, %v706
      %v726 = vadd.f32 %v539, %v708
      %v727 = vadd.f32 %v542, %v711
      %v728 = vadd.f32 %v544, %v713
      %v729 = vadd.f32 %v547, %v716
      %v730 = vadd.f32 %v549, %v718
      %v731 = vadd.f32 %v552, %v721
      %v732 = vadd.f32 %v554, %v723
      %s733 = scalar_lea.vmem %s192, 8
      %v734 = vld [vmem:[%s733] sm:$0xf]
      %v735 = vld [vmem:[%s733 + $0x8] sm:$0xf]
      %v736 = vld [vmem:[%s733 + $0x10] sm:$0xf]
      %v737 = vld [vmem:[%s733 + $0x18] sm:$0xf]
      %v738 = vld [vmem:[%s733 + $0x20] sm:$0xf]
      %v739 = vld [vmem:[%s733 + $0x28] sm:$0xf]
      %v740 = vld [vmem:[%s733 + $0x30] sm:$0xf]
      %v741 = vld [vmem:[%s733 + $0x38] sm:$0xf]
      %s742 = scalar_lea.vmem %s1, 192
      %v743 = vld [vmem:[%s742] sm:$0xf]
      %v744 = vld [vmem:[%s742 + $0x4] sm:$0xf]
      %v745 = vld [vmem:[%s742 + $0x8] sm:$0xf]
      %v746 = vld [vmem:[%s742 + $0xc] sm:$0xf]
      %v747 = vld [vmem:[%s742 + $0x10] sm:$0xf]
      %v748 = vld [vmem:[%s742 + $0x14] sm:$0xf]
      %v749 = vld [vmem:[%s742 + $0x18] sm:$0xf]
      %v750 = vld [vmem:[%s742 + $0x1c] sm:$0xf]
      %v751 = vld [vmem:[%s742 + $0x20] sm:$0xf]
      %v752 = vld [vmem:[%s742 + $0x24] sm:$0xf]
      %v753 = vld [vmem:[%s742 + $0x28] sm:$0xf]
      %v754 = vld [vmem:[%s742 + $0x2c] sm:$0xf]
      %v755 = vld [vmem:[%s742 + $0x30] sm:$0xf]
      %v756 = vld [vmem:[%s742 + $0x34] sm:$0xf]
      %v757 = vld [vmem:[%s742 + $0x38] sm:$0xf]
      %v758 = vld [vmem:[%s742 + $0x3c] sm:$0xf]
      %v767 = vunpack.c.l.b16 %v734
      %v768 = vunpack.c.l.b16 %v735
      %v769 = vunpack.c.l.b16 %v736
      %v770 = vunpack.c.l.b16 %v737
      %v771 = vunpack.c.l.b16 %v738
      %v772 = vunpack.c.l.b16 %v739
      %v773 = vunpack.c.l.b16 %v740
      %v774 = vunpack.c.l.b16 %v741
      %v775 = vpack.c.b16 %v768, %v767
      %v776 = vpack.c.b16 %v770, %v769
      %v777 = vpack.c.b16 %v772, %v771
      %v778 = vpack.c.b16 %v774, %v773
      %v799 = vunpack.c.l.b16 %v743
      %v800 = vunpack.c.l.b16 %v744
      %v801 = vunpack.c.l.b16 %v745
      %v802 = vunpack.c.l.b16 %v746
      %v803 = vunpack.c.l.b16 %v747
      %v804 = vunpack.c.l.b16 %v748
      %v805 = vunpack.c.l.b16 %v749
      %v806 = vunpack.c.l.b16 %v750
      %v807 = vunpack.c.l.b16 %v751
      %v808 = vunpack.c.l.b16 %v752
      %v809 = vunpack.c.l.b16 %v753
      %v810 = vunpack.c.l.b16 %v754
      %v811 = vunpack.c.l.b16 %v755
      %v812 = vunpack.c.l.b16 %v756
      %v813 = vunpack.c.l.b16 %v757
      %v814 = vunpack.c.l.b16 %v758
      %v815 = vpack.c.b16 %v800, %v799
      %v816 = vpack.c.b16 %v802, %v801
      %v817 = vpack.c.b16 %v804, %v803
      %v818 = vpack.c.b16 %v806, %v805
      %v819 = vpack.c.b16 %v808, %v807
      %v820 = vpack.c.b16 %v810, %v809
      %v821 = vpack.c.b16 %v812, %v811
      %v822 = vpack.c.b16 %v814, %v813
      %831 = vmatpush.bf16.msra.mxu0 %v822
      %832 = vmatpush.bf16.msra.mxu0 %v821
      %833 = vmatpush.bf16.msra.mxu0 %v820
      %834 = vmatpush.bf16.msra.mxu0 %v819
      %835 = vmatpush.bf16.msra.mxu0 %v818
      %836 = vmatpush.bf16.msra.mxu0 %v817
      %837 = vmatpush.bf16.msra.mxu0 %v816
      %838 = vmatpush.bf16.msra.mxu0 %v815
      %839 = vmatmul.bf16.gmra.mxu0 %v775
      %v840 = vpop.f32.mrf.mxu0
      %v841 = vadd.f32 0.0, %v840
      %v842 = vpop.f32.mrf.mxu0
      %v843 = vadd.f32 0.0, %v842
      %844 = vmatmul.bf16.gmra.mxu0 %v776
      %v845 = vpop.f32.mrf.mxu0
      %v846 = vadd.f32 0.0, %v845
      %v847 = vpop.f32.mrf.mxu0
      %v848 = vadd.f32 0.0, %v847
      %849 = vmatmul.bf16.gmra.mxu0 %v777
      %v850 = vpop.f32.mrf.mxu0
      %v851 = vadd.f32 0.0, %v850
      %v852 = vpop.f32.mrf.mxu0
      %v853 = vadd.f32 0.0, %v852
      %854 = vmatmul.bf16.gmra.mxu0 %v778
      %v855 = vpop.f32.mrf.mxu0
      %v856 = vadd.f32 0.0, %v855
      %v857 = vpop.f32.mrf.mxu0
      %v858 = vadd.f32 0.0, %v857
      %859 = vdwg.mxu0
      %v860 = vadd.f32 %v725, %v841
      %v861 = vadd.f32 %v726, %v843
      %v862 = vadd.f32 %v727, %v846
      %v863 = vadd.f32 %v728, %v848
      %v864 = vadd.f32 %v729, %v851
      %v865 = vadd.f32 %v730, %v853
      %v866 = vadd.f32 %v731, %v856
      %v867 = vadd.f32 %v732, %v858
      %v868 = vld [vmem:[%s733] sm:$0xf]
      %v869 = vld [vmem:[%s733 + $0x4] sm:$0x1]
      %v870 = vld [vmem:[%s733 + $0x8] sm:$0xf]
      %v871 = vld [vmem:[%s733 + $0xc] sm:$0x1]
      %v872 = vld [vmem:[%s733 + $0x10] sm:$0xf]
      %v873 = vld [vmem:[%s733 + $0x14] sm:$0x1]
      %v874 = vld [vmem:[%s733 + $0x18] sm:$0xf]
      %v875 = vld [vmem:[%s733 + $0x1c] sm:$0x1]
      %v876 = vld [vmem:[%s733 + $0x20] sm:$0xf]
      %v877 = vld [vmem:[%s733 + $0x24] sm:$0x1]
      %v878 = vld [vmem:[%s733 + $0x28] sm:$0xf]
      %v879 = vld [vmem:[%s733 + $0x2c] sm:$0x1]
      %v880 = vld [vmem:[%s733 + $0x30] sm:$0xf]
      %v881 = vld [vmem:[%s733 + $0x34] sm:$0x1]
      %v882 = vld [vmem:[%s733 + $0x38] sm:$0xf]
      %v883 = vld [vmem:[%s733 + $0x3c] sm:$0x1]
      %v885 = vshrl.u32 %v868, 16
      %v887 = vrot.slane %v885, 4
      %v888 = vshll.u32 %v868, 16
      %v890 = vrot.slane %v888, 5
      %v891 = vor.u32 %v887, %v890
      %v892 = vrot.slane %v891, 4
      %v894 = vshll.u32 %v869, 16
      %v896 = vrot.slane %v894, 5
      %v897 = vsel %vm232, %v892, %v896
      %v899 = vshrl.u32 %v870, 16
      %v901 = vrot.slane %v899, 4
      %v902 = vshll.u32 %v870, 16
      %v904 = vrot.slane %v902, 5
      %v905 = vor.u32 %v901, %v904
      %v906 = vrot.slane %v905, 4
      %v908 = vshll.u32 %v871, 16
      %v910 = vrot.slane %v908, 5
      %v911 = vsel %vm232, %v906, %v910
      %v913 = vshrl.u32 %v872, 16
      %v915 = vrot.slane %v913, 4
      %v916 = vshll.u32 %v872, 16
      %v918 = vrot.slane %v916, 5
      %v919 = vor.u32 %v915, %v918
      %v920 = vrot.slane %v919, 4
      %v922 = vshll.u32 %v873, 16
      %v924 = vrot.slane %v922, 5
      %v925 = vsel %vm232, %v920, %v924
      %v927 = vshrl.u32 %v874, 16
      %v929 = vrot.slane %v927, 4
      %v930 = vshll.u32 %v874, 16
      %v932 = vrot.slane %v930, 5
      %v933 = vor.u32 %v929, %v932
      %v934 = vrot.slane %v933, 4
      %v936 = vshll.u32 %v875, 16
      %v938 = vrot.slane %v936, 5
      %v939 = vsel %vm232, %v934, %v938
      %v941 = vshrl.u32 %v876, 16
      %v943 = vrot.slane %v941, 4
      %v944 = vshll.u32 %v876, 16
      %v946 = vrot.slane %v944, 5
      %v947 = vor.u32 %v943, %v946
      %v948 = vrot.slane %v947, 4
      %v950 = vshll.u32 %v877, 16
      %v952 = vrot.slane %v950, 5
      %v953 = vsel %vm232, %v948, %v952
      %v955 = vshrl.u32 %v878, 16
      %v957 = vrot.slane %v955, 4
      %v958 = vshll.u32 %v878, 16
      %v960 = vrot.slane %v958, 5
      %v961 = vor.u32 %v957, %v960
      %v962 = vrot.slane %v961, 4
      %v964 = vshll.u32 %v879, 16
      %v966 = vrot.slane %v964, 5
      %v967 = vsel %vm232, %v962, %v966
      %v969 = vshrl.u32 %v880, 16
      %v971 = vrot.slane %v969, 4
      %v972 = vshll.u32 %v880, 16
      %v974 = vrot.slane %v972, 5
      %v975 = vor.u32 %v971, %v974
      %v976 = vrot.slane %v975, 4
      %v978 = vshll.u32 %v881, 16
      %v980 = vrot.slane %v978, 5
      %v981 = vsel %vm232, %v976, %v980
      %v983 = vshrl.u32 %v882, 16
      %v985 = vrot.slane %v983, 4
      %v986 = vshll.u32 %v882, 16
      %v988 = vrot.slane %v986, 5
      %v989 = vor.u32 %v985, %v988
      %v990 = vrot.slane %v989, 4
      %v992 = vshll.u32 %v883, 16
      %v994 = vrot.slane %v992, 5
      %v995 = vsel %vm232, %v990, %v994
      %s996 = scalar_lea.vmem %s1, 256
      %v997 = vld [vmem:[%s996] sm:$0xf]
      %v998 = vld [vmem:[%s996 + $0x4] sm:$0xf]
      %v999 = vld [vmem:[%s996 + $0x8] sm:$0xf]
      %v1000 = vld [vmem:[%s996 + $0xc] sm:$0xf]
      %v1001 = vld [vmem:[%s996 + $0x10] sm:$0xf]
      %v1002 = vld [vmem:[%s996 + $0x14] sm:$0xf]
      %v1003 = vld [vmem:[%s996 + $0x18] sm:$0xf]
      %v1004 = vld [vmem:[%s996 + $0x1c] sm:$0xf]
      %v1005 = vld [vmem:[%s996 + $0x20] sm:$0xf]
      %v1006 = vld [vmem:[%s996 + $0x24] sm:$0xf]
      %v1007 = vld [vmem:[%s996 + $0x28] sm:$0xf]
      %v1008 = vld [vmem:[%s996 + $0x2c] sm:$0xf]
      %v1009 = vld [vmem:[%s996 + $0x30] sm:$0xf]
      %v1010 = vld [vmem:[%s996 + $0x34] sm:$0xf]
      %v1011 = vld [vmem:[%s996 + $0x38] sm:$0xf]
      %v1012 = vld [vmem:[%s996 + $0x3c] sm:$0xf]
      %v1013 = vunpack.c.l.b16 %v897
      %v1014 = vunpack.c.l.b16 %v911
      %v1015 = vunpack.c.l.b16 %v925
      %v1016 = vunpack.c.l.b16 %v939
      %v1017 = vunpack.c.l.b16 %v953
      %v1018 = vunpack.c.l.b16 %v967
      %v1019 = vunpack.c.l.b16 %v981
      %v1020 = vunpack.c.l.b16 %v995
      %v1021 = vpack.c.b16 %v1014, %v1013
      %v1022 = vpack.c.b16 %v1016, %v1015
      %v1023 = vpack.c.b16 %v1018, %v1017
      %v1024 = vpack.c.b16 %v1020, %v1019
      %v1045 = vunpack.c.l.b16 %v997
      %v1046 = vunpack.c.l.b16 %v998
      %v1047 = vunpack.c.l.b16 %v999
      %v1048 = vunpack.c.l.b16 %v1000
      %v1049 = vunpack.c.l.b16 %v1001
      %v1050 = vunpack.c.l.b16 %v1002
      %v1051 = vunpack.c.l.b16 %v1003
      %v1052 = vunpack.c.l.b16 %v1004
      %v1053 = vunpack.c.l.b16 %v1005
      %v1054 = vunpack.c.l.b16 %v1006
      %v1055 = vunpack.c.l.b16 %v1007
      %v1056 = vunpack.c.l.b16 %v1008
      %v1057 = vunpack.c.l.b16 %v1009
      %v1058 = vunpack.c.l.b16 %v1010
      %v1059 = vunpack.c.l.b16 %v1011
      %v1060 = vunpack.c.l.b16 %v1012
      %v1061 = vpack.c.b16 %v1046, %v1045
      %v1062 = vpack.c.b16 %v1048, %v1047
      %v1063 = vpack.c.b16 %v1050, %v1049
      %v1064 = vpack.c.b16 %v1052, %v1051
      %v1065 = vpack.c.b16 %v1054, %v1053
      %v1066 = vpack.c.b16 %v1056, %v1055
      %v1067 = vpack.c.b16 %v1058, %v1057
      %v1068 = vpack.c.b16 %v1060, %v1059
      %1077 = vmatpush.bf16.msra.mxu0 %v1068
      %1078 = vmatpush.bf16.msra.mxu0 %v1067
      %1079 = vmatpush.bf16.msra.mxu0 %v1066
      %1080 = vmatpush.bf16.msra.mxu0 %v1065
      %1081 = vmatpush.bf16.msra.mxu0 %v1064
      %1082 = vmatpush.bf16.msra.mxu0 %v1063
      %1083 = vmatpush.bf16.msra.mxu0 %v1062
      %1084 = vmatpush.bf16.msra.mxu0 %v1061
      %1085 = vmatmul.bf16.gmra.mxu0 %v1021
      %v1086 = vpop.f32.mrf.mxu0
      %v1087 = vadd.f32 0.0, %v1086
      %v1088 = vpop.f32.mrf.mxu0
      %v1089 = vadd.f32 0.0, %v1088
      %1090 = vmatmul.bf16.gmra.mxu0 %v1022
      %v1091 = vpop.f32.mrf.mxu0
      %v1092 = vadd.f32 0.0, %v1091
      %v1093 = vpop.f32.mrf.mxu0
      %v1094 = vadd.f32 0.0, %v1093
      %1095 = vmatmul.bf16.gmra.mxu0 %v1023
      %v1096 = vpop.f32.mrf.mxu0
      %v1097 = vadd.f32 0.0, %v1096
      %v1098 = vpop.f32.mrf.mxu0
      %v1099 = vadd.f32 0.0, %v1098
      %1100 = vmatmul.bf16.gmra.mxu0 %v1024
      %v1101 = vpop.f32.mrf.mxu0
      %v1102 = vadd.f32 0.0, %v1101
      %v1103 = vpop.f32.mrf.mxu0
      %v1104 = vadd.f32 0.0, %v1103
      %1105 = vdwg.mxu0
      %v1106 = vadd.f32 %v860, %v1087
      %v1107 = vadd.f32 %v861, %v1089
      %v1108 = vadd.f32 %v862, %v1092
      %v1109 = vadd.f32 %v863, %v1094
      %v1110 = vadd.f32 %v864, %v1097
      %v1111 = vadd.f32 %v865, %v1099
      %v1112 = vadd.f32 %v866, %v1102
      %v1113 = vadd.f32 %v867, %v1104
      %v1114 = vld [vmem:[%s733] sm:$0xe]
      %v1115 = vld [vmem:[%s733 + $0x8] sm:$0xe]
      %v1116 = vld [vmem:[%s733 + $0x10] sm:$0xe]
      %v1117 = vld [vmem:[%s733 + $0x18] sm:$0xe]
      %v1118 = vld [vmem:[%s733 + $0x20] sm:$0xe]
      %v1119 = vld [vmem:[%s733 + $0x28] sm:$0xe]
      %v1120 = vld [vmem:[%s733 + $0x30] sm:$0xe]
      %v1121 = vld [vmem:[%s733 + $0x38] sm:$0xe]
      %v1138 = vrot.slane %v1114, 5
      %v1139 = vrot.slane %v1138, 4
      %v1140 = vrot.slane %v869, 5
      %v1141 = vsel %vm582, %v1139, %v1140
      %v1142 = vrot.slane %v1115, 5
      %v1143 = vrot.slane %v1142, 4
      %v1144 = vrot.slane %v871, 5
      %v1145 = vsel %vm582, %v1143, %v1144
      %v1146 = vrot.slane %v1116, 5
      %v1147 = vrot.slane %v1146, 4
      %v1148 = vrot.slane %v873, 5
      %v1149 = vsel %vm582, %v1147, %v1148
      %v1150 = vrot.slane %v1117, 5
      %v1151 = vrot.slane %v1150, 4
      %v1152 = vrot.slane %v875, 5
      %v1153 = vsel %vm582, %v1151, %v1152
      %v1154 = vrot.slane %v1118, 5
      %v1155 = vrot.slane %v1154, 4
      %v1156 = vrot.slane %v877, 5
      %v1157 = vsel %vm582, %v1155, %v1156
      %v1158 = vrot.slane %v1119, 5
      %v1159 = vrot.slane %v1158, 4
      %v1160 = vrot.slane %v879, 5
      %v1161 = vsel %vm582, %v1159, %v1160
      %v1162 = vrot.slane %v1120, 5
      %v1163 = vrot.slane %v1162, 4
      %v1164 = vrot.slane %v881, 5
      %v1165 = vsel %vm582, %v1163, %v1164
      %v1166 = vrot.slane %v1121, 5
      %v1167 = vrot.slane %v1166, 4
      %v1168 = vrot.slane %v883, 5
      %v1169 = vsel %vm582, %v1167, %v1168
      %s1170 = scalar_lea.vmem %s1, 320
      %v1171 = vld [vmem:[%s1170] sm:$0xf]
      %v1172 = vld [vmem:[%s1170 + $0x4] sm:$0xf]
      %v1173 = vld [vmem:[%s1170 + $0x8] sm:$0xf]
      %v1174 = vld [vmem:[%s1170 + $0xc] sm:$0xf]
      %v1175 = vld [vmem:[%s1170 + $0x10] sm:$0xf]
      %v1176 = vld [vmem:[%s1170 + $0x14] sm:$0xf]
      %v1177 = vld [vmem:[%s1170 + $0x18] sm:$0xf]
      %v1178 = vld [vmem:[%s1170 + $0x1c] sm:$0xf]
      %v1179 = vld [vmem:[%s1170 + $0x20] sm:$0xf]
      %v1180 = vld [vmem:[%s1170 + $0x24] sm:$0xf]
      %v1181 = vld [vmem:[%s1170 + $0x28] sm:$0xf]
      %v1182 = vld [vmem:[%s1170 + $0x2c] sm:$0xf]
      %v1183 = vld [vmem:[%s1170 + $0x30] sm:$0xf]
      %v1184 = vld [vmem:[%s1170 + $0x34] sm:$0xf]
      %v1185 = vld [vmem:[%s1170 + $0x38] sm:$0xf]
      %v1186 = vld [vmem:[%s1170 + $0x3c] sm:$0xf]
      %v1187 = vunpack.c.l.b16 %v1141
      %v1188 = vunpack.c.l.b16 %v1145
      %v1189 = vunpack.c.l.b16 %v1149
      %v1190 = vunpack.c.l.b16 %v1153
      %v1191 = vunpack.c.l.b16 %v1157
      %v1192 = vunpack.c.l.b16 %v1161
      %v1193 = vunpack.c.l.b16 %v1165
      %v1194 = vunpack.c.l.b16 %v1169
      %v1195 = vpack.c.b16 %v1188, %v1187
      %v1196 = vpack.c.b16 %v1190, %v1189
      %v1197 = vpack.c.b16 %v1192, %v1191
      %v1198 = vpack.c.b16 %v1194, %v1193
      %v1219 = vunpack.c.l.b16 %v1171
      %v1220 = vunpack.c.l.b16 %v1172
      %v1221 = vunpack.c.l.b16 %v1173
      %v1222 = vunpack.c.l.b16 %v1174
      %v1223 = vunpack.c.l.b16 %v1175
      %v1224 = vunpack.c.l.b16 %v1176
      %v1225 = vunpack.c.l.b16 %v1177
      %v1226 = vunpack.c.l.b16 %v1178
      %v1227 = vunpack.c.l.b16 %v1179
      %v1228 = vunpack.c.l.b16 %v1180
      %v1229 = vunpack.c.l.b16 %v1181
      %v1230 = vunpack.c.l.b16 %v1182
      %v1231 = vunpack.c.l.b16 %v1183
      %v1232 = vunpack.c.l.b16 %v1184
      %v1233 = vunpack.c.l.b16 %v1185
      %v1234 = vunpack.c.l.b16 %v1186
      %v1235 = vpack.c.b16 %v1220, %v1219
      %v1236 = vpack.c.b16 %v1222, %v1221
      %v1237 = vpack.c.b16 %v1224, %v1223
      %v1238 = vpack.c.b16 %v1226, %v1225
      %v1239 = vpack.c.b16 %v1228, %v1227
      %v1240 = vpack.c.b16 %v1230, %v1229
      %v1241 = vpack.c.b16 %v1232, %v1231
      %v1242 = vpack.c.b16 %v1234, %v1233
      %1251 = vmatpush.bf16.msra.mxu0 %v1242
      %1252 = vmatpush.bf16.msra.mxu0 %v1241
      %1253 = vmatpush.bf16.msra.mxu0 %v1240
      %1254 = vmatpush.bf16.msra.mxu0 %v1239
      %1255 = vmatpush.bf16.msra.mxu0 %v1238
      %1256 = vmatpush.bf16.msra.mxu0 %v1237
      %1257 = vmatpush.bf16.msra.mxu0 %v1236
      %1258 = vmatpush.bf16.msra.mxu0 %v1235
      %1259 = vmatmul.bf16.gmra.mxu0 %v1195
      %v1260 = vpop.f32.mrf.mxu0
      %v1261 = vadd.f32 0.0, %v1260
      %v1262 = vpop.f32.mrf.mxu0
      %v1263 = vadd.f32 0.0, %v1262
      %1264 = vmatmul.bf16.gmra.mxu0 %v1196
      %v1265 = vpop.f32.mrf.mxu0
      %v1266 = vadd.f32 0.0, %v1265
      %v1267 = vpop.f32.mrf.mxu0
      %v1268 = vadd.f32 0.0, %v1267
      %1269 = vmatmul.bf16.gmra.mxu0 %v1197
      %v1270 = vpop.f32.mrf.mxu0
      %v1271 = vadd.f32 0.0, %v1270
      %v1272 = vpop.f32.mrf.mxu0
      %v1273 = vadd.f32 0.0, %v1272
      %1274 = vmatmul.bf16.gmra.mxu0 %v1198
      %v1275 = vpop.f32.mrf.mxu0
      %v1276 = vadd.f32 0.0, %v1275
      %v1277 = vpop.f32.mrf.mxu0
      %v1278 = vadd.f32 0.0, %v1277
      %1279 = vdwg.mxu0
      %v1280 = vadd.f32 %v1106, %v1261
      %v1281 = vadd.f32 %v1107, %v1263
      %v1282 = vadd.f32 %v1108, %v1266
      %v1283 = vadd.f32 %v1109, %v1268
      %v1284 = vadd.f32 %v1110, %v1271
      %v1285 = vadd.f32 %v1111, %v1273
      %v1286 = vadd.f32 %v1112, %v1276
      %v1287 = vadd.f32 %v1113, %v1278
      %s1288 = scalar_lea.vmem %s192, 16
      %v1289 = vld [vmem:[%s1288] sm:$0xf]
      %v1290 = vld [vmem:[%s1288 + $0x8] sm:$0xf]
      %v1291 = vld [vmem:[%s1288 + $0x10] sm:$0xf]
      %v1292 = vld [vmem:[%s1288 + $0x18] sm:$0xf]
      %v1293 = vld [vmem:[%s1288 + $0x20] sm:$0xf]
      %v1294 = vld [vmem:[%s1288 + $0x28] sm:$0xf]
      %v1295 = vld [vmem:[%s1288 + $0x30] sm:$0xf]
      %v1296 = vld [vmem:[%s1288 + $0x38] sm:$0xf]
      %s1297 = scalar_lea.vmem %s1, 384
      %v1298 = vld [vmem:[%s1297] sm:$0xf]
      %v1299 = vld [vmem:[%s1297 + $0x4] sm:$0xf]
      %v1300 = vld [vmem:[%s1297 + $0x8] sm:$0xf]
      %v1301 = vld [vmem:[%s1297 + $0xc] sm:$0xf]
      %v1302 = vld [vmem:[%s1297 + $0x10] sm:$0xf]
      %v1303 = vld [vmem:[%s1297 + $0x14] sm:$0xf]
      %v1304 = vld [vmem:[%s1297 + $0x18] sm:$0xf]
      %v1305 = vld [vmem:[%s1297 + $0x1c] sm:$0xf]
      %v1306 = vld [vmem:[%s1297 + $0x20] sm:$0xf]
      %v1307 = vld [vmem:[%s1297 + $0x24] sm:$0xf]
      %v1308 = vld [vmem:[%s1297 + $0x28] sm:$0xf]
      %v1309 = vld [vmem:[%s1297 + $0x2c] sm:$0xf]
      %v1310 = vld [vmem:[%s1297 + $0x30] sm:$0xf]
      %v1311 = vld [vmem:[%s1297 + $0x34] sm:$0xf]
      %v1312 = vld [vmem:[%s1297 + $0x38] sm:$0xf]
      %v1313 = vld [vmem:[%s1297 + $0x3c] sm:$0xf]
      %v1322 = vunpack.c.l.b16 %v1289
      %v1323 = vunpack.c.l.b16 %v1290
      %v1324 = vunpack.c.l.b16 %v1291
      %v1325 = vunpack.c.l.b16 %v1292
      %v1326 = vunpack.c.l.b16 %v1293
      %v1327 = vunpack.c.l.b16 %v1294
      %v1328 = vunpack.c.l.b16 %v1295
      %v1329 = vunpack.c.l.b16 %v1296
      %v1330 = vpack.c.b16 %v1323, %v1322
      %v1331 = vpack.c.b16 %v1325, %v1324
      %v1332 = vpack.c.b16 %v1327, %v1326
      %v1333 = vpack.c.b16 %v1329, %v1328
      %v1354 = vunpack.c.l.b16 %v1298
      %v1355 = vunpack.c.l.b16 %v1299
      %v1356 = vunpack.c.l.b16 %v1300
      %v1357 = vunpack.c.l.b16 %v1301
      %v1358 = vunpack.c.l.b16 %v1302
      %v1359 = vunpack.c.l.b16 %v1303
      %v1360 = vunpack.c.l.b16 %v1304
      %v1361 = vunpack.c.l.b16 %v1305
      %v1362 = vunpack.c.l.b16 %v1306
      %v1363 = vunpack.c.l.b16 %v1307
      %v1364 = vunpack.c.l.b16 %v1308
      %v1365 = vunpack.c.l.b16 %v1309
      %v1366 = vunpack.c.l.b16 %v1310
      %v1367 = vunpack.c.l.b16 %v1311
      %v1368 = vunpack.c.l.b16 %v1312
      %v1369 = vunpack.c.l.b16 %v1313
      %v1370 = vpack.c.b16 %v1355, %v1354
      %v1371 = vpack.c.b16 %v1357, %v1356
      %v1372 = vpack.c.b16 %v1359, %v1358
      %v1373 = vpack.c.b16 %v1361, %v1360
      %v1374 = vpack.c.b16 %v1363, %v1362
      %v1375 = vpack.c.b16 %v1365, %v1364
      %v1376 = vpack.c.b16 %v1367, %v1366
      %v1377 = vpack.c.b16 %v1369, %v1368
      %1386 = vmatpush.bf16.msra.mxu0 %v1377
      %1387 = vmatpush.bf16.msra.mxu0 %v1376
      %1388 = vmatpush.bf16.msra.mxu0 %v1375
      %1389 = vmatpush.bf16.msra.mxu0 %v1374
      %1390 = vmatpush.bf16.msra.mxu0 %v1373
      %1391 = vmatpush.bf16.msra.mxu0 %v1372
      %1392 = vmatpush.bf16.msra.mxu0 %v1371
      %1393 = vmatpush.bf16.msra.mxu0 %v1370
      %1394 = vmatmul.bf16.gmra.mxu0 %v1330
      %v1395 = vpop.f32.mrf.mxu0
      %v1396 = vadd.f32 0.0, %v1395
      %v1397 = vpop.f32.mrf.mxu0
      %v1398 = vadd.f32 0.0, %v1397
      %1399 = vmatmul.bf16.gmra.mxu0 %v1331
      %v1400 = vpop.f32.mrf.mxu0
      %v1401 = vadd.f32 0.0, %v1400
      %v1402 = vpop.f32.mrf.mxu0
      %v1403 = vadd.f32 0.0, %v1402
      %1404 = vmatmul.bf16.gmra.mxu0 %v1332
      %v1405 = vpop.f32.mrf.mxu0
      %v1406 = vadd.f32 0.0, %v1405
      %v1407 = vpop.f32.mrf.mxu0
      %v1408 = vadd.f32 0.0, %v1407
      %1409 = vmatmul.bf16.gmra.mxu0 %v1333
      %v1410 = vpop.f32.mrf.mxu0
      %v1411 = vadd.f32 0.0, %v1410
      %v1412 = vpop.f32.mrf.mxu0
      %v1413 = vadd.f32 0.0, %v1412
      %1414 = vdwg.mxu0
      %v1415 = vadd.f32 %v1280, %v1396
      %v1416 = vadd.f32 %v1281, %v1398
      %v1417 = vadd.f32 %v1282, %v1401
      %v1418 = vadd.f32 %v1283, %v1403
      %v1419 = vadd.f32 %v1284, %v1406
      %v1420 = vadd.f32 %v1285, %v1408
      %v1421 = vadd.f32 %v1286, %v1411
      %v1422 = vadd.f32 %v1287, %v1413
      %v1423 = vld [vmem:[%s1288] sm:$0xf]
      %v1424 = vld [vmem:[%s1288 + $0x4] sm:$0x1]
      %v1425 = vld [vmem:[%s1288 + $0x8] sm:$0xf]
      %v1426 = vld [vmem:[%s1288 + $0xc] sm:$0x1]
      %v1427 = vld [vmem:[%s1288 + $0x10] sm:$0xf]
      %v1428 = vld [vmem:[%s1288 + $0x14] sm:$0x1]
      %v1429 = vld [vmem:[%s1288 + $0x18] sm:$0xf]
      %v1430 = vld [vmem:[%s1288 + $0x1c] sm:$0x1]
      %v1431 = vld [vmem:[%s1288 + $0x20] sm:$0xf]
      %v1432 = vld [vmem:[%s1288 + $0x24] sm:$0x1]
      %v1433 = vld [vmem:[%s1288 + $0x28] sm:$0xf]
      %v1434 = vld [vmem:[%s1288 + $0x2c] sm:$0x1]
      %v1435 = vld [vmem:[%s1288 + $0x30] sm:$0xf]
      %v1436 = vld [vmem:[%s1288 + $0x34] sm:$0x1]
      %v1437 = vld [vmem:[%s1288 + $0x38] sm:$0xf]
      %v1438 = vld [vmem:[%s1288 + $0x3c] sm:$0x1]
      %v1440 = vshrl.u32 %v1423, 16
      %v1442 = vrot.slane %v1440, 4
      %v1443 = vshll.u32 %v1423, 16
      %v1445 = vrot.slane %v1443, 5
      %v1446 = vor.u32 %v1442, %v1445
      %v1447 = vrot.slane %v1446, 4
      %v1449 = vshll.u32 %v1424, 16
      %v1451 = vrot.slane %v1449, 5
      %v1452 = vsel %vm232, %v1447, %v1451
      %v1454 = vshrl.u32 %v1425, 16
      %v1456 = vrot.slane %v1454, 4
      %v1457 = vshll.u32 %v1425, 16
      %v1459 = vrot.slane %v1457, 5
      %v1460 = vor.u32 %v1456, %v1459
      %v1461 = vrot.slane %v1460, 4
      %v1463 = vshll.u32 %v1426, 16
      %v1465 = vrot.slane %v1463, 5
      %v1466 = vsel %vm232, %v1461, %v1465
      %v1468 = vshrl.u32 %v1427, 16
      %v1470 = vrot.slane %v1468, 4
      %v1471 = vshll.u32 %v1427, 16
      %v1473 = vrot.slane %v1471, 5
      %v1474 = vor.u32 %v1470, %v1473
      %v1475 = vrot.slane %v1474, 4
      %v1477 = vshll.u32 %v1428, 16
      %v1479 = vrot.slane %v1477, 5
      %v1480 = vsel %vm232, %v1475, %v1479
      %v1482 = vshrl.u32 %v1429, 16
      %v1484 = vrot.slane %v1482, 4
      %v1485 = vshll.u32 %v1429, 16
      %v1487 = vrot.slane %v1485, 5
      %v1488 = vor.u32 %v1484, %v1487
      %v1489 = vrot.slane %v1488, 4
      %v1491 = vshll.u32 %v1430, 16
      %v1493 = vrot.slane %v1491, 5
      %v1494 = vsel %vm232, %v1489, %v1493
      %v1496 = vshrl.u32 %v1431, 16
      %v1498 = vrot.slane %v1496, 4
      %v1499 = vshll.u32 %v1431, 16
      %v1501 = vrot.slane %v1499, 5
      %v1502 = vor.u32 %v1498, %v1501
      %v1503 = vrot.slane %v1502, 4
      %v1505 = vshll.u32 %v1432, 16
      %v1507 = vrot.slane %v1505, 5
      %v1508 = vsel %vm232, %v1503, %v1507
      %v1510 = vshrl.u32 %v1433, 16
      %v1512 = vrot.slane %v1510, 4
      %v1513 = vshll.u32 %v1433, 16
      %v1515 = vrot.slane %v1513, 5
      %v1516 = vor.u32 %v1512, %v1515
      %v1517 = vrot.slane %v1516, 4
      %v1519 = vshll.u32 %v1434, 16
      %v1521 = vrot.slane %v1519, 5
      %v1522 = vsel %vm232, %v1517, %v1521
      %v1524 = vshrl.u32 %v1435, 16
      %v1526 = vrot.slane %v1524, 4
      %v1527 = vshll.u32 %v1435, 16
      %v1529 = vrot.slane %v1527, 5
      %v1530 = vor.u32 %v1526, %v1529
      %v1531 = vrot.slane %v1530, 4
      %v1533 = vshll.u32 %v1436, 16
      %v1535 = vrot.slane %v1533, 5
      %v1536 = vsel %vm232, %v1531, %v1535
      %v1538 = vshrl.u32 %v1437, 16
      %v1540 = vrot.slane %v1538, 4
      %v1541 = vshll.u32 %v1437, 16
      %v1543 = vrot.slane %v1541, 5
      %v1544 = vor.u32 %v1540, %v1543
      %v1545 = vrot.slane %v1544, 4
      %v1547 = vshll.u32 %v1438, 16
      %v1549 = vrot.slane %v1547, 5
      %v1550 = vsel %vm232, %v1545, %v1549
      %s1551 = scalar_lea.vmem %s1, 448
      %v1552 = vld [vmem:[%s1551] sm:$0xf]
      %v1553 = vld [vmem:[%s1551 + $0x4] sm:$0xf]
      %v1554 = vld [vmem:[%s1551 + $0x8] sm:$0xf]
      %v1555 = vld [vmem:[%s1551 + $0xc] sm:$0xf]
      %v1556 = vld [vmem:[%s1551 + $0x10] sm:$0xf]
      %v1557 = vld [vmem:[%s1551 + $0x14] sm:$0xf]
      %v1558 = vld [vmem:[%s1551 + $0x18] sm:$0xf]
      %v1559 = vld [vmem:[%s1551 + $0x1c] sm:$0xf]
      %v1560 = vld [vmem:[%s1551 + $0x20] sm:$0xf]
      %v1561 = vld [vmem:[%s1551 + $0x24] sm:$0xf]
      %v1562 = vld [vmem:[%s1551 + $0x28] sm:$0xf]
      %v1563 = vld [vmem:[%s1551 + $0x2c] sm:$0xf]
      %v1564 = vld [vmem:[%s1551 + $0x30] sm:$0xf]
      %v1565 = vld [vmem:[%s1551 + $0x34] sm:$0xf]
      %v1566 = vld [vmem:[%s1551 + $0x38] sm:$0xf]
      %v1567 = vld [vmem:[%s1551 + $0x3c] sm:$0xf]
      %v1568 = vunpack.c.l.b16 %v1452
      %v1569 = vunpack.c.l.b16 %v1466
      %v1570 = vunpack.c.l.b16 %v1480
      %v1571 = vunpack.c.l.b16 %v1494
      %v1572 = vunpack.c.l.b16 %v1508
      %v1573 = vunpack.c.l.b16 %v1522
      %v1574 = vunpack.c.l.b16 %v1536
      %v1575 = vunpack.c.l.b16 %v1550
      %v1576 = vpack.c.b16 %v1569, %v1568
      %v1577 = vpack.c.b16 %v1571, %v1570
      %v1578 = vpack.c.b16 %v1573, %v1572
      %v1579 = vpack.c.b16 %v1575, %v1574
      %v1600 = vunpack.c.l.b16 %v1552
      %v1601 = vunpack.c.l.b16 %v1553
      %v1602 = vunpack.c.l.b16 %v1554
      %v1603 = vunpack.c.l.b16 %v1555
      %v1604 = vunpack.c.l.b16 %v1556
      %v1605 = vunpack.c.l.b16 %v1557
      %v1606 = vunpack.c.l.b16 %v1558
      %v1607 = vunpack.c.l.b16 %v1559
      %v1608 = vunpack.c.l.b16 %v1560
      %v1609 = vunpack.c.l.b16 %v1561
      %v1610 = vunpack.c.l.b16 %v1562
      %v1611 = vunpack.c.l.b16 %v1563
      %v1612 = vunpack.c.l.b16 %v1564
      %v1613 = vunpack.c.l.b16 %v1565
      %v1614 = vunpack.c.l.b16 %v1566
      %v1615 = vunpack.c.l.b16 %v1567
      %v1616 = vpack.c.b16 %v1601, %v1600
      %v1617 = vpack.c.b16 %v1603, %v1602
      %v1618 = vpack.c.b16 %v1605, %v1604
      %v1619 = vpack.c.b16 %v1607, %v1606
      %v1620 = vpack.c.b16 %v1609, %v1608
      %v1621 = vpack.c.b16 %v1611, %v1610
      %v1622 = vpack.c.b16 %v1613, %v1612
      %v1623 = vpack.c.b16 %v1615, %v1614
      %1632 = vmatpush.bf16.msra.mxu0 %v1623
      %1633 = vmatpush.bf16.msra.mxu0 %v1622
      %1634 = vmatpush.bf16.msra.mxu0 %v1621
      %1635 = vmatpush.bf16.msra.mxu0 %v1620
      %1636 = vmatpush.bf16.msra.mxu0 %v1619
      %1637 = vmatpush.bf16.msra.mxu0 %v1618
      %1638 = vmatpush.bf16.msra.mxu0 %v1617
      %1639 = vmatpush.bf16.msra.mxu0 %v1616
      %1640 = vmatmul.bf16.gmra.mxu0 %v1576
      %v1641 = vpop.f32.mrf.mxu0
      %v1642 = vadd.f32 0.0, %v1641
      %v1643 = vpop.f32.mrf.mxu0
      %v1644 = vadd.f32 0.0, %v1643
      %1645 = vmatmul.bf16.gmra.mxu0 %v1577
      %v1646 = vpop.f32.mrf.mxu0
      %v1647 = vadd.f32 0.0, %v1646
      %v1648 = vpop.f32.mrf.mxu0
      %v1649 = vadd.f32 0.0, %v1648
      %1650 = vmatmul.bf16.gmra.mxu0 %v1578
      %v1651 = vpop.f32.mrf.mxu0
      %v1652 = vadd.f32 0.0, %v1651
      %v1653 = vpop.f32.mrf.mxu0
      %v1654 = vadd.f32 0.0, %v1653
      %1655 = vmatmul.bf16.gmra.mxu0 %v1579
      %v1656 = vpop.f32.mrf.mxu0
      %v1657 = vadd.f32 0.0, %v1656
      %v1658 = vpop.f32.mrf.mxu0
      %v1659 = vadd.f32 0.0, %v1658
      %1660 = vdwg.mxu0
      %v1661 = vadd.f32 %v1415, %v1642
      %v1662 = vadd.f32 %v1416, %v1644
      %v1663 = vadd.f32 %v1417, %v1647
      %v1664 = vadd.f32 %v1418, %v1649
      %v1665 = vadd.f32 %v1419, %v1652
      %v1666 = vadd.f32 %v1420, %v1654
      %v1667 = vadd.f32 %v1421, %v1657
      %v1668 = vadd.f32 %v1422, %v1659
      %v1669 = vld [vmem:[%s1288] sm:$0xe]
      %v1670 = vld [vmem:[%s1288 + $0x8] sm:$0xe]
      %v1671 = vld [vmem:[%s1288 + $0x10] sm:$0xe]
      %v1672 = vld [vmem:[%s1288 + $0x18] sm:$0xe]
      %v1673 = vld [vmem:[%s1288 + $0x20] sm:$0xe]
      %v1674 = vld [vmem:[%s1288 + $0x28] sm:$0xe]
      %v1675 = vld [vmem:[%s1288 + $0x30] sm:$0xe]
      %v1676 = vld [vmem:[%s1288 + $0x38] sm:$0xe]
      %v1693 = vrot.slane %v1669, 5
      %v1694 = vrot.slane %v1693, 4
      %v1695 = vrot.slane %v1424, 5
      %v1696 = vsel %vm582, %v1694, %v1695
      %v1697 = vrot.slane %v1670, 5
      %v1698 = vrot.slane %v1697, 4
      %v1699 = vrot.slane %v1426, 5
      %v1700 = vsel %vm582, %v1698, %v1699
      %v1701 = vrot.slane %v1671, 5
      %v1702 = vrot.slane %v1701, 4
      %v1703 = vrot.slane %v1428, 5
      %v1704 = vsel %vm582, %v1702, %v1703
      %v1705 = vrot.slane %v1672, 5
      %v1706 = vrot.slane %v1705, 4
      %v1707 = vrot.slane %v1430, 5
      %v1708 = vsel %vm582, %v1706, %v1707
      %v1709 = vrot.slane %v1673, 5
      %v1710 = vrot.slane %v1709, 4
      %v1711 = vrot.slane %v1432, 5
      %v1712 = vsel %vm582, %v1710, %v1711
      %v1713 = vrot.slane %v1674, 5
      %v1714 = vrot.slane %v1713, 4
      %v1715 = vrot.slane %v1434, 5
      %v1716 = vsel %vm582, %v1714, %v1715
      %v1717 = vrot.slane %v1675, 5
      %v1718 = vrot.slane %v1717, 4
      %v1719 = vrot.slane %v1436, 5
      %v1720 = vsel %vm582, %v1718, %v1719
      %v1721 = vrot.slane %v1676, 5
      %v1722 = vrot.slane %v1721, 4
      %v1723 = vrot.slane %v1438, 5
      %v1724 = vsel %vm582, %v1722, %v1723
      %s1725 = scalar_lea.vmem %s1, 512
      %v1726 = vld [vmem:[%s1725] sm:$0xf]
      %v1727 = vld [vmem:[%s1725 + $0x4] sm:$0xf]
      %v1728 = vld [vmem:[%s1725 + $0x8] sm:$0xf]
      %v1729 = vld [vmem:[%s1725 + $0xc] sm:$0xf]
      %v1730 = vld [vmem:[%s1725 + $0x10] sm:$0xf]
      %v1731 = vld [vmem:[%s1725 + $0x14] sm:$0xf]
      %v1732 = vld [vmem:[%s1725 + $0x18] sm:$0xf]
      %v1733 = vld [vmem:[%s1725 + $0x1c] sm:$0xf]
      %v1734 = vld [vmem:[%s1725 + $0x20] sm:$0xf]
      %v1735 = vld [vmem:[%s1725 + $0x24] sm:$0xf]
      %v1736 = vld [vmem:[%s1725 + $0x28] sm:$0xf]
      %v1737 = vld [vmem:[%s1725 + $0x2c] sm:$0xf]
      %v1738 = vld [vmem:[%s1725 + $0x30] sm:$0xf]
      %v1739 = vld [vmem:[%s1725 + $0x34] sm:$0xf]
      %v1740 = vld [vmem:[%s1725 + $0x38] sm:$0xf]
      %v1741 = vld [vmem:[%s1725 + $0x3c] sm:$0xf]
      %v1742 = vunpack.c.l.b16 %v1696
      %v1743 = vunpack.c.l.b16 %v1700
      %v1744 = vunpack.c.l.b16 %v1704
      %v1745 = vunpack.c.l.b16 %v1708
      %v1746 = vunpack.c.l.b16 %v1712
      %v1747 = vunpack.c.l.b16 %v1716
      %v1748 = vunpack.c.l.b16 %v1720
      %v1749 = vunpack.c.l.b16 %v1724
      %v1750 = vpack.c.b16 %v1743, %v1742
      %v1751 = vpack.c.b16 %v1745, %v1744
      %v1752 = vpack.c.b16 %v1747, %v1746
      %v1753 = vpack.c.b16 %v1749, %v1748
      %v1774 = vunpack.c.l.b16 %v1726
      %v1775 = vunpack.c.l.b16 %v1727
      %v1776 = vunpack.c.l.b16 %v1728
      %v1777 = vunpack.c.l.b16 %v1729
      %v1778 = vunpack.c.l.b16 %v1730
      %v1779 = vunpack.c.l.b16 %v1731
      %v1780 = vunpack.c.l.b16 %v1732
      %v1781 = vunpack.c.l.b16 %v1733
      %v1782 = vunpack.c.l.b16 %v1734
      %v1783 = vunpack.c.l.b16 %v1735
      %v1784 = vunpack.c.l.b16 %v1736
      %v1785 = vunpack.c.l.b16 %v1737
      %v1786 = vunpack.c.l.b16 %v1738
      %v1787 = vunpack.c.l.b16 %v1739
      %v1788 = vunpack.c.l.b16 %v1740
      %v1789 = vunpack.c.l.b16 %v1741
      %v1790 = vpack.c.b16 %v1775, %v1774
      %v1791 = vpack.c.b16 %v1777, %v1776
      %v1792 = vpack.c.b16 %v1779, %v1778
      %v1793 = vpack.c.b16 %v1781, %v1780
      %v1794 = vpack.c.b16 %v1783, %v1782
      %v1795 = vpack.c.b16 %v1785, %v1784
      %v1796 = vpack.c.b16 %v1787, %v1786
      %v1797 = vpack.c.b16 %v1789, %v1788
      %1806 = vmatpush.bf16.msra.mxu0 %v1797
      %1807 = vmatpush.bf16.msra.mxu0 %v1796
      %1808 = vmatpush.bf16.msra.mxu0 %v1795
      %1809 = vmatpush.bf16.msra.mxu0 %v1794
      %1810 = vmatpush.bf16.msra.mxu0 %v1793
      %1811 = vmatpush.bf16.msra.mxu0 %v1792
      %1812 = vmatpush.bf16.msra.mxu0 %v1791
      %1813 = vmatpush.bf16.msra.mxu0 %v1790
      %1814 = vmatmul.bf16.gmra.mxu0 %v1750
      %v1815 = vpop.f32.mrf.mxu0
      %v1816 = vadd.f32 0.0, %v1815
      %v1817 = vpop.f32.mrf.mxu0
      %v1818 = vadd.f32 0.0, %v1817
      %1819 = vmatmul.bf16.gmra.mxu0 %v1751
      %v1820 = vpop.f32.mrf.mxu0
      %v1821 = vadd.f32 0.0, %v1820
      %v1822 = vpop.f32.mrf.mxu0
      %v1823 = vadd.f32 0.0, %v1822
      %1824 = vmatmul.bf16.gmra.mxu0 %v1752
      %v1825 = vpop.f32.mrf.mxu0
      %v1826 = vadd.f32 0.0, %v1825
      %v1827 = vpop.f32.mrf.mxu0
      %v1828 = vadd.f32 0.0, %v1827
      %1829 = vmatmul.bf16.gmra.mxu0 %v1753
      %v1830 = vpop.f32.mrf.mxu0
      %v1831 = vadd.f32 0.0, %v1830
      %v1832 = vpop.f32.mrf.mxu0
      %v1833 = vadd.f32 0.0, %v1832
      %1834 = vdwg.mxu0
      %v1835 = vadd.f32 %v1661, %v1816
      %v1836 = vadd.f32 %v1662, %v1818
      %v1837 = vadd.f32 %v1663, %v1821
      %v1838 = vadd.f32 %v1664, %v1823
      %v1839 = vadd.f32 %v1665, %v1826
      %v1840 = vadd.f32 %v1666, %v1828
      %v1841 = vadd.f32 %v1667, %v1831
      %v1842 = vadd.f32 %v1668, %v1833
      %v1843 = vld [vmem:[%s2] sm:$0x1]
      %v1845 = vperm.slane %v1843, 0
      %v1847 = vmul.f32 %v1835, %v1845
      %v1848 = vmul.f32 %v1836, %v1845
      %v1849 = vmul.f32 %v1837, %v1845
      %v1850 = vmul.f32 %v1838, %v1845
      %v1851 = vmul.f32 %v1839, %v1845
      %v1852 = vmul.f32 %v1840, %v1845
      %v1853 = vmul.f32 %v1841, %v1845
      %v1854 = vmul.f32 %v1842, %v1845
      %v1855 = vld [vmem:[%s3] sm:$0x1]
      %v1857 = vperm.slane %v1855, 0
      %v1859 = vadd.f32 %v1847, %v1857
      %v1860 = vadd.f32 %v1848, %v1857
      %v1861 = vadd.f32 %v1849, %v1857
      %v1862 = vadd.f32 %v1850, %v1857
      %v1863 = vadd.f32 %v1851, %v1857
      %v1864 = vadd.f32 %v1852, %v1857
      %v1865 = vadd.f32 %v1853, %v1857
      %v1866 = vadd.f32 %v1854, %v1857
      %v1867 = vxor.u32 %v1859, 2147483648
      %v1868 = vxor.u32 %v1860, 2147483648
      %v1869 = vxor.u32 %v1861, 2147483648
      %v1870 = vxor.u32 %v1862, 2147483648
      %v1871 = vxor.u32 %v1863, 2147483648
      %v1872 = vxor.u32 %v1864, 2147483648
      %v1873 = vxor.u32 %v1865, 2147483648
      %v1874 = vxor.u32 %v1866, 2147483648
      %v1875 = vmul.f32 %v1867, 1.442695
      %v1876 = vpow.pop %v1875
      %v1877 = vmul.f32 %v1868, 1.442695
      %v1878 = vpow.pop %v1877
      %v1879 = vmul.f32 %v1869, 1.442695
      %v1880 = vpow.pop %v1879
      %v1881 = vmul.f32 %v1870, 1.442695
      %v1882 = vpow.pop %v1881
      %v1883 = vmul.f32 %v1871, 1.442695
      %v1884 = vpow.pop %v1883
      %v1885 = vmul.f32 %v1872, 1.442695
      %v1886 = vpow.pop %v1885
      %v1887 = vmul.f32 %v1873, 1.442695
      %v1888 = vpow.pop %v1887
      %v1889 = vmul.f32 %v1874, 1.442695
      %v1890 = vpow.pop %v1889
      %v1891 = vadd.f32 %v1876, 1.0
      %v1892 = vadd.f32 %v1878, 1.0
      %v1893 = vadd.f32 %v1880, 1.0
      %v1894 = vadd.f32 %v1882, 1.0
      %v1895 = vadd.f32 %v1884, 1.0
      %v1896 = vadd.f32 %v1886, 1.0
      %v1897 = vadd.f32 %v1888, 1.0
      %v1898 = vadd.f32 %v1890, 1.0
      %v1899 = vrcp.pop %v1891
      %v1900 = vmul.f32 %v1891, %v1899
      %v1901 = vsub.f32 1.0, %v1900
      %v1902 = vmul.f32 %v1899, %v1901
      %v1903 = vadd.f32 %v1899, %v1902
      %vm1904 = vweird.f32 %v1891
      %vm1905 = vweird.f32 %v1899
      %vm1906 = vmor %vm1904, %vm1905
      %v1907 = vsel %vm1906, %v1899, %v1903
      %v1908 = vand.u32 2147483647, %v1891
      %vm1909 = vcmp.eq.f32.partialorder %v1908, 8.507059e+37
      %v1910 = vand.u32 %v1891, 2147483648
      %v1911 = vor.u32 1.1754944e-38, %v1910
      %v1912 = vsel %vm1909, %v1911, %v1907
      %v1913 = vmul.f32 1.0, %v1912
      %v1914 = vrcp.pop %v1892
      %v1915 = vmul.f32 %v1892, %v1914
      %v1916 = vsub.f32 1.0, %v1915
      %v1917 = vmul.f32 %v1914, %v1916
      %v1918 = vadd.f32 %v1914, %v1917
      %vm1919 = vweird.f32 %v1892
      %vm1920 = vweird.f32 %v1914
      %vm1921 = vmor %vm1919, %vm1920
      %v1922 = vsel %vm1921, %v1914, %v1918
      %v1923 = vand.u32 2147483647, %v1892
      %vm1924 = vcmp.eq.f32.partialorder %v1923, 8.507059e+37
      %v1925 = vand.u32 %v1892, 2147483648
      %v1926 = vor.u32 1.1754944e-38, %v1925
      %v1927 = vsel %vm1924, %v1926, %v1922
      %v1928 = vmul.f32 1.0, %v1927
      %v1929 = vrcp.pop %v1893
      %v1930 = vmul.f32 %v1893, %v1929
      %v1931 = vsub.f32 1.0, %v1930
      %v1932 = vmul.f32 %v1929, %v1931
      %v1933 = vadd.f32 %v1929, %v1932
      %vm1934 = vweird.f32 %v1893
      %vm1935 = vweird.f32 %v1929
      %vm1936 = vmor %vm1934, %vm1935
      %v1937 = vsel %vm1936, %v1929, %v1933
      %v1938 = vand.u32 2147483647, %v1893
      %vm1939 = vcmp.eq.f32.partialorder %v1938, 8.507059e+37
      %v1940 = vand.u32 %v1893, 2147483648
      %v1941 = vor.u32 1.1754944e-38, %v1940
      %v1942 = vsel %vm1939, %v1941, %v1937
      %v1943 = vmul.f32 1.0, %v1942
      %v1944 = vrcp.pop %v1894
      %v1945 = vmul.f32 %v1894, %v1944
      %v1946 = vsub.f32 1.0, %v1945
      %v1947 = vmul.f32 %v1944, %v1946
      %v1948 = vadd.f32 %v1944, %v1947
      %vm1949 = vweird.f32 %v1894
      %vm1950 = vweird.f32 %v1944
      %vm1951 = vmor %vm1949, %vm1950
      %v1952 = vsel %vm1951, %v1944, %v1948
      %v1953 = vand.u32 2147483647, %v1894
      %vm1954 = vcmp.eq.f32.partialorder %v1953, 8.507059e+37
      %v1955 = vand.u32 %v1894, 2147483648
      %v1956 = vor.u32 1.1754944e-38, %v1955
      %v1957 = vsel %vm1954, %v1956, %v1952
      %v1958 = vmul.f32 1.0, %v1957
      %v1959 = vrcp.pop %v1895
      %v1960 = vmul.f32 %v1895, %v1959
      %v1961 = vsub.f32 1.0, %v1960
      %v1962 = vmul.f32 %v1959, %v1961
      %v1963 = vadd.f32 %v1959, %v1962
      %vm1964 = vweird.f32 %v1895
      %vm1965 = vweird.f32 %v1959
      %vm1966 = vmor %vm1964, %vm1965
      %v1967 = vsel %vm1966, %v1959, %v1963
      %v1968 = vand.u32 2147483647, %v1895
      %vm1969 = vcmp.eq.f32.partialorder %v1968, 8.507059e+37
      %v1970 = vand.u32 %v1895, 2147483648
      %v1971 = vor.u32 1.1754944e-38, %v1970
      %v1972 = vsel %vm1969, %v1971, %v1967
      %v1973 = vmul.f32 1.0, %v1972
      %v1974 = vrcp.pop %v1896
      %v1975 = vmul.f32 %v1896, %v1974
      %v1976 = vsub.f32 1.0, %v1975
      %v1977 = vmul.f32 %v1974, %v1976
      %v1978 = vadd.f32 %v1974, %v1977
      %vm1979 = vweird.f32 %v1896
      %vm1980 = vweird.f32 %v1974
      %vm1981 = vmor %vm1979, %vm1980
      %v1982 = vsel %vm1981, %v1974, %v1978
      %v1983 = vand.u32 2147483647, %v1896
      %vm1984 = vcmp.eq.f32.partialorder %v1983, 8.507059e+37
      %v1985 = vand.u32 %v1896, 2147483648
      %v1986 = vor.u32 1.1754944e-38, %v1985
      %v1987 = vsel %vm1984, %v1986, %v1982
      %v1988 = vmul.f32 1.0, %v1987
      %v1989 = vrcp.pop %v1897
      %v1990 = vmul.f32 %v1897, %v1989
      %v1991 = vsub.f32 1.0, %v1990
      %v1992 = vmul.f32 %v1989, %v1991
      %v1993 = vadd.f32 %v1989, %v1992
      %vm1994 = vweird.f32 %v1897
      %vm1995 = vweird.f32 %v1989
      %vm1996 = vmor %vm1994, %vm1995
      %v1997 = vsel %vm1996, %v1989, %v1993
      %v1998 = vand.u32 2147483647, %v1897
      %vm1999 = vcmp.eq.f32.partialorder %v1998, 8.507059e+37
      %v2000 = vand.u32 %v1897, 2147483648
      %v2001 = vor.u32 1.1754944e-38, %v2000
      %v2002 = vsel %vm1999, %v2001, %v1997
      %v2003 = vmul.f32 1.0, %v2002
      %v2004 = vrcp.pop %v1898
      %v2005 = vmul.f32 %v1898, %v2004
      %v2006 = vsub.f32 1.0, %v2005
      %v2007 = vmul.f32 %v2004, %v2006
      %v2008 = vadd.f32 %v2004, %v2007
      %vm2009 = vweird.f32 %v1898
      %vm2010 = vweird.f32 %v2004
      %vm2011 = vmor %vm2009, %vm2010
      %v2012 = vsel %vm2011, %v2004, %v2008
      %v2013 = vand.u32 2147483647, %v1898
      %vm2014 = vcmp.eq.f32.partialorder %v2013, 8.507059e+37
      %v2015 = vand.u32 %v1898, 2147483648
      %v2016 = vor.u32 1.1754944e-38, %v2015
      %v2017 = vsel %vm2014, %v2016, %v2012
      %v2018 = vmul.f32 1.0, %v2017
      %v2019 = vmul.f32 %v1859, %v1913
      %v2020 = vmul.f32 %v1860, %v1928
      %v2021 = vmul.f32 %v1861, %v1943
      %v2022 = vmul.f32 %v1862, %v1958
      %v2023 = vmul.f32 %v1863, %v1973
      %v2024 = vmul.f32 %v1864, %v1988
      %v2025 = vmul.f32 %v1865, %v2003
      %v2026 = vmul.f32 %v1866, %v2018
      %v2027 = vpack.c.bf16 %v2019, %v2019
      %v2028 = vpack.c.bf16 %v2020, %v2020
      %v2029 = vpack.c.bf16 %v2021, %v2021
      %v2030 = vpack.c.bf16 %v2022, %v2022
      %v2031 = vpack.c.bf16 %v2023, %v2023
      %v2032 = vpack.c.bf16 %v2024, %v2024
      %v2033 = vpack.c.bf16 %v2025, %v2025
      %v2034 = vpack.c.bf16 %v2026, %v2026
      %2035 = vst [vmem:[%s197] sm:$0xf] %v2027
      %2036 = vst [vmem:[%s197 + $0x4] sm:$0xf] %v2028
      %2037 = vst [vmem:[%s197 + $0x8] sm:$0xf] %v2029
      %2038 = vst [vmem:[%s197 + $0xc] sm:$0xf] %v2030
      %2039 = vst [vmem:[%s197 + $0x10] sm:$0xf] %v2031
      %2040 = vst [vmem:[%s197 + $0x14] sm:$0xf] %v2032
      %2041 = vst [vmem:[%s197 + $0x18] sm:$0xf] %v2033
      %2042 = vst [vmem:[%s197 + $0x1c] sm:$0xf] %v2034
      %p2043 = scmp.lt.s32.totalorder %s15, 1
      %s2044 = scalar_select %p2043, %s15, 1
      %s2045 = smul.addr %s2044, 8
      %s2046 = smul.addr %s2045, 4
      %s2047 = scalar_lea.vmem %s4, %s2046
      // Predicated region
      $region37: #{_lambda_.6} parent=35 // pred_check
        %p2048 = pneg %p122
      $region38: #{_lambda_.6} parent=35 // pred_check_branch
        %2050 = sbr.rel (%p2048) target = $region40
      $region39: #{_lambda_.6} parent=35 // pred_region
        _
      $region40: #{_lambda_.6} parent=35 // pred_fallthru
        _
    $region36: #{_lambda_.6} parent=5 // pred_fallthru
      _
    %p2051 = scmp.le.s32.totalorder 2, %s10
    // Predicated region
    $region41: #{_lambda_.6} parent=5 // pred_check
      %p2052 = pneg %p2051
    $region42: #{_lambda_.6} parent=5 // pred_check_branch
      %2054 = sbr.rel (%p2052) target = $region44
    $region43: #{_lambda_.6} parent=5 // pred_region
      %s2055 = ssub.s32 %s10, 2
      // Predicated region
      $region45: #{_lambda_.6} parent=43 // pred_check
        %p2056 = pneg %p128
      $region46: #{_lambda_.6} parent=43 // pred_check_branch
        %2058 = sbr.rel (%p2056) target = $region48
      $region47: #{_lambda_.6} parent=43 // pred_region
        %p2059 = scmp.lt.s32.totalorder %s16, 1
        %s2060 = scalar_select %p2059, %s16, 1
        %s2061 = smul.addr %s2060, 8
        %s2062 = smul.addr %s2061, 4
        %s2063 = scalar_lea.vmem %s4, %s2062
      $region48: #{_lambda_.6} parent=43 // pred_fallthru
        _
    $region44: #{_lambda_.6} parent=5 // pred_fallthru
      _
  $region6: #{_lambda_.6} parent=0 // loop_footer
    %s14 = sadd.s32 1, %s10
  $region7: #{_lambda_.6} parent=0 // loop_footer_branch
    %9 = sbr.rel target = $region3
  $region8: #{_lambda_.6} parent=0 // loop_exit
    _

// kernel: _lambda_.5
$region0: #{_lambda_.5}
  #allocation0 [shape = 'u32[]', space=smem, size = 0x4, offset = 0x4, fixed_abs, tag = 'smem constant byte address 0x4 - core index']
  #allocation1 [shape = 'u32[72,128]{1,0:T(1,128)}', space=vmem, size = 0x9000, scoped, tag = 'internal scratch']
  %s0 = inlined_call_operand.vmem [shape: bf16[2,10,10,128], index: 0, kind: input, shape index: {}]
  %s1 = inlined_call_operand.vmem [shape: bf16[9,128,128], index: 1, kind: input, shape index: {}]
  %s2 = inlined_call_operand.vmem [shape: f32[1,128], index: 2, kind: input, shape index: {}]
  %s3 = inlined_call_operand.vmem [shape: f32[1,128], index: 3, kind: input, shape index: {}]
  %s4 = inlined_call_operand.vmem [shape: bf16[2,8,8,128], index: 4, kind: input, shape index: {}]
  %s5 = inlined_call_operand.vmem [shape: bf16[128,128], index: 5, kind: input, shape index: {}]
  %s6 = inlined_call_operand.vmem [shape: f32[1,128], index: 6, kind: input, shape index: {}]
  %s7 = inlined_call_operand.vmem [shape: f32[1,128], index: 7, kind: input, shape index: {}]
  %s8 = inlined_call_operand.vmem [shape: f32[128,128], index: 8, kind: input, shape index: {}]
  %s9 = inlined_call_operand.vmem [shape: f32[1,128], index: 9, kind: input, shape index: {}]
  %s10 = inlined_call_operand.vmem [shape: f32[128,128], index: 10, kind: input, shape index: {}]
  %s11 = inlined_call_operand.vmem [shape: f32[1,128], index: 11, kind: input, shape index: {}]
  %s12 = inlined_call_operand.vmem [shape: bf16[2,8,8,128], index: 12, kind: output, shape index: {}]
  %s13 = sld [smem:[#allocation0]]
  $region81: #{_lambda_.5} parent=0
    _
  %s15 = ssub.s32 1, %s13
  %s16 = scalar_select 0, %s15, %s13
  loop: start=0, step=1, limit=4
  $region2: #{_lambda_.5} parent=0 // loop_pre_header
    _
  $region3: #{_lambda_.5} parent=0 // loop_header
    %s18 = sphi 0, %s22
    %p19 = scmp.ge.s32.totalorder %s18, 4
    %s28 = sphi 0, %s30
    %s31 = sphi 0, %s28
    %s32 = sphi 0, %s31
    %s48 = sphi 0, %s32
    %s52 = sphi 0, %s52
    %s54 = sphi 0, %s52
    %s55 = sphi 0, %s54
    %s69 = sphi 0, %s55
    %s73 = sphi 0, %s73
    %s75 = sphi 0, %s73
    %s76 = sphi 0, %s75
    %s90 = sphi 0, %s76
    %s94 = sphi 0, %s94
    %s96 = sphi 0, %s94
    %s97 = sphi 0, %s96
    %s111 = sphi 0, %s97
    %s117 = sphi 0, %s119
    %s120 = sphi 0, %s117
    %s121 = sphi 0, %s120
    %s137 = sphi 0, %s121
    %s141 = sphi 0, %s141
    %s143 = sphi 0, %s141
    %s144 = sphi 0, %s143
    %s158 = sphi 0, %s144
    %s162 = sphi 0, %s162
    %s164 = sphi 0, %s162
    %s165 = sphi 0, %s164
    %s179 = sphi 0, %s165
    %s183 = sphi 0, %s183
    %s185 = sphi 0, %s183
    %s186 = sphi 0, %s185
    %s200 = sphi 0, %s186
    %s204 = sphi 0, %s204
    %s206 = sphi 0, %s204
    %s207 = sphi 0, %s206
    %s221 = sphi 0, %s207
    %s225 = sphi 0, %s225
    %s227 = sphi 0, %s225
    %s228 = sphi 0, %s227
    %s242 = sphi 0, %s228
    %s246 = sphi 0, %s246
    %s248 = sphi 0, %s246
    %s249 = sphi 0, %s248
    %s263 = sphi 0, %s249
    %s267 = sphi 0, %s267
    %s269 = sphi 0, %s267
    %s270 = sphi 0, %s269
    %s284 = sphi 0, %s270
    %s290 = sphi 0, %s292
    %s293 = sphi 0, %s290
    %s294 = sphi 0, %s293
    %s310 = sphi 0, %s294
  $region4: #{_lambda_.5} parent=0 // loop_header_branch
    %21 = sbr.rel (%p19) target = $region8
  $region5: #{_lambda_.5} parent=0 // loop_body
    %s23 = ssub.s32 %s18, 1
    %s24 = ssub.s32 %s18, 2
    %s25 = sadd.s32 %s18, 1
    %s26 = ssub.s32 %s18, %s25
    %p27 = scmp.eq.s32.totalorder %s26, 0
    %s29 = sadd.s32 %s28, 1
    %s30 = scalar_select %p27, %s28, %s29
    %p33 = pneg %p27
    %p34 = scmp.eq.s32.totalorder %s18, 1
    %p35 = por %p33, %p34
    %p36 = scmp.ne.s32.totalorder %s28, %s31
    %p37 = scmp.eq.s32.totalorder %s18, 0
    %p38 = por %p36, %p37
    %p39 = scmp.ne.s32.totalorder %s28, %s31
    %p40 = scmp.eq.s32.totalorder %s23, 1
    %p41 = por %p39, %p40
    %p42 = scmp.ne.s32.totalorder %s31, %s32
    %p43 = scmp.eq.s32.totalorder %s23, 0
    %p44 = por %p42, %p43
    %p45 = scmp.ne.s32.totalorder %s31, %s32
    %p46 = scmp.eq.s32.totalorder %s24, 1
    %p47 = por %p45, %p46
    %p49 = scmp.ne.s32.totalorder %s32, %s48
    %p50 = scmp.eq.s32.totalorder %s24, 0
    %p51 = por %p49, %p50
    %s53 = sadd.s32 %s52, 1
    %p56 = scmp.eq.s32.totalorder %s18, 1
    %p57 = scmp.ne.s32.totalorder %s52, %s54
    %p58 = scmp.eq.s32.totalorder %s18, 0
    %p59 = por %p57, %p58
    %p60 = scmp.ne.s32.totalorder %s52, %s54
    %p61 = scmp.eq.s32.totalorder %s23, 1
    %p62 = por %p60, %p61
    %p63 = scmp.ne.s32.totalorder %s54, %s55
    %p64 = scmp.eq.s32.totalorder %s23, 0
    %p65 = por %p63, %p64
    %p66 = scmp.ne.s32.totalorder %s54, %s55
    %p67 = scmp.eq.s32.totalorder %s24, 1
    %p68 = por %p66, %p67
    %p70 = scmp.ne.s32.totalorder %s55, %s69
    %p71 = scmp.eq.s32.totalorder %s24, 0
    %p72 = por %p70, %p71
    %s74 = sadd.s32 %s73, 1
    %p77 = scmp.eq.s32.totalorder %s18, 1
    %p78 = scmp.ne.s32.totalorder %s73, %s75
    %p79 = scmp.eq.s32.totalorder %s18, 0
    %p80 = por %p78, %p79
    %p81 = scmp.ne.s32.totalorder %s73, %s75
    %p82 = scmp.eq.s32.totalorder %s23, 1
    %p83 = por %p81, %p82
    %p84 = scmp.ne.s32.totalorder %s75, %s76
    %p85 = scmp.eq.s32.totalorder %s23, 0
    %p86 = por %p84, %p85
    %p87 = scmp.ne.s32.totalorder %s75, %s76
    %p88 = scmp.eq.s32.totalorder %s24, 1
    %p89 = por %p87, %p88
    %p91 = scmp.ne.s32.totalorder %s76, %s90
    %p92 = scmp.eq.s32.totalorder %s24, 0
    %p93 = por %p91, %p92
    %s95 = sadd.s32 %s94, 1
    %p98 = scmp.eq.s32.totalorder %s18, 1
    %p99 = scmp.ne.s32.totalorder %s94, %s96
    %p100 = scmp.eq.s32.totalorder %s18, 0
    %p101 = por %p99, %p100
    %p102 = scmp.ne.s32.totalorder %s94, %s96
    %p103 = scmp.eq.s32.totalorder %s23, 1
    %p104 = por %p102, %p103
    %p105 = scmp.ne.s32.totalorder %s96, %s97
    %p106 = scmp.eq.s32.totalorder %s23, 0
    %p107 = por %p105, %p106
    %p108 = scmp.ne.s32.totalorder %s96, %s97
    %p109 = scmp.eq.s32.totalorder %s24, 1
    %p110 = por %p108, %p109
    %p112 = scmp.ne.s32.totalorder %s97, %s111
    %p113 = scmp.eq.s32.totalorder %s24, 0
    %p114 = por %p112, %p113
    %s115 = ssub.s32 %s18, %s25
    %p116 = scmp.eq.s32.totalorder %s115, 0
    %s118 = sadd.s32 %s117, 1
    %s119 = scalar_select %p116, %s117, %s118
    %p122 = pneg %p116
    %p123 = scmp.eq.s32.totalorder %s18, 1
    %p124 = por %p122, %p123
    %p125 = scmp.ne.s32.totalorder %s117, %s120
    %p126 = scmp.eq.s32.totalorder %s18, 0
    %p127 = por %p125, %p126
    %p128 = scmp.ne.s32.totalorder %s117, %s120
    %p129 = scmp.eq.s32.totalorder %s23, 1
    %p130 = por %p128, %p129
    %p131 = scmp.ne.s32.totalorder %s120, %s121
    %p132 = scmp.eq.s32.totalorder %s23, 0
    %p133 = por %p131, %p132
    %p134 = scmp.ne.s32.totalorder %s120, %s121
    %p135 = scmp.eq.s32.totalorder %s24, 1
    %p136 = por %p134, %p135
    %p138 = scmp.ne.s32.totalorder %s121, %s137
    %p139 = scmp.eq.s32.totalorder %s24, 0
    %p140 = por %p138, %p139
    %s142 = sadd.s32 %s141, 1
    %p145 = scmp.eq.s32.totalorder %s18, 1
    %p146 = scmp.ne.s32.totalorder %s141, %s143
    %p147 = scmp.eq.s32.totalorder %s18, 0
    %p148 = por %p146, %p147
    %p149 = scmp.ne.s32.totalorder %s141, %s143
    %p150 = scmp.eq.s32.totalorder %s23, 1
    %p151 = por %p149, %p150
    %p152 = scmp.ne.s32.totalorder %s143, %s144
    %p153 = scmp.eq.s32.totalorder %s23, 0
    %p154 = por %p152, %p153
    %p155 = scmp.ne.s32.totalorder %s143, %s144
    %p156 = scmp.eq.s32.totalorder %s24, 1
    %p157 = por %p155, %p156
    %p159 = scmp.ne.s32.totalorder %s144, %s158
    %p160 = scmp.eq.s32.totalorder %s24, 0
    %p161 = por %p159, %p160
    %s163 = sadd.s32 %s162, 1
    %p166 = scmp.eq.s32.totalorder %s18, 1
    %p167 = scmp.ne.s32.totalorder %s162, %s164
    %p168 = scmp.eq.s32.totalorder %s18, 0
    %p169 = por %p167, %p168
    %p170 = scmp.ne.s32.totalorder %s162, %s164
    %p171 = scmp.eq.s32.totalorder %s23, 1
    %p172 = por %p170, %p171
    %p173 = scmp.ne.s32.totalorder %s164, %s165
    %p174 = scmp.eq.s32.totalorder %s23, 0
    %p175 = por %p173, %p174
    %p176 = scmp.ne.s32.totalorder %s164, %s165
    %p177 = scmp.eq.s32.totalorder %s24, 1
    %p178 = por %p176, %p177
    %p180 = scmp.ne.s32.totalorder %s165, %s179
    %p181 = scmp.eq.s32.totalorder %s24, 0
    %p182 = por %p180, %p181
    %s184 = sadd.s32 %s183, 1
    %p187 = scmp.eq.s32.totalorder %s18, 1
    %p188 = scmp.ne.s32.totalorder %s183, %s185
    %p189 = scmp.eq.s32.totalorder %s18, 0
    %p190 = por %p188, %p189
    %p191 = scmp.ne.s32.totalorder %s183, %s185
    %p192 = scmp.eq.s32.totalorder %s23, 1
    %p193 = por %p191, %p192
    %p194 = scmp.ne.s32.totalorder %s185, %s186
    %p195 = scmp.eq.s32.totalorder %s23, 0
    %p196 = por %p194, %p195
    %p197 = scmp.ne.s32.totalorder %s185, %s186
    %p198 = scmp.eq.s32.totalorder %s24, 1
    %p199 = por %p197, %p198
    %p201 = scmp.ne.s32.totalorder %s186, %s200
    %p202 = scmp.eq.s32.totalorder %s24, 0
    %p203 = por %p201, %p202
    %s205 = sadd.s32 %s204, 1
    %p208 = scmp.eq.s32.totalorder %s18, 1
    %p209 = scmp.ne.s32.totalorder %s204, %s206
    %p210 = scmp.eq.s32.totalorder %s18, 0
    %p211 = por %p209, %p210
    %p212 = scmp.ne.s32.totalorder %s204, %s206
    %p213 = scmp.eq.s32.totalorder %s23, 1
    %p214 = por %p212, %p213
    %p215 = scmp.ne.s32.totalorder %s206, %s207
    %p216 = scmp.eq.s32.totalorder %s23, 0
    %p217 = por %p215, %p216
    %p218 = scmp.ne.s32.totalorder %s206, %s207
    %p219 = scmp.eq.s32.totalorder %s24, 1
    %p220 = por %p218, %p219
    %p222 = scmp.ne.s32.totalorder %s207, %s221
    %p223 = scmp.eq.s32.totalorder %s24, 0
    %p224 = por %p222, %p223
    %s226 = sadd.s32 %s225, 1
    %p229 = scmp.eq.s32.totalorder %s18, 1
    %p230 = scmp.ne.s32.totalorder %s225, %s227
    %p231 = scmp.eq.s32.totalorder %s18, 0
    %p232 = por %p230, %p231
    %p233 = scmp.ne.s32.totalorder %s225, %s227
    %p234 = scmp.eq.s32.totalorder %s23, 1
    %p235 = por %p233, %p234
    %p236 = scmp.ne.s32.totalorder %s227, %s228
    %p237 = scmp.eq.s32.totalorder %s23, 0
    %p238 = por %p236, %p237
    %p239 = scmp.ne.s32.totalorder %s227, %s228
    %p240 = scmp.eq.s32.totalorder %s24, 1
    %p241 = por %p239, %p240
    %p243 = scmp.ne.s32.totalorder %s228, %s242
    %p244 = scmp.eq.s32.totalorder %s24, 0
    %p245 = por %p243, %p244
    %s247 = sadd.s32 %s246, 1
    %p250 = scmp.eq.s32.totalorder %s18, 1
    %p251 = scmp.ne.s32.totalorder %s246, %s248
    %p252 = scmp.eq.s32.totalorder %s18, 0
    %p253 = por %p251, %p252
    %p254 = scmp.ne.s32.totalorder %s246, %s248
    %p255 = scmp.eq.s32.totalorder %s23, 1
    %p256 = por %p254, %p255
    %p257 = scmp.ne.s32.totalorder %s248, %s249
    %p258 = scmp.eq.s32.totalorder %s23, 0
    %p259 = por %p257, %p258
    %p260 = scmp.ne.s32.totalorder %s248, %s249
    %p261 = scmp.eq.s32.totalorder %s24, 1
    %p262 = por %p260, %p261
    %p264 = scmp.ne.s32.totalorder %s249, %s263
    %p265 = scmp.eq.s32.totalorder %s24, 0
    %p266 = por %p264, %p265
    %s268 = sadd.s32 %s267, 1
    %p271 = scmp.eq.s32.totalorder %s18, 1
    %p272 = scmp.ne.s32.totalorder %s267, %s269
    %p273 = scmp.eq.s32.totalorder %s18, 0
    %p274 = por %p272, %p273
    %p275 = scmp.ne.s32.totalorder %s267, %s269
    %p276 = scmp.eq.s32.totalorder %s23, 1
    %p277 = por %p275, %p276
    %p278 = scmp.ne.s32.totalorder %s269, %s270
    %p279 = scmp.eq.s32.totalorder %s23, 0
    %p280 = por %p278, %p279
    %p281 = scmp.ne.s32.totalorder %s269, %s270
    %p282 = scmp.eq.s32.totalorder %s24, 1
    %p283 = por %p281, %p282
    %p285 = scmp.ne.s32.totalorder %s270, %s284
    %p286 = scmp.eq.s32.totalorder %s24, 0
    %p287 = por %p285, %p286
    %s288 = ssub.s32 %s18, %s25
    %p289 = scmp.eq.s32.totalorder %s288, 0
    %s291 = sadd.s32 %s290, 1
    %s292 = scalar_select %p289, %s290, %s291
    %p295 = pneg %p289
    %p296 = scmp.eq.s32.totalorder %s18, 1
    %p297 = por %p295, %p296
    %p298 = scmp.ne.s32.totalorder %s290, %s293
    %p299 = scmp.eq.s32.totalorder %s18, 0
    %p300 = por %p298, %p299
    %p301 = scmp.ne.s32.totalorder %s290, %s293
    %p302 = scmp.eq.s32.totalorder %s23, 1
    %p303 = por %p301, %p302
    %p304 = scmp.ne.s32.totalorder %s293, %s294
    %p305 = scmp.eq.s32.totalorder %s23, 0
    %p306 = por %p304, %p305
    %p307 = scmp.ne.s32.totalorder %s293, %s294
    %p308 = scmp.eq.s32.totalorder %s24, 1
    %p309 = por %p307, %p308
    %p311 = scmp.ne.s32.totalorder %s294, %s310
    %p312 = scmp.eq.s32.totalorder %s24, 0
    %p313 = por %p311, %p312
    %p314 = scmp.le.s32.totalorder 1, %s18
    %p315 = scmp.lt.s32.totalorder %s18, 3
    %p316 = pnand %p314, %p315
    %p317 = pneg %p316
    // Predicated region
    $region9: #{_lambda_.5} parent=5 // pred_check
      _
    $region10: #{_lambda_.5} parent=5 // pred_check_branch
      %319 = sbr.rel (%p316) target = $region12
    $region11: #{_lambda_.5} parent=5 // pred_region
      %s320 = ssub.s32 %s18, 1
      // Predicated region
      $region13: #{_lambda_.5} parent=11 // pred_check
        %p321 = pneg %p65
      $region14: #{_lambda_.5} parent=11 // pred_check_branch
        %323 = sbr.rel (%p321) target = $region16
      $region15: #{_lambda_.5} parent=11 // pred_region
        _
      $region16: #{_lambda_.5} parent=11 // pred_fallthru
        _
      // Predicated region
      $region17: #{_lambda_.5} parent=11 // pred_check
        %p324 = pneg %p86
      $region18: #{_lambda_.5} parent=11 // pred_check_branch
        %326 = sbr.rel (%p324) target = $region20
      $region19: #{_lambda_.5} parent=11 // pred_region
        _
      $region20: #{_lambda_.5} parent=11 // pred_fallthru
        _
      // Predicated region
      $region21: #{_lambda_.5} parent=11 // pred_check
        %p327 = pneg %p107
      $region22: #{_lambda_.5} parent=11 // pred_check_branch
        %329 = sbr.rel (%p327) target = $region24
      $region23: #{_lambda_.5} parent=11 // pred_region
        _
      $region24: #{_lambda_.5} parent=11 // pred_fallthru
        _
      // Predicated region
      $region25: #{_lambda_.5} parent=11 // pred_check
        %p330 = pneg %p154
      $region26: #{_lambda_.5} parent=11 // pred_check_branch
        %332 = sbr.rel (%p330) target = $region28
      $region27: #{_lambda_.5} parent=11 // pred_region
        _
      $region28: #{_lambda_.5} parent=11 // pred_fallthru
        _
      // Predicated region
      $region29: #{_lambda_.5} parent=11 // pred_check
        %p333 = pneg %p175
      $region30: #{_lambda_.5} parent=11 // pred_check_branch
        %335 = sbr.rel (%p333) target = $region32
      $region31: #{_lambda_.5} parent=11 // pred_region
        _
      $region32: #{_lambda_.5} parent=11 // pred_fallthru
        _
      // Predicated region
      $region33: #{_lambda_.5} parent=11 // pred_check
        %p336 = pneg %p196
      $region34: #{_lambda_.5} parent=11 // pred_check_branch
        %338 = sbr.rel (%p336) target = $region36
      $region35: #{_lambda_.5} parent=11 // pred_region
        _
      $region36: #{_lambda_.5} parent=11 // pred_fallthru
        _
      // Predicated region
      $region37: #{_lambda_.5} parent=11 // pred_check
        %p339 = pneg %p217
      $region38: #{_lambda_.5} parent=11 // pred_check_branch
        %341 = sbr.rel (%p339) target = $region40
      $region39: #{_lambda_.5} parent=11 // pred_region
        _
      $region40: #{_lambda_.5} parent=11 // pred_fallthru
        _
      // Predicated region
      $region41: #{_lambda_.5} parent=11 // pred_check
        %p342 = pneg %p238
      $region42: #{_lambda_.5} parent=11 // pred_check_branch
        %344 = sbr.rel (%p342) target = $region44
      $region43: #{_lambda_.5} parent=11 // pred_region
        _
      $region44: #{_lambda_.5} parent=11 // pred_fallthru
        _
      // Predicated region
      $region45: #{_lambda_.5} parent=11 // pred_check
        %p345 = pneg %p259
      $region46: #{_lambda_.5} parent=11 // pred_check_branch
        %347 = sbr.rel (%p345) target = $region48
      $region47: #{_lambda_.5} parent=11 // pred_region
        _
      $region48: #{_lambda_.5} parent=11 // pred_fallthru
        _
      // Predicated region
      $region49: #{_lambda_.5} parent=11 // pred_check
        %p348 = pneg %p280
      $region50: #{_lambda_.5} parent=11 // pred_check_branch
        %350 = sbr.rel (%p348) target = $region52
      $region51: #{_lambda_.5} parent=11 // pred_region
        _
      $region52: #{_lambda_.5} parent=11 // pred_fallthru
        _
    $region12: #{_lambda_.5} parent=5 // pred_fallthru
      _
    %p351 = scmp.lt.s32.totalorder %s18, 2
    // Predicated region
    $region53: #{_lambda_.5} parent=5 // pred_check
      %p352 = pneg %p351
    $region54: #{_lambda_.5} parent=5 // pred_check_branch
      %354 = sbr.rel (%p352) target = $region56
    $region55: #{_lambda_.5} parent=5 // pred_region
      // Predicated region
      $region57: #{_lambda_.5} parent=55 // pred_check
        %p355 = pneg %p38
      $region58: #{_lambda_.5} parent=55 // pred_check_branch
        %357 = sbr.rel (%p355) target = $region60
      $region59: #{_lambda_.5} parent=55 // pred_region
        %p358 = scmp.lt.s32.totalorder %s18, 1
        %s359 = scalar_select %p358, %s18, 1
        %s360 = smul.addr %s359, 20
        %s361 = smul.addr %s360, 4
        %s362 = scalar_lea.vmem %s0, %s361
      $region60: #{_lambda_.5} parent=55 // pred_fallthru
        _
      // Predicated region
      $region61: #{_lambda_.5} parent=55 // pred_check
        %p363 = pneg %p127
      $region62: #{_lambda_.5} parent=55 // pred_check_branch
        %365 = sbr.rel (%p363) target = $region64
      $region63: #{_lambda_.5} parent=55 // pred_region
        %p366 = scmp.lt.s32.totalorder %s18, 1
        %s367 = scalar_select %p366, %s18, 1
        %s368 = smul.addr %s367, 8
        %s369 = smul.addr %s368, 4
        %s370 = scalar_lea.vmem %s4, %s369
      $region64: #{_lambda_.5} parent=55 // pred_fallthru
        _
    $region56: #{_lambda_.5} parent=5 // pred_fallthru
      _
    %p371 = scmp.le.s32.totalorder 1, %s18
    %p372 = scmp.lt.s32.totalorder %s18, 3
    %p373 = pnand %p371, %p372
    %p374 = pneg %p373
    // Predicated region
    $region65: #{_lambda_.5} parent=5 // pred_check
      _
    $region66: #{_lambda_.5} parent=5 // pred_check_branch
      %376 = sbr.rel (%p373) target = $region68
    $region67: #{_lambda_.5} parent=5 // pred_region
      %s377 = ssub.s32 %s18, 1
      %p378 = scmp.lt.s32.totalorder %s23, 1
      %s379 = scalar_select %p378, %s23, 1
      %s380 = smul.addr %s379, 20
      %s381 = smul.addr %s380, 4
      %s382 = scalar_lea.vmem %s0, %s381
      %p383 = pneg %p44
      %p384 = pneg %p41
      %p385 = pneg %p65
      %p386 = pneg %p62
      %p387 = pneg %p86
      %p388 = pneg %p83
      %p389 = pneg %p107
      %p390 = pneg %p104
      %p391 = scmp.lt.s32.totalorder %s23, 1
      %s392 = scalar_select %p391, %s23, 1
      %s393 = smul.addr %s392, 8
      %s394 = smul.addr %s393, 4
      %s395 = scalar_lea.vmem %s4, %s394
      %p396 = pneg %p133
      %p397 = pneg %p130
      %p398 = pneg %p154
      %p399 = pneg %p151
      %p400 = pneg %p175
      %p401 = pneg %p172
      %p402 = pneg %p196
      %p403 = pneg %p193
      %p404 = pneg %p217
      %p405 = pneg %p214
      %p406 = pneg %p238
      %p407 = pneg %p235
      %p408 = pneg %p259
      %p409 = pneg %p256
      %p410 = pneg %p280
      %p411 = pneg %p277
      %p412 = pneg %p306
      %p413 = pneg %p303
      %p414 = scmp.lt.s32.totalorder %s23, 1
      %s415 = scalar_select %p414, %s23, 1
      %s416 = smul.addr %s415, 8
      %s417 = smul.addr %s416, 4
      %s418 = scalar_lea.vmem %s12, %s417
      %p419 = scmp.lt.s32.totalorder %s23, 1
      %s420 = scalar_select %p419, %s23, 1
      %s421 = smul.addr %s420, 20
      %s422 = smul.addr %s421, 4
      %s423 = scalar_lea.vmem %s0, %s422
      %p424 = scmp.lt.s32.totalorder %s23, 1
      %s425 = scalar_select %p424, %s23, 1
      %s426 = smul.addr %s425, 8
      %s427 = smul.addr %s426, 4
      %s428 = scalar_lea.vmem %s4, %s427
      %p429 = scmp.lt.s32.totalorder %s23, 1
      %s430 = scalar_select %p429, %s23, 1
      %s431 = smul.addr %s430, 8
      %s432 = smul.addr %s431, 4
      %s433 = scalar_lea.vmem %s12, %s432
      %v434 = vld [vmem:[%s423] sm:$0xf]
      %v435 = vld [vmem:[%s423 + $0x8] sm:$0xf]
      %v436 = vld [vmem:[%s423 + $0x10] sm:$0xf]
      %v437 = vld [vmem:[%s423 + $0x18] sm:$0xf]
      %v438 = vld [vmem:[%s423 + $0x20] sm:$0xf]
      %v439 = vld [vmem:[%s423 + $0x28] sm:$0xf]
      %v440 = vld [vmem:[%s423 + $0x30] sm:$0xf]
      %v441 = vld [vmem:[%s423 + $0x38] sm:$0xf]
      %v442 = vld [vmem:[%s1] sm:$0xf]
      %v443 = vld [vmem:[%s1 + $0x4] sm:$0xf]
      %v444 = vld [vmem:[%s1 + $0x8] sm:$0xf]
      %v445 = vld [vmem:[%s1 + $0xc] sm:$0xf]
      %v446 = vld [vmem:[%s1 + $0x10] sm:$0xf]
      %v447 = vld [vmem:[%s1 + $0x14] sm:$0xf]
      %v448 = vld [vmem:[%s1 + $0x18] sm:$0xf]
      %v449 = vld [vmem:[%s1 + $0x1c] sm:$0xf]
      %v450 = vld [vmem:[%s1 + $0x20] sm:$0xf]
      %v451 = vld [vmem:[%s1 + $0x24] sm:$0xf]
      %v452 = vld [vmem:[%s1 + $0x28] sm:$0xf]
      %v453 = vld [vmem:[%s1 + $0x2c] sm:$0xf]
      %v454 = vld [vmem:[%s1 + $0x30] sm:$0xf]
      %v455 = vld [vmem:[%s1 + $0x34] sm:$0xf]
      %v456 = vld [vmem:[%s1 + $0x38] sm:$0xf]
      %v457 = vld [vmem:[%s1 + $0x3c] sm:$0xf]
      %v458 = vld [vmem:[%s423 + $0x4] sm:$0x1]
      %v459 = vld [vmem:[%s423 + $0xc] sm:$0x1]
      %v460 = vld [vmem:[%s423 + $0x14] sm:$0x1]
      %v461 = vld [vmem:[%s423 + $0x1c] sm:$0x1]
      %v462 = vld [vmem:[%s423 + $0x24] sm:$0x1]
      %v463 = vld [vmem:[%s423 + $0x2c] sm:$0x1]
      %v464 = vld [vmem:[%s423 + $0x34] sm:$0x1]
      %v465 = vld [vmem:[%s423 + $0x3c] sm:$0x1]
      %vm466 = vsmask.f32 3328
      %vm467 = vsmask.f32 7440
      %vm468 = vmor %vm466, %vm467
      %v470 = vshrl.u32 %v434, 16
      %v472 = vrot.slane %v470, 4
      %v473 = vshll.u32 %v434, 16
      %v475 = vrot.slane %v473, 5
      %v476 = vor.u32 %v472, %v475
      %v477 = vrot.slane %v476, 4
      %v479 = vshll.u32 %v458, 16
      %v481 = vrot.slane %v479, 5
      %v482 = vsel %vm468, %v477, %v481
      %v484 = vshrl.u32 %v435, 16
      %v486 = vrot.slane %v484, 4
      %v487 = vshll.u32 %v435, 16
      %v489 = vrot.slane %v487, 5
      %v490 = vor.u32 %v486, %v489
      %v491 = vrot.slane %v490, 4
      %v493 = vshll.u32 %v459, 16
      %v495 = vrot.slane %v493, 5
      %v496 = vsel %vm468, %v491, %v495
      %v498 = vshrl.u32 %v436, 16
      %v500 = vrot.slane %v498, 4
      %v501 = vshll.u32 %v436, 16
      %v503 = vrot.slane %v501, 5
      %v504 = vor.u32 %v500, %v503
      %v505 = vrot.slane %v504, 4
      %v507 = vshll.u32 %v460, 16
      %v509 = vrot.slane %v507, 5
      %v510 = vsel %vm468, %v505, %v509
      %v512 = vshrl.u32 %v437, 16
      %v514 = vrot.slane %v512, 4
      %v515 = vshll.u32 %v437, 16
      %v517 = vrot.slane %v515, 5
      %v518 = vor.u32 %v514, %v517
      %v519 = vrot.slane %v518, 4
      %v521 = vshll.u32 %v461, 16
      %v523 = vrot.slane %v521, 5
      %v524 = vsel %vm468, %v519, %v523
      %v526 = vshrl.u32 %v438, 16
      %v528 = vrot.slane %v526, 4
      %v529 = vshll.u32 %v438, 16
      %v531 = vrot.slane %v529, 5
      %v532 = vor.u32 %v528, %v531
      %v533 = vrot.slane %v532, 4
      %v535 = vshll.u32 %v462, 16
      %v537 = vrot.slane %v535, 5
      %v538 = vsel %vm468, %v533, %v537
      %v540 = vshrl.u32 %v439, 16
      %v542 = vrot.slane %v540, 4
      %v543 = vshll.u32 %v439, 16
      %v545 = vrot.slane %v543, 5
      %v546 = vor.u32 %v542, %v545
      %v547 = vrot.slane %v546, 4
      %v549 = vshll.u32 %v463, 16
      %v551 = vrot.slane %v549, 5
      %v552 = vsel %vm468, %v547, %v551
      %v554 = vshrl.u32 %v440, 16
      %v556 = vrot.slane %v554, 4
      %v557 = vshll.u32 %v440, 16
      %v559 = vrot.slane %v557, 5
      %v560 = vor.u32 %v556, %v559
      %v561 = vrot.slane %v560, 4
      %v563 = vshll.u32 %v464, 16
      %v565 = vrot.slane %v563, 5
      %v566 = vsel %vm468, %v561, %v565
      %v568 = vshrl.u32 %v441, 16
      %v570 = vrot.slane %v568, 4
      %v571 = vshll.u32 %v441, 16
      %v573 = vrot.slane %v571, 5
      %v574 = vor.u32 %v570, %v573
      %v575 = vrot.slane %v574, 4
      %v577 = vshll.u32 %v465, 16
      %v579 = vrot.slane %v577, 5
      %v580 = vsel %vm468, %v575, %v579
      %s581 = scalar_lea.vmem %s1, 64
      %v582 = vld [vmem:[%s581] sm:$0xf]
      %v583 = vld [vmem:[%s581 + $0x4] sm:$0xf]
      %v584 = vld [vmem:[%s581 + $0x8] sm:$0xf]
      %v585 = vld [vmem:[%s581 + $0xc] sm:$0xf]
      %v586 = vld [vmem:[%s581 + $0x10] sm:$0xf]
      %v587 = vld [vmem:[%s581 + $0x14] sm:$0xf]
      %v588 = vld [vmem:[%s581 + $0x18] sm:$0xf]
      %v589 = vld [vmem:[%s581 + $0x1c] sm:$0xf]
      %v590 = vld [vmem:[%s581 + $0x20] sm:$0xf]
      %v591 = vld [vmem:[%s581 + $0x24] sm:$0xf]
      %v592 = vld [vmem:[%s581 + $0x28] sm:$0xf]
      %v593 = vld [vmem:[%s581 + $0x2c] sm:$0xf]
      %v594 = vld [vmem:[%s581 + $0x30] sm:$0xf]
      %v595 = vld [vmem:[%s581 + $0x34] sm:$0xf]
      %v596 = vld [vmem:[%s581 + $0x38] sm:$0xf]
      %v597 = vld [vmem:[%s581 + $0x3c] sm:$0xf]
      %v598 = vunpack.c.l.b16 %v482
      %v599 = vunpack.c.l.b16 %v496
      %v600 = vunpack.c.l.b16 %v510
      %v601 = vunpack.c.l.b16 %v524
      %v602 = vunpack.c.l.b16 %v538
      %v603 = vunpack.c.l.b16 %v552
      %v604 = vunpack.c.l.b16 %v566
      %v605 = vunpack.c.l.b16 %v580
      %v606 = vpack.c.b16 %v599, %v598
      %v607 = vpack.c.b16 %v601, %v600
      %v608 = vpack.c.b16 %v603, %v602
      %v609 = vpack.c.b16 %v605, %v604
      %v630 = vunpack.c.l.b16 %v582
      %v631 = vunpack.c.l.b16 %v583
      %v632 = vunpack.c.l.b16 %v584
      %v633 = vunpack.c.l.b16 %v585
      %v634 = vunpack.c.l.b16 %v586
      %v635 = vunpack.c.l.b16 %v587
      %v636 = vunpack.c.l.b16 %v588
      %v637 = vunpack.c.l.b16 %v589
      %v638 = vunpack.c.l.b16 %v590
      %v639 = vunpack.c.l.b16 %v591
      %v640 = vunpack.c.l.b16 %v592
      %v641 = vunpack.c.l.b16 %v593
      %v642 = vunpack.c.l.b16 %v594
      %v643 = vunpack.c.l.b16 %v595
      %v644 = vunpack.c.l.b16 %v596
      %v645 = vunpack.c.l.b16 %v597
      %v646 = vpack.c.b16 %v631, %v630
      %v647 = vpack.c.b16 %v633, %v632
      %v648 = vpack.c.b16 %v635, %v634
      %v649 = vpack.c.b16 %v637, %v636
      %v650 = vpack.c.b16 %v639, %v638
      %v651 = vpack.c.b16 %v641, %v640
      %v652 = vpack.c.b16 %v643, %v642
      %v653 = vpack.c.b16 %v645, %v644
      %662 = vmatpush.bf16.msra.mxu0 %v653
      %663 = vmatpush.bf16.msra.mxu0 %v652
      %664 = vmatpush.bf16.msra.mxu0 %v651
      %665 = vmatpush.bf16.msra.mxu0 %v650
      %666 = vmatpush.bf16.msra.mxu0 %v649
      %667 = vmatpush.bf16.msra.mxu0 %v648
      %668 = vmatpush.bf16.msra.mxu0 %v647
      %669 = vmatpush.bf16.msra.mxu0 %v646
      %670 = vmatmul.bf16.gmra.mxu0 %v606
      %v671 = vpop.f32.mrf.mxu0
      %v672 = vadd.f32 0.0, %v671
      %v673 = vpop.f32.mrf.mxu0
      %v674 = vadd.f32 0.0, %v673
      %675 = vmatmul.bf16.gmra.mxu0 %v607
      %v676 = vpop.f32.mrf.mxu0
      %v677 = vadd.f32 0.0, %v676
      %v678 = vpop.f32.mrf.mxu0
      %v679 = vadd.f32 0.0, %v678
      %680 = vmatmul.bf16.gmra.mxu0 %v608
      %v681 = vpop.f32.mrf.mxu0
      %v682 = vadd.f32 0.0, %v681
      %v683 = vpop.f32.mrf.mxu0
      %v684 = vadd.f32 0.0, %v683
      %685 = vmatmul.bf16.gmra.mxu0 %v609
      %v686 = vpop.f32.mrf.mxu0
      %v687 = vadd.f32 0.0, %v686
      %v688 = vpop.f32.mrf.mxu0
      %v689 = vadd.f32 0.0, %v688
      %690 = vdwg.mxu0
      %v699 = vunpack.c.l.b16 %v434
      %v700 = vunpack.c.l.b16 %v435
      %v701 = vunpack.c.l.b16 %v436
      %v702 = vunpack.c.l.b16 %v437
      %v703 = vunpack.c.l.b16 %v438
      %v704 = vunpack.c.l.b16 %v439
      %v705 = vunpack.c.l.b16 %v440
      %v706 = vunpack.c.l.b16 %v441
      %v707 = vpack.c.b16 %v700, %v699
      %v708 = vpack.c.b16 %v702, %v701
      %v709 = vpack.c.b16 %v704, %v703
      %v710 = vpack.c.b16 %v706, %v705
      %v731 = vunpack.c.l.b16 %v442
      %v732 = vunpack.c.l.b16 %v443
      %v733 = vunpack.c.l.b16 %v444
      %v734 = vunpack.c.l.b16 %v445
      %v735 = vunpack.c.l.b16 %v446
      %v736 = vunpack.c.l.b16 %v447
      %v737 = vunpack.c.l.b16 %v448
      %v738 = vunpack.c.l.b16 %v449
      %v739 = vunpack.c.l.b16 %v450
      %v740 = vunpack.c.l.b16 %v451
      %v741 = vunpack.c.l.b16 %v452
      %v742 = vunpack.c.l.b16 %v453
      %v743 = vunpack.c.l.b16 %v454
      %v744 = vunpack.c.l.b16 %v455
      %v745 = vunpack.c.l.b16 %v456
      %v746 = vunpack.c.l.b16 %v457
      %v747 = vpack.c.b16 %v732, %v731
      %v748 = vpack.c.b16 %v734, %v733
      %v749 = vpack.c.b16 %v736, %v735
      %v750 = vpack.c.b16 %v738, %v737
      %v751 = vpack.c.b16 %v740, %v739
      %v752 = vpack.c.b16 %v742, %v741
      %v753 = vpack.c.b16 %v744, %v743
      %v754 = vpack.c.b16 %v746, %v745
      %763 = vmatpush.bf16.msra.mxu0 %v754
      %764 = vmatpush.bf16.msra.mxu0 %v753
      %765 = vmatpush.bf16.msra.mxu0 %v752
      %766 = vmatpush.bf16.msra.mxu0 %v751
      %767 = vmatpush.bf16.msra.mxu0 %v750
      %768 = vmatpush.bf16.msra.mxu0 %v749
      %769 = vmatpush.bf16.msra.mxu0 %v748
      %770 = vmatpush.bf16.msra.mxu0 %v747
      %771 = vmatmul.bf16.gmra.mxu0 %v707
      %v772 = vpop.f32.mrf.mxu0
      %v773 = vadd.f32 %v672, %v772
      %v774 = vpop.f32.mrf.mxu0
      %v775 = vadd.f32 %v674, %v774
      %776 = vmatmul.bf16.gmra.mxu0 %v708
      %v777 = vpop.f32.mrf.mxu0
      %v778 = vadd.f32 %v677, %v777
      %v779 = vpop.f32.mrf.mxu0
      %v780 = vadd.f32 %v679, %v779
      %781 = vmatmul.bf16.gmra.mxu0 %v709
      %v782 = vpop.f32.mrf.mxu0
      %v783 = vadd.f32 %v682, %v782
      %v784 = vpop.f32.mrf.mxu0
      %v785 = vadd.f32 %v684, %v784
      %786 = vmatmul.bf16.gmra.mxu0 %v710
      %v787 = vpop.f32.mrf.mxu0
      %v788 = vadd.f32 %v687, %v787
      %v789 = vpop.f32.mrf.mxu0
      %v790 = vadd.f32 %v689, %v789
      %791 = vdwg.mxu0
      %v792 = vld [vmem:[%s423] sm:$0xe]
      %v793 = vld [vmem:[%s423 + $0x8] sm:$0xe]
      %v794 = vld [vmem:[%s423 + $0x10] sm:$0xe]
      %v795 = vld [vmem:[%s423 + $0x18] sm:$0xe]
      %v796 = vld [vmem:[%s423 + $0x20] sm:$0xe]
      %v797 = vld [vmem:[%s423 + $0x28] sm:$0xe]
      %v798 = vld [vmem:[%s423 + $0x30] sm:$0xe]
      %v799 = vld [vmem:[%s423 + $0x38] sm:$0xe]
      %vm816 = vcmask 1042432
      %vm817 = vcmask 1046532
      %vm818 = vmor %vm816, %vm817
      %v819 = vrot.slane %v792, 5
      %v820 = vrot.slane %v819, 4
      %v821 = vrot.slane %v458, 5
      %v822 = vsel %vm818, %v820, %v821
      %v823 = vrot.slane %v793, 5
      %v824 = vrot.slane %v823, 4
      %v825 = vrot.slane %v459, 5
      %v826 = vsel %vm818, %v824, %v825
      %v827 = vrot.slane %v794, 5
      %v828 = vrot.slane %v827, 4
      %v829 = vrot.slane %v460, 5
      %v830 = vsel %vm818, %v828, %v829
      %v831 = vrot.slane %v795, 5
      %v832 = vrot.slane %v831, 4
      %v833 = vrot.slane %v461, 5
      %v834 = vsel %vm818, %v832, %v833
      %v835 = vrot.slane %v796, 5
      %v836 = vrot.slane %v835, 4
      %v837 = vrot.slane %v462, 5
      %v838 = vsel %vm818, %v836, %v837
      %v839 = vrot.slane %v797, 5
      %v840 = vrot.slane %v839, 4
      %v841 = vrot.slane %v463, 5
      %v842 = vsel %vm818, %v840, %v841
      %v843 = vrot.slane %v798, 5
      %v844 = vrot.slane %v843, 4
      %v845 = vrot.slane %v464, 5
      %v846 = vsel %vm818, %v844, %v845
      %v847 = vrot.slane %v799, 5
      %v848 = vrot.slane %v847, 4
      %v849 = vrot.slane %v465, 5
      %v850 = vsel %vm818, %v848, %v849
      %s851 = scalar_lea.vmem %s1, 128
      %v852 = vld [vmem:[%s851] sm:$0xf]
      %v853 = vld [vmem:[%s851 + $0x4] sm:$0xf]
      %v854 = vld [vmem:[%s851 + $0x8] sm:$0xf]
      %v855 = vld [vmem:[%s851 + $0xc] sm:$0xf]
      %v856 = vld [vmem:[%s851 + $0x10] sm:$0xf]
      %v857 = vld [vmem:[%s851 + $0x14] sm:$0xf]
      %v858 = vld [vmem:[%s851 + $0x18] sm:$0xf]
      %v859 = vld [vmem:[%s851 + $0x1c] sm:$0xf]
      %v860 = vld [vmem:[%s851 + $0x20] sm:$0xf]
      %v861 = vld [vmem:[%s851 + $0x24] sm:$0xf]
      %v862 = vld [vmem:[%s851 + $0x28] sm:$0xf]
      %v863 = vld [vmem:[%s851 + $0x2c] sm:$0xf]
      %v864 = vld [vmem:[%s851 + $0x30] sm:$0xf]
      %v865 = vld [vmem:[%s851 + $0x34] sm:$0xf]
      %v866 = vld [vmem:[%s851 + $0x38] sm:$0xf]
      %v867 = vld [vmem:[%s851 + $0x3c] sm:$0xf]
      %v868 = vunpack.c.l.b16 %v822
      %v869 = vunpack.c.l.b16 %v826
      %v870 = vunpack.c.l.b16 %v830
      %v871 = vunpack.c.l.b16 %v834
      %v872 = vunpack.c.l.b16 %v838
      %v873 = vunpack.c.l.b16 %v842
      %v874 = vunpack.c.l.b16 %v846
      %v875 = vunpack.c.l.b16 %v850
      %v876 = vpack.c.b16 %v869, %v868
      %v877 = vpack.c.b16 %v871, %v870
      %v878 = vpack.c.b16 %v873, %v872
      %v879 = vpack.c.b16 %v875, %v874
      %v900 = vunpack.c.l.b16 %v852
      %v901 = vunpack.c.l.b16 %v853
      %v902 = vunpack.c.l.b16 %v854
      %v903 = vunpack.c.l.b16 %v855
      %v904 = vunpack.c.l.b16 %v856
      %v905 = vunpack.c.l.b16 %v857
      %v906 = vunpack.c.l.b16 %v858
      %v907 = vunpack.c.l.b16 %v859
      %v908 = vunpack.c.l.b16 %v860
      %v909 = vunpack.c.l.b16 %v861
      %v910 = vunpack.c.l.b16 %v862
      %v911 = vunpack.c.l.b16 %v863
      %v912 = vunpack.c.l.b16 %v864
      %v913 = vunpack.c.l.b16 %v865
      %v914 = vunpack.c.l.b16 %v866
      %v915 = vunpack.c.l.b16 %v867
      %v916 = vpack.c.b16 %v901, %v900
      %v917 = vpack.c.b16 %v903, %v902
      %v918 = vpack.c.b16 %v905, %v904
      %v919 = vpack.c.b16 %v907, %v906
      %v920 = vpack.c.b16 %v909, %v908
      %v921 = vpack.c.b16 %v911, %v910
      %v922 = vpack.c.b16 %v913, %v912
      %v923 = vpack.c.b16 %v915, %v914
      %932 = vmatpush.bf16.msra.mxu0 %v923
      %933 = vmatpush.bf16.msra.mxu0 %v922
      %934 = vmatpush.bf16.msra.mxu0 %v921
      %935 = vmatpush.bf16.msra.mxu0 %v920
      %936 = vmatpush.bf16.msra.mxu0 %v919
      %937 = vmatpush.bf16.msra.mxu0 %v918
      %938 = vmatpush.bf16.msra.mxu0 %v917
      %939 = vmatpush.bf16.msra.mxu0 %v916
      %940 = vmatmul.bf16.gmra.mxu0 %v876
      %v941 = vpop.f32.mrf.mxu0
      %v942 = vadd.f32 0.0, %v941
      %v943 = vpop.f32.mrf.mxu0
      %v944 = vadd.f32 0.0, %v943
      %945 = vmatmul.bf16.gmra.mxu0 %v877
      %v946 = vpop.f32.mrf.mxu0
      %v947 = vadd.f32 0.0, %v946
      %v948 = vpop.f32.mrf.mxu0
      %v949 = vadd.f32 0.0, %v948
      %950 = vmatmul.bf16.gmra.mxu0 %v878
      %v951 = vpop.f32.mrf.mxu0
      %v952 = vadd.f32 0.0, %v951
      %v953 = vpop.f32.mrf.mxu0
      %v954 = vadd.f32 0.0, %v953
      %955 = vmatmul.bf16.gmra.mxu0 %v879
      %v956 = vpop.f32.mrf.mxu0
      %v957 = vadd.f32 0.0, %v956
      %v958 = vpop.f32.mrf.mxu0
      %v959 = vadd.f32 0.0, %v958
      %960 = vdwg.mxu0
      %v961 = vadd.f32 %v773, %v942
      %v962 = vadd.f32 %v775, %v944
      %v963 = vadd.f32 %v778, %v947
      %v964 = vadd.f32 %v780, %v949
      %v965 = vadd.f32 %v783, %v952
      %v966 = vadd.f32 %v785, %v954
      %v967 = vadd.f32 %v788, %v957
      %v968 = vadd.f32 %v790, %v959
      %s969 = scalar_lea.vmem %s423, 8
      %v970 = vld [vmem:[%s969] sm:$0xf]
      %v971 = vld [vmem:[%s969 + $0x8] sm:$0xf]
      %v972 = vld [vmem:[%s969 + $0x10] sm:$0xf]
      %v973 = vld [vmem:[%s969 + $0x18] sm:$0xf]
      %v974 = vld [vmem:[%s969 + $0x20] sm:$0xf]
      %v975 = vld [vmem:[%s969 + $0x28] sm:$0xf]
      %v976 = vld [vmem:[%s969 + $0x30] sm:$0xf]
      %v977 = vld [vmem:[%s969 + $0x38] sm:$0xf]
      %s978 = scalar_lea.vmem %s1, 192
      %v979 = vld [vmem:[%s978] sm:$0xf]
      %v980 = vld [vmem:[%s978 + $0x4] sm:$0xf]
      %v981 = vld [vmem:[%s978 + $0x8] sm:$0xf]
      %v982 = vld [vmem:[%s978 + $0xc] sm:$0xf]
      %v983 = vld [vmem:[%s978 + $0x10] sm:$0xf]
      %v984 = vld [vmem:[%s978 + $0x14] sm:$0xf]
      %v985 = vld [vmem:[%s978 + $0x18] sm:$0xf]
      %v986 = vld [vmem:[%s978 + $0x1c] sm:$0xf]
      %v987 = vld [vmem:[%s978 + $0x20] sm:$0xf]
      %v988 = vld [vmem:[%s978 + $0x24] sm:$0xf]
      %v989 = vld [vmem:[%s978 + $0x28] sm:$0xf]
      %v990 = vld [vmem:[%s978 + $0x2c] sm:$0xf]
      %v991 = vld [vmem:[%s978 + $0x30] sm:$0xf]
      %v992 = vld [vmem:[%s978 + $0x34] sm:$0xf]
      %v993 = vld [vmem:[%s978 + $0x38] sm:$0xf]
      %v994 = vld [vmem:[%s978 + $0x3c] sm:$0xf]
      %v1003 = vunpack.c.l.b16 %v970
      %v1004 = vunpack.c.l.b16 %v971
      %v1005 = vunpack.c.l.b16 %v972
      %v1006 = vunpack.c.l.b16 %v973
      %v1007 = vunpack.c.l.b16 %v974
      %v1008 = vunpack.c.l.b16 %v975
      %v1009 = vunpack.c.l.b16 %v976
      %v1010 = vunpack.c.l.b16 %v977
      %v1011 = vpack.c.b16 %v1004, %v1003
      %v1012 = vpack.c.b16 %v1006, %v1005
      %v1013 = vpack.c.b16 %v1008, %v1007
      %v1014 = vpack.c.b16 %v1010, %v1009
      %v1035 = vunpack.c.l.b16 %v979
      %v1036 = vunpack.c.l.b16 %v980
      %v1037 = vunpack.c.l.b16 %v981
      %v1038 = vunpack.c.l.b16 %v982
      %v1039 = vunpack.c.l.b16 %v983
      %v1040 = vunpack.c.l.b16 %v984
      %v1041 = vunpack.c.l.b16 %v985
      %v1042 = vunpack.c.l.b16 %v986
      %v1043 = vunpack.c.l.b16 %v987
      %v1044 = vunpack.c.l.b16 %v988
      %v1045 = vunpack.c.l.b16 %v989
      %v1046 = vunpack.c.l.b16 %v990
      %v1047 = vunpack.c.l.b16 %v991
      %v1048 = vunpack.c.l.b16 %v992
      %v1049 = vunpack.c.l.b16 %v993
      %v1050 = vunpack.c.l.b16 %v994
      %v1051 = vpack.c.b16 %v1036, %v1035
      %v1052 = vpack.c.b16 %v1038, %v1037
      %v1053 = vpack.c.b16 %v1040, %v1039
      %v1054 = vpack.c.b16 %v1042, %v1041
      %v1055 = vpack.c.b16 %v1044, %v1043
      %v1056 = vpack.c.b16 %v1046, %v1045
      %v1057 = vpack.c.b16 %v1048, %v1047
      %v1058 = vpack.c.b16 %v1050, %v1049
      %1067 = vmatpush.bf16.msra.mxu0 %v1058
      %1068 = vmatpush.bf16.msra.mxu0 %v1057
      %1069 = vmatpush.bf16.msra.mxu0 %v1056
      %1070 = vmatpush.bf16.msra.mxu0 %v1055
      %1071 = vmatpush.bf16.msra.mxu0 %v1054
      %1072 = vmatpush.bf16.msra.mxu0 %v1053
      %1073 = vmatpush.bf16.msra.mxu0 %v1052
      %1074 = vmatpush.bf16.msra.mxu0 %v1051
      %1075 = vmatmul.bf16.gmra.mxu0 %v1011
      %v1076 = vpop.f32.mrf.mxu0
      %v1077 = vadd.f32 0.0, %v1076
      %v1078 = vpop.f32.mrf.mxu0
      %v1079 = vadd.f32 0.0, %v1078
      %1080 = vmatmul.bf16.gmra.mxu0 %v1012
      %v1081 = vpop.f32.mrf.mxu0
      %v1082 = vadd.f32 0.0, %v1081
      %v1083 = vpop.f32.mrf.mxu0
      %v1084 = vadd.f32 0.0, %v1083
      %1085 = vmatmul.bf16.gmra.mxu0 %v1013
      %v1086 = vpop.f32.mrf.mxu0
      %v1087 = vadd.f32 0.0, %v1086
      %v1088 = vpop.f32.mrf.mxu0
      %v1089 = vadd.f32 0.0, %v1088
      %1090 = vmatmul.bf16.gmra.mxu0 %v1014
      %v1091 = vpop.f32.mrf.mxu0
      %v1092 = vadd.f32 0.0, %v1091
      %v1093 = vpop.f32.mrf.mxu0
      %v1094 = vadd.f32 0.0, %v1093
      %1095 = vdwg.mxu0
      %v1096 = vadd.f32 %v961, %v1077
      %v1097 = vadd.f32 %v962, %v1079
      %v1098 = vadd.f32 %v963, %v1082
      %v1099 = vadd.f32 %v964, %v1084
      %v1100 = vadd.f32 %v965, %v1087
      %v1101 = vadd.f32 %v966, %v1089
      %v1102 = vadd.f32 %v967, %v1092
      %v1103 = vadd.f32 %v968, %v1094
      %v1104 = vld [vmem:[%s969] sm:$0xf]
      %v1105 = vld [vmem:[%s969 + $0x4] sm:$0x1]
      %v1106 = vld [vmem:[%s969 + $0x8] sm:$0xf]
      %v1107 = vld [vmem:[%s969 + $0xc] sm:$0x1]
      %v1108 = vld [vmem:[%s969 + $0x10] sm:$0xf]
      %v1109 = vld [vmem:[%s969 + $0x14] sm:$0x1]
      %v1110 = vld [vmem:[%s969 + $0x18] sm:$0xf]
      %v1111 = vld [vmem:[%s969 + $0x1c] sm:$0x1]
      %v1112 = vld [vmem:[%s969 + $0x20] sm:$0xf]
      %v1113 = vld [vmem:[%s969 + $0x24] sm:$0x1]
      %v1114 = vld [vmem:[%s969 + $0x28] sm:$0xf]
      %v1115 = vld [vmem:[%s969 + $0x2c] sm:$0x1]
      %v1116 = vld [vmem:[%s969 + $0x30] sm:$0xf]
      %v1117 = vld [vmem:[%s969 + $0x34] sm:$0x1]
      %v1118 = vld [vmem:[%s969 + $0x38] sm:$0xf]
      %v1119 = vld [vmem:[%s969 + $0x3c] sm:$0x1]
      %v1121 = vshrl.u32 %v1104, 16
      %v1123 = vrot.slane %v1121, 4
      %v1124 = vshll.u32 %v1104, 16
      %v1126 = vrot.slane %v1124, 5
      %v1127 = vor.u32 %v1123, %v1126
      %v1128 = vrot.slane %v1127, 4
      %v1130 = vshll.u32 %v1105, 16
      %v1132 = vrot.slane %v1130, 5
      %v1133 = vsel %vm468, %v1128, %v1132
      %v1135 = vshrl.u32 %v1106, 16
      %v1137 = vrot.slane %v1135, 4
      %v1138 = vshll.u32 %v1106, 16
      %v1140 = vrot.slane %v1138, 5
      %v1141 = vor.u32 %v1137, %v1140
      %v1142 = vrot.slane %v1141, 4
      %v1144 = vshll.u32 %v1107, 16
      %v1146 = vrot.slane %v1144, 5
      %v1147 = vsel %vm468, %v1142, %v1146
      %v1149 = vshrl.u32 %v1108, 16
      %v1151 = vrot.slane %v1149, 4
      %v1152 = vshll.u32 %v1108, 16
      %v1154 = vrot.slane %v1152, 5
      %v1155 = vor.u32 %v1151, %v1154
      %v1156 = vrot.slane %v1155, 4
      %v1158 = vshll.u32 %v1109, 16
      %v1160 = vrot.slane %v1158, 5
      %v1161 = vsel %vm468, %v1156, %v1160
      %v1163 = vshrl.u32 %v1110, 16
      %v1165 = vrot.slane %v1163, 4
      %v1166 = vshll.u32 %v1110, 16
      %v1168 = vrot.slane %v1166, 5
      %v1169 = vor.u32 %v1165, %v1168
      %v1170 = vrot.slane %v1169, 4
      %v1172 = vshll.u32 %v1111, 16
      %v1174 = vrot.slane %v1172, 5
      %v1175 = vsel %vm468, %v1170, %v1174
      %v1177 = vshrl.u32 %v1112, 16
      %v1179 = vrot.slane %v1177, 4
      %v1180 = vshll.u32 %v1112, 16
      %v1182 = vrot.slane %v1180, 5
      %v1183 = vor.u32 %v1179, %v1182
      %v1184 = vrot.slane %v1183, 4
      %v1186 = vshll.u32 %v1113, 16
      %v1188 = vrot.slane %v1186, 5
      %v1189 = vsel %vm468, %v1184, %v1188
      %v1191 = vshrl.u32 %v1114, 16
      %v1193 = vrot.slane %v1191, 4
      %v1194 = vshll.u32 %v1114, 16
      %v1196 = vrot.slane %v1194, 5
      %v1197 = vor.u32 %v1193, %v1196
      %v1198 = vrot.slane %v1197, 4
      %v1200 = vshll.u32 %v1115, 16
      %v1202 = vrot.slane %v1200, 5
      %v1203 = vsel %vm468, %v1198, %v1202
      %v1205 = vshrl.u32 %v1116, 16
      %v1207 = vrot.slane %v1205, 4
      %v1208 = vshll.u32 %v1116, 16
      %v1210 = vrot.slane %v1208, 5
      %v1211 = vor.u32 %v1207, %v1210
      %v1212 = vrot.slane %v1211, 4
      %v1214 = vshll.u32 %v1117, 16
      %v1216 = vrot.slane %v1214, 5
      %v1217 = vsel %vm468, %v1212, %v1216
      %v1219 = vshrl.u32 %v1118, 16
      %v1221 = vrot.slane %v1219, 4
      %v1222 = vshll.u32 %v1118, 16
      %v1224 = vrot.slane %v1222, 5
      %v1225 = vor.u32 %v1221, %v1224
      %v1226 = vrot.slane %v1225, 4
      %v1228 = vshll.u32 %v1119, 16
      %v1230 = vrot.slane %v1228, 5
      %v1231 = vsel %vm468, %v1226, %v1230
      %s1232 = scalar_lea.vmem %s1, 256
      %v1233 = vld [vmem:[%s1232] sm:$0xf]
      %v1234 = vld [vmem:[%s1232 + $0x4] sm:$0xf]
      %v1235 = vld [vmem:[%s1232 + $0x8] sm:$0xf]
      %v1236 = vld [vmem:[%s1232 + $0xc] sm:$0xf]
      %v1237 = vld [vmem:[%s1232 + $0x10] sm:$0xf]
      %v1238 = vld [vmem:[%s1232 + $0x14] sm:$0xf]
      %v1239 = vld [vmem:[%s1232 + $0x18] sm:$0xf]
      %v1240 = vld [vmem:[%s1232 + $0x1c] sm:$0xf]
      %v1241 = vld [vmem:[%s1232 + $0x20] sm:$0xf]
      %v1242 = vld [vmem:[%s1232 + $0x24] sm:$0xf]
      %v1243 = vld [vmem:[%s1232 + $0x28] sm:$0xf]
      %v1244 = vld [vmem:[%s1232 + $0x2c] sm:$0xf]
      %v1245 = vld [vmem:[%s1232 + $0x30] sm:$0xf]
      %v1246 = vld [vmem:[%s1232 + $0x34] sm:$0xf]
      %v1247 = vld [vmem:[%s1232 + $0x38] sm:$0xf]
      %v1248 = vld [vmem:[%s1232 + $0x3c] sm:$0xf]
      %v1249 = vunpack.c.l.b16 %v1133
      %v1250 = vunpack.c.l.b16 %v1147
      %v1251 = vunpack.c.l.b16 %v1161
      %v1252 = vunpack.c.l.b16 %v1175
      %v1253 = vunpack.c.l.b16 %v1189
      %v1254 = vunpack.c.l.b16 %v1203
      %v1255 = vunpack.c.l.b16 %v1217
      %v1256 = vunpack.c.l.b16 %v1231
      %v1257 = vpack.c.b16 %v1250, %v1249
      %v1258 = vpack.c.b16 %v1252, %v1251
      %v1259 = vpack.c.b16 %v1254, %v1253
      %v1260 = vpack.c.b16 %v1256, %v1255
      %v1281 = vunpack.c.l.b16 %v1233
      %v1282 = vunpack.c.l.b16 %v1234
      %v1283 = vunpack.c.l.b16 %v1235
      %v1284 = vunpack.c.l.b16 %v1236
      %v1285 = vunpack.c.l.b16 %v1237
      %v1286 = vunpack.c.l.b16 %v1238
      %v1287 = vunpack.c.l.b16 %v1239
      %v1288 = vunpack.c.l.b16 %v1240
      %v1289 = vunpack.c.l.b16 %v1241
      %v1290 = vunpack.c.l.b16 %v1242
      %v1291 = vunpack.c.l.b16 %v1243
      %v1292 = vunpack.c.l.b16 %v1244
      %v1293 = vunpack.c.l.b16 %v1245
      %v1294 = vunpack.c.l.b16 %v1246
      %v1295 = vunpack.c.l.b16 %v1247
      %v1296 = vunpack.c.l.b16 %v1248
      %v1297 = vpack.c.b16 %v1282, %v1281
      %v1298 = vpack.c.b16 %v1284, %v1283
      %v1299 = vpack.c.b16 %v1286, %v1285
      %v1300 = vpack.c.b16 %v1288, %v1287
      %v1301 = vpack.c.b16 %v1290, %v1289
      %v1302 = vpack.c.b16 %v1292, %v1291
      %v1303 = vpack.c.b16 %v1294, %v1293
      %v1304 = vpack.c.b16 %v1296, %v1295
      %1313 = vmatpush.bf16.msra.mxu0 %v1304
      %1314 = vmatpush.bf16.msra.mxu0 %v1303
      %1315 = vmatpush.bf16.msra.mxu0 %v1302
      %1316 = vmatpush.bf16.msra.mxu0 %v1301
      %1317 = vmatpush.bf16.msra.mxu0 %v1300
      %1318 = vmatpush.bf16.msra.mxu0 %v1299
      %1319 = vmatpush.bf16.msra.mxu0 %v1298
      %1320 = vmatpush.bf16.msra.mxu0 %v1297
      %1321 = vmatmul.bf16.gmra.mxu0 %v1257
      %v1322 = vpop.f32.mrf.mxu0
      %v1323 = vadd.f32 0.0, %v1322
      %v1324 = vpop.f32.mrf.mxu0
      %v1325 = vadd.f32 0.0, %v1324
      %1326 = vmatmul.bf16.gmra.mxu0 %v1258
      %v1327 = vpop.f32.mrf.mxu0
      %v1328 = vadd.f32 0.0, %v1327
      %v1329 = vpop.f32.mrf.mxu0
      %v1330 = vadd.f32 0.0, %v1329
      %1331 = vmatmul.bf16.gmra.mxu0 %v1259
      %v1332 = vpop.f32.mrf.mxu0
      %v1333 = vadd.f32 0.0, %v1332
      %v1334 = vpop.f32.mrf.mxu0
      %v1335 = vadd.f32 0.0, %v1334
      %1336 = vmatmul.bf16.gmra.mxu0 %v1260
      %v1337 = vpop.f32.mrf.mxu0
      %v1338 = vadd.f32 0.0, %v1337
      %v1339 = vpop.f32.mrf.mxu0
      %v1340 = vadd.f32 0.0, %v1339
      %1341 = vdwg.mxu0
      %v1342 = vadd.f32 %v1096, %v1323
      %v1343 = vadd.f32 %v1097, %v1325
      %v1344 = vadd.f32 %v1098, %v1328
      %v1345 = vadd.f32 %v1099, %v1330
      %v1346 = vadd.f32 %v1100, %v1333
      %v1347 = vadd.f32 %v1101, %v1335
      %v1348 = vadd.f32 %v1102, %v1338
      %v1349 = vadd.f32 %v1103, %v1340
      %v1350 = vld [vmem:[%s969] sm:$0xe]
      %v1351 = vld [vmem:[%s969 + $0x8] sm:$0xe]
      %v1352 = vld [vmem:[%s969 + $0x10] sm:$0xe]
      %v1353 = vld [vmem:[%s969 + $0x18] sm:$0xe]
      %v1354 = vld [vmem:[%s969 + $0x20] sm:$0xe]
      %v1355 = vld [vmem:[%s969 + $0x28] sm:$0xe]
      %v1356 = vld [vmem:[%s969 + $0x30] sm:$0xe]
      %v1357 = vld [vmem:[%s969 + $0x38] sm:$0xe]
      %v1374 = vrot.slane %v1350, 5
      %v1375 = vrot.slane %v1374, 4
      %v1376 = vrot.slane %v1105, 5
      %v1377 = vsel %vm818, %v1375, %v1376
      %v1378 = vrot.slane %v1351, 5
      %v1379 = vrot.slane %v1378, 4
      %v1380 = vrot.slane %v1107, 5
      %v1381 = vsel %vm818, %v1379, %v1380
      %v1382 = vrot.slane %v1352, 5
      %v1383 = vrot.slane %v1382, 4
      %v1384 = vrot.slane %v1109, 5
      %v1385 = vsel %vm818, %v1383, %v1384
      %v1386 = vrot.slane %v1353, 5
      %v1387 = vrot.slane %v1386, 4
      %v1388 = vrot.slane %v1111, 5
      %v1389 = vsel %vm818, %v1387, %v1388
      %v1390 = vrot.slane %v1354, 5
      %v1391 = vrot.slane %v1390, 4
      %v1392 = vrot.slane %v1113, 5
      %v1393 = vsel %vm818, %v1391, %v1392
      %v1394 = vrot.slane %v1355, 5
      %v1395 = vrot.slane %v1394, 4
      %v1396 = vrot.slane %v1115, 5
      %v1397 = vsel %vm818, %v1395, %v1396
      %v1398 = vrot.slane %v1356, 5
      %v1399 = vrot.slane %v1398, 4
      %v1400 = vrot.slane %v1117, 5
      %v1401 = vsel %vm818, %v1399, %v1400
      %v1402 = vrot.slane %v1357, 5
      %v1403 = vrot.slane %v1402, 4
      %v1404 = vrot.slane %v1119, 5
      %v1405 = vsel %vm818, %v1403, %v1404
      %s1406 = scalar_lea.vmem %s1, 320
      %v1407 = vld [vmem:[%s1406] sm:$0xf]
      %v1408 = vld [vmem:[%s1406 + $0x4] sm:$0xf]
      %v1409 = vld [vmem:[%s1406 + $0x8] sm:$0xf]
      %v1410 = vld [vmem:[%s1406 + $0xc] sm:$0xf]
      %v1411 = vld [vmem:[%s1406 + $0x10] sm:$0xf]
      %v1412 = vld [vmem:[%s1406 + $0x14] sm:$0xf]
      %v1413 = vld [vmem:[%s1406 + $0x18] sm:$0xf]
      %v1414 = vld [vmem:[%s1406 + $0x1c] sm:$0xf]
      %v1415 = vld [vmem:[%s1406 + $0x20] sm:$0xf]
      %v1416 = vld [vmem:[%s1406 + $0x24] sm:$0xf]
      %v1417 = vld [vmem:[%s1406 + $0x28] sm:$0xf]
      %v1418 = vld [vmem:[%s1406 + $0x2c] sm:$0xf]
      %v1419 = vld [vmem:[%s1406 + $0x30] sm:$0xf]
      %v1420 = vld [vmem:[%s1406 + $0x34] sm:$0xf]
      %v1421 = vld [vmem:[%s1406 + $0x38] sm:$0xf]
      %v1422 = vld [vmem:[%s1406 + $0x3c] sm:$0xf]
      %v1423 = vunpack.c.l.b16 %v1377
      %v1424 = vunpack.c.l.b16 %v1381
      %v1425 = vunpack.c.l.b16 %v1385
      %v1426 = vunpack.c.l.b16 %v1389
      %v1427 = vunpack.c.l.b16 %v1393
      %v1428 = vunpack.c.l.b16 %v1397
      %v1429 = vunpack.c.l.b16 %v1401
      %v1430 = vunpack.c.l.b16 %v1405
      %v1431 = vpack.c.b16 %v1424, %v1423
      %v1432 = vpack.c.b16 %v1426, %v1425
      %v1433 = vpack.c.b16 %v1428, %v1427
      %v1434 = vpack.c.b16 %v1430, %v1429
      %v1455 = vunpack.c.l.b16 %v1407
      %v1456 = vunpack.c.l.b16 %v1408
      %v1457 = vunpack.c.l.b16 %v1409
      %v1458 = vunpack.c.l.b16 %v1410
      %v1459 = vunpack.c.l.b16 %v1411
      %v1460 = vunpack.c.l.b16 %v1412
      %v1461 = vunpack.c.l.b16 %v1413
      %v1462 = vunpack.c.l.b16 %v1414
      %v1463 = vunpack.c.l.b16 %v1415
      %v1464 = vunpack.c.l.b16 %v1416
      %v1465 = vunpack.c.l.b16 %v1417
      %v1466 = vunpack.c.l.b16 %v1418
      %v1467 = vunpack.c.l.b16 %v1419
      %v1468 = vunpack.c.l.b16 %v1420
      %v1469 = vunpack.c.l.b16 %v1421
      %v1470 = vunpack.c.l.b16 %v1422
      %v1471 = vpack.c.b16 %v1456, %v1455
      %v1472 = vpack.c.b16 %v1458, %v1457
      %v1473 = vpack.c.b16 %v1460, %v1459
      %v1474 = vpack.c.b16 %v1462, %v1461
      %v1475 = vpack.c.b16 %v1464, %v1463
      %v1476 = vpack.c.b16 %v1466, %v1465
      %v1477 = vpack.c.b16 %v1468, %v1467
      %v1478 = vpack.c.b16 %v1470, %v1469
      %1487 = vmatpush.bf16.msra.mxu0 %v1478
      %1488 = vmatpush.bf16.msra.mxu0 %v1477
      %1489 = vmatpush.bf16.msra.mxu0 %v1476
      %1490 = vmatpush.bf16.msra.mxu0 %v1475
      %1491 = vmatpush.bf16.msra.mxu0 %v1474
      %1492 = vmatpush.bf16.msra.mxu0 %v1473
      %1493 = vmatpush.bf16.msra.mxu0 %v1472
      %1494 = vmatpush.bf16.msra.mxu0 %v1471
      %1495 = vmatmul.bf16.gmra.mxu0 %v1431
      %v1496 = vpop.f32.mrf.mxu0
      %v1497 = vadd.f32 0.0, %v1496
      %v1498 = vpop.f32.mrf.mxu0
      %v1499 = vadd.f32 0.0, %v1498
      %1500 = vmatmul.bf16.gmra.mxu0 %v1432
      %v1501 = vpop.f32.mrf.mxu0
      %v1502 = vadd.f32 0.0, %v1501
      %v1503 = vpop.f32.mrf.mxu0
      %v1504 = vadd.f32 0.0, %v1503
      %1505 = vmatmul.bf16.gmra.mxu0 %v1433
      %v1506 = vpop.f32.mrf.mxu0
      %v1507 = vadd.f32 0.0, %v1506
      %v1508 = vpop.f32.mrf.mxu0
      %v1509 = vadd.f32 0.0, %v1508
      %1510 = vmatmul.bf16.gmra.mxu0 %v1434
      %v1511 = vpop.f32.mrf.mxu0
      %v1512 = vadd.f32 0.0, %v1511
      %v1513 = vpop.f32.mrf.mxu0
      %v1514 = vadd.f32 0.0, %v1513
      %1515 = vdwg.mxu0
      %v1516 = vadd.f32 %v1342, %v1497
      %v1517 = vadd.f32 %v1343, %v1499
      %v1518 = vadd.f32 %v1344, %v1502
      %v1519 = vadd.f32 %v1345, %v1504
      %v1520 = vadd.f32 %v1346, %v1507
      %v1521 = vadd.f32 %v1347, %v1509
      %v1522 = vadd.f32 %v1348, %v1512
      %v1523 = vadd.f32 %v1349, %v1514
      %s1524 = scalar_lea.vmem %s423, 16
      %v1525 = vld [vmem:[%s1524] sm:$0xf]
      %v1526 = vld [vmem:[%s1524 + $0x8] sm:$0xf]
      %v1527 = vld [vmem:[%s1524 + $0x10] sm:$0xf]
      %v1528 = vld [vmem:[%s1524 + $0x18] sm:$0xf]
      %v1529 = vld [vmem:[%s1524 + $0x20] sm:$0xf]
      %v1530 = vld [vmem:[%s1524 + $0x28] sm:$0xf]
      %v1531 = vld [vmem:[%s1524 + $0x30] sm:$0xf]
      %v1532 = vld [vmem:[%s1524 + $0x38] sm:$0xf]
      %s1533 = scalar_lea.vmem %s1, 384
      %v1534 = vld [vmem:[%s1533] sm:$0xf]
      %v1535 = vld [vmem:[%s1533 + $0x4] sm:$0xf]
      %v1536 = vld [vmem:[%s1533 + $0x8] sm:$0xf]
      %v1537 = vld [vmem:[%s1533 + $0xc] sm:$0xf]
      %v1538 = vld [vmem:[%s1533 + $0x10] sm:$0xf]
      %v1539 = vld [vmem:[%s1533 + $0x14] sm:$0xf]
      %v1540 = vld [vmem:[%s1533 + $0x18] sm:$0xf]
      %v1541 = vld [vmem:[%s1533 + $0x1c] sm:$0xf]
      %v1542 = vld [vmem:[%s1533 + $0x20] sm:$0xf]
      %v1543 = vld [vmem:[%s1533 + $0x24] sm:$0xf]
      %v1544 = vld [vmem:[%s1533 + $0x28] sm:$0xf]
      %v1545 = vld [vmem:[%s1533 + $0x2c] sm:$0xf]
      %v1546 = vld [vmem:[%s1533 + $0x30] sm:$0xf]
      %v1547 = vld [vmem:[%s1533 + $0x34] sm:$0xf]
      %v1548 = vld [vmem:[%s1533 + $0x38] sm:$0xf]
      %v1549 = vld [vmem:[%s1533 + $0x3c] sm:$0xf]
      %v1558 = vunpack.c.l.b16 %v1525
      %v1559 = vunpack.c.l.b16 %v1526
      %v1560 = vunpack.c.l.b16 %v1527
      %v1561 = vunpack.c.l.b16 %v1528
      %v1562 = vunpack.c.l.b16 %v1529
      %v1563 = vunpack.c.l.b16 %v1530
      %v1564 = vunpack.c.l.b16 %v1531
      %v1565 = vunpack.c.l.b16 %v1532
      %v1566 = vpack.c.b16 %v1559, %v1558
      %v1567 = vpack.c.b16 %v1561, %v1560
      %v1568 = vpack.c.b16 %v1563, %v1562
      %v1569 = vpack.c.b16 %v1565, %v1564
      %v1590 = vunpack.c.l.b16 %v1534
      %v1591 = vunpack.c.l.b16 %v1535
      %v1592 = vunpack.c.l.b16 %v1536
      %v1593 = vunpack.c.l.b16 %v1537
      %v1594 = vunpack.c.l.b16 %v1538
      %v1595 = vunpack.c.l.b16 %v1539
      %v1596 = vunpack.c.l.b16 %v1540
      %v1597 = vunpack.c.l.b16 %v1541
      %v1598 = vunpack.c.l.b16 %v1542
      %v1599 = vunpack.c.l.b16 %v1543
      %v1600 = vunpack.c.l.b16 %v1544
      %v1601 = vunpack.c.l.b16 %v1545
      %v1602 = vunpack.c.l.b16 %v1546
      %v1603 = vunpack.c.l.b16 %v1547
      %v1604 = vunpack.c.l.b16 %v1548
      %v1605 = vunpack.c.l.b16 %v1549
      %v1606 = vpack.c.b16 %v1591, %v1590
      %v1607 = vpack.c.b16 %v1593, %v1592
      %v1608 = vpack.c.b16 %v1595, %v1594
      %v1609 = vpack.c.b16 %v1597, %v1596
      %v1610 = vpack.c.b16 %v1599, %v1598
      %v1611 = vpack.c.b16 %v1601, %v1600
      %v1612 = vpack.c.b16 %v1603, %v1602
      %v1613 = vpack.c.b16 %v1605, %v1604
      %1622 = vmatpush.bf16.msra.mxu0 %v1613
      %1623 = vmatpush.bf16.msra.mxu0 %v1612
      %1624 = vmatpush.bf16.msra.mxu0 %v1611
      %1625 = vmatpush.bf16.msra.mxu0 %v1610
      %1626 = vmatpush.bf16.msra.mxu0 %v1609
      %1627 = vmatpush.bf16.msra.mxu0 %v1608
      %1628 = vmatpush.bf16.msra.mxu0 %v1607
      %1629 = vmatpush.bf16.msra.mxu0 %v1606
      %1630 = vmatmul.bf16.gmra.mxu0 %v1566
      %v1631 = vpop.f32.mrf.mxu0
      %v1632 = vadd.f32 0.0, %v1631
      %v1633 = vpop.f32.mrf.mxu0
      %v1634 = vadd.f32 0.0, %v1633
      %1635 = vmatmul.bf16.gmra.mxu0 %v1567
      %v1636 = vpop.f32.mrf.mxu0
      %v1637 = vadd.f32 0.0, %v1636
      %v1638 = vpop.f32.mrf.mxu0
      %v1639 = vadd.f32 0.0, %v1638
      %1640 = vmatmul.bf16.gmra.mxu0 %v1568
      %v1641 = vpop.f32.mrf.mxu0
      %v1642 = vadd.f32 0.0, %v1641
      %v1643 = vpop.f32.mrf.mxu0
      %v1644 = vadd.f32 0.0, %v1643
      %1645 = vmatmul.bf16.gmra.mxu0 %v1569
      %v1646 = vpop.f32.mrf.mxu0
      %v1647 = vadd.f32 0.0, %v1646
      %v1648 = vpop.f32.mrf.mxu0
      %v1649 = vadd.f32 0.0, %v1648
      %1650 = vdwg.mxu0
      %v1651 = vadd.f32 %v1516, %v1632
      %v1652 = vadd.f32 %v1517, %v1634
      %v1653 = vadd.f32 %v1518, %v1637
      %v1654 = vadd.f32 %v1519, %v1639
      %v1655 = vadd.f32 %v1520, %v1642
      %v1656 = vadd.f32 %v1521, %v1644
      %v1657 = vadd.f32 %v1522, %v1647
      %v1658 = vadd.f32 %v1523, %v1649
      %v1659 = vld [vmem:[%s1524] sm:$0xf]
      %v1660 = vld [vmem:[%s1524 + $0x4] sm:$0x1]
      %v1661 = vld [vmem:[%s1524 + $0x8] sm:$0xf]
      %v1662 = vld [vmem:[%s1524 + $0xc] sm:$0x1]
      %v1663 = vld [vmem:[%s1524 + $0x10] sm:$0xf]
      %v1664 = vld [vmem:[%s1524 + $0x14] sm:$0x1]
      %v1665 = vld [vmem:[%s1524 + $0x18] sm:$0xf]
      %v1666 = vld [vmem:[%s1524 + $0x1c] sm:$0x1]
      %v1667 = vld [vmem:[%s1524 + $0x20] sm:$0xf]
      %v1668 = vld [vmem:[%s1524 + $0x24] sm:$0x1]
      %v1669 = vld [vmem:[%s1524 + $0x28] sm:$0xf]
      %v1670 = vld [vmem:[%s1524 + $0x2c] sm:$0x1]
      %v1671 = vld [vmem:[%s1524 + $0x30] sm:$0xf]
      %v1672 = vld [vmem:[%s1524 + $0x34] sm:$0x1]
      %v1673 = vld [vmem:[%s1524 + $0x38] sm:$0xf]
      %v1674 = vld [vmem:[%s1524 + $0x3c] sm:$0x1]
      %v1676 = vshrl.u32 %v1659, 16
      %v1678 = vrot.slane %v1676, 4
      %v1679 = vshll.u32 %v1659, 16
      %v1681 = vrot.slane %v1679, 5
      %v1682 = vor.u32 %v1678, %v1681
      %v1683 = vrot.slane %v1682, 4
      %v1685 = vshll.u32 %v1660, 16
      %v1687 = vrot.slane %v1685, 5
      %v1688 = vsel %vm468, %v1683, %v1687
      %v1690 = vshrl.u32 %v1661, 16
      %v1692 = vrot.slane %v1690, 4
      %v1693 = vshll.u32 %v1661, 16
      %v1695 = vrot.slane %v1693, 5
      %v1696 = vor.u32 %v1692, %v1695
      %v1697 = vrot.slane %v1696, 4
      %v1699 = vshll.u32 %v1662, 16
      %v1701 = vrot.slane %v1699, 5
      %v1702 = vsel %vm468, %v1697, %v1701
      %v1704 = vshrl.u32 %v1663, 16
      %v1706 = vrot.slane %v1704, 4
      %v1707 = vshll.u32 %v1663, 16
      %v1709 = vrot.slane %v1707, 5
      %v1710 = vor.u32 %v1706, %v1709
      %v1711 = vrot.slane %v1710, 4
      %v1713 = vshll.u32 %v1664, 16
      %v1715 = vrot.slane %v1713, 5
      %v1716 = vsel %vm468, %v1711, %v1715
      %v1718 = vshrl.u32 %v1665, 16
      %v1720 = vrot.slane %v1718, 4
      %v1721 = vshll.u32 %v1665, 16
      %v1723 = vrot.slane %v1721, 5
      %v1724 = vor.u32 %v1720, %v1723
      %v1725 = vrot.slane %v1724, 4
      %v1727 = vshll.u32 %v1666, 16
      %v1729 = vrot.slane %v1727, 5
      %v1730 = vsel %vm468, %v1725, %v1729
      %v1732 = vshrl.u32 %v1667, 16
      %v1734 = vrot.slane %v1732, 4
      %v1735 = vshll.u32 %v1667, 16
      %v1737 = vrot.slane %v1735, 5
      %v1738 = vor.u32 %v1734, %v1737
      %v1739 = vrot.slane %v1738, 4
      %v1741 = vshll.u32 %v1668, 16
      %v1743 = vrot.slane %v1741, 5
      %v1744 = vsel %vm468, %v1739, %v1743
      %v1746 = vshrl.u32 %v1669, 16
      %v1748 = vrot.slane %v1746, 4
      %v1749 = vshll.u32 %v1669, 16
      %v1751 = vrot.slane %v1749, 5
      %v1752 = vor.u32 %v1748, %v1751
      %v1753 = vrot.slane %v1752, 4
      %v1755 = vshll.u32 %v1670, 16
      %v1757 = vrot.slane %v1755, 5
      %v1758 = vsel %vm468, %v1753, %v1757
      %v1760 = vshrl.u32 %v1671, 16
      %v1762 = vrot.slane %v1760, 4
      %v1763 = vshll.u32 %v1671, 16
      %v1765 = vrot.slane %v1763, 5
      %v1766 = vor.u32 %v1762, %v1765
      %v1767 = vrot.slane %v1766, 4
      %v1769 = vshll.u32 %v1672, 16
      %v1771 = vrot.slane %v1769, 5
      %v1772 = vsel %vm468, %v1767, %v1771
      %v1774 = vshrl.u32 %v1673, 16
      %v1776 = vrot.slane %v1774, 4
      %v1777 = vshll.u32 %v1673, 16
      %v1779 = vrot.slane %v1777, 5
      %v1780 = vor.u32 %v1776, %v1779
      %v1781 = vrot.slane %v1780, 4
      %v1783 = vshll.u32 %v1674, 16
      %v1785 = vrot.slane %v1783, 5
      %v1786 = vsel %vm468, %v1781, %v1785
      %s1787 = scalar_lea.vmem %s1, 448
      %v1788 = vld [vmem:[%s1787] sm:$0xf]
      %v1789 = vld [vmem:[%s1787 + $0x4] sm:$0xf]
      %v1790 = vld [vmem:[%s1787 + $0x8] sm:$0xf]
      %v1791 = vld [vmem:[%s1787 + $0xc] sm:$0xf]
      %v1792 = vld [vmem:[%s1787 + $0x10] sm:$0xf]
      %v1793 = vld [vmem:[%s1787 + $0x14] sm:$0xf]
      %v1794 = vld [vmem:[%s1787 + $0x18] sm:$0xf]
      %v1795 = vld [vmem:[%s1787 + $0x1c] sm:$0xf]
      %v1796 = vld [vmem:[%s1787 + $0x20] sm:$0xf]
      %v1797 = vld [vmem:[%s1787 + $0x24] sm:$0xf]
      %v1798 = vld [vmem:[%s1787 + $0x28] sm:$0xf]
      %v1799 = vld [vmem:[%s1787 + $0x2c] sm:$0xf]
      %v1800 = vld [vmem:[%s1787 + $0x30] sm:$0xf]
      %v1801 = vld [vmem:[%s1787 + $0x34] sm:$0xf]
      %v1802 = vld [vmem:[%s1787 + $0x38] sm:$0xf]
      %v1803 = vld [vmem:[%s1787 + $0x3c] sm:$0xf]
      %v1804 = vunpack.c.l.b16 %v1688
      %v1805 = vunpack.c.l.b16 %v1702
      %v1806 = vunpack.c.l.b16 %v1716
      %v1807 = vunpack.c.l.b16 %v1730
      %v1808 = vunpack.c.l.b16 %v1744
      %v1809 = vunpack.c.l.b16 %v1758
      %v1810 = vunpack.c.l.b16 %v1772
      %v1811 = vunpack.c.l.b16 %v1786
      %v1812 = vpack.c.b16 %v1805, %v1804
      %v1813 = vpack.c.b16 %v1807, %v1806
      %v1814 = vpack.c.b16 %v1809, %v1808
      %v1815 = vpack.c.b16 %v1811, %v1810
      %v1836 = vunpack.c.l.b16 %v1788
      %v1837 = vunpack.c.l.b16 %v1789
      %v1838 = vunpack.c.l.b16 %v1790
      %v1839 = vunpack.c.l.b16 %v1791
      %v1840 = vunpack.c.l.b16 %v1792
      %v1841 = vunpack.c.l.b16 %v1793
      %v1842 = vunpack.c.l.b16 %v1794
      %v1843 = vunpack.c.l.b16 %v1795
      %v1844 = vunpack.c.l.b16 %v1796
      %v1845 = vunpack.c.l.b16 %v1797
      %v1846 = vunpack.c.l.b16 %v1798
      %v1847 = vunpack.c.l.b16 %v1799
      %v1848 = vunpack.c.l.b16 %v1800
      %v1849 = vunpack.c.l.b16 %v1801
      %v1850 = vunpack.c.l.b16 %v1802
      %v1851 = vunpack.c.l.b16 %v1803
      %v1852 = vpack.c.b16 %v1837, %v1836
      %v1853 = vpack.c.b16 %v1839, %v1838
      %v1854 = vpack.c.b16 %v1841, %v1840
      %v1855 = vpack.c.b16 %v1843, %v1842
      %v1856 = vpack.c.b16 %v1845, %v1844
      %v1857 = vpack.c.b16 %v1847, %v1846
      %v1858 = vpack.c.b16 %v1849, %v1848
      %v1859 = vpack.c.b16 %v1851, %v1850
      %1868 = vmatpush.bf16.msra.mxu0 %v1859
      %1869 = vmatpush.bf16.msra.mxu0 %v1858
      %1870 = vmatpush.bf16.msra.mxu0 %v1857
      %1871 = vmatpush.bf16.msra.mxu0 %v1856
      %1872 = vmatpush.bf16.msra.mxu0 %v1855
      %1873 = vmatpush.bf16.msra.mxu0 %v1854
      %1874 = vmatpush.bf16.msra.mxu0 %v1853
      %1875 = vmatpush.bf16.msra.mxu0 %v1852
      %1876 = vmatmul.bf16.gmra.mxu0 %v1812
      %v1877 = vpop.f32.mrf.mxu0
      %v1878 = vadd.f32 0.0, %v1877
      %v1879 = vpop.f32.mrf.mxu0
      %v1880 = vadd.f32 0.0, %v1879
      %1881 = vmatmul.bf16.gmra.mxu0 %v1813
      %v1882 = vpop.f32.mrf.mxu0
      %v1883 = vadd.f32 0.0, %v1882
      %v1884 = vpop.f32.mrf.mxu0
      %v1885 = vadd.f32 0.0, %v1884
      %1886 = vmatmul.bf16.gmra.mxu0 %v1814
      %v1887 = vpop.f32.mrf.mxu0
      %v1888 = vadd.f32 0.0, %v1887
      %v1889 = vpop.f32.mrf.mxu0
      %v1890 = vadd.f32 0.0, %v1889
      %1891 = vmatmul.bf16.gmra.mxu0 %v1815
      %v1892 = vpop.f32.mrf.mxu0
      %v1893 = vadd.f32 0.0, %v1892
      %v1894 = vpop.f32.mrf.mxu0
      %v1895 = vadd.f32 0.0, %v1894
      %1896 = vdwg.mxu0
      %v1897 = vadd.f32 %v1651, %v1878
      %v1898 = vadd.f32 %v1652, %v1880
      %v1899 = vadd.f32 %v1653, %v1883
      %v1900 = vadd.f32 %v1654, %v1885
      %v1901 = vadd.f32 %v1655, %v1888
      %v1902 = vadd.f32 %v1656, %v1890
      %v1903 = vadd.f32 %v1657, %v1893
      %v1904 = vadd.f32 %v1658, %v1895
      %v1905 = vld [vmem:[%s1524] sm:$0xe]
      %v1906 = vld [vmem:[%s1524 + $0x8] sm:$0xe]
      %v1907 = vld [vmem:[%s1524 + $0x10] sm:$0xe]
      %v1908 = vld [vmem:[%s1524 + $0x18] sm:$0xe]
      %v1909 = vld [vmem:[%s1524 + $0x20] sm:$0xe]
      %v1910 = vld [vmem:[%s1524 + $0x28] sm:$0xe]
      %v1911 = vld [vmem:[%s1524 + $0x30] sm:$0xe]
      %v1912 = vld [vmem:[%s1524 + $0x38] sm:$0xe]
      %v1929 = vrot.slane %v1905, 5
      %v1930 = vrot.slane %v1929, 4
      %v1931 = vrot.slane %v1660, 5
      %v1932 = vsel %vm818, %v1930, %v1931
      %v1933 = vrot.slane %v1906, 5
      %v1934 = vrot.slane %v1933, 4
      %v1935 = vrot.slane %v1662, 5
      %v1936 = vsel %vm818, %v1934, %v1935
      %v1937 = vrot.slane %v1907, 5
      %v1938 = vrot.slane %v1937, 4
      %v1939 = vrot.slane %v1664, 5
      %v1940 = vsel %vm818, %v1938, %v1939
      %v1941 = vrot.slane %v1908, 5
      %v1942 = vrot.slane %v1941, 4
      %v1943 = vrot.slane %v1666, 5
      %v1944 = vsel %vm818, %v1942, %v1943
      %v1945 = vrot.slane %v1909, 5
      %v1946 = vrot.slane %v1945, 4
      %v1947 = vrot.slane %v1668, 5
      %v1948 = vsel %vm818, %v1946, %v1947
      %v1949 = vrot.slane %v1910, 5
      %v1950 = vrot.slane %v1949, 4
      %v1951 = vrot.slane %v1670, 5
      %v1952 = vsel %vm818, %v1950, %v1951
      %v1953 = vrot.slane %v1911, 5
      %v1954 = vrot.slane %v1953, 4
      %v1955 = vrot.slane %v1672, 5
      %v1956 = vsel %vm818, %v1954, %v1955
      %v1957 = vrot.slane %v1912, 5
      %v1958 = vrot.slane %v1957, 4
      %v1959 = vrot.slane %v1674, 5
      %v1960 = vsel %vm818, %v1958, %v1959
      %s1961 = scalar_lea.vmem %s1, 512
      %v1962 = vld [vmem:[%s1961] sm:$0xf]
      %v1963 = vld [vmem:[%s1961 + $0x4] sm:$0xf]
      %v1964 = vld [vmem:[%s1961 + $0x8] sm:$0xf]
      %v1965 = vld [vmem:[%s1961 + $0xc] sm:$0xf]
      %v1966 = vld [vmem:[%s1961 + $0x10] sm:$0xf]
      %v1967 = vld [vmem:[%s1961 + $0x14] sm:$0xf]
      %v1968 = vld [vmem:[%s1961 + $0x18] sm:$0xf]
      %v1969 = vld [vmem:[%s1961 + $0x1c] sm:$0xf]
      %v1970 = vld [vmem:[%s1961 + $0x20] sm:$0xf]
      %v1971 = vld [vmem:[%s1961 + $0x24] sm:$0xf]
      %v1972 = vld [vmem:[%s1961 + $0x28] sm:$0xf]
      %v1973 = vld [vmem:[%s1961 + $0x2c] sm:$0xf]
      %v1974 = vld [vmem:[%s1961 + $0x30] sm:$0xf]
      %v1975 = vld [vmem:[%s1961 + $0x34] sm:$0xf]
      %v1976 = vld [vmem:[%s1961 + $0x38] sm:$0xf]
      %v1977 = vld [vmem:[%s1961 + $0x3c] sm:$0xf]
      %v1978 = vunpack.c.l.b16 %v1932
      %v1979 = vunpack.c.l.b16 %v1936
      %v1980 = vunpack.c.l.b16 %v1940
      %v1981 = vunpack.c.l.b16 %v1944
      %v1982 = vunpack.c.l.b16 %v1948
      %v1983 = vunpack.c.l.b16 %v1952
      %v1984 = vunpack.c.l.b16 %v1956
      %v1985 = vunpack.c.l.b16 %v1960
      %v1986 = vpack.c.b16 %v1979, %v1978
      %v1987 = vpack.c.b16 %v1981, %v1980
      %v1988 = vpack.c.b16 %v1983, %v1982
      %v1989 = vpack.c.b16 %v1985, %v1984
      %v2010 = vunpack.c.l.b16 %v1962
      %v2011 = vunpack.c.l.b16 %v1963
      %v2012 = vunpack.c.l.b16 %v1964
      %v2013 = vunpack.c.l.b16 %v1965
      %v2014 = vunpack.c.l.b16 %v1966
      %v2015 = vunpack.c.l.b16 %v1967
      %v2016 = vunpack.c.l.b16 %v1968
      %v2017 = vunpack.c.l.b16 %v1969
      %v2018 = vunpack.c.l.b16 %v1970
      %v2019 = vunpack.c.l.b16 %v1971
      %v2020 = vunpack.c.l.b16 %v1972
      %v2021 = vunpack.c.l.b16 %v1973
      %v2022 = vunpack.c.l.b16 %v1974
      %v2023 = vunpack.c.l.b16 %v1975
      %v2024 = vunpack.c.l.b16 %v1976
      %v2025 = vunpack.c.l.b16 %v1977
      %v2026 = vpack.c.b16 %v2011, %v2010
      %v2027 = vpack.c.b16 %v2013, %v2012
      %v2028 = vpack.c.b16 %v2015, %v2014
      %v2029 = vpack.c.b16 %v2017, %v2016
      %v2030 = vpack.c.b16 %v2019, %v2018
      %v2031 = vpack.c.b16 %v2021, %v2020
      %v2032 = vpack.c.b16 %v2023, %v2022
      %v2033 = vpack.c.b16 %v2025, %v2024
      %2042 = vmatpush.bf16.msra.mxu0 %v2033
      %2043 = vmatpush.bf16.msra.mxu0 %v2032
      %2044 = vmatpush.bf16.msra.mxu0 %v2031
      %2045 = vmatpush.bf16.msra.mxu0 %v2030
      %2046 = vmatpush.bf16.msra.mxu0 %v2029
      %2047 = vmatpush.bf16.msra.mxu0 %v2028
      %2048 = vmatpush.bf16.msra.mxu0 %v2027
      %2049 = vmatpush.bf16.msra.mxu0 %v2026
      %2050 = vmatmul.bf16.gmra.mxu0 %v1986
      %v2051 = vpop.f32.mrf.mxu0
      %v2052 = vadd.f32 0.0, %v2051
      %v2053 = vpop.f32.mrf.mxu0
      %v2054 = vadd.f32 0.0, %v2053
      %2055 = vmatmul.bf16.gmra.mxu0 %v1987
      %v2056 = vpop.f32.mrf.mxu0
      %v2057 = vadd.f32 0.0, %v2056
      %v2058 = vpop.f32.mrf.mxu0
      %v2059 = vadd.f32 0.0, %v2058
      %2060 = vmatmul.bf16.gmra.mxu0 %v1988
      %v2061 = vpop.f32.mrf.mxu0
      %v2062 = vadd.f32 0.0, %v2061
      %v2063 = vpop.f32.mrf.mxu0
      %v2064 = vadd.f32 0.0, %v2063
      %2065 = vmatmul.bf16.gmra.mxu0 %v1989
      %v2066 = vpop.f32.mrf.mxu0
      %v2067 = vadd.f32 0.0, %v2066
      %v2068 = vpop.f32.mrf.mxu0
      %v2069 = vadd.f32 0.0, %v2068
      %2070 = vdwg.mxu0
      %v2071 = vadd.f32 %v1897, %v2052
      %v2072 = vadd.f32 %v1898, %v2054
      %v2073 = vadd.f32 %v1899, %v2057
      %v2074 = vadd.f32 %v1900, %v2059
      %v2075 = vadd.f32 %v1901, %v2062
      %v2076 = vadd.f32 %v1902, %v2064
      %v2077 = vadd.f32 %v1903, %v2067
      %v2078 = vadd.f32 %v1904, %v2069
      %v2079 = vld [vmem:[%s2] sm:$0x1]
      %v2081 = vperm.slane %v2079, 0
      %v2083 = vmul.f32 %v2071, %v2081
      %v2084 = vmul.f32 %v2072, %v2081
      %v2085 = vmul.f32 %v2073, %v2081
      %v2086 = vmul.f32 %v2074, %v2081
      %v2087 = vmul.f32 %v2075, %v2081
      %v2088 = vmul.f32 %v2076, %v2081
      %v2089 = vmul.f32 %v2077, %v2081
      %v2090 = vmul.f32 %v2078, %v2081
      %v2091 = vld [vmem:[%s3] sm:$0x1]
      %v2093 = vperm.slane %v2091, 0
      %v2095 = vadd.f32 %v2083, %v2093
      %v2096 = vadd.f32 %v2084, %v2093
      %v2097 = vadd.f32 %v2085, %v2093
      %v2098 = vadd.f32 %v2086, %v2093
      %v2099 = vadd.f32 %v2087, %v2093
      %v2100 = vadd.f32 %v2088, %v2093
      %v2101 = vadd.f32 %v2089, %v2093
      %v2102 = vadd.f32 %v2090, %v2093
      %v2103 = vxor.u32 %v2095, 2147483648
      %v2104 = vxor.u32 %v2096, 2147483648
      %v2105 = vxor.u32 %v2097, 2147483648
      %v2106 = vxor.u32 %v2098, 2147483648
      %v2107 = vxor.u32 %v2099, 2147483648
      %v2108 = vxor.u32 %v2100, 2147483648
      %v2109 = vxor.u32 %v2101, 2147483648
      %v2110 = vxor.u32 %v2102, 2147483648
      %v2111 = vmul.f32 %v2103, 1.442695
      %v2112 = vpow.pop %v2111
      %v2113 = vmul.f32 %v2104, 1.442695
      %v2114 = vpow.pop %v2113
      %v2115 = vmul.f32 %v2105, 1.442695
      %v2116 = vpow.pop %v2115
      %v2117 = vmul.f32 %v2106, 1.442695
      %v2118 = vpow.pop %v2117
      %v2119 = vmul.f32 %v2107, 1.442695
      %v2120 = vpow.pop %v2119
      %v2121 = vmul.f32 %v2108, 1.442695
      %v2122 = vpow.pop %v2121
      %v2123 = vmul.f32 %v2109, 1.442695
      %v2124 = vpow.pop %v2123
      %v2125 = vmul.f32 %v2110, 1.442695
      %v2126 = vpow.pop %v2125
      %v2127 = vadd.f32 %v2112, 1.0
      %v2128 = vadd.f32 %v2114, 1.0
      %v2129 = vadd.f32 %v2116, 1.0
      %v2130 = vadd.f32 %v2118, 1.0
      %v2131 = vadd.f32 %v2120, 1.0
      %v2132 = vadd.f32 %v2122, 1.0
      %v2133 = vadd.f32 %v2124, 1.0
      %v2134 = vadd.f32 %v2126, 1.0
      %v2135 = vrcp.pop %v2127
      %v2136 = vmul.f32 %v2127, %v2135
      %v2137 = vsub.f32 1.0, %v2136
      %v2138 = vmul.f32 %v2135, %v2137
      %v2139 = vadd.f32 %v2135, %v2138
      %vm2140 = vweird.f32 %v2127
      %vm2141 = vweird.f32 %v2135
      %vm2142 = vmor %vm2140, %vm2141
      %v2143 = vsel %vm2142, %v2135, %v2139
      %v2144 = vand.u32 2147483647, %v2127
      %vm2145 = vcmp.eq.f32.partialorder %v2144, 8.507059e+37
      %v2146 = vand.u32 %v2127, 2147483648
      %v2147 = vor.u32 1.1754944e-38, %v2146
      %v2148 = vsel %vm2145, %v2147, %v2143
      %v2149 = vmul.f32 1.0, %v2148
      %v2150 = vrcp.pop %v2128
      %v2151 = vmul.f32 %v2128, %v2150
      %v2152 = vsub.f32 1.0, %v2151
      %v2153 = vmul.f32 %v2150, %v2152
      %v2154 = vadd.f32 %v2150, %v2153
      %vm2155 = vweird.f32 %v2128
      %vm2156 = vweird.f32 %v2150
      %vm2157 = vmor %vm2155, %vm2156
      %v2158 = vsel %vm2157, %v2150, %v2154
      %v2159 = vand.u32 2147483647, %v2128
      %vm2160 = vcmp.eq.f32.partialorder %v2159, 8.507059e+37
      %v2161 = vand.u32 %v2128, 2147483648
      %v2162 = vor.u32 1.1754944e-38, %v2161
      %v2163 = vsel %vm2160, %v2162, %v2158
      %v2164 = vmul.f32 1.0, %v2163
      %v2165 = vrcp.pop %v2129
      %v2166 = vmul.f32 %v2129, %v2165
      %v2167 = vsub.f32 1.0, %v2166
      %v2168 = vmul.f32 %v2165, %v2167
      %v2169 = vadd.f32 %v2165, %v2168
      %vm2170 = vweird.f32 %v2129
      %vm2171 = vweird.f32 %v2165
      %vm2172 = vmor %vm2170, %vm2171
      %v2173 = vsel %vm2172, %v2165, %v2169
      %v2174 = vand.u32 2147483647, %v2129
      %vm2175 = vcmp.eq.f32.partialorder %v2174, 8.507059e+37
      %v2176 = vand.u32 %v2129, 2147483648
      %v2177 = vor.u32 1.1754944e-38, %v2176
      %v2178 = vsel %vm2175, %v2177, %v2173
      %v2179 = vmul.f32 1.0, %v2178
      %v2180 = vrcp.pop %v2130
      %v2181 = vmul.f32 %v2130, %v2180
      %v2182 = vsub.f32 1.0, %v2181
      %v2183 = vmul.f32 %v2180, %v2182
      %v2184 = vadd.f32 %v2180, %v2183
      %vm2185 = vweird.f32 %v2130
      %vm2186 = vweird.f32 %v2180
      %vm2187 = vmor %vm2185, %vm2186
      %v2188 = vsel %vm2187, %v2180, %v2184
      %v2189 = vand.u32 2147483647, %v2130
      %vm2190 = vcmp.eq.f32.partialorder %v2189, 8.507059e+37
      %v2191 = vand.u32 %v2130, 2147483648
      %v2192 = vor.u32 1.1754944e-38, %v2191
      %v2193 = vsel %vm2190, %v2192, %v2188
      %v2194 = vmul.f32 1.0, %v2193
      %v2195 = vrcp.pop %v2131
      %v2196 = vmul.f32 %v2131, %v2195
      %v2197 = vsub.f32 1.0, %v2196
      %v2198 = vmul.f32 %v2195, %v2197
      %v2199 = vadd.f32 %v2195, %v2198
      %vm2200 = vweird.f32 %v2131
      %vm2201 = vweird.f32 %v2195
      %vm2202 = vmor %vm2200, %vm2201
      %v2203 = vsel %vm2202, %v2195, %v2199
      %v2204 = vand.u32 2147483647, %v2131
      %vm2205 = vcmp.eq.f32.partialorder %v2204, 8.507059e+37
      %v2206 = vand.u32 %v2131, 2147483648
      %v2207 = vor.u32 1.1754944e-38, %v2206
      %v2208 = vsel %vm2205, %v2207, %v2203
      %v2209 = vmul.f32 1.0, %v2208
      %v2210 = vrcp.pop %v2132
      %v2211 = vmul.f32 %v2132, %v2210
      %v2212 = vsub.f32 1.0, %v2211
      %v2213 = vmul.f32 %v2210, %v2212
      %v2214 = vadd.f32 %v2210, %v2213
      %vm2215 = vweird.f32 %v2132
      %vm2216 = vweird.f32 %v2210
      %vm2217 = vmor %vm2215, %vm2216
      %v2218 = vsel %vm2217, %v2210, %v2214
      %v2219 = vand.u32 2147483647, %v2132
      %vm2220 = vcmp.eq.f32.partialorder %v2219, 8.507059e+37
      %v2221 = vand.u32 %v2132, 2147483648
      %v2222 = vor.u32 1.1754944e-38, %v2221
      %v2223 = vsel %vm2220, %v2222, %v2218
      %v2224 = vmul.f32 1.0, %v2223
      %v2225 = vrcp.pop %v2133
      %v2226 = vmul.f32 %v2133, %v2225
      %v2227 = vsub.f32 1.0, %v2226
      %v2228 = vmul.f32 %v2225, %v2227
      %v2229 = vadd.f32 %v2225, %v2228
      %vm2230 = vweird.f32 %v2133
      %vm2231 = vweird.f32 %v2225
      %vm2232 = vmor %vm2230, %vm2231
      %v2233 = vsel %vm2232, %v2225, %v2229
      %v2234 = vand.u32 2147483647, %v2133
      %vm2235 = vcmp.eq.f32.partialorder %v2234, 8.507059e+37
      %v2236 = vand.u32 %v2133, 2147483648
      %v2237 = vor.u32 1.1754944e-38, %v2236
      %v2238 = vsel %vm2235, %v2237, %v2233
      %v2239 = vmul.f32 1.0, %v2238
      %v2240 = vrcp.pop %v2134
      %v2241 = vmul.f32 %v2134, %v2240
      %v2242 = vsub.f32 1.0, %v2241
      %v2243 = vmul.f32 %v2240, %v2242
      %v2244 = vadd.f32 %v2240, %v2243
      %vm2245 = vweird.f32 %v2134
      %vm2246 = vweird.f32 %v2240
      %vm2247 = vmor %vm2245, %vm2246
      %v2248 = vsel %vm2247, %v2240, %v2244
      %v2249 = vand.u32 2147483647, %v2134
      %vm2250 = vcmp.eq.f32.partialorder %v2249, 8.507059e+37
      %v2251 = vand.u32 %v2134, 2147483648
      %v2252 = vor.u32 1.1754944e-38, %v2251
      %v2253 = vsel %vm2250, %v2252, %v2248
      %v2254 = vmul.f32 1.0, %v2253
      %v2255 = vmul.f32 %v2095, %v2149
      %v2256 = vmul.f32 %v2096, %v2164
      %v2257 = vmul.f32 %v2097, %v2179
      %v2258 = vmul.f32 %v2098, %v2194
      %v2259 = vmul.f32 %v2099, %v2209
      %v2260 = vmul.f32 %v2100, %v2224
      %v2261 = vmul.f32 %v2101, %v2239
      %v2262 = vmul.f32 %v2102, %v2254
      %v2263 = vadd.f32 %v2255, %v2256
      %v2264 = vadd.f32 %v2263, %v2257
      %v2265 = vadd.f32 %v2264, %v2258
      %v2266 = vadd.f32 %v2265, %v2259
      %v2267 = vadd.f32 %v2266, %v2260
      %v2268 = vadd.f32 %v2267, %v2261
      %v2269 = vadd.f32 %v2268, %v2262
      %v2270 = vrot.slane %v2269, 4
      %v2271 = vadd.f32 %v2269, %v2270
      %v2272 = vrot.slane %v2271, 2
      %v2273 = vadd.f32 %v2271, %v2272
      %v2274 = vrot.slane %v2273, 1
      %v2275 = vadd.f32 %v2273, %v2274
      %v2276 = vmul.f32 %v2275, 0.015625
      %v2277 = vld [vmem:[%s8] sm:$0xff]
      %v2278 = vld [vmem:[%s8 + $0x8] sm:$0xff]
      %v2279 = vld [vmem:[%s8 + $0x10] sm:$0xff]
      %v2280 = vld [vmem:[%s8 + $0x18] sm:$0xff]
      %v2281 = vld [vmem:[%s8 + $0x20] sm:$0xff]
      %v2282 = vld [vmem:[%s8 + $0x28] sm:$0xff]
      %v2283 = vld [vmem:[%s8 + $0x30] sm:$0xff]
      %v2284 = vld [vmem:[%s8 + $0x38] sm:$0xff]
      %v2285 = vld [vmem:[%s8 + $0x40] sm:$0xff]
      %v2286 = vld [vmem:[%s8 + $0x48] sm:$0xff]
      %v2287 = vld [vmem:[%s8 + $0x50] sm:$0xff]
      %v2288 = vld [vmem:[%s8 + $0x58] sm:$0xff]
      %v2289 = vld [vmem:[%s8 + $0x60] sm:$0xff]
      %v2290 = vld [vmem:[%s8 + $0x68] sm:$0xff]
      %v2291 = vld [vmem:[%s8 + $0x70] sm:$0xff]
      %v2292 = vld [vmem:[%s8 + $0x78] sm:$0xff]
      %v2293 = vld [vmem:[%s9] sm:$0x1]
      %2294 = vmatpush.msra.mxu0 %v2292
      %2295 = vmatpush.msra.mxu0 %v2291
      %2296 = vmatpush.msra.mxu0 %v2290
      %2297 = vmatpush.msra.mxu0 %v2289
      %2298 = vmatpush.msra.mxu0 %v2288
      %2299 = vmatpush.msra.mxu0 %v2287
      %2300 = vmatpush.msra.mxu0 %v2286
      %2301 = vmatpush.msra.mxu0 %v2285
      %2302 = vmatpush.msra.mxu0 %v2284
      %2303 = vmatpush.msra.mxu0 %v2283
      %2304 = vmatpush.msra.mxu0 %v2282
      %2305 = vmatpush.msra.mxu0 %v2281
      %2306 = vmatpush.msra.mxu0 %v2280
      %2307 = vmatpush.msra.mxu0 %v2279
      %2308 = vmatpush.msra.mxu0 %v2278
      %2309 = vmatpush.msra.mxu0 %v2277
      %2310 = vmatmul.f32.gmra.mxu0 %v2276
      %v2311 = vpop.f32.mrf.mxu0
      %v2312 = vadd.f32 %v2293, %v2311
      %2313 = vdwg.mxu0
      %v2314 = vmax.f32 %v2312, 0.0
      %v2315 = vld [vmem:[%s10] sm:$0xff]
      %v2316 = vld [vmem:[%s10 + $0x8] sm:$0xff]
      %v2317 = vld [vmem:[%s10 + $0x10] sm:$0xff]
      %v2318 = vld [vmem:[%s10 + $0x18] sm:$0xff]
      %v2319 = vld [vmem:[%s10 + $0x20] sm:$0xff]
      %v2320 = vld [vmem:[%s10 + $0x28] sm:$0xff]
      %v2321 = vld [vmem:[%s10 + $0x30] sm:$0xff]
      %v2322 = vld [vmem:[%s10 + $0x38] sm:$0xff]
      %v2323 = vld [vmem:[%s10 + $0x40] sm:$0xff]
      %v2324 = vld [vmem:[%s10 + $0x48] sm:$0xff]
      %v2325 = vld [vmem:[%s10 + $0x50] sm:$0xff]
      %v2326 = vld [vmem:[%s10 + $0x58] sm:$0xff]
      %v2327 = vld [vmem:[%s10 + $0x60] sm:$0xff]
      %v2328 = vld [vmem:[%s10 + $0x68] sm:$0xff]
      %v2329 = vld [vmem:[%s10 + $0x70] sm:$0xff]
      %v2330 = vld [vmem:[%s10 + $0x78] sm:$0xff]
      %v2331 = vld [vmem:[%s11] sm:$0x1]
      %2332 = vmatpush.msra.mxu0 %v2330
      %2333 = vmatpush.msra.mxu0 %v2329
      %2334 = vmatpush.msra.mxu0 %v2328
      %2335 = vmatpush.msra.mxu0 %v2327
      %2336 = vmatpush.msra.mxu0 %v2326
      %2337 = vmatpush.msra.mxu0 %v2325
      %2338 = vmatpush.msra.mxu0 %v2324
      %2339 = vmatpush.msra.mxu0 %v2323
      %2340 = vmatpush.msra.mxu0 %v2322
      %2341 = vmatpush.msra.mxu0 %v2321
      %2342 = vmatpush.msra.mxu0 %v2320
      %2343 = vmatpush.msra.mxu0 %v2319
      %2344 = vmatpush.msra.mxu0 %v2318
      %2345 = vmatpush.msra.mxu0 %v2317
      %2346 = vmatpush.msra.mxu0 %v2316
      %2347 = vmatpush.msra.mxu0 %v2315
      %2348 = vmatmul.f32.gmra.mxu0 %v2314
      %v2349 = vpop.f32.mrf.mxu0
      %v2350 = vadd.f32 %v2331, %v2349
      %2351 = vdwg.mxu0
      %v2352 = vxor.u32 %v2350, 2147483648
      %v2353 = vmul.f32 %v2352, 1.442695
      %v2354 = vpow.pop %v2353
      %v2355 = vadd.f32 %v2354, 1.0
      %v2356 = vrcp.pop %v2355
      %v2357 = vmul.f32 %v2355, %v2356
      %v2358 = vsub.f32 1.0, %v2357
      %v2359 = vmul.f32 %v2356, %v2358
      %v2360 = vadd.f32 %v2356, %v2359
      %vm2361 = vweird.f32 %v2355
      %vm2362 = vweird.f32 %v2356
      %vm2363 = vmor %vm2361, %vm2362
      %v2364 = vsel %vm2363, %v2356, %v2360
      %v2365 = vand.u32 2147483647, %v2355
      %vm2366 = vcmp.eq.f32.partialorder %v2365, 8.507059e+37
      %v2367 = vand.u32 %v2355, 2147483648
      %v2368 = vor.u32 1.1754944e-38, %v2367
      %v2369 = vsel %vm2366, %v2368, %v2364
      %v2370 = vmul.f32 1.0, %v2369
      %v2371 = vld [vmem:[%s428] sm:$0xf]
      %v2372 = vld [vmem:[%s428 + $0x4] sm:$0xf]
      %v2373 = vld [vmem:[%s428 + $0x8] sm:$0xf]
      %v2374 = vld [vmem:[%s428 + $0xc] sm:$0xf]
      %v2375 = vld [vmem:[%s428 + $0x10] sm:$0xf]
      %v2376 = vld [vmem:[%s428 + $0x14] sm:$0xf]
      %v2377 = vld [vmem:[%s428 + $0x18] sm:$0xf]
      %v2378 = vld [vmem:[%s428 + $0x1c] sm:$0xf]
      %v2379 = vld [vmem:[%s5] sm:$0xf]
      %v2380 = vld [vmem:[%s5 + $0x4] sm:$0xf]
      %v2381 = vld [vmem:[%s5 + $0x8] sm:$0xf]
      %v2382 = vld [vmem:[%s5 + $0xc] sm:$0xf]
      %v2383 = vld [vmem:[%s5 + $0x10] sm:$0xf]
      %v2384 = vld [vmem:[%s5 + $0x14] sm:$0xf]
      %v2385 = vld [vmem:[%s5 + $0x18] sm:$0xf]
      %v2386 = vld [vmem:[%s5 + $0x1c] sm:$0xf]
      %v2387 = vld [vmem:[%s5 + $0x20] sm:$0xf]
      %v2388 = vld [vmem:[%s5 + $0x24] sm:$0xf]
      %v2389 = vld [vmem:[%s5 + $0x28] sm:$0xf]
      %v2390 = vld [vmem:[%s5 + $0x2c] sm:$0xf]
      %v2391 = vld [vmem:[%s5 + $0x30] sm:$0xf]
      %v2392 = vld [vmem:[%s5 + $0x34] sm:$0xf]
      %v2393 = vld [vmem:[%s5 + $0x38] sm:$0xf]
      %v2394 = vld [vmem:[%s5 + $0x3c] sm:$0xf]
      %v2403 = vunpack.c.l.b16 %v2371
      %v2404 = vunpack.c.l.b16 %v2372
      %v2405 = vunpack.c.l.b16 %v2373
      %v2406 = vunpack.c.l.b16 %v2374
      %v2407 = vunpack.c.l.b16 %v2375
      %v2408 = vunpack.c.l.b16 %v2376
      %v2409 = vunpack.c.l.b16 %v2377
      %v2410 = vunpack.c.l.b16 %v2378
      %v2411 = vpack.c.b16 %v2404, %v2403
      %v2412 = vpack.c.b16 %v2406, %v2405
      %v2413 = vpack.c.b16 %v2408, %v2407
      %v2414 = vpack.c.b16 %v2410, %v2409
      %v2435 = vunpack.c.l.b16 %v2379
      %v2436 = vunpack.c.l.b16 %v2380
      %v2437 = vunpack.c.l.b16 %v2381
      %v2438 = vunpack.c.l.b16 %v2382
      %v2439 = vunpack.c.l.b16 %v2383
      %v2440 = vunpack.c.l.b16 %v2384
      %v2441 = vunpack.c.l.b16 %v2385
      %v2442 = vunpack.c.l.b16 %v2386
      %v2443 = vunpack.c.l.b16 %v2387
      %v2444 = vunpack.c.l.b16 %v2388
      %v2445 = vunpack.c.l.b16 %v2389
      %v2446 = vunpack.c.l.b16 %v2390
      %v2447 = vunpack.c.l.b16 %v2391
      %v2448 = vunpack.c.l.b16 %v2392
      %v2449 = vunpack.c.l.b16 %v2393
      %v2450 = vunpack.c.l.b16 %v2394
      %v2451 = vpack.c.b16 %v2436, %v2435
      %v2452 = vpack.c.b16 %v2438, %v2437
      %v2453 = vpack.c.b16 %v2440, %v2439
      %v2454 = vpack.c.b16 %v2442, %v2441
      %v2455 = vpack.c.b16 %v2444, %v2443
      %v2456 = vpack.c.b16 %v2446, %v2445
      %v2457 = vpack.c.b16 %v2448, %v2447
      %v2458 = vpack.c.b16 %v2450, %v2449
      %2467 = vmatpush.bf16.msra.mxu0 %v2458
      %2468 = vmatpush.bf16.msra.mxu0 %v2457
      %2469 = vmatpush.bf16.msra.mxu0 %v2456
      %2470 = vmatpush.bf16.msra.mxu0 %v2455
      %2471 = vmatpush.bf16.msra.mxu0 %v2454
      %2472 = vmatpush.bf16.msra.mxu0 %v2453
      %2473 = vmatpush.bf16.msra.mxu0 %v2452
      %2474 = vmatpush.bf16.msra.mxu0 %v2451
      %2475 = vmatmul.bf16.gmra.mxu0 %v2411
      %v2476 = vpop.f32.mrf.mxu0
      %v2477 = vadd.f32 0.0, %v2476
      %v2478 = vpop.f32.mrf.mxu0
      %v2479 = vadd.f32 0.0, %v2478
      %2480 = vmatmul.bf16.gmra.mxu0 %v2412
      %v2481 = vpop.f32.mrf.mxu0
      %v2482 = vadd.f32 0.0, %v2481
      %v2483 = vpop.f32.mrf.mxu0
      %v2484 = vadd.f32 0.0, %v2483
      %2485 = vmatmul.bf16.gmra.mxu0 %v2413
      %v2486 = vpop.f32.mrf.mxu0
      %v2487 = vadd.f32 0.0, %v2486
      %v2488 = vpop.f32.mrf.mxu0
      %v2489 = vadd.f32 0.0, %v2488
      %2490 = vmatmul.bf16.gmra.mxu0 %v2414
      %v2491 = vpop.f32.mrf.mxu0
      %v2492 = vadd.f32 0.0, %v2491
      %v2493 = vpop.f32.mrf.mxu0
      %v2494 = vadd.f32 0.0, %v2493
      %2495 = vdwg.mxu0
      %v2496 = vld [vmem:[%s6] sm:$0x1]
      %v2498 = vperm.slane %v2496, 0
      %v2500 = vmul.f32 %v2477, %v2498
      %v2501 = vmul.f32 %v2479, %v2498
      %v2502 = vmul.f32 %v2482, %v2498
      %v2503 = vmul.f32 %v2484, %v2498
      %v2504 = vmul.f32 %v2487, %v2498
      %v2505 = vmul.f32 %v2489, %v2498
      %v2506 = vmul.f32 %v2492, %v2498
      %v2507 = vmul.f32 %v2494, %v2498
      %v2508 = vld [vmem:[%s7] sm:$0x1]
      %v2510 = vperm.slane %v2508, 0
      %v2512 = vadd.f32 %v2500, %v2510
      %v2513 = vadd.f32 %v2501, %v2510
      %v2514 = vadd.f32 %v2502, %v2510
      %v2515 = vadd.f32 %v2503, %v2510
      %v2516 = vadd.f32 %v2504, %v2510
      %v2517 = vadd.f32 %v2505, %v2510
      %v2518 = vadd.f32 %v2506, %v2510
      %v2519 = vadd.f32 %v2507, %v2510
      %v2520 = vperm.slane %v2370, 0
      %v2521 = vmul.f32 %v2255, %v2520
      %v2522 = vmul.f32 %v2256, %v2520
      %v2523 = vmul.f32 %v2257, %v2520
      %v2524 = vmul.f32 %v2258, %v2520
      %v2525 = vmul.f32 %v2259, %v2520
      %v2526 = vmul.f32 %v2260, %v2520
      %v2527 = vmul.f32 %v2261, %v2520
      %v2528 = vmul.f32 %v2262, %v2520
      %v2529 = vadd.f32 %v2521, %v2512
      %v2530 = vadd.f32 %v2522, %v2513
      %v2531 = vadd.f32 %v2523, %v2514
      %v2532 = vadd.f32 %v2524, %v2515
      %v2533 = vadd.f32 %v2525, %v2516
      %v2534 = vadd.f32 %v2526, %v2517
      %v2535 = vadd.f32 %v2527, %v2518
      %v2536 = vadd.f32 %v2528, %v2519
      %v2537 = vpack.c.bf16 %v2529, %v2529
      %v2538 = vpack.c.bf16 %v2530, %v2530
      %v2539 = vpack.c.bf16 %v2531, %v2531
      %v2540 = vpack.c.bf16 %v2532, %v2532
      %v2541 = vpack.c.bf16 %v2533, %v2533
      %v2542 = vpack.c.bf16 %v2534, %v2534
      %v2543 = vpack.c.bf16 %v2535, %v2535
      %v2544 = vpack.c.bf16 %v2536, %v2536
      %2545 = vst [vmem:[%s433] sm:$0xf] %v2537
      %2546 = vst [vmem:[%s433 + $0x4] sm:$0xf] %v2538
      %2547 = vst [vmem:[%s433 + $0x8] sm:$0xf] %v2539
      %2548 = vst [vmem:[%s433 + $0xc] sm:$0xf] %v2540
      %2549 = vst [vmem:[%s433 + $0x10] sm:$0xf] %v2541
      %2550 = vst [vmem:[%s433 + $0x14] sm:$0xf] %v2542
      %2551 = vst [vmem:[%s433 + $0x18] sm:$0xf] %v2543
      %2552 = vst [vmem:[%s433 + $0x1c] sm:$0xf] %v2544
      %p2553 = scmp.lt.s32.totalorder %s23, 1
      %s2554 = scalar_select %p2553, %s23, 1
      %s2555 = smul.addr %s2554, 8
      %s2556 = smul.addr %s2555, 4
      %s2557 = scalar_lea.vmem %s12, %s2556
      // Predicated region
      $region69: #{_lambda_.5} parent=67 // pred_check
        %p2558 = pneg %p303
      $region70: #{_lambda_.5} parent=67 // pred_check_branch
        %2560 = sbr.rel (%p2558) target = $region72
      $region71: #{_lambda_.5} parent=67 // pred_region
        _
      $region72: #{_lambda_.5} parent=67 // pred_fallthru
        _
    $region68: #{_lambda_.5} parent=5 // pred_fallthru
      _
    %p2561 = scmp.le.s32.totalorder 2, %s18
    // Predicated region
    $region73: #{_lambda_.5} parent=5 // pred_check
      %p2562 = pneg %p2561
    $region74: #{_lambda_.5} parent=5 // pred_check_branch
      %2564 = sbr.rel (%p2562) target = $region76
    $region75: #{_lambda_.5} parent=5 // pred_region
      %s2565 = ssub.s32 %s18, 2
      // Predicated region
      $region77: #{_lambda_.5} parent=75 // pred_check
        %p2566 = pneg %p309
      $region78: #{_lambda_.5} parent=75 // pred_check_branch
        %2568 = sbr.rel (%p2566) target = $region80
      $region79: #{_lambda_.5} parent=75 // pred_region
        %p2569 = scmp.lt.s32.totalorder %s24, 1
        %s2570 = scalar_select %p2569, %s24, 1
        %s2571 = smul.addr %s2570, 8
        %s2572 = smul.addr %s2571, 4
        %s2573 = scalar_lea.vmem %s12, %s2572
      $region80: #{_lambda_.5} parent=75 // pred_fallthru
        _
    $region76: #{_lambda_.5} parent=5 // pred_fallthru
      _
  $region6: #{_lambda_.5} parent=0 // loop_footer
    %s22 = sadd.s32 1, %s18
  $region7: #{_lambda_.5} parent=0 // loop_footer_branch
    %17 = sbr.rel target = $region3
  $region8: #{_lambda_.5} parent=0 // loop_exit
    _

// kernel: _lambda_.7
$region0: #{_lambda_.7}
  #allocation0 [shape = 'u32[]', space=smem, size = 0x4, offset = 0x4, fixed_abs, tag = 'smem constant byte address 0x4 - core index']
  #allocation1 [shape = 'u32[72,128]{1,0:T(1,128)}', space=vmem, size = 0x9000, scoped, tag = 'internal scratch']
  %s0 = inlined_call_operand.vmem [shape: bf16[2,10,10,128], index: 0, kind: input, shape index: {}]
  %s1 = inlined_call_operand.vmem [shape: bf16[9,128,128], index: 1, kind: input, shape index: {}]
  %s2 = inlined_call_operand.vmem [shape: f32[1,128], index: 2, kind: input, shape index: {}]
  %s3 = inlined_call_operand.vmem [shape: f32[1,128], index: 3, kind: input, shape index: {}]
  %s4 = inlined_call_operand.vmem [shape: bf16[2,8,8,128], index: 4, kind: input, shape index: {}]
  %s5 = inlined_call_operand.vmem [shape: f32[128,128], index: 5, kind: input, shape index: {}]
  %s6 = inlined_call_operand.vmem [shape: f32[1,128], index: 6, kind: input, shape index: {}]
  %s7 = inlined_call_operand.vmem [shape: f32[128,128], index: 7, kind: input, shape index: {}]
  %s8 = inlined_call_operand.vmem [shape: f32[1,128], index: 8, kind: input, shape index: {}]
  %s9 = inlined_call_operand.vmem [shape: f32[2,8,8,128], index: 9, kind: output, shape index: {}]
  %s10 = sld [smem:[#allocation0]]
  $region69: #{_lambda_.7} parent=0
    _
  %s12 = ssub.s32 1, %s10
  %s13 = scalar_select 0, %s12, %s10
  loop: start=0, step=1, limit=4
  $region2: #{_lambda_.7} parent=0 // loop_pre_header
    _
  $region3: #{_lambda_.7} parent=0 // loop_header
    %s15 = sphi 0, %s19
    %p16 = scmp.ge.s32.totalorder %s15, 4
    %s25 = sphi 0, %s27
    %s28 = sphi 0, %s25
    %s29 = sphi 0, %s28
    %s45 = sphi 0, %s29
    %s49 = sphi 0, %s49
    %s51 = sphi 0, %s49
    %s52 = sphi 0, %s51
    %s66 = sphi 0, %s52
    %s70 = sphi 0, %s70
    %s72 = sphi 0, %s70
    %s73 = sphi 0, %s72
    %s87 = sphi 0, %s73
    %s91 = sphi 0, %s91
    %s93 = sphi 0, %s91
    %s94 = sphi 0, %s93
    %s108 = sphi 0, %s94
    %s114 = sphi 0, %s116
    %s117 = sphi 0, %s114
    %s118 = sphi 0, %s117
    %s134 = sphi 0, %s118
    %s138 = sphi 0, %s138
    %s140 = sphi 0, %s138
    %s141 = sphi 0, %s140
    %s155 = sphi 0, %s141
    %s159 = sphi 0, %s159
    %s161 = sphi 0, %s159
    %s162 = sphi 0, %s161
    %s176 = sphi 0, %s162
    %s180 = sphi 0, %s180
    %s182 = sphi 0, %s180
    %s183 = sphi 0, %s182
    %s197 = sphi 0, %s183
    %s201 = sphi 0, %s201
    %s203 = sphi 0, %s201
    %s204 = sphi 0, %s203
    %s218 = sphi 0, %s204
    %s224 = sphi 0, %s226
    %s227 = sphi 0, %s224
    %s228 = sphi 0, %s227
    %s244 = sphi 0, %s228
  $region4: #{_lambda_.7} parent=0 // loop_header_branch
    %18 = sbr.rel (%p16) target = $region8
  $region5: #{_lambda_.7} parent=0 // loop_body
    %s20 = ssub.s32 %s15, 1
    %s21 = ssub.s32 %s15, 2
    %s22 = sadd.s32 %s15, 1
    %s23 = ssub.s32 %s15, %s22
    %p24 = scmp.eq.s32.totalorder %s23, 0
    %s26 = sadd.s32 %s25, 1
    %s27 = scalar_select %p24, %s25, %s26
    %p30 = pneg %p24
    %p31 = scmp.eq.s32.totalorder %s15, 1
    %p32 = por %p30, %p31
    %p33 = scmp.ne.s32.totalorder %s25, %s28
    %p34 = scmp.eq.s32.totalorder %s15, 0
    %p35 = por %p33, %p34
    %p36 = scmp.ne.s32.totalorder %s25, %s28
    %p37 = scmp.eq.s32.totalorder %s20, 1
    %p38 = por %p36, %p37
    %p39 = scmp.ne.s32.totalorder %s28, %s29
    %p40 = scmp.eq.s32.totalorder %s20, 0
    %p41 = por %p39, %p40
    %p42 = scmp.ne.s32.totalorder %s28, %s29
    %p43 = scmp.eq.s32.totalorder %s21, 1
    %p44 = por %p42, %p43
    %p46 = scmp.ne.s32.totalorder %s29, %s45
    %p47 = scmp.eq.s32.totalorder %s21, 0
    %p48 = por %p46, %p47
    %s50 = sadd.s32 %s49, 1
    %p53 = scmp.eq.s32.totalorder %s15, 1
    %p54 = scmp.ne.s32.totalorder %s49, %s51
    %p55 = scmp.eq.s32.totalorder %s15, 0
    %p56 = por %p54, %p55
    %p57 = scmp.ne.s32.totalorder %s49, %s51
    %p58 = scmp.eq.s32.totalorder %s20, 1
    %p59 = por %p57, %p58
    %p60 = scmp.ne.s32.totalorder %s51, %s52
    %p61 = scmp.eq.s32.totalorder %s20, 0
    %p62 = por %p60, %p61
    %p63 = scmp.ne.s32.totalorder %s51, %s52
    %p64 = scmp.eq.s32.totalorder %s21, 1
    %p65 = por %p63, %p64
    %p67 = scmp.ne.s32.totalorder %s52, %s66
    %p68 = scmp.eq.s32.totalorder %s21, 0
    %p69 = por %p67, %p68
    %s71 = sadd.s32 %s70, 1
    %p74 = scmp.eq.s32.totalorder %s15, 1
    %p75 = scmp.ne.s32.totalorder %s70, %s72
    %p76 = scmp.eq.s32.totalorder %s15, 0
    %p77 = por %p75, %p76
    %p78 = scmp.ne.s32.totalorder %s70, %s72
    %p79 = scmp.eq.s32.totalorder %s20, 1
    %p80 = por %p78, %p79
    %p81 = scmp.ne.s32.totalorder %s72, %s73
    %p82 = scmp.eq.s32.totalorder %s20, 0
    %p83 = por %p81, %p82
    %p84 = scmp.ne.s32.totalorder %s72, %s73
    %p85 = scmp.eq.s32.totalorder %s21, 1
    %p86 = por %p84, %p85
    %p88 = scmp.ne.s32.totalorder %s73, %s87
    %p89 = scmp.eq.s32.totalorder %s21, 0
    %p90 = por %p88, %p89
    %s92 = sadd.s32 %s91, 1
    %p95 = scmp.eq.s32.totalorder %s15, 1
    %p96 = scmp.ne.s32.totalorder %s91, %s93
    %p97 = scmp.eq.s32.totalorder %s15, 0
    %p98 = por %p96, %p97
    %p99 = scmp.ne.s32.totalorder %s91, %s93
    %p100 = scmp.eq.s32.totalorder %s20, 1
    %p101 = por %p99, %p100
    %p102 = scmp.ne.s32.totalorder %s93, %s94
    %p103 = scmp.eq.s32.totalorder %s20, 0
    %p104 = por %p102, %p103
    %p105 = scmp.ne.s32.totalorder %s93, %s94
    %p106 = scmp.eq.s32.totalorder %s21, 1
    %p107 = por %p105, %p106
    %p109 = scmp.ne.s32.totalorder %s94, %s108
    %p110 = scmp.eq.s32.totalorder %s21, 0
    %p111 = por %p109, %p110
    %s112 = ssub.s32 %s15, %s22
    %p113 = scmp.eq.s32.totalorder %s112, 0
    %s115 = sadd.s32 %s114, 1
    %s116 = scalar_select %p113, %s114, %s115
    %p119 = pneg %p113
    %p120 = scmp.eq.s32.totalorder %s15, 1
    %p121 = por %p119, %p120
    %p122 = scmp.ne.s32.totalorder %s114, %s117
    %p123 = scmp.eq.s32.totalorder %s15, 0
    %p124 = por %p122, %p123
    %p125 = scmp.ne.s32.totalorder %s114, %s117
    %p126 = scmp.eq.s32.totalorder %s20, 1
    %p127 = por %p125, %p126
    %p128 = scmp.ne.s32.totalorder %s117, %s118
    %p129 = scmp.eq.s32.totalorder %s20, 0
    %p130 = por %p128, %p129
    %p131 = scmp.ne.s32.totalorder %s117, %s118
    %p132 = scmp.eq.s32.totalorder %s21, 1
    %p133 = por %p131, %p132
    %p135 = scmp.ne.s32.totalorder %s118, %s134
    %p136 = scmp.eq.s32.totalorder %s21, 0
    %p137 = por %p135, %p136
    %s139 = sadd.s32 %s138, 1
    %p142 = scmp.eq.s32.totalorder %s15, 1
    %p143 = scmp.ne.s32.totalorder %s138, %s140
    %p144 = scmp.eq.s32.totalorder %s15, 0
    %p145 = por %p143, %p144
    %p146 = scmp.ne.s32.totalorder %s138, %s140
    %p147 = scmp.eq.s32.totalorder %s20, 1
    %p148 = por %p146, %p147
    %p149 = scmp.ne.s32.totalorder %s140, %s141
    %p150 = scmp.eq.s32.totalorder %s20, 0
    %p151 = por %p149, %p150
    %p152 = scmp.ne.s32.totalorder %s140, %s141
    %p153 = scmp.eq.s32.totalorder %s21, 1
    %p154 = por %p152, %p153
    %p156 = scmp.ne.s32.totalorder %s141, %s155
    %p157 = scmp.eq.s32.totalorder %s21, 0
    %p158 = por %p156, %p157
    %s160 = sadd.s32 %s159, 1
    %p163 = scmp.eq.s32.totalorder %s15, 1
    %p164 = scmp.ne.s32.totalorder %s159, %s161
    %p165 = scmp.eq.s32.totalorder %s15, 0
    %p166 = por %p164, %p165
    %p167 = scmp.ne.s32.totalorder %s159, %s161
    %p168 = scmp.eq.s32.totalorder %s20, 1
    %p169 = por %p167, %p168
    %p170 = scmp.ne.s32.totalorder %s161, %s162
    %p171 = scmp.eq.s32.totalorder %s20, 0
    %p172 = por %p170, %p171
    %p173 = scmp.ne.s32.totalorder %s161, %s162
    %p174 = scmp.eq.s32.totalorder %s21, 1
    %p175 = por %p173, %p174
    %p177 = scmp.ne.s32.totalorder %s162, %s176
    %p178 = scmp.eq.s32.totalorder %s21, 0
    %p179 = por %p177, %p178
    %s181 = sadd.s32 %s180, 1
    %p184 = scmp.eq.s32.totalorder %s15, 1
    %p185 = scmp.ne.s32.totalorder %s180, %s182
    %p186 = scmp.eq.s32.totalorder %s15, 0
    %p187 = por %p185, %p186
    %p188 = scmp.ne.s32.totalorder %s180, %s182
    %p189 = scmp.eq.s32.totalorder %s20, 1
    %p190 = por %p188, %p189
    %p191 = scmp.ne.s32.totalorder %s182, %s183
    %p192 = scmp.eq.s32.totalorder %s20, 0
    %p193 = por %p191, %p192
    %p194 = scmp.ne.s32.totalorder %s182, %s183
    %p195 = scmp.eq.s32.totalorder %s21, 1
    %p196 = por %p194, %p195
    %p198 = scmp.ne.s32.totalorder %s183, %s197
    %p199 = scmp.eq.s32.totalorder %s21, 0
    %p200 = por %p198, %p199
    %s202 = sadd.s32 %s201, 1
    %p205 = scmp.eq.s32.totalorder %s15, 1
    %p206 = scmp.ne.s32.totalorder %s201, %s203
    %p207 = scmp.eq.s32.totalorder %s15, 0
    %p208 = por %p206, %p207
    %p209 = scmp.ne.s32.totalorder %s201, %s203
    %p210 = scmp.eq.s32.totalorder %s20, 1
    %p211 = por %p209, %p210
    %p212 = scmp.ne.s32.totalorder %s203, %s204
    %p213 = scmp.eq.s32.totalorder %s20, 0
    %p214 = por %p212, %p213
    %p215 = scmp.ne.s32.totalorder %s203, %s204
    %p216 = scmp.eq.s32.totalorder %s21, 1
    %p217 = por %p215, %p216
    %p219 = scmp.ne.s32.totalorder %s204, %s218
    %p220 = scmp.eq.s32.totalorder %s21, 0
    %p221 = por %p219, %p220
    %s222 = ssub.s32 %s15, %s22
    %p223 = scmp.eq.s32.totalorder %s222, 0
    %s225 = sadd.s32 %s224, 1
    %s226 = scalar_select %p223, %s224, %s225
    %p229 = pneg %p223
    %p230 = scmp.eq.s32.totalorder %s15, 1
    %p231 = por %p229, %p230
    %p232 = scmp.ne.s32.totalorder %s224, %s227
    %p233 = scmp.eq.s32.totalorder %s15, 0
    %p234 = por %p232, %p233
    %p235 = scmp.ne.s32.totalorder %s224, %s227
    %p236 = scmp.eq.s32.totalorder %s20, 1
    %p237 = por %p235, %p236
    %p238 = scmp.ne.s32.totalorder %s227, %s228
    %p239 = scmp.eq.s32.totalorder %s20, 0
    %p240 = por %p238, %p239
    %p241 = scmp.ne.s32.totalorder %s227, %s228
    %p242 = scmp.eq.s32.totalorder %s21, 1
    %p243 = por %p241, %p242
    %p245 = scmp.ne.s32.totalorder %s228, %s244
    %p246 = scmp.eq.s32.totalorder %s21, 0
    %p247 = por %p245, %p246
    %p248 = scmp.le.s32.totalorder 1, %s15
    %p249 = scmp.lt.s32.totalorder %s15, 3
    %p250 = pnand %p248, %p249
    %p251 = pneg %p250
    // Predicated region
    $region9: #{_lambda_.7} parent=5 // pred_check
      _
    $region10: #{_lambda_.7} parent=5 // pred_check_branch
      %253 = sbr.rel (%p250) target = $region12
    $region11: #{_lambda_.7} parent=5 // pred_region
      %s254 = ssub.s32 %s15, 1
      // Predicated region
      $region13: #{_lambda_.7} parent=11 // pred_check
        %p255 = pneg %p62
      $region14: #{_lambda_.7} parent=11 // pred_check_branch
        %257 = sbr.rel (%p255) target = $region16
      $region15: #{_lambda_.7} parent=11 // pred_region
        _
      $region16: #{_lambda_.7} parent=11 // pred_fallthru
        _
      // Predicated region
      $region17: #{_lambda_.7} parent=11 // pred_check
        %p258 = pneg %p83
      $region18: #{_lambda_.7} parent=11 // pred_check_branch
        %260 = sbr.rel (%p258) target = $region20
      $region19: #{_lambda_.7} parent=11 // pred_region
        _
      $region20: #{_lambda_.7} parent=11 // pred_fallthru
        _
      // Predicated region
      $region21: #{_lambda_.7} parent=11 // pred_check
        %p261 = pneg %p104
      $region22: #{_lambda_.7} parent=11 // pred_check_branch
        %263 = sbr.rel (%p261) target = $region24
      $region23: #{_lambda_.7} parent=11 // pred_region
        _
      $region24: #{_lambda_.7} parent=11 // pred_fallthru
        _
      // Predicated region
      $region25: #{_lambda_.7} parent=11 // pred_check
        %p264 = pneg %p151
      $region26: #{_lambda_.7} parent=11 // pred_check_branch
        %266 = sbr.rel (%p264) target = $region28
      $region27: #{_lambda_.7} parent=11 // pred_region
        _
      $region28: #{_lambda_.7} parent=11 // pred_fallthru
        _
      // Predicated region
      $region29: #{_lambda_.7} parent=11 // pred_check
        %p267 = pneg %p172
      $region30: #{_lambda_.7} parent=11 // pred_check_branch
        %269 = sbr.rel (%p267) target = $region32
      $region31: #{_lambda_.7} parent=11 // pred_region
        _
      $region32: #{_lambda_.7} parent=11 // pred_fallthru
        _
      // Predicated region
      $region33: #{_lambda_.7} parent=11 // pred_check
        %p270 = pneg %p193
      $region34: #{_lambda_.7} parent=11 // pred_check_branch
        %272 = sbr.rel (%p270) target = $region36
      $region35: #{_lambda_.7} parent=11 // pred_region
        _
      $region36: #{_lambda_.7} parent=11 // pred_fallthru
        _
      // Predicated region
      $region37: #{_lambda_.7} parent=11 // pred_check
        %p273 = pneg %p214
      $region38: #{_lambda_.7} parent=11 // pred_check_branch
        %275 = sbr.rel (%p273) target = $region40
      $region39: #{_lambda_.7} parent=11 // pred_region
        _
      $region40: #{_lambda_.7} parent=11 // pred_fallthru
        _
    $region12: #{_lambda_.7} parent=5 // pred_fallthru
      _
    %p276 = scmp.lt.s32.totalorder %s15, 2
    // Predicated region
    $region41: #{_lambda_.7} parent=5 // pred_check
      %p277 = pneg %p276
    $region42: #{_lambda_.7} parent=5 // pred_check_branch
      %279 = sbr.rel (%p277) target = $region44
    $region43: #{_lambda_.7} parent=5 // pred_region
      // Predicated region
      $region45: #{_lambda_.7} parent=43 // pred_check
        %p280 = pneg %p35
      $region46: #{_lambda_.7} parent=43 // pred_check_branch
        %282 = sbr.rel (%p280) target = $region48
      $region47: #{_lambda_.7} parent=43 // pred_region
        %p283 = scmp.lt.s32.totalorder %s15, 1
        %s284 = scalar_select %p283, %s15, 1
        %s285 = smul.addr %s284, 20
        %s286 = smul.addr %s285, 4
        %s287 = scalar_lea.vmem %s0, %s286
      $region48: #{_lambda_.7} parent=43 // pred_fallthru
        _
      // Predicated region
      $region49: #{_lambda_.7} parent=43 // pred_check
        %p288 = pneg %p124
      $region50: #{_lambda_.7} parent=43 // pred_check_branch
        %290 = sbr.rel (%p288) target = $region52
      $region51: #{_lambda_.7} parent=43 // pred_region
        %p291 = scmp.lt.s32.totalorder %s15, 1
        %s292 = scalar_select %p291, %s15, 1
        %s293 = smul.addr %s292, 8
        %s294 = smul.addr %s293, 4
        %s295 = scalar_lea.vmem %s4, %s294
      $region52: #{_lambda_.7} parent=43 // pred_fallthru
        _
    $region44: #{_lambda_.7} parent=5 // pred_fallthru
      _
    %p296 = scmp.le.s32.totalorder 1, %s15
    %p297 = scmp.lt.s32.totalorder %s15, 3
    %p298 = pnand %p296, %p297
    %p299 = pneg %p298
    // Predicated region
    $region53: #{_lambda_.7} parent=5 // pred_check
      _
    $region54: #{_lambda_.7} parent=5 // pred_check_branch
      %301 = sbr.rel (%p298) target = $region56
    $region55: #{_lambda_.7} parent=5 // pred_region
      %s302 = ssub.s32 %s15, 1
      %p303 = scmp.lt.s32.totalorder %s20, 1
      %s304 = scalar_select %p303, %s20, 1
      %s305 = smul.addr %s304, 20
      %s306 = smul.addr %s305, 4
      %s307 = scalar_lea.vmem %s0, %s306
      %p308 = pneg %p41
      %p309 = pneg %p38
      %p310 = pneg %p62
      %p311 = pneg %p59
      %p312 = pneg %p83
      %p313 = pneg %p80
      %p314 = pneg %p104
      %p315 = pneg %p101
      %p316 = scmp.lt.s32.totalorder %s20, 1
      %s317 = scalar_select %p316, %s20, 1
      %s318 = smul.addr %s317, 8
      %s319 = smul.addr %s318, 4
      %s320 = scalar_lea.vmem %s4, %s319
      %p321 = pneg %p130
      %p322 = pneg %p127
      %p323 = pneg %p151
      %p324 = pneg %p148
      %p325 = pneg %p172
      %p326 = pneg %p169
      %p327 = pneg %p193
      %p328 = pneg %p190
      %p329 = pneg %p214
      %p330 = pneg %p211
      %p331 = pneg %p240
      %p332 = pneg %p237
      %p333 = scmp.lt.s32.totalorder %s20, 1
      %s334 = scalar_select %p333, %s20, 1
      %s335 = smul.addr %s334, 8
      %s336 = smul.addr %s335, 8
      %s337 = scalar_lea.vmem %s9, %s336
      %p338 = scmp.lt.s32.totalorder %s20, 1
      %s339 = scalar_select %p338, %s20, 1
      %s340 = smul.addr %s339, 20
      %s341 = smul.addr %s340, 4
      %s342 = scalar_lea.vmem %s0, %s341
      %p343 = scmp.lt.s32.totalorder %s20, 1
      %s344 = scalar_select %p343, %s20, 1
      %s345 = smul.addr %s344, 8
      %s346 = smul.addr %s345, 4
      %s347 = scalar_lea.vmem %s4, %s346
      %p348 = scmp.lt.s32.totalorder %s20, 1
      %s349 = scalar_select %p348, %s20, 1
      %s350 = smul.addr %s349, 8
      %s351 = smul.addr %s350, 8
      %s352 = scalar_lea.vmem %s9, %s351
      %v353 = vld [vmem:[%s342] sm:$0xf]
      %v354 = vld [vmem:[%s342 + $0x8] sm:$0xf]
      %v355 = vld [vmem:[%s342 + $0x10] sm:$0xf]
      %v356 = vld [vmem:[%s342 + $0x18] sm:$0xf]
      %v357 = vld [vmem:[%s342 + $0x20] sm:$0xf]
      %v358 = vld [vmem:[%s342 + $0x28] sm:$0xf]
      %v359 = vld [vmem:[%s342 + $0x30] sm:$0xf]
      %v360 = vld [vmem:[%s342 + $0x38] sm:$0xf]
      %v361 = vld [vmem:[%s1] sm:$0xf]
      %v362 = vld [vmem:[%s1 + $0x4] sm:$0xf]
      %v363 = vld [vmem:[%s1 + $0x8] sm:$0xf]
      %v364 = vld [vmem:[%s1 + $0xc] sm:$0xf]
      %v365 = vld [vmem:[%s1 + $0x10] sm:$0xf]
      %v366 = vld [vmem:[%s1 + $0x14] sm:$0xf]
      %v367 = vld [vmem:[%s1 + $0x18] sm:$0xf]
      %v368 = vld [vmem:[%s1 + $0x1c] sm:$0xf]
      %v369 = vld [vmem:[%s1 + $0x20] sm:$0xf]
      %v370 = vld [vmem:[%s1 + $0x24] sm:$0xf]
      %v371 = vld [vmem:[%s1 + $0x28] sm:$0xf]
      %v372 = vld [vmem:[%s1 + $0x2c] sm:$0xf]
      %v373 = vld [vmem:[%s1 + $0x30] sm:$0xf]
      %v374 = vld [vmem:[%s1 + $0x34] sm:$0xf]
      %v375 = vld [vmem:[%s1 + $0x38] sm:$0xf]
      %v376 = vld [vmem:[%s1 + $0x3c] sm:$0xf]
      %v377 = vld [vmem:[%s342 + $0x4] sm:$0x1]
      %v378 = vld [vmem:[%s342 + $0xc] sm:$0x1]
      %v379 = vld [vmem:[%s342 + $0x14] sm:$0x1]
      %v380 = vld [vmem:[%s342 + $0x1c] sm:$0x1]
      %v381 = vld [vmem:[%s342 + $0x24] sm:$0x1]
      %v382 = vld [vmem:[%s342 + $0x2c] sm:$0x1]
      %v383 = vld [vmem:[%s342 + $0x34] sm:$0x1]
      %v384 = vld [vmem:[%s342 + $0x3c] sm:$0x1]
      %vm385 = vsmask.f32 3328
      %vm386 = vsmask.f32 7440
      %vm387 = vmor %vm385, %vm386
      %v389 = vshrl.u32 %v353, 16
      %v391 = vrot.slane %v389, 4
      %v392 = vshll.u32 %v353, 16
      %v394 = vrot.slane %v392, 5
      %v395 = vor.u32 %v391, %v394
      %v396 = vrot.slane %v395, 4
      %v398 = vshll.u32 %v377, 16
      %v400 = vrot.slane %v398, 5
      %v401 = vsel %vm387, %v396, %v400
      %v403 = vshrl.u32 %v354, 16
      %v405 = vrot.slane %v403, 4
      %v406 = vshll.u32 %v354, 16
      %v408 = vrot.slane %v406, 5
      %v409 = vor.u32 %v405, %v408
      %v410 = vrot.slane %v409, 4
      %v412 = vshll.u32 %v378, 16
      %v414 = vrot.slane %v412, 5
      %v415 = vsel %vm387, %v410, %v414
      %v417 = vshrl.u32 %v355, 16
      %v419 = vrot.slane %v417, 4
      %v420 = vshll.u32 %v355, 16
      %v422 = vrot.slane %v420, 5
      %v423 = vor.u32 %v419, %v422
      %v424 = vrot.slane %v423, 4
      %v426 = vshll.u32 %v379, 16
      %v428 = vrot.slane %v426, 5
      %v429 = vsel %vm387, %v424, %v428
      %v431 = vshrl.u32 %v356, 16
      %v433 = vrot.slane %v431, 4
      %v434 = vshll.u32 %v356, 16
      %v436 = vrot.slane %v434, 5
      %v437 = vor.u32 %v433, %v436
      %v438 = vrot.slane %v437, 4
      %v440 = vshll.u32 %v380, 16
      %v442 = vrot.slane %v440, 5
      %v443 = vsel %vm387, %v438, %v442
      %v445 = vshrl.u32 %v357, 16
      %v447 = vrot.slane %v445, 4
      %v448 = vshll.u32 %v357, 16
      %v450 = vrot.slane %v448, 5
      %v451 = vor.u32 %v447, %v450
      %v452 = vrot.slane %v451, 4
      %v454 = vshll.u32 %v381, 16
      %v456 = vrot.slane %v454, 5
      %v457 = vsel %vm387, %v452, %v456
      %v459 = vshrl.u32 %v358, 16
      %v461 = vrot.slane %v459, 4
      %v462 = vshll.u32 %v358, 16
      %v464 = vrot.slane %v462, 5
      %v465 = vor.u32 %v461, %v464
      %v466 = vrot.slane %v465, 4
      %v468 = vshll.u32 %v382, 16
      %v470 = vrot.slane %v468, 5
      %v471 = vsel %vm387, %v466, %v470
      %v473 = vshrl.u32 %v359, 16
      %v475 = vrot.slane %v473, 4
      %v476 = vshll.u32 %v359, 16
      %v478 = vrot.slane %v476, 5
      %v479 = vor.u32 %v475, %v478
      %v480 = vrot.slane %v479, 4
      %v482 = vshll.u32 %v383, 16
      %v484 = vrot.slane %v482, 5
      %v485 = vsel %vm387, %v480, %v484
      %v487 = vshrl.u32 %v360, 16
      %v489 = vrot.slane %v487, 4
      %v490 = vshll.u32 %v360, 16
      %v492 = vrot.slane %v490, 5
      %v493 = vor.u32 %v489, %v492
      %v494 = vrot.slane %v493, 4
      %v496 = vshll.u32 %v384, 16
      %v498 = vrot.slane %v496, 5
      %v499 = vsel %vm387, %v494, %v498
      %s500 = scalar_lea.vmem %s1, 64
      %v501 = vld [vmem:[%s500] sm:$0xf]
      %v502 = vld [vmem:[%s500 + $0x4] sm:$0xf]
      %v503 = vld [vmem:[%s500 + $0x8] sm:$0xf]
      %v504 = vld [vmem:[%s500 + $0xc] sm:$0xf]
      %v505 = vld [vmem:[%s500 + $0x10] sm:$0xf]
      %v506 = vld [vmem:[%s500 + $0x14] sm:$0xf]
      %v507 = vld [vmem:[%s500 + $0x18] sm:$0xf]
      %v508 = vld [vmem:[%s500 + $0x1c] sm:$0xf]
      %v509 = vld [vmem:[%s500 + $0x20] sm:$0xf]
      %v510 = vld [vmem:[%s500 + $0x24] sm:$0xf]
      %v511 = vld [vmem:[%s500 + $0x28] sm:$0xf]
      %v512 = vld [vmem:[%s500 + $0x2c] sm:$0xf]
      %v513 = vld [vmem:[%s500 + $0x30] sm:$0xf]
      %v514 = vld [vmem:[%s500 + $0x34] sm:$0xf]
      %v515 = vld [vmem:[%s500 + $0x38] sm:$0xf]
      %v516 = vld [vmem:[%s500 + $0x3c] sm:$0xf]
      %v517 = vunpack.c.l.b16 %v401
      %v518 = vunpack.c.l.b16 %v415
      %v519 = vunpack.c.l.b16 %v429
      %v520 = vunpack.c.l.b16 %v443
      %v521 = vunpack.c.l.b16 %v457
      %v522 = vunpack.c.l.b16 %v471
      %v523 = vunpack.c.l.b16 %v485
      %v524 = vunpack.c.l.b16 %v499
      %v525 = vpack.c.b16 %v518, %v517
      %v526 = vpack.c.b16 %v520, %v519
      %v527 = vpack.c.b16 %v522, %v521
      %v528 = vpack.c.b16 %v524, %v523
      %v549 = vunpack.c.l.b16 %v501
      %v550 = vunpack.c.l.b16 %v502
      %v551 = vunpack.c.l.b16 %v503
      %v552 = vunpack.c.l.b16 %v504
      %v553 = vunpack.c.l.b16 %v505
      %v554 = vunpack.c.l.b16 %v506
      %v555 = vunpack.c.l.b16 %v507
      %v556 = vunpack.c.l.b16 %v508
      %v557 = vunpack.c.l.b16 %v509
      %v558 = vunpack.c.l.b16 %v510
      %v559 = vunpack.c.l.b16 %v511
      %v560 = vunpack.c.l.b16 %v512
      %v561 = vunpack.c.l.b16 %v513
      %v562 = vunpack.c.l.b16 %v514
      %v563 = vunpack.c.l.b16 %v515
      %v564 = vunpack.c.l.b16 %v516
      %v565 = vpack.c.b16 %v550, %v549
      %v566 = vpack.c.b16 %v552, %v551
      %v567 = vpack.c.b16 %v554, %v553
      %v568 = vpack.c.b16 %v556, %v555
      %v569 = vpack.c.b16 %v558, %v557
      %v570 = vpack.c.b16 %v560, %v559
      %v571 = vpack.c.b16 %v562, %v561
      %v572 = vpack.c.b16 %v564, %v563
      %581 = vmatpush.bf16.msra.mxu0 %v572
      %582 = vmatpush.bf16.msra.mxu0 %v571
      %583 = vmatpush.bf16.msra.mxu0 %v570
      %584 = vmatpush.bf16.msra.mxu0 %v569
      %585 = vmatpush.bf16.msra.mxu0 %v568
      %586 = vmatpush.bf16.msra.mxu0 %v567
      %587 = vmatpush.bf16.msra.mxu0 %v566
      %588 = vmatpush.bf16.msra.mxu0 %v565
      %589 = vmatmul.bf16.gmra.mxu0 %v525
      %v590 = vpop.f32.mrf.mxu0
      %v591 = vadd.f32 0.0, %v590
      %v592 = vpop.f32.mrf.mxu0
      %v593 = vadd.f32 0.0, %v592
      %594 = vmatmul.bf16.gmra.mxu0 %v526
      %v595 = vpop.f32.mrf.mxu0
      %v596 = vadd.f32 0.0, %v595
      %v597 = vpop.f32.mrf.mxu0
      %v598 = vadd.f32 0.0, %v597
      %599 = vmatmul.bf16.gmra.mxu0 %v527
      %v600 = vpop.f32.mrf.mxu0
      %v601 = vadd.f32 0.0, %v600
      %v602 = vpop.f32.mrf.mxu0
      %v603 = vadd.f32 0.0, %v602
      %604 = vmatmul.bf16.gmra.mxu0 %v528
      %v605 = vpop.f32.mrf.mxu0
      %v606 = vadd.f32 0.0, %v605
      %v607 = vpop.f32.mrf.mxu0
      %v608 = vadd.f32 0.0, %v607
      %609 = vdwg.mxu0
      %v618 = vunpack.c.l.b16 %v353
      %v619 = vunpack.c.l.b16 %v354
      %v620 = vunpack.c.l.b16 %v355
      %v621 = vunpack.c.l.b16 %v356
      %v622 = vunpack.c.l.b16 %v357
      %v623 = vunpack.c.l.b16 %v358
      %v624 = vunpack.c.l.b16 %v359
      %v625 = vunpack.c.l.b16 %v360
      %v626 = vpack.c.b16 %v619, %v618
      %v627 = vpack.c.b16 %v621, %v620
      %v628 = vpack.c.b16 %v623, %v622
      %v629 = vpack.c.b16 %v625, %v624
      %v650 = vunpack.c.l.b16 %v361
      %v651 = vunpack.c.l.b16 %v362
      %v652 = vunpack.c.l.b16 %v363
      %v653 = vunpack.c.l.b16 %v364
      %v654 = vunpack.c.l.b16 %v365
      %v655 = vunpack.c.l.b16 %v366
      %v656 = vunpack.c.l.b16 %v367
      %v657 = vunpack.c.l.b16 %v368
      %v658 = vunpack.c.l.b16 %v369
      %v659 = vunpack.c.l.b16 %v370
      %v660 = vunpack.c.l.b16 %v371
      %v661 = vunpack.c.l.b16 %v372
      %v662 = vunpack.c.l.b16 %v373
      %v663 = vunpack.c.l.b16 %v374
      %v664 = vunpack.c.l.b16 %v375
      %v665 = vunpack.c.l.b16 %v376
      %v666 = vpack.c.b16 %v651, %v650
      %v667 = vpack.c.b16 %v653, %v652
      %v668 = vpack.c.b16 %v655, %v654
      %v669 = vpack.c.b16 %v657, %v656
      %v670 = vpack.c.b16 %v659, %v658
      %v671 = vpack.c.b16 %v661, %v660
      %v672 = vpack.c.b16 %v663, %v662
      %v673 = vpack.c.b16 %v665, %v664
      %682 = vmatpush.bf16.msra.mxu0 %v673
      %683 = vmatpush.bf16.msra.mxu0 %v672
      %684 = vmatpush.bf16.msra.mxu0 %v671
      %685 = vmatpush.bf16.msra.mxu0 %v670
      %686 = vmatpush.bf16.msra.mxu0 %v669
      %687 = vmatpush.bf16.msra.mxu0 %v668
      %688 = vmatpush.bf16.msra.mxu0 %v667
      %689 = vmatpush.bf16.msra.mxu0 %v666
      %690 = vmatmul.bf16.gmra.mxu0 %v626
      %v691 = vpop.f32.mrf.mxu0
      %v692 = vadd.f32 %v591, %v691
      %v693 = vpop.f32.mrf.mxu0
      %v694 = vadd.f32 %v593, %v693
      %695 = vmatmul.bf16.gmra.mxu0 %v627
      %v696 = vpop.f32.mrf.mxu0
      %v697 = vadd.f32 %v596, %v696
      %v698 = vpop.f32.mrf.mxu0
      %v699 = vadd.f32 %v598, %v698
      %700 = vmatmul.bf16.gmra.mxu0 %v628
      %v701 = vpop.f32.mrf.mxu0
      %v702 = vadd.f32 %v601, %v701
      %v703 = vpop.f32.mrf.mxu0
      %v704 = vadd.f32 %v603, %v703
      %705 = vmatmul.bf16.gmra.mxu0 %v629
      %v706 = vpop.f32.mrf.mxu0
      %v707 = vadd.f32 %v606, %v706
      %v708 = vpop.f32.mrf.mxu0
      %v709 = vadd.f32 %v608, %v708
      %710 = vdwg.mxu0
      %v711 = vld [vmem:[%s342] sm:$0xe]
      %v712 = vld [vmem:[%s342 + $0x8] sm:$0xe]
      %v713 = vld [vmem:[%s342 + $0x10] sm:$0xe]
      %v714 = vld [vmem:[%s342 + $0x18] sm:$0xe]
      %v715 = vld [vmem:[%s342 + $0x20] sm:$0xe]
      %v716 = vld [vmem:[%s342 + $0x28] sm:$0xe]
      %v717 = vld [vmem:[%s342 + $0x30] sm:$0xe]
      %v718 = vld [vmem:[%s342 + $0x38] sm:$0xe]
      %vm735 = vcmask 1042432
      %vm736 = vcmask 1046532
      %vm737 = vmor %vm735, %vm736
      %v738 = vrot.slane %v711, 5
      %v739 = vrot.slane %v738, 4
      %v740 = vrot.slane %v377, 5
      %v741 = vsel %vm737, %v739, %v740
      %v742 = vrot.slane %v712, 5
      %v743 = vrot.slane %v742, 4
      %v744 = vrot.slane %v378, 5
      %v745 = vsel %vm737, %v743, %v744
      %v746 = vrot.slane %v713, 5
      %v747 = vrot.slane %v746, 4
      %v748 = vrot.slane %v379, 5
      %v749 = vsel %vm737, %v747, %v748
      %v750 = vrot.slane %v714, 5
      %v751 = vrot.slane %v750, 4
      %v752 = vrot.slane %v380, 5
      %v753 = vsel %vm737, %v751, %v752
      %v754 = vrot.slane %v715, 5
      %v755 = vrot.slane %v754, 4
      %v756 = vrot.slane %v381, 5
      %v757 = vsel %vm737, %v755, %v756
      %v758 = vrot.slane %v716, 5
      %v759 = vrot.slane %v758, 4
      %v760 = vrot.slane %v382, 5
      %v761 = vsel %vm737, %v759, %v760
      %v762 = vrot.slane %v717, 5
      %v763 = vrot.slane %v762, 4
      %v764 = vrot.slane %v383, 5
      %v765 = vsel %vm737, %v763, %v764
      %v766 = vrot.slane %v718, 5
      %v767 = vrot.slane %v766, 4
      %v768 = vrot.slane %v384, 5
      %v769 = vsel %vm737, %v767, %v768
      %s770 = scalar_lea.vmem %s1, 128
      %v771 = vld [vmem:[%s770] sm:$0xf]
      %v772 = vld [vmem:[%s770 + $0x4] sm:$0xf]
      %v773 = vld [vmem:[%s770 + $0x8] sm:$0xf]
      %v774 = vld [vmem:[%s770 + $0xc] sm:$0xf]
      %v775 = vld [vmem:[%s770 + $0x10] sm:$0xf]
      %v776 = vld [vmem:[%s770 + $0x14] sm:$0xf]
      %v777 = vld [vmem:[%s770 + $0x18] sm:$0xf]
      %v778 = vld [vmem:[%s770 + $0x1c] sm:$0xf]
      %v779 = vld [vmem:[%s770 + $0x20] sm:$0xf]
      %v780 = vld [vmem:[%s770 + $0x24] sm:$0xf]
      %v781 = vld [vmem:[%s770 + $0x28] sm:$0xf]
      %v782 = vld [vmem:[%s770 + $0x2c] sm:$0xf]
      %v783 = vld [vmem:[%s770 + $0x30] sm:$0xf]
      %v784 = vld [vmem:[%s770 + $0x34] sm:$0xf]
      %v785 = vld [vmem:[%s770 + $0x38] sm:$0xf]
      %v786 = vld [vmem:[%s770 + $0x3c] sm:$0xf]
      %v787 = vunpack.c.l.b16 %v741
      %v788 = vunpack.c.l.b16 %v745
      %v789 = vunpack.c.l.b16 %v749
      %v790 = vunpack.c.l.b16 %v753
      %v791 = vunpack.c.l.b16 %v757
      %v792 = vunpack.c.l.b16 %v761
      %v793 = vunpack.c.l.b16 %v765
      %v794 = vunpack.c.l.b16 %v769
      %v795 = vpack.c.b16 %v788, %v787
      %v796 = vpack.c.b16 %v790, %v789
      %v797 = vpack.c.b16 %v792, %v791
      %v798 = vpack.c.b16 %v794, %v793
      %v819 = vunpack.c.l.b16 %v771
      %v820 = vunpack.c.l.b16 %v772
      %v821 = vunpack.c.l.b16 %v773
      %v822 = vunpack.c.l.b16 %v774
      %v823 = vunpack.c.l.b16 %v775
      %v824 = vunpack.c.l.b16 %v776
      %v825 = vunpack.c.l.b16 %v777
      %v826 = vunpack.c.l.b16 %v778
      %v827 = vunpack.c.l.b16 %v779
      %v828 = vunpack.c.l.b16 %v780
      %v829 = vunpack.c.l.b16 %v781
      %v830 = vunpack.c.l.b16 %v782
      %v831 = vunpack.c.l.b16 %v783
      %v832 = vunpack.c.l.b16 %v784
      %v833 = vunpack.c.l.b16 %v785
      %v834 = vunpack.c.l.b16 %v786
      %v835 = vpack.c.b16 %v820, %v819
      %v836 = vpack.c.b16 %v822, %v821
      %v837 = vpack.c.b16 %v824, %v823
      %v838 = vpack.c.b16 %v826, %v825
      %v839 = vpack.c.b16 %v828, %v827
      %v840 = vpack.c.b16 %v830, %v829
      %v841 = vpack.c.b16 %v832, %v831
      %v842 = vpack.c.b16 %v834, %v833
      %851 = vmatpush.bf16.msra.mxu0 %v842
      %852 = vmatpush.bf16.msra.mxu0 %v841
      %853 = vmatpush.bf16.msra.mxu0 %v840
      %854 = vmatpush.bf16.msra.mxu0 %v839
      %855 = vmatpush.bf16.msra.mxu0 %v838
      %856 = vmatpush.bf16.msra.mxu0 %v837
      %857 = vmatpush.bf16.msra.mxu0 %v836
      %858 = vmatpush.bf16.msra.mxu0 %v835
      %859 = vmatmul.bf16.gmra.mxu0 %v795
      %v860 = vpop.f32.mrf.mxu0
      %v861 = vadd.f32 0.0, %v860
      %v862 = vpop.f32.mrf.mxu0
      %v863 = vadd.f32 0.0, %v862
      %864 = vmatmul.bf16.gmra.mxu0 %v796
      %v865 = vpop.f32.mrf.mxu0
      %v866 = vadd.f32 0.0, %v865
      %v867 = vpop.f32.mrf.mxu0
      %v868 = vadd.f32 0.0, %v867
      %869 = vmatmul.bf16.gmra.mxu0 %v797
      %v870 = vpop.f32.mrf.mxu0
      %v871 = vadd.f32 0.0, %v870
      %v872 = vpop.f32.mrf.mxu0
      %v873 = vadd.f32 0.0, %v872
      %874 = vmatmul.bf16.gmra.mxu0 %v798
      %v875 = vpop.f32.mrf.mxu0
      %v876 = vadd.f32 0.0, %v875
      %v877 = vpop.f32.mrf.mxu0
      %v878 = vadd.f32 0.0, %v877
      %879 = vdwg.mxu0
      %v880 = vadd.f32 %v692, %v861
      %v881 = vadd.f32 %v694, %v863
      %v882 = vadd.f32 %v697, %v866
      %v883 = vadd.f32 %v699, %v868
      %v884 = vadd.f32 %v702, %v871
      %v885 = vadd.f32 %v704, %v873
      %v886 = vadd.f32 %v707, %v876
      %v887 = vadd.f32 %v709, %v878
      %s888 = scalar_lea.vmem %s342, 8
      %v889 = vld [vmem:[%s888] sm:$0xf]
      %v890 = vld [vmem:[%s888 + $0x8] sm:$0xf]
      %v891 = vld [vmem:[%s888 + $0x10] sm:$0xf]
      %v892 = vld [vmem:[%s888 + $0x18] sm:$0xf]
      %v893 = vld [vmem:[%s888 + $0x20] sm:$0xf]
      %v894 = vld [vmem:[%s888 + $0x28] sm:$0xf]
      %v895 = vld [vmem:[%s888 + $0x30] sm:$0xf]
      %v896 = vld [vmem:[%s888 + $0x38] sm:$0xf]
      %s897 = scalar_lea.vmem %s1, 192
      %v898 = vld [vmem:[%s897] sm:$0xf]
      %v899 = vld [vmem:[%s897 + $0x4] sm:$0xf]
      %v900 = vld [vmem:[%s897 + $0x8] sm:$0xf]
      %v901 = vld [vmem:[%s897 + $0xc] sm:$0xf]
      %v902 = vld [vmem:[%s897 + $0x10] sm:$0xf]
      %v903 = vld [vmem:[%s897 + $0x14] sm:$0xf]
      %v904 = vld [vmem:[%s897 + $0x18] sm:$0xf]
      %v905 = vld [vmem:[%s897 + $0x1c] sm:$0xf]
      %v906 = vld [vmem:[%s897 + $0x20] sm:$0xf]
      %v907 = vld [vmem:[%s897 + $0x24] sm:$0xf]
      %v908 = vld [vmem:[%s897 + $0x28] sm:$0xf]
      %v909 = vld [vmem:[%s897 + $0x2c] sm:$0xf]
      %v910 = vld [vmem:[%s897 + $0x30] sm:$0xf]
      %v911 = vld [vmem:[%s897 + $0x34] sm:$0xf]
      %v912 = vld [vmem:[%s897 + $0x38] sm:$0xf]
      %v913 = vld [vmem:[%s897 + $0x3c] sm:$0xf]
      %v922 = vunpack.c.l.b16 %v889
      %v923 = vunpack.c.l.b16 %v890
      %v924 = vunpack.c.l.b16 %v891
      %v925 = vunpack.c.l.b16 %v892
      %v926 = vunpack.c.l.b16 %v893
      %v927 = vunpack.c.l.b16 %v894
      %v928 = vunpack.c.l.b16 %v895
      %v929 = vunpack.c.l.b16 %v896
      %v930 = vpack.c.b16 %v923, %v922
      %v931 = vpack.c.b16 %v925, %v924
      %v932 = vpack.c.b16 %v927, %v926
      %v933 = vpack.c.b16 %v929, %v928
      %v954 = vunpack.c.l.b16 %v898
      %v955 = vunpack.c.l.b16 %v899
      %v956 = vunpack.c.l.b16 %v900
      %v957 = vunpack.c.l.b16 %v901
      %v958 = vunpack.c.l.b16 %v902
      %v959 = vunpack.c.l.b16 %v903
      %v960 = vunpack.c.l.b16 %v904
      %v961 = vunpack.c.l.b16 %v905
      %v962 = vunpack.c.l.b16 %v906
      %v963 = vunpack.c.l.b16 %v907
      %v964 = vunpack.c.l.b16 %v908
      %v965 = vunpack.c.l.b16 %v909
      %v966 = vunpack.c.l.b16 %v910
      %v967 = vunpack.c.l.b16 %v911
      %v968 = vunpack.c.l.b16 %v912
      %v969 = vunpack.c.l.b16 %v913
      %v970 = vpack.c.b16 %v955, %v954
      %v971 = vpack.c.b16 %v957, %v956
      %v972 = vpack.c.b16 %v959, %v958
      %v973 = vpack.c.b16 %v961, %v960
      %v974 = vpack.c.b16 %v963, %v962
      %v975 = vpack.c.b16 %v965, %v964
      %v976 = vpack.c.b16 %v967, %v966
      %v977 = vpack.c.b16 %v969, %v968
      %986 = vmatpush.bf16.msra.mxu0 %v977
      %987 = vmatpush.bf16.msra.mxu0 %v976
      %988 = vmatpush.bf16.msra.mxu0 %v975
      %989 = vmatpush.bf16.msra.mxu0 %v974
      %990 = vmatpush.bf16.msra.mxu0 %v973
      %991 = vmatpush.bf16.msra.mxu0 %v972
      %992 = vmatpush.bf16.msra.mxu0 %v971
      %993 = vmatpush.bf16.msra.mxu0 %v970
      %994 = vmatmul.bf16.gmra.mxu0 %v930
      %v995 = vpop.f32.mrf.mxu0
      %v996 = vadd.f32 0.0, %v995
      %v997 = vpop.f32.mrf.mxu0
      %v998 = vadd.f32 0.0, %v997
      %999 = vmatmul.bf16.gmra.mxu0 %v931
      %v1000 = vpop.f32.mrf.mxu0
      %v1001 = vadd.f32 0.0, %v1000
      %v1002 = vpop.f32.mrf.mxu0
      %v1003 = vadd.f32 0.0, %v1002
      %1004 = vmatmul.bf16.gmra.mxu0 %v932
      %v1005 = vpop.f32.mrf.mxu0
      %v1006 = vadd.f32 0.0, %v1005
      %v1007 = vpop.f32.mrf.mxu0
      %v1008 = vadd.f32 0.0, %v1007
      %1009 = vmatmul.bf16.gmra.mxu0 %v933
      %v1010 = vpop.f32.mrf.mxu0
      %v1011 = vadd.f32 0.0, %v1010
      %v1012 = vpop.f32.mrf.mxu0
      %v1013 = vadd.f32 0.0, %v1012
      %1014 = vdwg.mxu0
      %v1015 = vadd.f32 %v880, %v996
      %v1016 = vadd.f32 %v881, %v998
      %v1017 = vadd.f32 %v882, %v1001
      %v1018 = vadd.f32 %v883, %v1003
      %v1019 = vadd.f32 %v884, %v1006
      %v1020 = vadd.f32 %v885, %v1008
      %v1021 = vadd.f32 %v886, %v1011
      %v1022 = vadd.f32 %v887, %v1013
      %v1023 = vld [vmem:[%s888] sm:$0xf]
      %v1024 = vld [vmem:[%s888 + $0x4] sm:$0x1]
      %v1025 = vld [vmem:[%s888 + $0x8] sm:$0xf]
      %v1026 = vld [vmem:[%s888 + $0xc] sm:$0x1]
      %v1027 = vld [vmem:[%s888 + $0x10] sm:$0xf]
      %v1028 = vld [vmem:[%s888 + $0x14] sm:$0x1]
      %v1029 = vld [vmem:[%s888 + $0x18] sm:$0xf]
      %v1030 = vld [vmem:[%s888 + $0x1c] sm:$0x1]
      %v1031 = vld [vmem:[%s888 + $0x20] sm:$0xf]
      %v1032 = vld [vmem:[%s888 + $0x24] sm:$0x1]
      %v1033 = vld [vmem:[%s888 + $0x28] sm:$0xf]
      %v1034 = vld [vmem:[%s888 + $0x2c] sm:$0x1]
      %v1035 = vld [vmem:[%s888 + $0x30] sm:$0xf]
      %v1036 = vld [vmem:[%s888 + $0x34] sm:$0x1]
      %v1037 = vld [vmem:[%s888 + $0x38] sm:$0xf]
      %v1038 = vld [vmem:[%s888 + $0x3c] sm:$0x1]
      %v1040 = vshrl.u32 %v1023, 16
      %v1042 = vrot.slane %v1040, 4
      %v1043 = vshll.u32 %v1023, 16
      %v1045 = vrot.slane %v1043, 5
      %v1046 = vor.u32 %v1042, %v1045
      %v1047 = vrot.slane %v1046, 4
      %v1049 = vshll.u32 %v1024, 16
      %v1051 = vrot.slane %v1049, 5
      %v1052 = vsel %vm387, %v1047, %v1051
      %v1054 = vshrl.u32 %v1025, 16
      %v1056 = vrot.slane %v1054, 4
      %v1057 = vshll.u32 %v1025, 16
      %v1059 = vrot.slane %v1057, 5
      %v1060 = vor.u32 %v1056, %v1059
      %v1061 = vrot.slane %v1060, 4
      %v1063 = vshll.u32 %v1026, 16
      %v1065 = vrot.slane %v1063, 5
      %v1066 = vsel %vm387, %v1061, %v1065
      %v1068 = vshrl.u32 %v1027, 16
      %v1070 = vrot.slane %v1068, 4
      %v1071 = vshll.u32 %v1027, 16
      %v1073 = vrot.slane %v1071, 5
      %v1074 = vor.u32 %v1070, %v1073
      %v1075 = vrot.slane %v1074, 4
      %v1077 = vshll.u32 %v1028, 16
      %v1079 = vrot.slane %v1077, 5
      %v1080 = vsel %vm387, %v1075, %v1079
      %v1082 = vshrl.u32 %v1029, 16
      %v1084 = vrot.slane %v1082, 4
      %v1085 = vshll.u32 %v1029, 16
      %v1087 = vrot.slane %v1085, 5
      %v1088 = vor.u32 %v1084, %v1087
      %v1089 = vrot.slane %v1088, 4
      %v1091 = vshll.u32 %v1030, 16
      %v1093 = vrot.slane %v1091, 5
      %v1094 = vsel %vm387, %v1089, %v1093
      %v1096 = vshrl.u32 %v1031, 16
      %v1098 = vrot.slane %v1096, 4
      %v1099 = vshll.u32 %v1031, 16
      %v1101 = vrot.slane %v1099, 5
      %v1102 = vor.u32 %v1098, %v1101
      %v1103 = vrot.slane %v1102, 4
      %v1105 = vshll.u32 %v1032, 16
      %v1107 = vrot.slane %v1105, 5
      %v1108 = vsel %vm387, %v1103, %v1107
      %v1110 = vshrl.u32 %v1033, 16
      %v1112 = vrot.slane %v1110, 4
      %v1113 = vshll.u32 %v1033, 16
      %v1115 = vrot.slane %v1113, 5
      %v1116 = vor.u32 %v1112, %v1115
      %v1117 = vrot.slane %v1116, 4
      %v1119 = vshll.u32 %v1034, 16
      %v1121 = vrot.slane %v1119, 5
      %v1122 = vsel %vm387, %v1117, %v1121
      %v1124 = vshrl.u32 %v1035, 16
      %v1126 = vrot.slane %v1124, 4
      %v1127 = vshll.u32 %v1035, 16
      %v1129 = vrot.slane %v1127, 5
      %v1130 = vor.u32 %v1126, %v1129
      %v1131 = vrot.slane %v1130, 4
      %v1133 = vshll.u32 %v1036, 16
      %v1135 = vrot.slane %v1133, 5
      %v1136 = vsel %vm387, %v1131, %v1135
      %v1138 = vshrl.u32 %v1037, 16
      %v1140 = vrot.slane %v1138, 4
      %v1141 = vshll.u32 %v1037, 16
      %v1143 = vrot.slane %v1141, 5
      %v1144 = vor.u32 %v1140, %v1143
      %v1145 = vrot.slane %v1144, 4
      %v1147 = vshll.u32 %v1038, 16
      %v1149 = vrot.slane %v1147, 5
      %v1150 = vsel %vm387, %v1145, %v1149
      %s1151 = scalar_lea.vmem %s1, 256
      %v1152 = vld [vmem:[%s1151] sm:$0xf]
      %v1153 = vld [vmem:[%s1151 + $0x4] sm:$0xf]
      %v1154 = vld [vmem:[%s1151 + $0x8] sm:$0xf]
      %v1155 = vld [vmem:[%s1151 + $0xc] sm:$0xf]
      %v1156 = vld [vmem:[%s1151 + $0x10] sm:$0xf]
      %v1157 = vld [vmem:[%s1151 + $0x14] sm:$0xf]
      %v1158 = vld [vmem:[%s1151 + $0x18] sm:$0xf]
      %v1159 = vld [vmem:[%s1151 + $0x1c] sm:$0xf]
      %v1160 = vld [vmem:[%s1151 + $0x20] sm:$0xf]
      %v1161 = vld [vmem:[%s1151 + $0x24] sm:$0xf]
      %v1162 = vld [vmem:[%s1151 + $0x28] sm:$0xf]
      %v1163 = vld [vmem:[%s1151 + $0x2c] sm:$0xf]
      %v1164 = vld [vmem:[%s1151 + $0x30] sm:$0xf]
      %v1165 = vld [vmem:[%s1151 + $0x34] sm:$0xf]
      %v1166 = vld [vmem:[%s1151 + $0x38] sm:$0xf]
      %v1167 = vld [vmem:[%s1151 + $0x3c] sm:$0xf]
      %v1168 = vunpack.c.l.b16 %v1052
      %v1169 = vunpack.c.l.b16 %v1066
      %v1170 = vunpack.c.l.b16 %v1080
      %v1171 = vunpack.c.l.b16 %v1094
      %v1172 = vunpack.c.l.b16 %v1108
      %v1173 = vunpack.c.l.b16 %v1122
      %v1174 = vunpack.c.l.b16 %v1136
      %v1175 = vunpack.c.l.b16 %v1150
      %v1176 = vpack.c.b16 %v1169, %v1168
      %v1177 = vpack.c.b16 %v1171, %v1170
      %v1178 = vpack.c.b16 %v1173, %v1172
      %v1179 = vpack.c.b16 %v1175, %v1174
      %v1200 = vunpack.c.l.b16 %v1152
      %v1201 = vunpack.c.l.b16 %v1153
      %v1202 = vunpack.c.l.b16 %v1154
      %v1203 = vunpack.c.l.b16 %v1155
      %v1204 = vunpack.c.l.b16 %v1156
      %v1205 = vunpack.c.l.b16 %v1157
      %v1206 = vunpack.c.l.b16 %v1158
      %v1207 = vunpack.c.l.b16 %v1159
      %v1208 = vunpack.c.l.b16 %v1160
      %v1209 = vunpack.c.l.b16 %v1161
      %v1210 = vunpack.c.l.b16 %v1162
      %v1211 = vunpack.c.l.b16 %v1163
      %v1212 = vunpack.c.l.b16 %v1164
      %v1213 = vunpack.c.l.b16 %v1165
      %v1214 = vunpack.c.l.b16 %v1166
      %v1215 = vunpack.c.l.b16 %v1167
      %v1216 = vpack.c.b16 %v1201, %v1200
      %v1217 = vpack.c.b16 %v1203, %v1202
      %v1218 = vpack.c.b16 %v1205, %v1204
      %v1219 = vpack.c.b16 %v1207, %v1206
      %v1220 = vpack.c.b16 %v1209, %v1208
      %v1221 = vpack.c.b16 %v1211, %v1210
      %v1222 = vpack.c.b16 %v1213, %v1212
      %v1223 = vpack.c.b16 %v1215, %v1214
      %1232 = vmatpush.bf16.msra.mxu0 %v1223
      %1233 = vmatpush.bf16.msra.mxu0 %v1222
      %1234 = vmatpush.bf16.msra.mxu0 %v1221
      %1235 = vmatpush.bf16.msra.mxu0 %v1220
      %1236 = vmatpush.bf16.msra.mxu0 %v1219
      %1237 = vmatpush.bf16.msra.mxu0 %v1218
      %1238 = vmatpush.bf16.msra.mxu0 %v1217
      %1239 = vmatpush.bf16.msra.mxu0 %v1216
      %1240 = vmatmul.bf16.gmra.mxu0 %v1176
      %v1241 = vpop.f32.mrf.mxu0
      %v1242 = vadd.f32 0.0, %v1241
      %v1243 = vpop.f32.mrf.mxu0
      %v1244 = vadd.f32 0.0, %v1243
      %1245 = vmatmul.bf16.gmra.mxu0 %v1177
      %v1246 = vpop.f32.mrf.mxu0
      %v1247 = vadd.f32 0.0, %v1246
      %v1248 = vpop.f32.mrf.mxu0
      %v1249 = vadd.f32 0.0, %v1248
      %1250 = vmatmul.bf16.gmra.mxu0 %v1178
      %v1251 = vpop.f32.mrf.mxu0
      %v1252 = vadd.f32 0.0, %v1251
      %v1253 = vpop.f32.mrf.mxu0
      %v1254 = vadd.f32 0.0, %v1253
      %1255 = vmatmul.bf16.gmra.mxu0 %v1179
      %v1256 = vpop.f32.mrf.mxu0
      %v1257 = vadd.f32 0.0, %v1256
      %v1258 = vpop.f32.mrf.mxu0
      %v1259 = vadd.f32 0.0, %v1258
      %1260 = vdwg.mxu0
      %v1261 = vadd.f32 %v1015, %v1242
      %v1262 = vadd.f32 %v1016, %v1244
      %v1263 = vadd.f32 %v1017, %v1247
      %v1264 = vadd.f32 %v1018, %v1249
      %v1265 = vadd.f32 %v1019, %v1252
      %v1266 = vadd.f32 %v1020, %v1254
      %v1267 = vadd.f32 %v1021, %v1257
      %v1268 = vadd.f32 %v1022, %v1259
      %v1269 = vld [vmem:[%s888] sm:$0xe]
      %v1270 = vld [vmem:[%s888 + $0x8] sm:$0xe]
      %v1271 = vld [vmem:[%s888 + $0x10] sm:$0xe]
      %v1272 = vld [vmem:[%s888 + $0x18] sm:$0xe]
      %v1273 = vld [vmem:[%s888 + $0x20] sm:$0xe]
      %v1274 = vld [vmem:[%s888 + $0x28] sm:$0xe]
      %v1275 = vld [vmem:[%s888 + $0x30] sm:$0xe]
      %v1276 = vld [vmem:[%s888 + $0x38] sm:$0xe]
      %v1293 = vrot.slane %v1269, 5
      %v1294 = vrot.slane %v1293, 4
      %v1295 = vrot.slane %v1024, 5
      %v1296 = vsel %vm737, %v1294, %v1295
      %v1297 = vrot.slane %v1270, 5
      %v1298 = vrot.slane %v1297, 4
      %v1299 = vrot.slane %v1026, 5
      %v1300 = vsel %vm737, %v1298, %v1299
      %v1301 = vrot.slane %v1271, 5
      %v1302 = vrot.slane %v1301, 4
      %v1303 = vrot.slane %v1028, 5
      %v1304 = vsel %vm737, %v1302, %v1303
      %v1305 = vrot.slane %v1272, 5
      %v1306 = vrot.slane %v1305, 4
      %v1307 = vrot.slane %v1030, 5
      %v1308 = vsel %vm737, %v1306, %v1307
      %v1309 = vrot.slane %v1273, 5
      %v1310 = vrot.slane %v1309, 4
      %v1311 = vrot.slane %v1032, 5
      %v1312 = vsel %vm737, %v1310, %v1311
      %v1313 = vrot.slane %v1274, 5
      %v1314 = vrot.slane %v1313, 4
      %v1315 = vrot.slane %v1034, 5
      %v1316 = vsel %vm737, %v1314, %v1315
      %v1317 = vrot.slane %v1275, 5
      %v1318 = vrot.slane %v1317, 4
      %v1319 = vrot.slane %v1036, 5
      %v1320 = vsel %vm737, %v1318, %v1319
      %v1321 = vrot.slane %v1276, 5
      %v1322 = vrot.slane %v1321, 4
      %v1323 = vrot.slane %v1038, 5
      %v1324 = vsel %vm737, %v1322, %v1323
      %s1325 = scalar_lea.vmem %s1, 320
      %v1326 = vld [vmem:[%s1325] sm:$0xf]
      %v1327 = vld [vmem:[%s1325 + $0x4] sm:$0xf]
      %v1328 = vld [vmem:[%s1325 + $0x8] sm:$0xf]
      %v1329 = vld [vmem:[%s1325 + $0xc] sm:$0xf]
      %v1330 = vld [vmem:[%s1325 + $0x10] sm:$0xf]
      %v1331 = vld [vmem:[%s1325 + $0x14] sm:$0xf]
      %v1332 = vld [vmem:[%s1325 + $0x18] sm:$0xf]
      %v1333 = vld [vmem:[%s1325 + $0x1c] sm:$0xf]
      %v1334 = vld [vmem:[%s1325 + $0x20] sm:$0xf]
      %v1335 = vld [vmem:[%s1325 + $0x24] sm:$0xf]
      %v1336 = vld [vmem:[%s1325 + $0x28] sm:$0xf]
      %v1337 = vld [vmem:[%s1325 + $0x2c] sm:$0xf]
      %v1338 = vld [vmem:[%s1325 + $0x30] sm:$0xf]
      %v1339 = vld [vmem:[%s1325 + $0x34] sm:$0xf]
      %v1340 = vld [vmem:[%s1325 + $0x38] sm:$0xf]
      %v1341 = vld [vmem:[%s1325 + $0x3c] sm:$0xf]
      %v1342 = vunpack.c.l.b16 %v1296
      %v1343 = vunpack.c.l.b16 %v1300
      %v1344 = vunpack.c.l.b16 %v1304
      %v1345 = vunpack.c.l.b16 %v1308
      %v1346 = vunpack.c.l.b16 %v1312
      %v1347 = vunpack.c.l.b16 %v1316
      %v1348 = vunpack.c.l.b16 %v1320
      %v1349 = vunpack.c.l.b16 %v1324
      %v1350 = vpack.c.b16 %v1343, %v1342
      %v1351 = vpack.c.b16 %v1345, %v1344
      %v1352 = vpack.c.b16 %v1347, %v1346
      %v1353 = vpack.c.b16 %v1349, %v1348
      %v1374 = vunpack.c.l.b16 %v1326
      %v1375 = vunpack.c.l.b16 %v1327
      %v1376 = vunpack.c.l.b16 %v1328
      %v1377 = vunpack.c.l.b16 %v1329
      %v1378 = vunpack.c.l.b16 %v1330
      %v1379 = vunpack.c.l.b16 %v1331
      %v1380 = vunpack.c.l.b16 %v1332
      %v1381 = vunpack.c.l.b16 %v1333
      %v1382 = vunpack.c.l.b16 %v1334
      %v1383 = vunpack.c.l.b16 %v1335
      %v1384 = vunpack.c.l.b16 %v1336
      %v1385 = vunpack.c.l.b16 %v1337
      %v1386 = vunpack.c.l.b16 %v1338
      %v1387 = vunpack.c.l.b16 %v1339
      %v1388 = vunpack.c.l.b16 %v1340
      %v1389 = vunpack.c.l.b16 %v1341
      %v1390 = vpack.c.b16 %v1375, %v1374
      %v1391 = vpack.c.b16 %v1377, %v1376
      %v1392 = vpack.c.b16 %v1379, %v1378
      %v1393 = vpack.c.b16 %v1381, %v1380
      %v1394 = vpack.c.b16 %v1383, %v1382
      %v1395 = vpack.c.b16 %v1385, %v1384
      %v1396 = vpack.c.b16 %v1387, %v1386
      %v1397 = vpack.c.b16 %v1389, %v1388
      %1406 = vmatpush.bf16.msra.mxu0 %v1397
      %1407 = vmatpush.bf16.msra.mxu0 %v1396
      %1408 = vmatpush.bf16.msra.mxu0 %v1395
      %1409 = vmatpush.bf16.msra.mxu0 %v1394
      %1410 = vmatpush.bf16.msra.mxu0 %v1393
      %1411 = vmatpush.bf16.msra.mxu0 %v1392
      %1412 = vmatpush.bf16.msra.mxu0 %v1391
      %1413 = vmatpush.bf16.msra.mxu0 %v1390
      %1414 = vmatmul.bf16.gmra.mxu0 %v1350
      %v1415 = vpop.f32.mrf.mxu0
      %v1416 = vadd.f32 0.0, %v1415
      %v1417 = vpop.f32.mrf.mxu0
      %v1418 = vadd.f32 0.0, %v1417
      %1419 = vmatmul.bf16.gmra.mxu0 %v1351
      %v1420 = vpop.f32.mrf.mxu0
      %v1421 = vadd.f32 0.0, %v1420
      %v1422 = vpop.f32.mrf.mxu0
      %v1423 = vadd.f32 0.0, %v1422
      %1424 = vmatmul.bf16.gmra.mxu0 %v1352
      %v1425 = vpop.f32.mrf.mxu0
      %v1426 = vadd.f32 0.0, %v1425
      %v1427 = vpop.f32.mrf.mxu0
      %v1428 = vadd.f32 0.0, %v1427
      %1429 = vmatmul.bf16.gmra.mxu0 %v1353
      %v1430 = vpop.f32.mrf.mxu0
      %v1431 = vadd.f32 0.0, %v1430
      %v1432 = vpop.f32.mrf.mxu0
      %v1433 = vadd.f32 0.0, %v1432
      %1434 = vdwg.mxu0
      %v1435 = vadd.f32 %v1261, %v1416
      %v1436 = vadd.f32 %v1262, %v1418
      %v1437 = vadd.f32 %v1263, %v1421
      %v1438 = vadd.f32 %v1264, %v1423
      %v1439 = vadd.f32 %v1265, %v1426
      %v1440 = vadd.f32 %v1266, %v1428
      %v1441 = vadd.f32 %v1267, %v1431
      %v1442 = vadd.f32 %v1268, %v1433
      %s1443 = scalar_lea.vmem %s342, 16
      %v1444 = vld [vmem:[%s1443] sm:$0xf]
      %v1445 = vld [vmem:[%s1443 + $0x8] sm:$0xf]
      %v1446 = vld [vmem:[%s1443 + $0x10] sm:$0xf]
      %v1447 = vld [vmem:[%s1443 + $0x18] sm:$0xf]
      %v1448 = vld [vmem:[%s1443 + $0x20] sm:$0xf]
      %v1449 = vld [vmem:[%s1443 + $0x28] sm:$0xf]
      %v1450 = vld [vmem:[%s1443 + $0x30] sm:$0xf]
      %v1451 = vld [vmem:[%s1443 + $0x38] sm:$0xf]
      %s1452 = scalar_lea.vmem %s1, 384
      %v1453 = vld [vmem:[%s1452] sm:$0xf]
      %v1454 = vld [vmem:[%s1452 + $0x4] sm:$0xf]
      %v1455 = vld [vmem:[%s1452 + $0x8] sm:$0xf]
      %v1456 = vld [vmem:[%s1452 + $0xc] sm:$0xf]
      %v1457 = vld [vmem:[%s1452 + $0x10] sm:$0xf]
      %v1458 = vld [vmem:[%s1452 + $0x14] sm:$0xf]
      %v1459 = vld [vmem:[%s1452 + $0x18] sm:$0xf]
      %v1460 = vld [vmem:[%s1452 + $0x1c] sm:$0xf]
      %v1461 = vld [vmem:[%s1452 + $0x20] sm:$0xf]
      %v1462 = vld [vmem:[%s1452 + $0x24] sm:$0xf]
      %v1463 = vld [vmem:[%s1452 + $0x28] sm:$0xf]
      %v1464 = vld [vmem:[%s1452 + $0x2c] sm:$0xf]
      %v1465 = vld [vmem:[%s1452 + $0x30] sm:$0xf]
      %v1466 = vld [vmem:[%s1452 + $0x34] sm:$0xf]
      %v1467 = vld [vmem:[%s1452 + $0x38] sm:$0xf]
      %v1468 = vld [vmem:[%s1452 + $0x3c] sm:$0xf]
      %v1477 = vunpack.c.l.b16 %v1444
      %v1478 = vunpack.c.l.b16 %v1445
      %v1479 = vunpack.c.l.b16 %v1446
      %v1480 = vunpack.c.l.b16 %v1447
      %v1481 = vunpack.c.l.b16 %v1448
      %v1482 = vunpack.c.l.b16 %v1449
      %v1483 = vunpack.c.l.b16 %v1450
      %v1484 = vunpack.c.l.b16 %v1451
      %v1485 = vpack.c.b16 %v1478, %v1477
      %v1486 = vpack.c.b16 %v1480, %v1479
      %v1487 = vpack.c.b16 %v1482, %v1481
      %v1488 = vpack.c.b16 %v1484, %v1483
      %v1509 = vunpack.c.l.b16 %v1453
      %v1510 = vunpack.c.l.b16 %v1454
      %v1511 = vunpack.c.l.b16 %v1455
      %v1512 = vunpack.c.l.b16 %v1456
      %v1513 = vunpack.c.l.b16 %v1457
      %v1514 = vunpack.c.l.b16 %v1458
      %v1515 = vunpack.c.l.b16 %v1459
      %v1516 = vunpack.c.l.b16 %v1460
      %v1517 = vunpack.c.l.b16 %v1461
      %v1518 = vunpack.c.l.b16 %v1462
      %v1519 = vunpack.c.l.b16 %v1463
      %v1520 = vunpack.c.l.b16 %v1464
      %v1521 = vunpack.c.l.b16 %v1465
      %v1522 = vunpack.c.l.b16 %v1466
      %v1523 = vunpack.c.l.b16 %v1467
      %v1524 = vunpack.c.l.b16 %v1468
      %v1525 = vpack.c.b16 %v1510, %v1509
      %v1526 = vpack.c.b16 %v1512, %v1511
      %v1527 = vpack.c.b16 %v1514, %v1513
      %v1528 = vpack.c.b16 %v1516, %v1515
      %v1529 = vpack.c.b16 %v1518, %v1517
      %v1530 = vpack.c.b16 %v1520, %v1519
      %v1531 = vpack.c.b16 %v1522, %v1521
      %v1532 = vpack.c.b16 %v1524, %v1523
      %1541 = vmatpush.bf16.msra.mxu0 %v1532
      %1542 = vmatpush.bf16.msra.mxu0 %v1531
      %1543 = vmatpush.bf16.msra.mxu0 %v1530
      %1544 = vmatpush.bf16.msra.mxu0 %v1529
      %1545 = vmatpush.bf16.msra.mxu0 %v1528
      %1546 = vmatpush.bf16.msra.mxu0 %v1527
      %1547 = vmatpush.bf16.msra.mxu0 %v1526
      %1548 = vmatpush.bf16.msra.mxu0 %v1525
      %1549 = vmatmul.bf16.gmra.mxu0 %v1485
      %v1550 = vpop.f32.mrf.mxu0
      %v1551 = vadd.f32 0.0, %v1550
      %v1552 = vpop.f32.mrf.mxu0
      %v1553 = vadd.f32 0.0, %v1552
      %1554 = vmatmul.bf16.gmra.mxu0 %v1486
      %v1555 = vpop.f32.mrf.mxu0
      %v1556 = vadd.f32 0.0, %v1555
      %v1557 = vpop.f32.mrf.mxu0
      %v1558 = vadd.f32 0.0, %v1557
      %1559 = vmatmul.bf16.gmra.mxu0 %v1487
      %v1560 = vpop.f32.mrf.mxu0
      %v1561 = vadd.f32 0.0, %v1560
      %v1562 = vpop.f32.mrf.mxu0
      %v1563 = vadd.f32 0.0, %v1562
      %1564 = vmatmul.bf16.gmra.mxu0 %v1488
      %v1565 = vpop.f32.mrf.mxu0
      %v1566 = vadd.f32 0.0, %v1565
      %v1567 = vpop.f32.mrf.mxu0
      %v1568 = vadd.f32 0.0, %v1567
      %1569 = vdwg.mxu0
      %v1570 = vadd.f32 %v1435, %v1551
      %v1571 = vadd.f32 %v1436, %v1553
      %v1572 = vadd.f32 %v1437, %v1556
      %v1573 = vadd.f32 %v1438, %v1558
      %v1574 = vadd.f32 %v1439, %v1561
      %v1575 = vadd.f32 %v1440, %v1563
      %v1576 = vadd.f32 %v1441, %v1566
      %v1577 = vadd.f32 %v1442, %v1568
      %v1578 = vld [vmem:[%s1443] sm:$0xf]
      %v1579 = vld [vmem:[%s1443 + $0x4] sm:$0x1]
      %v1580 = vld [vmem:[%s1443 + $0x8] sm:$0xf]
      %v1581 = vld [vmem:[%s1443 + $0xc] sm:$0x1]
      %v1582 = vld [vmem:[%s1443 + $0x10] sm:$0xf]
      %v1583 = vld [vmem:[%s1443 + $0x14] sm:$0x1]
      %v1584 = vld [vmem:[%s1443 + $0x18] sm:$0xf]
      %v1585 = vld [vmem:[%s1443 + $0x1c] sm:$0x1]
      %v1586 = vld [vmem:[%s1443 + $0x20] sm:$0xf]
      %v1587 = vld [vmem:[%s1443 + $0x24] sm:$0x1]
      %v1588 = vld [vmem:[%s1443 + $0x28] sm:$0xf]
      %v1589 = vld [vmem:[%s1443 + $0x2c] sm:$0x1]
      %v1590 = vld [vmem:[%s1443 + $0x30] sm:$0xf]
      %v1591 = vld [vmem:[%s1443 + $0x34] sm:$0x1]
      %v1592 = vld [vmem:[%s1443 + $0x38] sm:$0xf]
      %v1593 = vld [vmem:[%s1443 + $0x3c] sm:$0x1]
      %v1595 = vshrl.u32 %v1578, 16
      %v1597 = vrot.slane %v1595, 4
      %v1598 = vshll.u32 %v1578, 16
      %v1600 = vrot.slane %v1598, 5
      %v1601 = vor.u32 %v1597, %v1600
      %v1602 = vrot.slane %v1601, 4
      %v1604 = vshll.u32 %v1579, 16
      %v1606 = vrot.slane %v1604, 5
      %v1607 = vsel %vm387, %v1602, %v1606
      %v1609 = vshrl.u32 %v1580, 16
      %v1611 = vrot.slane %v1609, 4
      %v1612 = vshll.u32 %v1580, 16
      %v1614 = vrot.slane %v1612, 5
      %v1615 = vor.u32 %v1611, %v1614
      %v1616 = vrot.slane %v1615, 4
      %v1618 = vshll.u32 %v1581, 16
      %v1620 = vrot.slane %v1618, 5
      %v1621 = vsel %vm387, %v1616, %v1620
      %v1623 = vshrl.u32 %v1582, 16
      %v1625 = vrot.slane %v1623, 4
      %v1626 = vshll.u32 %v1582, 16
      %v1628 = vrot.slane %v1626, 5
      %v1629 = vor.u32 %v1625, %v1628
      %v1630 = vrot.slane %v1629, 4
      %v1632 = vshll.u32 %v1583, 16
      %v1634 = vrot.slane %v1632, 5
      %v1635 = vsel %vm387, %v1630, %v1634
      %v1637 = vshrl.u32 %v1584, 16
      %v1639 = vrot.slane %v1637, 4
      %v1640 = vshll.u32 %v1584, 16
      %v1642 = vrot.slane %v1640, 5
      %v1643 = vor.u32 %v1639, %v1642
      %v1644 = vrot.slane %v1643, 4
      %v1646 = vshll.u32 %v1585, 16
      %v1648 = vrot.slane %v1646, 5
      %v1649 = vsel %vm387, %v1644, %v1648
      %v1651 = vshrl.u32 %v1586, 16
      %v1653 = vrot.slane %v1651, 4
      %v1654 = vshll.u32 %v1586, 16
      %v1656 = vrot.slane %v1654, 5
      %v1657 = vor.u32 %v1653, %v1656
      %v1658 = vrot.slane %v1657, 4
      %v1660 = vshll.u32 %v1587, 16
      %v1662 = vrot.slane %v1660, 5
      %v1663 = vsel %vm387, %v1658, %v1662
      %v1665 = vshrl.u32 %v1588, 16
      %v1667 = vrot.slane %v1665, 4
      %v1668 = vshll.u32 %v1588, 16
      %v1670 = vrot.slane %v1668, 5
      %v1671 = vor.u32 %v1667, %v1670
      %v1672 = vrot.slane %v1671, 4
      %v1674 = vshll.u32 %v1589, 16
      %v1676 = vrot.slane %v1674, 5
      %v1677 = vsel %vm387, %v1672, %v1676
      %v1679 = vshrl.u32 %v1590, 16
      %v1681 = vrot.slane %v1679, 4
      %v1682 = vshll.u32 %v1590, 16
      %v1684 = vrot.slane %v1682, 5
      %v1685 = vor.u32 %v1681, %v1684
      %v1686 = vrot.slane %v1685, 4
      %v1688 = vshll.u32 %v1591, 16
      %v1690 = vrot.slane %v1688, 5
      %v1691 = vsel %vm387, %v1686, %v1690
      %v1693 = vshrl.u32 %v1592, 16
      %v1695 = vrot.slane %v1693, 4
      %v1696 = vshll.u32 %v1592, 16
      %v1698 = vrot.slane %v1696, 5
      %v1699 = vor.u32 %v1695, %v1698
      %v1700 = vrot.slane %v1699, 4
      %v1702 = vshll.u32 %v1593, 16
      %v1704 = vrot.slane %v1702, 5
      %v1705 = vsel %vm387, %v1700, %v1704
      %s1706 = scalar_lea.vmem %s1, 448
      %v1707 = vld [vmem:[%s1706] sm:$0xf]
      %v1708 = vld [vmem:[%s1706 + $0x4] sm:$0xf]
      %v1709 = vld [vmem:[%s1706 + $0x8] sm:$0xf]
      %v1710 = vld [vmem:[%s1706 + $0xc] sm:$0xf]
      %v1711 = vld [vmem:[%s1706 + $0x10] sm:$0xf]
      %v1712 = vld [vmem:[%s1706 + $0x14] sm:$0xf]
      %v1713 = vld [vmem:[%s1706 + $0x18] sm:$0xf]
      %v1714 = vld [vmem:[%s1706 + $0x1c] sm:$0xf]
      %v1715 = vld [vmem:[%s1706 + $0x20] sm:$0xf]
      %v1716 = vld [vmem:[%s1706 + $0x24] sm:$0xf]
      %v1717 = vld [vmem:[%s1706 + $0x28] sm:$0xf]
      %v1718 = vld [vmem:[%s1706 + $0x2c] sm:$0xf]
      %v1719 = vld [vmem:[%s1706 + $0x30] sm:$0xf]
      %v1720 = vld [vmem:[%s1706 + $0x34] sm:$0xf]
      %v1721 = vld [vmem:[%s1706 + $0x38] sm:$0xf]
      %v1722 = vld [vmem:[%s1706 + $0x3c] sm:$0xf]
      %v1723 = vunpack.c.l.b16 %v1607
      %v1724 = vunpack.c.l.b16 %v1621
      %v1725 = vunpack.c.l.b16 %v1635
      %v1726 = vunpack.c.l.b16 %v1649
      %v1727 = vunpack.c.l.b16 %v1663
      %v1728 = vunpack.c.l.b16 %v1677
      %v1729 = vunpack.c.l.b16 %v1691
      %v1730 = vunpack.c.l.b16 %v1705
      %v1731 = vpack.c.b16 %v1724, %v1723
      %v1732 = vpack.c.b16 %v1726, %v1725
      %v1733 = vpack.c.b16 %v1728, %v1727
      %v1734 = vpack.c.b16 %v1730, %v1729
      %v1755 = vunpack.c.l.b16 %v1707
      %v1756 = vunpack.c.l.b16 %v1708
      %v1757 = vunpack.c.l.b16 %v1709
      %v1758 = vunpack.c.l.b16 %v1710
      %v1759 = vunpack.c.l.b16 %v1711
      %v1760 = vunpack.c.l.b16 %v1712
      %v1761 = vunpack.c.l.b16 %v1713
      %v1762 = vunpack.c.l.b16 %v1714
      %v1763 = vunpack.c.l.b16 %v1715
      %v1764 = vunpack.c.l.b16 %v1716
      %v1765 = vunpack.c.l.b16 %v1717
      %v1766 = vunpack.c.l.b16 %v1718
      %v1767 = vunpack.c.l.b16 %v1719
      %v1768 = vunpack.c.l.b16 %v1720
      %v1769 = vunpack.c.l.b16 %v1721
      %v1770 = vunpack.c.l.b16 %v1722
      %v1771 = vpack.c.b16 %v1756, %v1755
      %v1772 = vpack.c.b16 %v1758, %v1757
      %v1773 = vpack.c.b16 %v1760, %v1759
      %v1774 = vpack.c.b16 %v1762, %v1761
      %v1775 = vpack.c.b16 %v1764, %v1763
      %v1776 = vpack.c.b16 %v1766, %v1765
      %v1777 = vpack.c.b16 %v1768, %v1767
      %v1778 = vpack.c.b16 %v1770, %v1769
      %1787 = vmatpush.bf16.msra.mxu0 %v1778
      %1788 = vmatpush.bf16.msra.mxu0 %v1777
      %1789 = vmatpush.bf16.msra.mxu0 %v1776
      %1790 = vmatpush.bf16.msra.mxu0 %v1775
      %1791 = vmatpush.bf16.msra.mxu0 %v1774
      %1792 = vmatpush.bf16.msra.mxu0 %v1773
      %1793 = vmatpush.bf16.msra.mxu0 %v1772
      %1794 = vmatpush.bf16.msra.mxu0 %v1771
      %1795 = vmatmul.bf16.gmra.mxu0 %v1731
      %v1796 = vpop.f32.mrf.mxu0
      %v1797 = vadd.f32 0.0, %v1796
      %v1798 = vpop.f32.mrf.mxu0
      %v1799 = vadd.f32 0.0, %v1798
      %1800 = vmatmul.bf16.gmra.mxu0 %v1732
      %v1801 = vpop.f32.mrf.mxu0
      %v1802 = vadd.f32 0.0, %v1801
      %v1803 = vpop.f32.mrf.mxu0
      %v1804 = vadd.f32 0.0, %v1803
      %1805 = vmatmul.bf16.gmra.mxu0 %v1733
      %v1806 = vpop.f32.mrf.mxu0
      %v1807 = vadd.f32 0.0, %v1806
      %v1808 = vpop.f32.mrf.mxu0
      %v1809 = vadd.f32 0.0, %v1808
      %1810 = vmatmul.bf16.gmra.mxu0 %v1734
      %v1811 = vpop.f32.mrf.mxu0
      %v1812 = vadd.f32 0.0, %v1811
      %v1813 = vpop.f32.mrf.mxu0
      %v1814 = vadd.f32 0.0, %v1813
      %1815 = vdwg.mxu0
      %v1816 = vadd.f32 %v1570, %v1797
      %v1817 = vadd.f32 %v1571, %v1799
      %v1818 = vadd.f32 %v1572, %v1802
      %v1819 = vadd.f32 %v1573, %v1804
      %v1820 = vadd.f32 %v1574, %v1807
      %v1821 = vadd.f32 %v1575, %v1809
      %v1822 = vadd.f32 %v1576, %v1812
      %v1823 = vadd.f32 %v1577, %v1814
      %v1824 = vld [vmem:[%s1443] sm:$0xe]
      %v1825 = vld [vmem:[%s1443 + $0x8] sm:$0xe]
      %v1826 = vld [vmem:[%s1443 + $0x10] sm:$0xe]
      %v1827 = vld [vmem:[%s1443 + $0x18] sm:$0xe]
      %v1828 = vld [vmem:[%s1443 + $0x20] sm:$0xe]
      %v1829 = vld [vmem:[%s1443 + $0x28] sm:$0xe]
      %v1830 = vld [vmem:[%s1443 + $0x30] sm:$0xe]
      %v1831 = vld [vmem:[%s1443 + $0x38] sm:$0xe]
      %v1848 = vrot.slane %v1824, 5
      %v1849 = vrot.slane %v1848, 4
      %v1850 = vrot.slane %v1579, 5
      %v1851 = vsel %vm737, %v1849, %v1850
      %v1852 = vrot.slane %v1825, 5
      %v1853 = vrot.slane %v1852, 4
      %v1854 = vrot.slane %v1581, 5
      %v1855 = vsel %vm737, %v1853, %v1854
      %v1856 = vrot.slane %v1826, 5
      %v1857 = vrot.slane %v1856, 4
      %v1858 = vrot.slane %v1583, 5
      %v1859 = vsel %vm737, %v1857, %v1858
      %v1860 = vrot.slane %v1827, 5
      %v1861 = vrot.slane %v1860, 4
      %v1862 = vrot.slane %v1585, 5
      %v1863 = vsel %vm737, %v1861, %v1862
      %v1864 = vrot.slane %v1828, 5
      %v1865 = vrot.slane %v1864, 4
      %v1866 = vrot.slane %v1587, 5
      %v1867 = vsel %vm737, %v1865, %v1866
      %v1868 = vrot.slane %v1829, 5
      %v1869 = vrot.slane %v1868, 4
      %v1870 = vrot.slane %v1589, 5
      %v1871 = vsel %vm737, %v1869, %v1870
      %v1872 = vrot.slane %v1830, 5
      %v1873 = vrot.slane %v1872, 4
      %v1874 = vrot.slane %v1591, 5
      %v1875 = vsel %vm737, %v1873, %v1874
      %v1876 = vrot.slane %v1831, 5
      %v1877 = vrot.slane %v1876, 4
      %v1878 = vrot.slane %v1593, 5
      %v1879 = vsel %vm737, %v1877, %v1878
      %s1880 = scalar_lea.vmem %s1, 512
      %v1881 = vld [vmem:[%s1880] sm:$0xf]
      %v1882 = vld [vmem:[%s1880 + $0x4] sm:$0xf]
      %v1883 = vld [vmem:[%s1880 + $0x8] sm:$0xf]
      %v1884 = vld [vmem:[%s1880 + $0xc] sm:$0xf]
      %v1885 = vld [vmem:[%s1880 + $0x10] sm:$0xf]
      %v1886 = vld [vmem:[%s1880 + $0x14] sm:$0xf]
      %v1887 = vld [vmem:[%s1880 + $0x18] sm:$0xf]
      %v1888 = vld [vmem:[%s1880 + $0x1c] sm:$0xf]
      %v1889 = vld [vmem:[%s1880 + $0x20] sm:$0xf]
      %v1890 = vld [vmem:[%s1880 + $0x24] sm:$0xf]
      %v1891 = vld [vmem:[%s1880 + $0x28] sm:$0xf]
      %v1892 = vld [vmem:[%s1880 + $0x2c] sm:$0xf]
      %v1893 = vld [vmem:[%s1880 + $0x30] sm:$0xf]
      %v1894 = vld [vmem:[%s1880 + $0x34] sm:$0xf]
      %v1895 = vld [vmem:[%s1880 + $0x38] sm:$0xf]
      %v1896 = vld [vmem:[%s1880 + $0x3c] sm:$0xf]
      %v1897 = vunpack.c.l.b16 %v1851
      %v1898 = vunpack.c.l.b16 %v1855
      %v1899 = vunpack.c.l.b16 %v1859
      %v1900 = vunpack.c.l.b16 %v1863
      %v1901 = vunpack.c.l.b16 %v1867
      %v1902 = vunpack.c.l.b16 %v1871
      %v1903 = vunpack.c.l.b16 %v1875
      %v1904 = vunpack.c.l.b16 %v1879
      %v1905 = vpack.c.b16 %v1898, %v1897
      %v1906 = vpack.c.b16 %v1900, %v1899
      %v1907 = vpack.c.b16 %v1902, %v1901
      %v1908 = vpack.c.b16 %v1904, %v1903
      %v1929 = vunpack.c.l.b16 %v1881
      %v1930 = vunpack.c.l.b16 %v1882
      %v1931 = vunpack.c.l.b16 %v1883
      %v1932 = vunpack.c.l.b16 %v1884
      %v1933 = vunpack.c.l.b16 %v1885
      %v1934 = vunpack.c.l.b16 %v1886
      %v1935 = vunpack.c.l.b16 %v1887
      %v1936 = vunpack.c.l.b16 %v1888
      %v1937 = vunpack.c.l.b16 %v1889
      %v1938 = vunpack.c.l.b16 %v1890
      %v1939 = vunpack.c.l.b16 %v1891
      %v1940 = vunpack.c.l.b16 %v1892
      %v1941 = vunpack.c.l.b16 %v1893
      %v1942 = vunpack.c.l.b16 %v1894
      %v1943 = vunpack.c.l.b16 %v1895
      %v1944 = vunpack.c.l.b16 %v1896
      %v1945 = vpack.c.b16 %v1930, %v1929
      %v1946 = vpack.c.b16 %v1932, %v1931
      %v1947 = vpack.c.b16 %v1934, %v1933
      %v1948 = vpack.c.b16 %v1936, %v1935
      %v1949 = vpack.c.b16 %v1938, %v1937
      %v1950 = vpack.c.b16 %v1940, %v1939
      %v1951 = vpack.c.b16 %v1942, %v1941
      %v1952 = vpack.c.b16 %v1944, %v1943
      %1961 = vmatpush.bf16.msra.mxu0 %v1952
      %1962 = vmatpush.bf16.msra.mxu0 %v1951
      %1963 = vmatpush.bf16.msra.mxu0 %v1950
      %1964 = vmatpush.bf16.msra.mxu0 %v1949
      %1965 = vmatpush.bf16.msra.mxu0 %v1948
      %1966 = vmatpush.bf16.msra.mxu0 %v1947
      %1967 = vmatpush.bf16.msra.mxu0 %v1946
      %1968 = vmatpush.bf16.msra.mxu0 %v1945
      %1969 = vmatmul.bf16.gmra.mxu0 %v1905
      %v1970 = vpop.f32.mrf.mxu0
      %v1971 = vadd.f32 0.0, %v1970
      %v1972 = vpop.f32.mrf.mxu0
      %v1973 = vadd.f32 0.0, %v1972
      %1974 = vmatmul.bf16.gmra.mxu0 %v1906
      %v1975 = vpop.f32.mrf.mxu0
      %v1976 = vadd.f32 0.0, %v1975
      %v1977 = vpop.f32.mrf.mxu0
      %v1978 = vadd.f32 0.0, %v1977
      %1979 = vmatmul.bf16.gmra.mxu0 %v1907
      %v1980 = vpop.f32.mrf.mxu0
      %v1981 = vadd.f32 0.0, %v1980
      %v1982 = vpop.f32.mrf.mxu0
      %v1983 = vadd.f32 0.0, %v1982
      %1984 = vmatmul.bf16.gmra.mxu0 %v1908
      %v1985 = vpop.f32.mrf.mxu0
      %v1986 = vadd.f32 0.0, %v1985
      %v1987 = vpop.f32.mrf.mxu0
      %v1988 = vadd.f32 0.0, %v1987
      %1989 = vdwg.mxu0
      %v1990 = vadd.f32 %v1816, %v1971
      %v1991 = vadd.f32 %v1817, %v1973
      %v1992 = vadd.f32 %v1818, %v1976
      %v1993 = vadd.f32 %v1819, %v1978
      %v1994 = vadd.f32 %v1820, %v1981
      %v1995 = vadd.f32 %v1821, %v1983
      %v1996 = vadd.f32 %v1822, %v1986
      %v1997 = vadd.f32 %v1823, %v1988
      %v1998 = vld [vmem:[%s2] sm:$0x1]
      %v2000 = vperm.slane %v1998, 0
      %v2002 = vmul.f32 %v1990, %v2000
      %v2003 = vmul.f32 %v1991, %v2000
      %v2004 = vmul.f32 %v1992, %v2000
      %v2005 = vmul.f32 %v1993, %v2000
      %v2006 = vmul.f32 %v1994, %v2000
      %v2007 = vmul.f32 %v1995, %v2000
      %v2008 = vmul.f32 %v1996, %v2000
      %v2009 = vmul.f32 %v1997, %v2000
      %v2010 = vld [vmem:[%s3] sm:$0x1]
      %v2012 = vperm.slane %v2010, 0
      %v2014 = vadd.f32 %v2002, %v2012
      %v2015 = vadd.f32 %v2003, %v2012
      %v2016 = vadd.f32 %v2004, %v2012
      %v2017 = vadd.f32 %v2005, %v2012
      %v2018 = vadd.f32 %v2006, %v2012
      %v2019 = vadd.f32 %v2007, %v2012
      %v2020 = vadd.f32 %v2008, %v2012
      %v2021 = vadd.f32 %v2009, %v2012
      %v2022 = vxor.u32 %v2014, 2147483648
      %v2023 = vxor.u32 %v2015, 2147483648
      %v2024 = vxor.u32 %v2016, 2147483648
      %v2025 = vxor.u32 %v2017, 2147483648
      %v2026 = vxor.u32 %v2018, 2147483648
      %v2027 = vxor.u32 %v2019, 2147483648
      %v2028 = vxor.u32 %v2020, 2147483648
      %v2029 = vxor.u32 %v2021, 2147483648
      %v2030 = vmul.f32 %v2022, 1.442695
      %v2031 = vpow.pop %v2030
      %v2032 = vmul.f32 %v2023, 1.442695
      %v2033 = vpow.pop %v2032
      %v2034 = vmul.f32 %v2024, 1.442695
      %v2035 = vpow.pop %v2034
      %v2036 = vmul.f32 %v2025, 1.442695
      %v2037 = vpow.pop %v2036
      %v2038 = vmul.f32 %v2026, 1.442695
      %v2039 = vpow.pop %v2038
      %v2040 = vmul.f32 %v2027, 1.442695
      %v2041 = vpow.pop %v2040
      %v2042 = vmul.f32 %v2028, 1.442695
      %v2043 = vpow.pop %v2042
      %v2044 = vmul.f32 %v2029, 1.442695
      %v2045 = vpow.pop %v2044
      %v2046 = vadd.f32 %v2031, 1.0
      %v2047 = vadd.f32 %v2033, 1.0
      %v2048 = vadd.f32 %v2035, 1.0
      %v2049 = vadd.f32 %v2037, 1.0
      %v2050 = vadd.f32 %v2039, 1.0
      %v2051 = vadd.f32 %v2041, 1.0
      %v2052 = vadd.f32 %v2043, 1.0
      %v2053 = vadd.f32 %v2045, 1.0
      %v2054 = vrcp.pop %v2046
      %v2055 = vmul.f32 %v2046, %v2054
      %v2056 = vsub.f32 1.0, %v2055
      %v2057 = vmul.f32 %v2054, %v2056
      %v2058 = vadd.f32 %v2054, %v2057
      %vm2059 = vweird.f32 %v2046
      %vm2060 = vweird.f32 %v2054
      %vm2061 = vmor %vm2059, %vm2060
      %v2062 = vsel %vm2061, %v2054, %v2058
      %v2063 = vand.u32 2147483647, %v2046
      %vm2064 = vcmp.eq.f32.partialorder %v2063, 8.507059e+37
      %v2065 = vand.u32 %v2046, 2147483648
      %v2066 = vor.u32 1.1754944e-38, %v2065
      %v2067 = vsel %vm2064, %v2066, %v2062
      %v2068 = vmul.f32 1.0, %v2067
      %v2069 = vrcp.pop %v2047
      %v2070 = vmul.f32 %v2047, %v2069
      %v2071 = vsub.f32 1.0, %v2070
      %v2072 = vmul.f32 %v2069, %v2071
      %v2073 = vadd.f32 %v2069, %v2072
      %vm2074 = vweird.f32 %v2047
      %vm2075 = vweird.f32 %v2069
      %vm2076 = vmor %vm2074, %vm2075
      %v2077 = vsel %vm2076, %v2069, %v2073
      %v2078 = vand.u32 2147483647, %v2047
      %vm2079 = vcmp.eq.f32.partialorder %v2078, 8.507059e+37
      %v2080 = vand.u32 %v2047, 2147483648
      %v2081 = vor.u32 1.1754944e-38, %v2080
      %v2082 = vsel %vm2079, %v2081, %v2077
      %v2083 = vmul.f32 1.0, %v2082
      %v2084 = vrcp.pop %v2048
      %v2085 = vmul.f32 %v2048, %v2084
      %v2086 = vsub.f32 1.0, %v2085
      %v2087 = vmul.f32 %v2084, %v2086
      %v2088 = vadd.f32 %v2084, %v2087
      %vm2089 = vweird.f32 %v2048
      %vm2090 = vweird.f32 %v2084
      %vm2091 = vmor %vm2089, %vm2090
      %v2092 = vsel %vm2091, %v2084, %v2088
      %v2093 = vand.u32 2147483647, %v2048
      %vm2094 = vcmp.eq.f32.partialorder %v2093, 8.507059e+37
      %v2095 = vand.u32 %v2048, 2147483648
      %v2096 = vor.u32 1.1754944e-38, %v2095
      %v2097 = vsel %vm2094, %v2096, %v2092
      %v2098 = vmul.f32 1.0, %v2097
      %v2099 = vrcp.pop %v2049
      %v2100 = vmul.f32 %v2049, %v2099
      %v2101 = vsub.f32 1.0, %v2100
      %v2102 = vmul.f32 %v2099, %v2101
      %v2103 = vadd.f32 %v2099, %v2102
      %vm2104 = vweird.f32 %v2049
      %vm2105 = vweird.f32 %v2099
      %vm2106 = vmor %vm2104, %vm2105
      %v2107 = vsel %vm2106, %v2099, %v2103
      %v2108 = vand.u32 2147483647, %v2049
      %vm2109 = vcmp.eq.f32.partialorder %v2108, 8.507059e+37
      %v2110 = vand.u32 %v2049, 2147483648
      %v2111 = vor.u32 1.1754944e-38, %v2110
      %v2112 = vsel %vm2109, %v2111, %v2107
      %v2113 = vmul.f32 1.0, %v2112
      %v2114 = vrcp.pop %v2050
      %v2115 = vmul.f32 %v2050, %v2114
      %v2116 = vsub.f32 1.0, %v2115
      %v2117 = vmul.f32 %v2114, %v2116
      %v2118 = vadd.f32 %v2114, %v2117
      %vm2119 = vweird.f32 %v2050
      %vm2120 = vweird.f32 %v2114
      %vm2121 = vmor %vm2119, %vm2120
      %v2122 = vsel %vm2121, %v2114, %v2118
      %v2123 = vand.u32 2147483647, %v2050
      %vm2124 = vcmp.eq.f32.partialorder %v2123, 8.507059e+37
      %v2125 = vand.u32 %v2050, 2147483648
      %v2126 = vor.u32 1.1754944e-38, %v2125
      %v2127 = vsel %vm2124, %v2126, %v2122
      %v2128 = vmul.f32 1.0, %v2127
      %v2129 = vrcp.pop %v2051
      %v2130 = vmul.f32 %v2051, %v2129
      %v2131 = vsub.f32 1.0, %v2130
      %v2132 = vmul.f32 %v2129, %v2131
      %v2133 = vadd.f32 %v2129, %v2132
      %vm2134 = vweird.f32 %v2051
      %vm2135 = vweird.f32 %v2129
      %vm2136 = vmor %vm2134, %vm2135
      %v2137 = vsel %vm2136, %v2129, %v2133
      %v2138 = vand.u32 2147483647, %v2051
      %vm2139 = vcmp.eq.f32.partialorder %v2138, 8.507059e+37
      %v2140 = vand.u32 %v2051, 2147483648
      %v2141 = vor.u32 1.1754944e-38, %v2140
      %v2142 = vsel %vm2139, %v2141, %v2137
      %v2143 = vmul.f32 1.0, %v2142
      %v2144 = vrcp.pop %v2052
      %v2145 = vmul.f32 %v2052, %v2144
      %v2146 = vsub.f32 1.0, %v2145
      %v2147 = vmul.f32 %v2144, %v2146
      %v2148 = vadd.f32 %v2144, %v2147
      %vm2149 = vweird.f32 %v2052
      %vm2150 = vweird.f32 %v2144
      %vm2151 = vmor %vm2149, %vm2150
      %v2152 = vsel %vm2151, %v2144, %v2148
      %v2153 = vand.u32 2147483647, %v2052
      %vm2154 = vcmp.eq.f32.partialorder %v2153, 8.507059e+37
      %v2155 = vand.u32 %v2052, 2147483648
      %v2156 = vor.u32 1.1754944e-38, %v2155
      %v2157 = vsel %vm2154, %v2156, %v2152
      %v2158 = vmul.f32 1.0, %v2157
      %v2159 = vrcp.pop %v2053
      %v2160 = vmul.f32 %v2053, %v2159
      %v2161 = vsub.f32 1.0, %v2160
      %v2162 = vmul.f32 %v2159, %v2161
      %v2163 = vadd.f32 %v2159, %v2162
      %vm2164 = vweird.f32 %v2053
      %vm2165 = vweird.f32 %v2159
      %vm2166 = vmor %vm2164, %vm2165
      %v2167 = vsel %vm2166, %v2159, %v2163
      %v2168 = vand.u32 2147483647, %v2053
      %vm2169 = vcmp.eq.f32.partialorder %v2168, 8.507059e+37
      %v2170 = vand.u32 %v2053, 2147483648
      %v2171 = vor.u32 1.1754944e-38, %v2170
      %v2172 = vsel %vm2169, %v2171, %v2167
      %v2173 = vmul.f32 1.0, %v2172
      %v2174 = vmul.f32 %v2014, %v2068
      %v2175 = vmul.f32 %v2015, %v2083
      %v2176 = vmul.f32 %v2016, %v2098
      %v2177 = vmul.f32 %v2017, %v2113
      %v2178 = vmul.f32 %v2018, %v2128
      %v2179 = vmul.f32 %v2019, %v2143
      %v2180 = vmul.f32 %v2020, %v2158
      %v2181 = vmul.f32 %v2021, %v2173
      %v2182 = vadd.f32 %v2174, %v2175
      %v2183 = vadd.f32 %v2182, %v2176
      %v2184 = vadd.f32 %v2183, %v2177
      %v2185 = vadd.f32 %v2184, %v2178
      %v2186 = vadd.f32 %v2185, %v2179
      %v2187 = vadd.f32 %v2186, %v2180
      %v2188 = vadd.f32 %v2187, %v2181
      %v2189 = vrot.slane %v2188, 4
      %v2190 = vadd.f32 %v2188, %v2189
      %v2191 = vrot.slane %v2190, 2
      %v2192 = vadd.f32 %v2190, %v2191
      %v2193 = vrot.slane %v2192, 1
      %v2194 = vadd.f32 %v2192, %v2193
      %v2195 = vmul.f32 %v2194, 0.015625
      %v2196 = vld [vmem:[%s5] sm:$0xff]
      %v2197 = vld [vmem:[%s5 + $0x8] sm:$0xff]
      %v2198 = vld [vmem:[%s5 + $0x10] sm:$0xff]
      %v2199 = vld [vmem:[%s5 + $0x18] sm:$0xff]
      %v2200 = vld [vmem:[%s5 + $0x20] sm:$0xff]
      %v2201 = vld [vmem:[%s5 + $0x28] sm:$0xff]
      %v2202 = vld [vmem:[%s5 + $0x30] sm:$0xff]
      %v2203 = vld [vmem:[%s5 + $0x38] sm:$0xff]
      %v2204 = vld [vmem:[%s5 + $0x40] sm:$0xff]
      %v2205 = vld [vmem:[%s5 + $0x48] sm:$0xff]
      %v2206 = vld [vmem:[%s5 + $0x50] sm:$0xff]
      %v2207 = vld [vmem:[%s5 + $0x58] sm:$0xff]
      %v2208 = vld [vmem:[%s5 + $0x60] sm:$0xff]
      %v2209 = vld [vmem:[%s5 + $0x68] sm:$0xff]
      %v2210 = vld [vmem:[%s5 + $0x70] sm:$0xff]
      %v2211 = vld [vmem:[%s5 + $0x78] sm:$0xff]
      %v2212 = vld [vmem:[%s6] sm:$0x1]
      %2213 = vmatpush.msra.mxu0 %v2211
      %2214 = vmatpush.msra.mxu0 %v2210
      %2215 = vmatpush.msra.mxu0 %v2209
      %2216 = vmatpush.msra.mxu0 %v2208
      %2217 = vmatpush.msra.mxu0 %v2207
      %2218 = vmatpush.msra.mxu0 %v2206
      %2219 = vmatpush.msra.mxu0 %v2205
      %2220 = vmatpush.msra.mxu0 %v2204
      %2221 = vmatpush.msra.mxu0 %v2203
      %2222 = vmatpush.msra.mxu0 %v2202
      %2223 = vmatpush.msra.mxu0 %v2201
      %2224 = vmatpush.msra.mxu0 %v2200
      %2225 = vmatpush.msra.mxu0 %v2199
      %2226 = vmatpush.msra.mxu0 %v2198
      %2227 = vmatpush.msra.mxu0 %v2197
      %2228 = vmatpush.msra.mxu0 %v2196
      %2229 = vmatmul.f32.gmra.mxu0 %v2195
      %v2230 = vpop.f32.mrf.mxu0
      %v2231 = vadd.f32 %v2212, %v2230
      %2232 = vdwg.mxu0
      %v2233 = vmax.f32 %v2231, 0.0
      %v2234 = vld [vmem:[%s7] sm:$0xff]
      %v2235 = vld [vmem:[%s7 + $0x8] sm:$0xff]
      %v2236 = vld [vmem:[%s7 + $0x10] sm:$0xff]
      %v2237 = vld [vmem:[%s7 + $0x18] sm:$0xff]
      %v2238 = vld [vmem:[%s7 + $0x20] sm:$0xff]
      %v2239 = vld [vmem:[%s7 + $0x28] sm:$0xff]
      %v2240 = vld [vmem:[%s7 + $0x30] sm:$0xff]
      %v2241 = vld [vmem:[%s7 + $0x38] sm:$0xff]
      %v2242 = vld [vmem:[%s7 + $0x40] sm:$0xff]
      %v2243 = vld [vmem:[%s7 + $0x48] sm:$0xff]
      %v2244 = vld [vmem:[%s7 + $0x50] sm:$0xff]
      %v2245 = vld [vmem:[%s7 + $0x58] sm:$0xff]
      %v2246 = vld [vmem:[%s7 + $0x60] sm:$0xff]
      %v2247 = vld [vmem:[%s7 + $0x68] sm:$0xff]
      %v2248 = vld [vmem:[%s7 + $0x70] sm:$0xff]
      %v2249 = vld [vmem:[%s7 + $0x78] sm:$0xff]
      %v2250 = vld [vmem:[%s8] sm:$0x1]
      %2251 = vmatpush.msra.mxu0 %v2249
      %2252 = vmatpush.msra.mxu0 %v2248
      %2253 = vmatpush.msra.mxu0 %v2247
      %2254 = vmatpush.msra.mxu0 %v2246
      %2255 = vmatpush.msra.mxu0 %v2245
      %2256 = vmatpush.msra.mxu0 %v2244
      %2257 = vmatpush.msra.mxu0 %v2243
      %2258 = vmatpush.msra.mxu0 %v2242
      %2259 = vmatpush.msra.mxu0 %v2241
      %2260 = vmatpush.msra.mxu0 %v2240
      %2261 = vmatpush.msra.mxu0 %v2239
      %2262 = vmatpush.msra.mxu0 %v2238
      %2263 = vmatpush.msra.mxu0 %v2237
      %2264 = vmatpush.msra.mxu0 %v2236
      %2265 = vmatpush.msra.mxu0 %v2235
      %2266 = vmatpush.msra.mxu0 %v2234
      %2267 = vmatmul.f32.gmra.mxu0 %v2233
      %v2268 = vpop.f32.mrf.mxu0
      %v2269 = vadd.f32 %v2250, %v2268
      %2270 = vdwg.mxu0
      %v2271 = vxor.u32 %v2269, 2147483648
      %v2272 = vmul.f32 %v2271, 1.442695
      %v2273 = vpow.pop %v2272
      %v2274 = vadd.f32 %v2273, 1.0
      %v2275 = vrcp.pop %v2274
      %v2276 = vmul.f32 %v2274, %v2275
      %v2277 = vsub.f32 1.0, %v2276
      %v2278 = vmul.f32 %v2275, %v2277
      %v2279 = vadd.f32 %v2275, %v2278
      %vm2280 = vweird.f32 %v2274
      %vm2281 = vweird.f32 %v2275
      %vm2282 = vmor %vm2280, %vm2281
      %v2283 = vsel %vm2282, %v2275, %v2279
      %v2284 = vand.u32 2147483647, %v2274
      %vm2285 = vcmp.eq.f32.partialorder %v2284, 8.507059e+37
      %v2286 = vand.u32 %v2274, 2147483648
      %v2287 = vor.u32 1.1754944e-38, %v2286
      %v2288 = vsel %vm2285, %v2287, %v2283
      %v2289 = vmul.f32 1.0, %v2288
      %v2290 = vld [vmem:[%s347] sm:$0xf]
      %v2291 = vld [vmem:[%s347 + $0x4] sm:$0xf]
      %v2292 = vld [vmem:[%s347 + $0x8] sm:$0xf]
      %v2293 = vld [vmem:[%s347 + $0xc] sm:$0xf]
      %v2294 = vld [vmem:[%s347 + $0x10] sm:$0xf]
      %v2295 = vld [vmem:[%s347 + $0x14] sm:$0xf]
      %v2296 = vld [vmem:[%s347 + $0x18] sm:$0xf]
      %v2297 = vld [vmem:[%s347 + $0x1c] sm:$0xf]
      %v2298 = vunpack.c.l.bf16 %v2290
      %v2299 = vunpack.c.l.bf16 %v2291
      %v2300 = vunpack.c.l.bf16 %v2292
      %v2301 = vunpack.c.l.bf16 %v2293
      %v2302 = vunpack.c.l.bf16 %v2294
      %v2303 = vunpack.c.l.bf16 %v2295
      %v2304 = vunpack.c.l.bf16 %v2296
      %v2305 = vunpack.c.l.bf16 %v2297
      %v2306 = vperm.slane %v2289, 0
      %v2307 = vmul.f32 %v2174, %v2306
      %v2308 = vmul.f32 %v2175, %v2306
      %v2309 = vmul.f32 %v2176, %v2306
      %v2310 = vmul.f32 %v2177, %v2306
      %v2311 = vmul.f32 %v2178, %v2306
      %v2312 = vmul.f32 %v2179, %v2306
      %v2313 = vmul.f32 %v2180, %v2306
      %v2314 = vmul.f32 %v2181, %v2306
      %v2315 = vadd.f32 %v2307, %v2298
      %v2316 = vadd.f32 %v2308, %v2299
      %v2317 = vadd.f32 %v2309, %v2300
      %v2318 = vadd.f32 %v2310, %v2301
      %v2319 = vadd.f32 %v2311, %v2302
      %v2320 = vadd.f32 %v2312, %v2303
      %v2321 = vadd.f32 %v2313, %v2304
      %v2322 = vadd.f32 %v2314, %v2305
      %2323 = vst [vmem:[%s352] sm:$0xff] %v2315
      %2324 = vst [vmem:[%s352 + $0x8] sm:$0xff] %v2316
      %2325 = vst [vmem:[%s352 + $0x10] sm:$0xff] %v2317
      %2326 = vst [vmem:[%s352 + $0x18] sm:$0xff] %v2318
      %2327 = vst [vmem:[%s352 + $0x20] sm:$0xff] %v2319
      %2328 = vst [vmem:[%s352 + $0x28] sm:$0xff] %v2320
      %2329 = vst [vmem:[%s352 + $0x30] sm:$0xff] %v2321
      %2330 = vst [vmem:[%s352 + $0x38] sm:$0xff] %v2322
      %p2331 = scmp.lt.s32.totalorder %s20, 1
      %s2332 = scalar_select %p2331, %s20, 1
      %s2333 = smul.addr %s2332, 8
      %s2334 = smul.addr %s2333, 8
      %s2335 = scalar_lea.vmem %s9, %s2334
      // Predicated region
      $region57: #{_lambda_.7} parent=55 // pred_check
        %p2336 = pneg %p237
      $region58: #{_lambda_.7} parent=55 // pred_check_branch
        %2338 = sbr.rel (%p2336) target = $region60
      $region59: #{_lambda_.7} parent=55 // pred_region
        _
      $region60: #{_lambda_.7} parent=55 // pred_fallthru
        _
    $region56: #{_lambda_.7} parent=5 // pred_fallthru
      _
    %p2339 = scmp.le.s32.totalorder 2, %s15
    // Predicated region
    $region61: #{_lambda_.7} parent=5 // pred_check
      %p2340 = pneg %p2339
    $region62: #{_lambda_.7} parent=5 // pred_check_branch
      %2342 = sbr.rel (%p2340) target = $region64
    $region63: #{_lambda_.7} parent=5 // pred_region
      %s2343 = ssub.s32 %s15, 2
      // Predicated region
      $region65: #{_lambda_.7} parent=63 // pred_check
        %p2344 = pneg %p243
      $region66: #{_lambda_.7} parent=63 // pred_check_branch
        %2346 = sbr.rel (%p2344) target = $region68
      $region67: #{_lambda_.7} parent=63 // pred_region
        %p2347 = scmp.lt.s32.totalorder %s21, 1
        %s2348 = scalar_select %p2347, %s21, 1
        %s2349 = smul.addr %s2348, 8
        %s2350 = smul.addr %s2349, 8
        %s2351 = scalar_lea.vmem %s9, %s2350
      $region68: #{_lambda_.7} parent=63 // pred_fallthru
        _
    $region64: #{_lambda_.7} parent=5 // pred_fallthru
      _
  $region6: #{_lambda_.7} parent=0 // loop_footer
    %s19 = sadd.s32 1, %s15
  $region7: #{_lambda_.7} parent=0 // loop_footer_branch
    %14 = sbr.rel target = $region3
  $region8: #{_lambda_.7} parent=0 // loop_exit
    _

</llo_original>
